<compile_context>
chip_gen: v5e
topology: v5e:2x2
jax: 0.10.0
libtpu: 0.0.40
codegen_flags: <defaults>
</compile_context>

<pallas_src>
import jax
import jax.numpy as jnp
from jax.experimental import pallas as pl
from jax.experimental.pallas import tpu as pltpu

NUM_HEADS = 8
LN_EPS = 1e-5
LAYERS = 2


def _att_subblock(q_flat, kv3, B, Tq, Tk, D,
                  wqkv, bqkv, wo, bo, gamma, beta, self_attn):
    """One AttSubBlock on VMEM-resident values.

    q_flat : (B*Tq, D) f32  queries, flattened over batch
    kv3    : (B, Tk, D) f32 key/value source (only used for cross-attention)
    wqkv   : (D, 3D) pre-transposed packed [Wq^T | Wk^T | Wv^T]
    bqkv   : (1, 3D) packed [bq | bk | bv]
    wo     : (D, D)  pre-transposed output projection, bo/gamma/beta: (1, D)
    returns (B*Tq, D) f32
    """
    H = NUM_HEADS
    dh = D // H
    scale = 1.0 / (dh ** 0.5)

    if self_attn:
        # one lane-dense (B*Tq, D) x (D, 3D) matmul gives Q, K, V together
        qkv = jnp.dot(q_flat, wqkv, preferred_element_type=jnp.float32) + bqkv
        Q = qkv[:, :D] * scale                       # fold 1/sqrt(dh) into Q
        K3 = qkv[:, D:2 * D].reshape(B, Tk, D)       # layout-identical reshape
        V3 = qkv[:, 2 * D:].reshape(B, Tk, D)
    else:
        Q = (jnp.dot(q_flat, wqkv[:, :D], preferred_element_type=jnp.float32)
             + bqkv[:, :D]) * scale
        k_parts, v_parts = [], []
        for b in range(B):                           # B is tiny & static
            kvp = (jnp.dot(kv3[b], wqkv[:, D:],
                           preferred_element_type=jnp.float32) + bqkv[:, D:])
            k_parts.append(kvp[:, :D])
            v_parts.append(kvp[:, D:])
        K3 = jnp.stack(k_parts, axis=0)              # (B, Tk, D)
        V3 = jnp.stack(v_parts, axis=0)
    Q3 = Q.reshape(B, Tq, D)

    # per-head attention, batched over the batch dim (3-D einsums on the MXU)
    ctx_heads = []
    for h in range(H):
        lo, hi = h * dh, (h + 1) * dh
        s = jnp.einsum('bqd,bkd->bqk', Q3[:, :, lo:hi], K3[:, :, lo:hi],
                       preferred_element_type=jnp.float32)     # (B, Tq, Tk)
        s = s - jnp.max(s, axis=-1, keepdims=True)
        p = jnp.exp(s)
        p = p * pl.reciprocal(jnp.sum(p, axis=-1, keepdims=True), approx=True)
        ctx_heads.append(jnp.einsum('bqk,bkd->bqd', p, V3[:, :, lo:hi],
                                    preferred_element_type=jnp.float32))
    ctx = jnp.concatenate(ctx_heads, axis=-1).reshape(B * Tq, D)

    att_out = jnp.dot(ctx, wo, preferred_element_type=jnp.float32) + bo

    # residual + LayerNorm(eps=1e-5) over the embedding dim (biased variance)
    res = att_out + q_flat
    mean = jnp.mean(res, axis=-1, keepdims=True)
    cent = res - mean
    var = jnp.mean(cent * cent, axis=-1, keepdims=True)
    return cent * jax.lax.rsqrt(var + LN_EPS) * gamma + beta


def timbre_transformer_kernel(x_ref, emb_ref,
                              wqkv_ref, bqkv_ref, wo_ref, bo_ref,
                              gamma_ref, beta_ref, o_ref):
    """Whole TimbreTransformer forward in one program; activations never
    round-trip through HBM between sub-blocks."""
    B, T, D = x_ref.shape
    Te = emb_ref.shape[1]
    n_blocks = wqkv_ref.shape[0]

    x = x_ref[...].astype(jnp.float32).reshape(B * T, D)   # layout-identical
    emb = emb_ref[...].astype(jnp.float32)                 # (B, Te, D)

    def params(blk):
        return (wqkv_ref[blk].astype(jnp.float32),
                bqkv_ref[blk].astype(jnp.float32),
                wo_ref[blk].astype(jnp.float32),
                bo_ref[blk].astype(jnp.float32),
                gamma_ref[blk].astype(jnp.float32),
                beta_ref[blk].astype(jnp.float32))

    for blk in range(0, n_blocks, 2):
        # self-attention:  x = AttSubBlock(x, x)
        x3 = x.reshape(B, T, D)
        x = _att_subblock(x, x3, B, T, T, D, *params(blk), self_attn=True)
        # cross-attention: x = AttSubBlock(x, timbre_emb)
        x = _att_subblock(x, emb, B, T, Te, D, *params(blk + 1),
                          self_attn=False)

    o_ref[...] = x.reshape(B, T, D).astype(o_ref.dtype)


def pack_att_block_params(p):
    """PyTorch-convention params (W is (out,in), y = x @ W.T + b) ->
    pre-transposed / packed arrays used by the kernel."""
    wq, wk, wv, bq, bk, bv, wo, bo, gamma, beta = p
    D = wq.shape[0]
    wqkv_t = jnp.concatenate([wq.T, wk.T, wv.T], axis=1)         # (D, 3D)
    bqkv = jnp.concatenate([bq, bk, bv]).reshape(1, 3 * D)       # (1, 3D)
    return (wqkv_t, bqkv, wo.T, bo.reshape(1, D),
            gamma.reshape(1, D), beta.reshape(1, D))


def timbre_transformer_forward(x, timbre_emb, layer_params):
    """Fused forward: ONE pallas_call for all layers / sub-blocks."""
    B, T, D = x.shape
    _, Te, _ = timbre_emb.shape

    packed = []
    for self_p, cross_p in layer_params:
        packed.append(pack_att_block_params(self_p))
        packed.append(pack_att_block_params(cross_p))
    wqkv_all = jnp.stack([p[0] for p in packed])     # (4, D, 3D)
    bqkv_all = jnp.stack([p[1] for p in packed])     # (4, 1, 3D)
    wo_all = jnp.stack([p[2] for p in packed])       # (4, D, D)
    bo_all = jnp.stack([p[3] for p in packed])       # (4, 1, D)
    gamma_all = jnp.stack([p[4] for p in packed])    # (4, 1, D)
    beta_all = jnp.stack([p[5] for p in packed])     # (4, 1, D)

    inputs = (x, timbre_emb, wqkv_all, bqkv_all, wo_all, bo_all,
              gamma_all, beta_all)

    # advisory cost estimate for the XLA scheduler
    H, dh = NUM_HEADS, D // NUM_HEADS
    flops, transc = 0, 0
    for blk in range(2 * len(layer_params)):
        self_attn = (blk % 2 == 0)
        Tk = T if self_attn else Te
        if self_attn:
            flops += 2 * B * T * D * 3 * D                  # packed QKV proj
        else:
            flops += 2 * B * T * D * D + 2 * B * Tk * D * 2 * D
        flops += 2 * 2 * B * H * T * Tk * dh                # scores + context
        flops += 2 * B * T * D * D                          # output proj
        transc += B * H * T * Tk + B * T                    # exp + rsqrt
    bytes_accessed = (sum(int(a.nbytes) for a in inputs)
                      + B * T * D * x.dtype.itemsize)

    def full_spec(shape):
        return pl.BlockSpec(shape, lambda i: (0,) * len(shape))

    return pl.pallas_call(
        timbre_transformer_kernel,
        out_shape=jax.ShapeDtypeStruct((B, T, D), x.dtype),
        grid=(1,),
        in_specs=[full_spec(a.shape) for a in inputs],
        out_specs=full_spec((B, T, D)),
        compiler_params=pltpu.CompilerParams(
            dimension_semantics=("arbitrary",)),
        cost_estimate=pl.CostEstimate(flops=flops, transcendentals=transc,
                                      bytes_accessed=bytes_accessed),
    )(*inputs)


def init_att_block_params(key, D):
    """Deterministic synthetic params matching nn.MultiheadAttention + LayerNorm."""
    k0, k1, k2, k3 = jax.random.split(key, 4)
    in_proj_w = jax.random.normal(k0, (3 * D, D), jnp.float32) * 0.05  # packed QKV rows [Q;K;V]
    in_proj_b = jax.random.normal(k1, (3 * D,), jnp.float32) * 0.05
    wo = jax.random.normal(k2, (D, D), jnp.float32) * 0.05
    bo = jax.random.normal(k3, (D,), jnp.float32) * 0.05
    gamma = jnp.ones((D,), jnp.float32)
    beta = jnp.zeros((D,), jnp.float32)
    wq, wk, wv = in_proj_w[:D], in_proj_w[D:2 * D], in_proj_w[2 * D:]
    bq, bk, bv = in_proj_b[:D], in_proj_b[D:2 * D], in_proj_b[2 * D:]
    return (wq, wk, wv, bq, bk, bv, wo, bo, gamma, beta)


def init_timbre_transformer_params(key, timbre_emb_dim, layers=2):
    keys = jax.random.split(key, 2 * layers)
    layer_params = []
    for l in range(layers):
        self_p = init_att_block_params(keys[2 * l], timbre_emb_dim)
        cross_p = init_att_block_params(keys[2 * l + 1], timbre_emb_dim)
        layer_params.append((self_p, cross_p))
    return layer_params


if __name__ == "__main__":
    B, T, D = 2, 8, 32          # timbre_emb_dim = 32 (divisible by 8 heads)
    T_emb = 4                   # timbre embedding sequence length

    key = jax.random.PRNGKey(0)
    kx, ke, kp = jax.random.split(key, 3)
    x = jax.random.normal(kx, (B, T, D), jnp.float32)
    timbre_emb = jax.random.normal(ke, (B, T_emb, D), jnp.float32)

    params = init_timbre_transformer_params(kp, D, layers=LAYERS)

    out = jax.block_until_ready(timbre_transformer_forward(x, timbre_emb, params))
    assert out.shape == (B, T, D)
    print("KERNEL_OK")
</pallas_src>

<mosaic_0001>
module attributes {stable_mosaic.version = 11 : i64} {
  func.func @timbre_transformer_kernel(%arg0: i32, %arg1: memref<2x8x32xf32, #tpu.memory_space<vmem>>, %arg2: memref<2x4x32xf32, #tpu.memory_space<vmem>>, %arg3: memref<4x32x96xf32, #tpu.memory_space<vmem>>, %arg4: memref<4x1x96xf32, #tpu.memory_space<vmem>>, %arg5: memref<4x32x32xf32, #tpu.memory_space<vmem>>, %arg6: memref<4x1x32xf32, #tpu.memory_space<vmem>>, %arg7: memref<4x1x32xf32, #tpu.memory_space<vmem>>, %arg8: memref<4x1x32xf32, #tpu.memory_space<vmem>>, %arg9: memref<2x8x32xf32, #tpu.memory_space<vmem>>) attributes {dimension_semantics = [#tpu.dimension_semantics<arbitrary>], iteration_bounds = array<i64: 1>, scalar_prefetch = 0 : i64, scratch_operands = 0 : i64, tpu.core_type = #tpu.core_type<tc>, window_params = [{pipeline_mode = #tpu.pipeline_mode<synchronous>, transform_indices = @transform_0, window_bounds = array<i64: 2, 8, 32>}, {pipeline_mode = #tpu.pipeline_mode<synchronous>, transform_indices = @transform_1, window_bounds = array<i64: 2, 4, 32>}, {pipeline_mode = #tpu.pipeline_mode<synchronous>, transform_indices = @transform_2, window_bounds = array<i64: 4, 32, 96>}, {pipeline_mode = #tpu.pipeline_mode<synchronous>, transform_indices = @transform_3, window_bounds = array<i64: 4, 1, 96>}, {pipeline_mode = #tpu.pipeline_mode<synchronous>, transform_indices = @transform_4, window_bounds = array<i64: 4, 32, 32>}, {pipeline_mode = #tpu.pipeline_mode<synchronous>, transform_indices = @transform_5, window_bounds = array<i64: 4, 1, 32>}, {pipeline_mode = #tpu.pipeline_mode<synchronous>, transform_indices = @transform_6, window_bounds = array<i64: 4, 1, 32>}, {pipeline_mode = #tpu.pipeline_mode<synchronous>, transform_indices = @transform_7, window_bounds = array<i64: 4, 1, 32>}, {pipeline_mode = #tpu.pipeline_mode<synchronous>, transform_indices = @transform_8, window_bounds = array<i64: 2, 8, 32>}]} {
    %c0 = arith.constant 0 : index
    %c0_0 = arith.constant 0 : index
    %c0_1 = arith.constant 0 : index
    %0 = vector.load %arg1[%c0, %c0_0, %c0_1] : memref<2x8x32xf32, #tpu.memory_space<vmem>>, vector<2x8x32xf32>
    %1 = vector.shape_cast %0 : vector<2x8x32xf32> to vector<16x32xf32>
    %c0_2 = arith.constant 0 : index
    %c0_3 = arith.constant 0 : index
    %c0_4 = arith.constant 0 : index
    %2 = vector.load %arg2[%c0_2, %c0_3, %c0_4] : memref<2x4x32xf32, #tpu.memory_space<vmem>>, vector<2x4x32xf32>
    %c0_5 = arith.constant 0 : index
    %c0_6 = arith.constant 0 : index
    %c0_7 = arith.constant 0 : index
    %3 = vector.load %arg3[%c0_5, %c0_6, %c0_7] : memref<4x32x96xf32, #tpu.memory_space<vmem>>, vector<1x32x96xf32>
    %4 = vector.shape_cast %3 : vector<1x32x96xf32> to vector<32x96xf32>
    %c0_8 = arith.constant 0 : index
    %c0_9 = arith.constant 0 : index
    %c0_10 = arith.constant 0 : index
    %5 = vector.load %arg4[%c0_8, %c0_9, %c0_10] : memref<4x1x96xf32, #tpu.memory_space<vmem>>, vector<1x1x96xf32>
    %6 = vector.shape_cast %5 : vector<1x1x96xf32> to vector<1x96xf32>
    %c0_11 = arith.constant 0 : index
    %c0_12 = arith.constant 0 : index
    %c0_13 = arith.constant 0 : index
    %7 = vector.load %arg5[%c0_11, %c0_12, %c0_13] : memref<4x32x32xf32, #tpu.memory_space<vmem>>, vector<1x32x32xf32>
    %8 = vector.shape_cast %7 : vector<1x32x32xf32> to vector<32x32xf32>
    %c0_14 = arith.constant 0 : index
    %c0_15 = arith.constant 0 : index
    %c0_16 = arith.constant 0 : index
    %9 = vector.load %arg6[%c0_14, %c0_15, %c0_16] : memref<4x1x32xf32, #tpu.memory_space<vmem>>, vector<1x1x32xf32>
    %10 = vector.shape_cast %9 : vector<1x1x32xf32> to vector<1x32xf32>
    %c0_17 = arith.constant 0 : index
    %c0_18 = arith.constant 0 : index
    %c0_19 = arith.constant 0 : index
    %11 = vector.load %arg7[%c0_17, %c0_18, %c0_19] : memref<4x1x32xf32, #tpu.memory_space<vmem>>, vector<1x1x32xf32>
    %12 = vector.shape_cast %11 : vector<1x1x32xf32> to vector<1x32xf32>
    %c0_20 = arith.constant 0 : index
    %c0_21 = arith.constant 0 : index
    %c0_22 = arith.constant 0 : index
    %13 = vector.load %arg8[%c0_20, %c0_21, %c0_22] : memref<4x1x32xf32, #tpu.memory_space<vmem>>, vector<1x1x32xf32>
    %14 = vector.shape_cast %13 : vector<1x1x32xf32> to vector<1x32xf32>
    %cst = arith.constant dense<0.000000e+00> : vector<16x96xf32>
    %15 = tpu.matmul %1, %4, %cst {dimension_numbers = #tpu.dot_dimension_numbers<[1], [0], [0], [1], [0, 0, 1, 1], [], []>} : vector<16x32xf32>, vector<32x96xf32>, vector<16x96xf32> -> vector<16x96xf32>
    %16 = vector.broadcast %6 : vector<1x96xf32> to vector<16x96xf32>
    %17 = arith.addf %15, %16 : vector<16x96xf32>
    %18 = vector.extract_strided_slice %17 {offsets = [0, 0], sizes = [16, 32], strides = [1, 1]} : vector<16x96xf32> to vector<16x32xf32>
    %cst_23 = arith.constant 5.000000e-01 : f32
    %19 = vector.broadcast %cst_23 : f32 to vector<16x32xf32>
    %20 = arith.mulf %18, %19 : vector<16x32xf32>
    %21 = vector.extract_strided_slice %17 {offsets = [0, 32], sizes = [16, 32], strides = [1, 1]} : vector<16x96xf32> to vector<16x32xf32>
    %22 = vector.shape_cast %21 : vector<16x32xf32> to vector<2x8x32xf32>
    %23 = vector.extract_strided_slice %17 {offsets = [0, 64], sizes = [16, 32], strides = [1, 1]} : vector<16x96xf32> to vector<16x32xf32>
    %24 = vector.shape_cast %23 : vector<16x32xf32> to vector<2x8x32xf32>
    %25 = vector.shape_cast %20 : vector<16x32xf32> to vector<2x8x32xf32>
    %26 = vector.extract_strided_slice %25 {offsets = [0, 0, 0], sizes = [2, 8, 4], strides = [1, 1, 1]} : vector<2x8x32xf32> to vector<2x8x4xf32>
    %27 = vector.extract_strided_slice %22 {offsets = [0, 0, 0], sizes = [2, 8, 4], strides = [1, 1, 1]} : vector<2x8x32xf32> to vector<2x8x4xf32>
    "tpu.trace_start"() <{level = 10 : i32, message = "bqd,bkd->bqk"}> : () -> ()
    %cst_24 = arith.constant dense<0.000000e+00> : vector<2x8x8xf32>
    %28 = tpu.matmul %26, %27, %cst_24 {dimension_numbers = #tpu.dot_dimension_numbers<[2], [2], [1], [1], [0, 0, 0, 1, 1, 1], [0], [0]>} : vector<2x8x4xf32>, vector<2x8x4xf32>, vector<2x8x8xf32> -> vector<2x8x8xf32>
    "tpu.trace_stop"() : () -> ()
    %cst_25 = arith.constant dense<0xFF800000> : vector<2x8xf32>
    %29 = vector.multi_reduction <maximumf>, %28, %cst_25 [2] : vector<2x8x8xf32> to vector<2x8xf32>
    %30 = vector.shape_cast %29 : vector<2x8xf32> to vector<2x8x1xf32>
    %31 = vector.broadcast %30 : vector<2x8x1xf32> to vector<2x8x8xf32>
    %32 = arith.subf %28, %31 : vector<2x8x8xf32>
    %33 = math.exp %32 : vector<2x8x8xf32>
    %cst_26 = arith.constant dense<0.000000e+00> : vector<2x8xf32>
    %34 = vector.multi_reduction <add>, %33, %cst_26 [2] : vector<2x8x8xf32> to vector<2x8xf32>
    %35 = vector.shape_cast %34 : vector<2x8xf32> to vector<2x8x1xf32>
    %36 = tpu.reciprocal %35 {approx = true} : vector<2x8x1xf32> -> vector<2x8x1xf32>
    %37 = vector.broadcast %36 : vector<2x8x1xf32> to vector<2x8x8xf32>
    %38 = arith.mulf %33, %37 : vector<2x8x8xf32>
    %39 = vector.extract_strided_slice %24 {offsets = [0, 0, 0], sizes = [2, 8, 4], strides = [1, 1, 1]} : vector<2x8x32xf32> to vector<2x8x4xf32>
    "tpu.trace_start"() <{level = 10 : i32, message = "bqk,bkd->bqd"}> : () -> ()
    %cst_27 = arith.constant dense<0.000000e+00> : vector<2x8x4xf32>
    %40 = tpu.matmul %38, %39, %cst_27 {dimension_numbers = #tpu.dot_dimension_numbers<[2], [1], [1], [2], [0, 0, 0, 1, 1, 2], [0], [0]>} : vector<2x8x8xf32>, vector<2x8x4xf32>, vector<2x8x4xf32> -> vector<2x8x4xf32>
    "tpu.trace_stop"() : () -> ()
    %41 = vector.extract_strided_slice %25 {offsets = [0, 0, 4], sizes = [2, 8, 4], strides = [1, 1, 1]} : vector<2x8x32xf32> to vector<2x8x4xf32>
    %42 = vector.extract_strided_slice %22 {offsets = [0, 0, 4], sizes = [2, 8, 4], strides = [1, 1, 1]} : vector<2x8x32xf32> to vector<2x8x4xf32>
    "tpu.trace_start"() <{level = 10 : i32, message = "bqd,bkd->bqk"}> : () -> ()
    %cst_28 = arith.constant dense<0.000000e+00> : vector<2x8x8xf32>
    %43 = tpu.matmul %41, %42, %cst_28 {dimension_numbers = #tpu.dot_dimension_numbers<[2], [2], [1], [1], [0, 0, 0, 1, 1, 1], [0], [0]>} : vector<2x8x4xf32>, vector<2x8x4xf32>, vector<2x8x8xf32> -> vector<2x8x8xf32>
    "tpu.trace_stop"() : () -> ()
    %cst_29 = arith.constant dense<0xFF800000> : vector<2x8xf32>
    %44 = vector.multi_reduction <maximumf>, %43, %cst_29 [2] : vector<2x8x8xf32> to vector<2x8xf32>
    %45 = vector.shape_cast %44 : vector<2x8xf32> to vector<2x8x1xf32>
    %46 = vector.broadcast %45 : vector<2x8x1xf32> to vector<2x8x8xf32>
    %47 = arith.subf %43, %46 : vector<2x8x8xf32>
    %48 = math.exp %47 : vector<2x8x8xf32>
    %cst_30 = arith.constant dense<0.000000e+00> : vector<2x8xf32>
    %49 = vector.multi_reduction <add>, %48, %cst_30 [2] : vector<2x8x8xf32> to vector<2x8xf32>
    %50 = vector.shape_cast %49 : vector<2x8xf32> to vector<2x8x1xf32>
    %51 = tpu.reciprocal %50 {approx = true} : vector<2x8x1xf32> -> vector<2x8x1xf32>
    %52 = vector.broadcast %51 : vector<2x8x1xf32> to vector<2x8x8xf32>
    %53 = arith.mulf %48, %52 : vector<2x8x8xf32>
    %54 = vector.extract_strided_slice %24 {offsets = [0, 0, 4], sizes = [2, 8, 4], strides = [1, 1, 1]} : vector<2x8x32xf32> to vector<2x8x4xf32>
    "tpu.trace_start"() <{level = 10 : i32, message = "bqk,bkd->bqd"}> : () -> ()
    %cst_31 = arith.constant dense<0.000000e+00> : vector<2x8x4xf32>
    %55 = tpu.matmul %53, %54, %cst_31 {dimension_numbers = #tpu.dot_dimension_numbers<[2], [1], [1], [2], [0, 0, 0, 1, 1, 2], [0], [0]>} : vector<2x8x8xf32>, vector<2x8x4xf32>, vector<2x8x4xf32> -> vector<2x8x4xf32>
    "tpu.trace_stop"() : () -> ()
    %56 = vector.extract_strided_slice %25 {offsets = [0, 0, 8], sizes = [2, 8, 4], strides = [1, 1, 1]} : vector<2x8x32xf32> to vector<2x8x4xf32>
    %57 = vector.extract_strided_slice %22 {offsets = [0, 0, 8], sizes = [2, 8, 4], strides = [1, 1, 1]} : vector<2x8x32xf32> to vector<2x8x4xf32>
    "tpu.trace_start"() <{level = 10 : i32, message = "bqd,bkd->bqk"}> : () -> ()
    %cst_32 = arith.constant dense<0.000000e+00> : vector<2x8x8xf32>
    %58 = tpu.matmul %56, %57, %cst_32 {dimension_numbers = #tpu.dot_dimension_numbers<[2], [2], [1], [1], [0, 0, 0, 1, 1, 1], [0], [0]>} : vector<2x8x4xf32>, vector<2x8x4xf32>, vector<2x8x8xf32> -> vector<2x8x8xf32>
    "tpu.trace_stop"() : () -> ()
    %cst_33 = arith.constant dense<0xFF800000> : vector<2x8xf32>
    %59 = vector.multi_reduction <maximumf>, %58, %cst_33 [2] : vector<2x8x8xf32> to vector<2x8xf32>
    %60 = vector.shape_cast %59 : vector<2x8xf32> to vector<2x8x1xf32>
    %61 = vector.broadcast %60 : vector<2x8x1xf32> to vector<2x8x8xf32>
    %62 = arith.subf %58, %61 : vector<2x8x8xf32>
    %63 = math.exp %62 : vector<2x8x8xf32>
    %cst_34 = arith.constant dense<0.000000e+00> : vector<2x8xf32>
    %64 = vector.multi_reduction <add>, %63, %cst_34 [2] : vector<2x8x8xf32> to vector<2x8xf32>
    %65 = vector.shape_cast %64 : vector<2x8xf32> to vector<2x8x1xf32>
    %66 = tpu.reciprocal %65 {approx = true} : vector<2x8x1xf32> -> vector<2x8x1xf32>
    %67 = vector.broadcast %66 : vector<2x8x1xf32> to vector<2x8x8xf32>
    %68 = arith.mulf %63, %67 : vector<2x8x8xf32>
    %69 = vector.extract_strided_slice %24 {offsets = [0, 0, 8], sizes = [2, 8, 4], strides = [1, 1, 1]} : vector<2x8x32xf32> to vector<2x8x4xf32>
    "tpu.trace_start"() <{level = 10 : i32, message = "bqk,bkd->bqd"}> : () -> ()
    %cst_35 = arith.constant dense<0.000000e+00> : vector<2x8x4xf32>
    %70 = tpu.matmul %68, %69, %cst_35 {dimension_numbers = #tpu.dot_dimension_numbers<[2], [1], [1], [2], [0, 0, 0, 1, 1, 2], [0], [0]>} : vector<2x8x8xf32>, vector<2x8x4xf32>, vector<2x8x4xf32> -> vector<2x8x4xf32>
    "tpu.trace_stop"() : () -> ()
    %71 = vector.extract_strided_slice %25 {offsets = [0, 0, 12], sizes = [2, 8, 4], strides = [1, 1, 1]} : vector<2x8x32xf32> to vector<2x8x4xf32>
    %72 = vector.extract_strided_slice %22 {offsets = [0, 0, 12], sizes = [2, 8, 4], strides = [1, 1, 1]} : vector<2x8x32xf32> to vector<2x8x4xf32>
    "tpu.trace_start"() <{level = 10 : i32, message = "bqd,bkd->bqk"}> : () -> ()
    %cst_36 = arith.constant dense<0.000000e+00> : vector<2x8x8xf32>
    %73 = tpu.matmul %71, %72, %cst_36 {dimension_numbers = #tpu.dot_dimension_numbers<[2], [2], [1], [1], [0, 0, 0, 1, 1, 1], [0], [0]>} : vector<2x8x4xf32>, vector<2x8x4xf32>, vector<2x8x8xf32> -> vector<2x8x8xf32>
    "tpu.trace_stop"() : () -> ()
    %cst_37 = arith.constant dense<0xFF800000> : vector<2x8xf32>
    %74 = vector.multi_reduction <maximumf>, %73, %cst_37 [2] : vector<2x8x8xf32> to vector<2x8xf32>
    %75 = vector.shape_cast %74 : vector<2x8xf32> to vector<2x8x1xf32>
    %76 = vector.broadcast %75 : vector<2x8x1xf32> to vector<2x8x8xf32>
    %77 = arith.subf %73, %76 : vector<2x8x8xf32>
    %78 = math.exp %77 : vector<2x8x8xf32>
    %cst_38 = arith.constant dense<0.000000e+00> : vector<2x8xf32>
    %79 = vector.multi_reduction <add>, %78, %cst_38 [2] : vector<2x8x8xf32> to vector<2x8xf32>
    %80 = vector.shape_cast %79 : vector<2x8xf32> to vector<2x8x1xf32>
    %81 = tpu.reciprocal %80 {approx = true} : vector<2x8x1xf32> -> vector<2x8x1xf32>
    %82 = vector.broadcast %81 : vector<2x8x1xf32> to vector<2x8x8xf32>
    %83 = arith.mulf %78, %82 : vector<2x8x8xf32>
    %84 = vector.extract_strided_slice %24 {offsets = [0, 0, 12], sizes = [2, 8, 4], strides = [1, 1, 1]} : vector<2x8x32xf32> to vector<2x8x4xf32>
    "tpu.trace_start"() <{level = 10 : i32, message = "bqk,bkd->bqd"}> : () -> ()
    %cst_39 = arith.constant dense<0.000000e+00> : vector<2x8x4xf32>
    %85 = tpu.matmul %83, %84, %cst_39 {dimension_numbers = #tpu.dot_dimension_numbers<[2], [1], [1], [2], [0, 0, 0, 1, 1, 2], [0], [0]>} : vector<2x8x8xf32>, vector<2x8x4xf32>, vector<2x8x4xf32> -> vector<2x8x4xf32>
    "tpu.trace_stop"() : () -> ()
    %86 = vector.extract_strided_slice %25 {offsets = [0, 0, 16], sizes = [2, 8, 4], strides = [1, 1, 1]} : vector<2x8x32xf32> to vector<2x8x4xf32>
    %87 = vector.extract_strided_slice %22 {offsets = [0, 0, 16], sizes = [2, 8, 4], strides = [1, 1, 1]} : vector<2x8x32xf32> to vector<2x8x4xf32>
    "tpu.trace_start"() <{level = 10 : i32, message = "bqd,bkd->bqk"}> : () -> ()
    %cst_40 = arith.constant dense<0.000000e+00> : vector<2x8x8xf32>
    %88 = tpu.matmul %86, %87, %cst_40 {dimension_numbers = #tpu.dot_dimension_numbers<[2], [2], [1], [1], [0, 0, 0, 1, 1, 1], [0], [0]>} : vector<2x8x4xf32>, vector<2x8x4xf32>, vector<2x8x8xf32> -> vector<2x8x8xf32>
    "tpu.trace_stop"() : () -> ()
    %cst_41 = arith.constant dense<0xFF800000> : vector<2x8xf32>
    %89 = vector.multi_reduction <maximumf>, %88, %cst_41 [2] : vector<2x8x8xf32> to vector<2x8xf32>
    %90 = vector.shape_cast %89 : vector<2x8xf32> to vector<2x8x1xf32>
    %91 = vector.broadcast %90 : vector<2x8x1xf32> to vector<2x8x8xf32>
    %92 = arith.subf %88, %91 : vector<2x8x8xf32>
    %93 = math.exp %92 : vector<2x8x8xf32>
    %cst_42 = arith.constant dense<0.000000e+00> : vector<2x8xf32>
    %94 = vector.multi_reduction <add>, %93, %cst_42 [2] : vector<2x8x8xf32> to vector<2x8xf32>
    %95 = vector.shape_cast %94 : vector<2x8xf32> to vector<2x8x1xf32>
    %96 = tpu.reciprocal %95 {approx = true} : vector<2x8x1xf32> -> vector<2x8x1xf32>
    %97 = vector.broadcast %96 : vector<2x8x1xf32> to vector<2x8x8xf32>
    %98 = arith.mulf %93, %97 : vector<2x8x8xf32>
    %99 = vector.extract_strided_slice %24 {offsets = [0, 0, 16], sizes = [2, 8, 4], strides = [1, 1, 1]} : vector<2x8x32xf32> to vector<2x8x4xf32>
    "tpu.trace_start"() <{level = 10 : i32, message = "bqk,bkd->bqd"}> : () -> ()
    %cst_43 = arith.constant dense<0.000000e+00> : vector<2x8x4xf32>
    %100 = tpu.matmul %98, %99, %cst_43 {dimension_numbers = #tpu.dot_dimension_numbers<[2], [1], [1], [2], [0, 0, 0, 1, 1, 2], [0], [0]>} : vector<2x8x8xf32>, vector<2x8x4xf32>, vector<2x8x4xf32> -> vector<2x8x4xf32>
    "tpu.trace_stop"() : () -> ()
    %101 = vector.extract_strided_slice %25 {offsets = [0, 0, 20], sizes = [2, 8, 4], strides = [1, 1, 1]} : vector<2x8x32xf32> to vector<2x8x4xf32>
    %102 = vector.extract_strided_slice %22 {offsets = [0, 0, 20], sizes = [2, 8, 4], strides = [1, 1, 1]} : vector<2x8x32xf32> to vector<2x8x4xf32>
    "tpu.trace_start"() <{level = 10 : i32, message = "bqd,bkd->bqk"}> : () -> ()
    %cst_44 = arith.constant dense<0.000000e+00> : vector<2x8x8xf32>
    %103 = tpu.matmul %101, %102, %cst_44 {dimension_numbers = #tpu.dot_dimension_numbers<[2], [2], [1], [1], [0, 0, 0, 1, 1, 1], [0], [0]>} : vector<2x8x4xf32>, vector<2x8x4xf32>, vector<2x8x8xf32> -> vector<2x8x8xf32>
    "tpu.trace_stop"() : () -> ()
    %cst_45 = arith.constant dense<0xFF800000> : vector<2x8xf32>
    %104 = vector.multi_reduction <maximumf>, %103, %cst_45 [2] : vector<2x8x8xf32> to vector<2x8xf32>
    %105 = vector.shape_cast %104 : vector<2x8xf32> to vector<2x8x1xf32>
    %106 = vector.broadcast %105 : vector<2x8x1xf32> to vector<2x8x8xf32>
    %107 = arith.subf %103, %106 : vector<2x8x8xf32>
    %108 = math.exp %107 : vector<2x8x8xf32>
    %cst_46 = arith.constant dense<0.000000e+00> : vector<2x8xf32>
    %109 = vector.multi_reduction <add>, %108, %cst_46 [2] : vector<2x8x8xf32> to vector<2x8xf32>
    %110 = vector.shape_cast %109 : vector<2x8xf32> to vector<2x8x1xf32>
    %111 = tpu.reciprocal %110 {approx = true} : vector<2x8x1xf32> -> vector<2x8x1xf32>
    %112 = vector.broadcast %111 : vector<2x8x1xf32> to vector<2x8x8xf32>
    %113 = arith.mulf %108, %112 : vector<2x8x8xf32>
    %114 = vector.extract_strided_slice %24 {offsets = [0, 0, 20], sizes = [2, 8, 4], strides = [1, 1, 1]} : vector<2x8x32xf32> to vector<2x8x4xf32>
    "tpu.trace_start"() <{level = 10 : i32, message = "bqk,bkd->bqd"}> : () -> ()
    %cst_47 = arith.constant dense<0.000000e+00> : vector<2x8x4xf32>
    %115 = tpu.matmul %113, %114, %cst_47 {dimension_numbers = #tpu.dot_dimension_numbers<[2], [1], [1], [2], [0, 0, 0, 1, 1, 2], [0], [0]>} : vector<2x8x8xf32>, vector<2x8x4xf32>, vector<2x8x4xf32> -> vector<2x8x4xf32>
    "tpu.trace_stop"() : () -> ()
    %116 = vector.extract_strided_slice %25 {offsets = [0, 0, 24], sizes = [2, 8, 4], strides = [1, 1, 1]} : vector<2x8x32xf32> to vector<2x8x4xf32>
    %117 = vector.extract_strided_slice %22 {offsets = [0, 0, 24], sizes = [2, 8, 4], strides = [1, 1, 1]} : vector<2x8x32xf32> to vector<2x8x4xf32>
    "tpu.trace_start"() <{level = 10 : i32, message = "bqd,bkd->bqk"}> : () -> ()
    %cst_48 = arith.constant dense<0.000000e+00> : vector<2x8x8xf32>
    %118 = tpu.matmul %116, %117, %cst_48 {dimension_numbers = #tpu.dot_dimension_numbers<[2], [2], [1], [1], [0, 0, 0, 1, 1, 1], [0], [0]>} : vector<2x8x4xf32>, vector<2x8x4xf32>, vector<2x8x8xf32> -> vector<2x8x8xf32>
    "tpu.trace_stop"() : () -> ()
    %cst_49 = arith.constant dense<0xFF800000> : vector<2x8xf32>
    %119 = vector.multi_reduction <maximumf>, %118, %cst_49 [2] : vector<2x8x8xf32> to vector<2x8xf32>
    %120 = vector.shape_cast %119 : vector<2x8xf32> to vector<2x8x1xf32>
    %121 = vector.broadcast %120 : vector<2x8x1xf32> to vector<2x8x8xf32>
    %122 = arith.subf %118, %121 : vector<2x8x8xf32>
    %123 = math.exp %122 : vector<2x8x8xf32>
    %cst_50 = arith.constant dense<0.000000e+00> : vector<2x8xf32>
    %124 = vector.multi_reduction <add>, %123, %cst_50 [2] : vector<2x8x8xf32> to vector<2x8xf32>
    %125 = vector.shape_cast %124 : vector<2x8xf32> to vector<2x8x1xf32>
    %126 = tpu.reciprocal %125 {approx = true} : vector<2x8x1xf32> -> vector<2x8x1xf32>
    %127 = vector.broadcast %126 : vector<2x8x1xf32> to vector<2x8x8xf32>
    %128 = arith.mulf %123, %127 : vector<2x8x8xf32>
    %129 = vector.extract_strided_slice %24 {offsets = [0, 0, 24], sizes = [2, 8, 4], strides = [1, 1, 1]} : vector<2x8x32xf32> to vector<2x8x4xf32>
    "tpu.trace_start"() <{level = 10 : i32, message = "bqk,bkd->bqd"}> : () -> ()
    %cst_51 = arith.constant dense<0.000000e+00> : vector<2x8x4xf32>
    %130 = tpu.matmul %128, %129, %cst_51 {dimension_numbers = #tpu.dot_dimension_numbers<[2], [1], [1], [2], [0, 0, 0, 1, 1, 2], [0], [0]>} : vector<2x8x8xf32>, vector<2x8x4xf32>, vector<2x8x4xf32> -> vector<2x8x4xf32>
    "tpu.trace_stop"() : () -> ()
    %131 = vector.extract_strided_slice %25 {offsets = [0, 0, 28], sizes = [2, 8, 4], strides = [1, 1, 1]} : vector<2x8x32xf32> to vector<2x8x4xf32>
    %132 = vector.extract_strided_slice %22 {offsets = [0, 0, 28], sizes = [2, 8, 4], strides = [1, 1, 1]} : vector<2x8x32xf32> to vector<2x8x4xf32>
    "tpu.trace_start"() <{level = 10 : i32, message = "bqd,bkd->bqk"}> : () -> ()
    %cst_52 = arith.constant dense<0.000000e+00> : vector<2x8x8xf32>
    %133 = tpu.matmul %131, %132, %cst_52 {dimension_numbers = #tpu.dot_dimension_numbers<[2], [2], [1], [1], [0, 0, 0, 1, 1, 1], [0], [0]>} : vector<2x8x4xf32>, vector<2x8x4xf32>, vector<2x8x8xf32> -> vector<2x8x8xf32>
    "tpu.trace_stop"() : () -> ()
    %cst_53 = arith.constant dense<0xFF800000> : vector<2x8xf32>
    %134 = vector.multi_reduction <maximumf>, %133, %cst_53 [2] : vector<2x8x8xf32> to vector<2x8xf32>
    %135 = vector.shape_cast %134 : vector<2x8xf32> to vector<2x8x1xf32>
    %136 = vector.broadcast %135 : vector<2x8x1xf32> to vector<2x8x8xf32>
    %137 = arith.subf %133, %136 : vector<2x8x8xf32>
    %138 = math.exp %137 : vector<2x8x8xf32>
    %cst_54 = arith.constant dense<0.000000e+00> : vector<2x8xf32>
    %139 = vector.multi_reduction <add>, %138, %cst_54 [2] : vector<2x8x8xf32> to vector<2x8xf32>
    %140 = vector.shape_cast %139 : vector<2x8xf32> to vector<2x8x1xf32>
    %141 = tpu.reciprocal %140 {approx = true} : vector<2x8x1xf32> -> vector<2x8x1xf32>
    %142 = vector.broadcast %141 : vector<2x8x1xf32> to vector<2x8x8xf32>
    %143 = arith.mulf %138, %142 : vector<2x8x8xf32>
    %144 = vector.extract_strided_slice %24 {offsets = [0, 0, 28], sizes = [2, 8, 4], strides = [1, 1, 1]} : vector<2x8x32xf32> to vector<2x8x4xf32>
    "tpu.trace_start"() <{level = 10 : i32, message = "bqk,bkd->bqd"}> : () -> ()
    %cst_55 = arith.constant dense<0.000000e+00> : vector<2x8x4xf32>
    %145 = tpu.matmul %143, %144, %cst_55 {dimension_numbers = #tpu.dot_dimension_numbers<[2], [1], [1], [2], [0, 0, 0, 1, 1, 2], [0], [0]>} : vector<2x8x8xf32>, vector<2x8x4xf32>, vector<2x8x4xf32> -> vector<2x8x4xf32>
    "tpu.trace_stop"() : () -> ()
    %146 = tpu.concatenate %40, %55, %70, %85, %100, %115, %130, %145 in 2 : vector<2x8x4xf32>, vector<2x8x4xf32>, vector<2x8x4xf32>, vector<2x8x4xf32>, vector<2x8x4xf32>, vector<2x8x4xf32>, vector<2x8x4xf32>, vector<2x8x4xf32> -> vector<2x8x32xf32>
    %147 = vector.shape_cast %146 : vector<2x8x32xf32> to vector<16x32xf32>
    %cst_56 = arith.constant dense<0.000000e+00> : vector<16x32xf32>
    %148 = tpu.matmul %147, %8, %cst_56 {dimension_numbers = #tpu.dot_dimension_numbers<[1], [0], [0], [1], [0, 0, 1, 1], [], []>} : vector<16x32xf32>, vector<32x32xf32>, vector<16x32xf32> -> vector<16x32xf32>
    %149 = vector.broadcast %10 : vector<1x32xf32> to vector<16x32xf32>
    %150 = arith.addf %148, %149 : vector<16x32xf32>
    %151 = arith.addf %150, %1 : vector<16x32xf32>
    %cst_57 = arith.constant dense<0.000000e+00> : vector<16xf32>
    %152 = vector.multi_reduction <add>, %151, %cst_57 [1] : vector<16x32xf32> to vector<16xf32>
    %153 = vector.shape_cast %152 : vector<16xf32> to vector<16x1xf32>
    %cst_58 = arith.constant 3.200000e+01 : f32
    %154 = vector.broadcast %cst_58 : f32 to vector<16x1xf32>
    %155 = arith.divf %153, %154 : vector<16x1xf32>
    %156 = vector.broadcast %155 : vector<16x1xf32> to vector<16x32xf32>
    %157 = arith.subf %151, %156 : vector<16x32xf32>
    %158 = arith.mulf %157, %157 : vector<16x32xf32>
    %cst_59 = arith.constant dense<0.000000e+00> : vector<16xf32>
    %159 = vector.multi_reduction <add>, %158, %cst_59 [1] : vector<16x32xf32> to vector<16xf32>
    %160 = vector.shape_cast %159 : vector<16xf32> to vector<16x1xf32>
    %cst_60 = arith.constant 3.200000e+01 : f32
    %161 = vector.broadcast %cst_60 : f32 to vector<16x1xf32>
    %162 = arith.divf %160, %161 : vector<16x1xf32>
    %cst_61 = arith.constant 9.99999974E-6 : f32
    %163 = vector.broadcast %cst_61 : f32 to vector<16x1xf32>
    %164 = arith.addf %162, %163 : vector<16x1xf32>
    %165 = math.rsqrt %164 : vector<16x1xf32>
    %166 = vector.broadcast %165 : vector<16x1xf32> to vector<16x32xf32>
    %167 = arith.mulf %157, %166 : vector<16x32xf32>
    %168 = vector.broadcast %12 : vector<1x32xf32> to vector<16x32xf32>
    %169 = arith.mulf %167, %168 : vector<16x32xf32>
    %170 = vector.broadcast %14 : vector<1x32xf32> to vector<16x32xf32>
    %171 = arith.addf %169, %170 : vector<16x32xf32>
    %c1 = arith.constant 1 : index
    %c0_62 = arith.constant 0 : index
    %c0_63 = arith.constant 0 : index
    %172 = vector.load %arg3[%c1, %c0_62, %c0_63] : memref<4x32x96xf32, #tpu.memory_space<vmem>>, vector<1x32x96xf32>
    %173 = vector.shape_cast %172 : vector<1x32x96xf32> to vector<32x96xf32>
    %c1_64 = arith.constant 1 : index
    %c0_65 = arith.constant 0 : index
    %c0_66 = arith.constant 0 : index
    %174 = vector.load %arg4[%c1_64, %c0_65, %c0_66] : memref<4x1x96xf32, #tpu.memory_space<vmem>>, vector<1x1x96xf32>
    %175 = vector.shape_cast %174 : vector<1x1x96xf32> to vector<1x96xf32>
    %c1_67 = arith.constant 1 : index
    %c0_68 = arith.constant 0 : index
    %c0_69 = arith.constant 0 : index
    %176 = vector.load %arg5[%c1_67, %c0_68, %c0_69] : memref<4x32x32xf32, #tpu.memory_space<vmem>>, vector<1x32x32xf32>
    %177 = vector.shape_cast %176 : vector<1x32x32xf32> to vector<32x32xf32>
    %c1_70 = arith.constant 1 : index
    %c0_71 = arith.constant 0 : index
    %c0_72 = arith.constant 0 : index
    %178 = vector.load %arg6[%c1_70, %c0_71, %c0_72] : memref<4x1x32xf32, #tpu.memory_space<vmem>>, vector<1x1x32xf32>
    %179 = vector.shape_cast %178 : vector<1x1x32xf32> to vector<1x32xf32>
    %c1_73 = arith.constant 1 : index
    %c0_74 = arith.constant 0 : index
    %c0_75 = arith.constant 0 : index
    %180 = vector.load %arg7[%c1_73, %c0_74, %c0_75] : memref<4x1x32xf32, #tpu.memory_space<vmem>>, vector<1x1x32xf32>
    %181 = vector.shape_cast %180 : vector<1x1x32xf32> to vector<1x32xf32>
    %c1_76 = arith.constant 1 : index
    %c0_77 = arith.constant 0 : index
    %c0_78 = arith.constant 0 : index
    %182 = vector.load %arg8[%c1_76, %c0_77, %c0_78] : memref<4x1x32xf32, #tpu.memory_space<vmem>>, vector<1x1x32xf32>
    %183 = vector.shape_cast %182 : vector<1x1x32xf32> to vector<1x32xf32>
    %184 = vector.extract_strided_slice %173 {offsets = [0, 0], sizes = [32, 32], strides = [1, 1]} : vector<32x96xf32> to vector<32x32xf32>
    %cst_79 = arith.constant dense<0.000000e+00> : vector<16x32xf32>
    %185 = tpu.matmul %171, %184, %cst_79 {dimension_numbers = #tpu.dot_dimension_numbers<[1], [0], [0], [1], [0, 0, 1, 1], [], []>} : vector<16x32xf32>, vector<32x32xf32>, vector<16x32xf32> -> vector<16x32xf32>
    %186 = vector.extract_strided_slice %175 {offsets = [0, 0], sizes = [1, 32], strides = [1, 1]} : vector<1x96xf32> to vector<1x32xf32>
    %187 = vector.broadcast %186 : vector<1x32xf32> to vector<16x32xf32>
    %188 = arith.addf %185, %187 : vector<16x32xf32>
    %cst_80 = arith.constant 5.000000e-01 : f32
    %189 = vector.broadcast %cst_80 : f32 to vector<16x32xf32>
    %190 = arith.mulf %188, %189 : vector<16x32xf32>
    %191 = vector.extract_strided_slice %2 {offsets = [0, 0, 0], sizes = [1, 4, 32], strides = [1, 1, 1]} : vector<2x4x32xf32> to vector<1x4x32xf32>
    %192 = vector.shape_cast %191 : vector<1x4x32xf32> to vector<4x32xf32>
    %193 = vector.extract_strided_slice %173 {offsets = [0, 32], sizes = [32, 64], strides = [1, 1]} : vector<32x96xf32> to vector<32x64xf32>
    %cst_81 = arith.constant dense<0.000000e+00> : vector<4x64xf32>
    %194 = tpu.matmul %192, %193, %cst_81 {dimension_numbers = #tpu.dot_dimension_numbers<[1], [0], [0], [1], [0, 0, 1, 1], [], []>} : vector<4x32xf32>, vector<32x64xf32>, vector<4x64xf32> -> vector<4x64xf32>
    %195 = vector.extract_strided_slice %175 {offsets = [0, 32], sizes = [1, 64], strides = [1, 1]} : vector<1x96xf32> to vector<1x64xf32>
    %196 = vector.broadcast %195 : vector<1x64xf32> to vector<4x64xf32>
    %197 = arith.addf %194, %196 : vector<4x64xf32>
    %198 = vector.extract_strided_slice %197 {offsets = [0, 0], sizes = [4, 32], strides = [1, 1]} : vector<4x64xf32> to vector<4x32xf32>
    %199 = vector.extract_strided_slice %197 {offsets = [0, 32], sizes = [4, 32], strides = [1, 1]} : vector<4x64xf32> to vector<4x32xf32>
    %200 = vector.extract_strided_slice %2 {offsets = [1, 0, 0], sizes = [1, 4, 32], strides = [1, 1, 1]} : vector<2x4x32xf32> to vector<1x4x32xf32>
    %201 = vector.shape_cast %200 : vector<1x4x32xf32> to vector<4x32xf32>
    %202 = vector.extract_strided_slice %173 {offsets = [0, 32], sizes = [32, 64], strides = [1, 1]} : vector<32x96xf32> to vector<32x64xf32>
    %cst_82 = arith.constant dense<0.000000e+00> : vector<4x64xf32>
    %203 = tpu.matmul %201, %202, %cst_82 {dimension_numbers = #tpu.dot_dimension_numbers<[1], [0], [0], [1], [0, 0, 1, 1], [], []>} : vector<4x32xf32>, vector<32x64xf32>, vector<4x64xf32> -> vector<4x64xf32>
    %204 = vector.extract_strided_slice %175 {offsets = [0, 32], sizes = [1, 64], strides = [1, 1]} : vector<1x96xf32> to vector<1x64xf32>
    %205 = vector.broadcast %204 : vector<1x64xf32> to vector<4x64xf32>
    %206 = arith.addf %203, %205 : vector<4x64xf32>
    %207 = vector.extract_strided_slice %206 {offsets = [0, 0], sizes = [4, 32], strides = [1, 1]} : vector<4x64xf32> to vector<4x32xf32>
    %208 = vector.extract_strided_slice %206 {offsets = [0, 32], sizes = [4, 32], strides = [1, 1]} : vector<4x64xf32> to vector<4x32xf32>
    %209 = vector.shape_cast %198 : vector<4x32xf32> to vector<1x4x32xf32>
    %210 = vector.shape_cast %207 : vector<4x32xf32> to vector<1x4x32xf32>
    %211 = tpu.concatenate %209, %210 in 0 : vector<1x4x32xf32>, vector<1x4x32xf32> -> vector<2x4x32xf32>
    %212 = vector.shape_cast %199 : vector<4x32xf32> to vector<1x4x32xf32>
    %213 = vector.shape_cast %208 : vector<4x32xf32> to vector<1x4x32xf32>
    %214 = tpu.concatenate %212, %213 in 0 : vector<1x4x32xf32>, vector<1x4x32xf32> -> vector<2x4x32xf32>
    %215 = vector.shape_cast %190 : vector<16x32xf32> to vector<2x8x32xf32>
    %216 = vector.extract_strided_slice %215 {offsets = [0, 0, 0], sizes = [2, 8, 4], strides = [1, 1, 1]} : vector<2x8x32xf32> to vector<2x8x4xf32>
    %217 = vector.extract_strided_slice %211 {offsets = [0, 0, 0], sizes = [2, 4, 4], strides = [1, 1, 1]} : vector<2x4x32xf32> to vector<2x4x4xf32>
    "tpu.trace_start"() <{level = 10 : i32, message = "bqd,bkd->bqk"}> : () -> ()
    %cst_83 = arith.constant dense<0.000000e+00> : vector<2x8x4xf32>
    %218 = tpu.matmul %216, %217, %cst_83 {dimension_numbers = #tpu.dot_dimension_numbers<[2], [2], [1], [1], [0, 0, 0, 1, 1, 1], [0], [0]>} : vector<2x8x4xf32>, vector<2x4x4xf32>, vector<2x8x4xf32> -> vector<2x8x4xf32>
    "tpu.trace_stop"() : () -> ()
    %cst_84 = arith.constant dense<0xFF800000> : vector<2x8xf32>
    %219 = vector.multi_reduction <maximumf>, %218, %cst_84 [2] : vector<2x8x4xf32> to vector<2x8xf32>
    %220 = vector.shape_cast %219 : vector<2x8xf32> to vector<2x8x1xf32>
    %221 = vector.broadcast %220 : vector<2x8x1xf32> to vector<2x8x4xf32>
    %222 = arith.subf %218, %221 : vector<2x8x4xf32>
    %223 = math.exp %222 : vector<2x8x4xf32>
    %cst_85 = arith.constant dense<0.000000e+00> : vector<2x8xf32>
    %224 = vector.multi_reduction <add>, %223, %cst_85 [2] : vector<2x8x4xf32> to vector<2x8xf32>
    %225 = vector.shape_cast %224 : vector<2x8xf32> to vector<2x8x1xf32>
    %226 = tpu.reciprocal %225 {approx = true} : vector<2x8x1xf32> -> vector<2x8x1xf32>
    %227 = vector.broadcast %226 : vector<2x8x1xf32> to vector<2x8x4xf32>
    %228 = arith.mulf %223, %227 : vector<2x8x4xf32>
    %229 = vector.extract_strided_slice %214 {offsets = [0, 0, 0], sizes = [2, 4, 4], strides = [1, 1, 1]} : vector<2x4x32xf32> to vector<2x4x4xf32>
    "tpu.trace_start"() <{level = 10 : i32, message = "bqk,bkd->bqd"}> : () -> ()
    %cst_86 = arith.constant dense<0.000000e+00> : vector<2x8x4xf32>
    %230 = tpu.matmul %228, %229, %cst_86 {dimension_numbers = #tpu.dot_dimension_numbers<[2], [1], [1], [2], [0, 0, 0, 1, 1, 2], [0], [0]>} : vector<2x8x4xf32>, vector<2x4x4xf32>, vector<2x8x4xf32> -> vector<2x8x4xf32>
    "tpu.trace_stop"() : () -> ()
    %231 = vector.extract_strided_slice %215 {offsets = [0, 0, 4], sizes = [2, 8, 4], strides = [1, 1, 1]} : vector<2x8x32xf32> to vector<2x8x4xf32>
    %232 = vector.extract_strided_slice %211 {offsets = [0, 0, 4], sizes = [2, 4, 4], strides = [1, 1, 1]} : vector<2x4x32xf32> to vector<2x4x4xf32>
    "tpu.trace_start"() <{level = 10 : i32, message = "bqd,bkd->bqk"}> : () -> ()
    %cst_87 = arith.constant dense<0.000000e+00> : vector<2x8x4xf32>
    %233 = tpu.matmul %231, %232, %cst_87 {dimension_numbers = #tpu.dot_dimension_numbers<[2], [2], [1], [1], [0, 0, 0, 1, 1, 1], [0], [0]>} : vector<2x8x4xf32>, vector<2x4x4xf32>, vector<2x8x4xf32> -> vector<2x8x4xf32>
    "tpu.trace_stop"() : () -> ()
    %cst_88 = arith.constant dense<0xFF800000> : vector<2x8xf32>
    %234 = vector.multi_reduction <maximumf>, %233, %cst_88 [2] : vector<2x8x4xf32> to vector<2x8xf32>
    %235 = vector.shape_cast %234 : vector<2x8xf32> to vector<2x8x1xf32>
    %236 = vector.broadcast %235 : vector<2x8x1xf32> to vector<2x8x4xf32>
    %237 = arith.subf %233, %236 : vector<2x8x4xf32>
    %238 = math.exp %237 : vector<2x8x4xf32>
    %cst_89 = arith.constant dense<0.000000e+00> : vector<2x8xf32>
    %239 = vector.multi_reduction <add>, %238, %cst_89 [2] : vector<2x8x4xf32> to vector<2x8xf32>
    %240 = vector.shape_cast %239 : vector<2x8xf32> to vector<2x8x1xf32>
    %241 = tpu.reciprocal %240 {approx = true} : vector<2x8x1xf32> -> vector<2x8x1xf32>
    %242 = vector.broadcast %241 : vector<2x8x1xf32> to vector<2x8x4xf32>
    %243 = arith.mulf %238, %242 : vector<2x8x4xf32>
    %244 = vector.extract_strided_slice %214 {offsets = [0, 0, 4], sizes = [2, 4, 4], strides = [1, 1, 1]} : vector<2x4x32xf32> to vector<2x4x4xf32>
    "tpu.trace_start"() <{level = 10 : i32, message = "bqk,bkd->bqd"}> : () -> ()
    %cst_90 = arith.constant dense<0.000000e+00> : vector<2x8x4xf32>
    %245 = tpu.matmul %243, %244, %cst_90 {dimension_numbers = #tpu.dot_dimension_numbers<[2], [1], [1], [2], [0, 0, 0, 1, 1, 2], [0], [0]>} : vector<2x8x4xf32>, vector<2x4x4xf32>, vector<2x8x4xf32> -> vector<2x8x4xf32>
    "tpu.trace_stop"() : () -> ()
    %246 = vector.extract_strided_slice %215 {offsets = [0, 0, 8], sizes = [2, 8, 4], strides = [1, 1, 1]} : vector<2x8x32xf32> to vector<2x8x4xf32>
    %247 = vector.extract_strided_slice %211 {offsets = [0, 0, 8], sizes = [2, 4, 4], strides = [1, 1, 1]} : vector<2x4x32xf32> to vector<2x4x4xf32>
    "tpu.trace_start"() <{level = 10 : i32, message = "bqd,bkd->bqk"}> : () -> ()
    %cst_91 = arith.constant dense<0.000000e+00> : vector<2x8x4xf32>
    %248 = tpu.matmul %246, %247, %cst_91 {dimension_numbers = #tpu.dot_dimension_numbers<[2], [2], [1], [1], [0, 0, 0, 1, 1, 1], [0], [0]>} : vector<2x8x4xf32>, vector<2x4x4xf32>, vector<2x8x4xf32> -> vector<2x8x4xf32>
    "tpu.trace_stop"() : () -> ()
    %cst_92 = arith.constant dense<0xFF800000> : vector<2x8xf32>
    %249 = vector.multi_reduction <maximumf>, %248, %cst_92 [2] : vector<2x8x4xf32> to vector<2x8xf32>
    %250 = vector.shape_cast %249 : vector<2x8xf32> to vector<2x8x1xf32>
    %251 = vector.broadcast %250 : vector<2x8x1xf32> to vector<2x8x4xf32>
    %252 = arith.subf %248, %251 : vector<2x8x4xf32>
    %253 = math.exp %252 : vector<2x8x4xf32>
    %cst_93 = arith.constant dense<0.000000e+00> : vector<2x8xf32>
    %254 = vector.multi_reduction <add>, %253, %cst_93 [2] : vector<2x8x4xf32> to vector<2x8xf32>
    %255 = vector.shape_cast %254 : vector<2x8xf32> to vector<2x8x1xf32>
    %256 = tpu.reciprocal %255 {approx = true} : vector<2x8x1xf32> -> vector<2x8x1xf32>
    %257 = vector.broadcast %256 : vector<2x8x1xf32> to vector<2x8x4xf32>
    %258 = arith.mulf %253, %257 : vector<2x8x4xf32>
    %259 = vector.extract_strided_slice %214 {offsets = [0, 0, 8], sizes = [2, 4, 4], strides = [1, 1, 1]} : vector<2x4x32xf32> to vector<2x4x4xf32>
    "tpu.trace_start"() <{level = 10 : i32, message = "bqk,bkd->bqd"}> : () -> ()
    %cst_94 = arith.constant dense<0.000000e+00> : vector<2x8x4xf32>
    %260 = tpu.matmul %258, %259, %cst_94 {dimension_numbers = #tpu.dot_dimension_numbers<[2], [1], [1], [2], [0, 0, 0, 1, 1, 2], [0], [0]>} : vector<2x8x4xf32>, vector<2x4x4xf32>, vector<2x8x4xf32> -> vector<2x8x4xf32>
    "tpu.trace_stop"() : () -> ()
    %261 = vector.extract_strided_slice %215 {offsets = [0, 0, 12], sizes = [2, 8, 4], strides = [1, 1, 1]} : vector<2x8x32xf32> to vector<2x8x4xf32>
    %262 = vector.extract_strided_slice %211 {offsets = [0, 0, 12], sizes = [2, 4, 4], strides = [1, 1, 1]} : vector<2x4x32xf32> to vector<2x4x4xf32>
    "tpu.trace_start"() <{level = 10 : i32, message = "bqd,bkd->bqk"}> : () -> ()
    %cst_95 = arith.constant dense<0.000000e+00> : vector<2x8x4xf32>
    %263 = tpu.matmul %261, %262, %cst_95 {dimension_numbers = #tpu.dot_dimension_numbers<[2], [2], [1], [1], [0, 0, 0, 1, 1, 1], [0], [0]>} : vector<2x8x4xf32>, vector<2x4x4xf32>, vector<2x8x4xf32> -> vector<2x8x4xf32>
    "tpu.trace_stop"() : () -> ()
    %cst_96 = arith.constant dense<0xFF800000> : vector<2x8xf32>
    %264 = vector.multi_reduction <maximumf>, %263, %cst_96 [2] : vector<2x8x4xf32> to vector<2x8xf32>
    %265 = vector.shape_cast %264 : vector<2x8xf32> to vector<2x8x1xf32>
    %266 = vector.broadcast %265 : vector<2x8x1xf32> to vector<2x8x4xf32>
    %267 = arith.subf %263, %266 : vector<2x8x4xf32>
    %268 = math.exp %267 : vector<2x8x4xf32>
    %cst_97 = arith.constant dense<0.000000e+00> : vector<2x8xf32>
    %269 = vector.multi_reduction <add>, %268, %cst_97 [2] : vector<2x8x4xf32> to vector<2x8xf32>
    %270 = vector.shape_cast %269 : vector<2x8xf32> to vector<2x8x1xf32>
    %271 = tpu.reciprocal %270 {approx = true} : vector<2x8x1xf32> -> vector<2x8x1xf32>
    %272 = vector.broadcast %271 : vector<2x8x1xf32> to vector<2x8x4xf32>
    %273 = arith.mulf %268, %272 : vector<2x8x4xf32>
    %274 = vector.extract_strided_slice %214 {offsets = [0, 0, 12], sizes = [2, 4, 4], strides = [1, 1, 1]} : vector<2x4x32xf32> to vector<2x4x4xf32>
    "tpu.trace_start"() <{level = 10 : i32, message = "bqk,bkd->bqd"}> : () -> ()
    %cst_98 = arith.constant dense<0.000000e+00> : vector<2x8x4xf32>
    %275 = tpu.matmul %273, %274, %cst_98 {dimension_numbers = #tpu.dot_dimension_numbers<[2], [1], [1], [2], [0, 0, 0, 1, 1, 2], [0], [0]>} : vector<2x8x4xf32>, vector<2x4x4xf32>, vector<2x8x4xf32> -> vector<2x8x4xf32>
    "tpu.trace_stop"() : () -> ()
    %276 = vector.extract_strided_slice %215 {offsets = [0, 0, 16], sizes = [2, 8, 4], strides = [1, 1, 1]} : vector<2x8x32xf32> to vector<2x8x4xf32>
    %277 = vector.extract_strided_slice %211 {offsets = [0, 0, 16], sizes = [2, 4, 4], strides = [1, 1, 1]} : vector<2x4x32xf32> to vector<2x4x4xf32>
    "tpu.trace_start"() <{level = 10 : i32, message = "bqd,bkd->bqk"}> : () -> ()
    %cst_99 = arith.constant dense<0.000000e+00> : vector<2x8x4xf32>
    %278 = tpu.matmul %276, %277, %cst_99 {dimension_numbers = #tpu.dot_dimension_numbers<[2], [2], [1], [1], [0, 0, 0, 1, 1, 1], [0], [0]>} : vector<2x8x4xf32>, vector<2x4x4xf32>, vector<2x8x4xf32> -> vector<2x8x4xf32>
    "tpu.trace_stop"() : () -> ()
    %cst_100 = arith.constant dense<0xFF800000> : vector<2x8xf32>
    %279 = vector.multi_reduction <maximumf>, %278, %cst_100 [2] : vector<2x8x4xf32> to vector<2x8xf32>
    %280 = vector.shape_cast %279 : vector<2x8xf32> to vector<2x8x1xf32>
    %281 = vector.broadcast %280 : vector<2x8x1xf32> to vector<2x8x4xf32>
    %282 = arith.subf %278, %281 : vector<2x8x4xf32>
    %283 = math.exp %282 : vector<2x8x4xf32>
    %cst_101 = arith.constant dense<0.000000e+00> : vector<2x8xf32>
    %284 = vector.multi_reduction <add>, %283, %cst_101 [2] : vector<2x8x4xf32> to vector<2x8xf32>
    %285 = vector.shape_cast %284 : vector<2x8xf32> to vector<2x8x1xf32>
    %286 = tpu.reciprocal %285 {approx = true} : vector<2x8x1xf32> -> vector<2x8x1xf32>
    %287 = vector.broadcast %286 : vector<2x8x1xf32> to vector<2x8x4xf32>
    %288 = arith.mulf %283, %287 : vector<2x8x4xf32>
    %289 = vector.extract_strided_slice %214 {offsets = [0, 0, 16], sizes = [2, 4, 4], strides = [1, 1, 1]} : vector<2x4x32xf32> to vector<2x4x4xf32>
    "tpu.trace_start"() <{level = 10 : i32, message = "bqk,bkd->bqd"}> : () -> ()
    %cst_102 = arith.constant dense<0.000000e+00> : vector<2x8x4xf32>
    %290 = tpu.matmul %288, %289, %cst_102 {dimension_numbers = #tpu.dot_dimension_numbers<[2], [1], [1], [2], [0, 0, 0, 1, 1, 2], [0], [0]>} : vector<2x8x4xf32>, vector<2x4x4xf32>, vector<2x8x4xf32> -> vector<2x8x4xf32>
    "tpu.trace_stop"() : () -> ()
    %291 = vector.extract_strided_slice %215 {offsets = [0, 0, 20], sizes = [2, 8, 4], strides = [1, 1, 1]} : vector<2x8x32xf32> to vector<2x8x4xf32>
    %292 = vector.extract_strided_slice %211 {offsets = [0, 0, 20], sizes = [2, 4, 4], strides = [1, 1, 1]} : vector<2x4x32xf32> to vector<2x4x4xf32>
    "tpu.trace_start"() <{level = 10 : i32, message = "bqd,bkd->bqk"}> : () -> ()
    %cst_103 = arith.constant dense<0.000000e+00> : vector<2x8x4xf32>
    %293 = tpu.matmul %291, %292, %cst_103 {dimension_numbers = #tpu.dot_dimension_numbers<[2], [2], [1], [1], [0, 0, 0, 1, 1, 1], [0], [0]>} : vector<2x8x4xf32>, vector<2x4x4xf32>, vector<2x8x4xf32> -> vector<2x8x4xf32>
    "tpu.trace_stop"() : () -> ()
    %cst_104 = arith.constant dense<0xFF800000> : vector<2x8xf32>
    %294 = vector.multi_reduction <maximumf>, %293, %cst_104 [2] : vector<2x8x4xf32> to vector<2x8xf32>
    %295 = vector.shape_cast %294 : vector<2x8xf32> to vector<2x8x1xf32>
    %296 = vector.broadcast %295 : vector<2x8x1xf32> to vector<2x8x4xf32>
    %297 = arith.subf %293, %296 : vector<2x8x4xf32>
    %298 = math.exp %297 : vector<2x8x4xf32>
    %cst_105 = arith.constant dense<0.000000e+00> : vector<2x8xf32>
    %299 = vector.multi_reduction <add>, %298, %cst_105 [2] : vector<2x8x4xf32> to vector<2x8xf32>
    %300 = vector.shape_cast %299 : vector<2x8xf32> to vector<2x8x1xf32>
    %301 = tpu.reciprocal %300 {approx = true} : vector<2x8x1xf32> -> vector<2x8x1xf32>
    %302 = vector.broadcast %301 : vector<2x8x1xf32> to vector<2x8x4xf32>
    %303 = arith.mulf %298, %302 : vector<2x8x4xf32>
    %304 = vector.extract_strided_slice %214 {offsets = [0, 0, 20], sizes = [2, 4, 4], strides = [1, 1, 1]} : vector<2x4x32xf32> to vector<2x4x4xf32>
    "tpu.trace_start"() <{level = 10 : i32, message = "bqk,bkd->bqd"}> : () -> ()
    %cst_106 = arith.constant dense<0.000000e+00> : vector<2x8x4xf32>
    %305 = tpu.matmul %303, %304, %cst_106 {dimension_numbers = #tpu.dot_dimension_numbers<[2], [1], [1], [2], [0, 0, 0, 1, 1, 2], [0], [0]>} : vector<2x8x4xf32>, vector<2x4x4xf32>, vector<2x8x4xf32> -> vector<2x8x4xf32>
    "tpu.trace_stop"() : () -> ()
    %306 = vector.extract_strided_slice %215 {offsets = [0, 0, 24], sizes = [2, 8, 4], strides = [1, 1, 1]} : vector<2x8x32xf32> to vector<2x8x4xf32>
    %307 = vector.extract_strided_slice %211 {offsets = [0, 0, 24], sizes = [2, 4, 4], strides = [1, 1, 1]} : vector<2x4x32xf32> to vector<2x4x4xf32>
    "tpu.trace_start"() <{level = 10 : i32, message = "bqd,bkd->bqk"}> : () -> ()
    %cst_107 = arith.constant dense<0.000000e+00> : vector<2x8x4xf32>
    %308 = tpu.matmul %306, %307, %cst_107 {dimension_numbers = #tpu.dot_dimension_numbers<[2], [2], [1], [1], [0, 0, 0, 1, 1, 1], [0], [0]>} : vector<2x8x4xf32>, vector<2x4x4xf32>, vector<2x8x4xf32> -> vector<2x8x4xf32>
    "tpu.trace_stop"() : () -> ()
    %cst_108 = arith.constant dense<0xFF800000> : vector<2x8xf32>
    %309 = vector.multi_reduction <maximumf>, %308, %cst_108 [2] : vector<2x8x4xf32> to vector<2x8xf32>
    %310 = vector.shape_cast %309 : vector<2x8xf32> to vector<2x8x1xf32>
    %311 = vector.broadcast %310 : vector<2x8x1xf32> to vector<2x8x4xf32>
    %312 = arith.subf %308, %311 : vector<2x8x4xf32>
    %313 = math.exp %312 : vector<2x8x4xf32>
    %cst_109 = arith.constant dense<0.000000e+00> : vector<2x8xf32>
    %314 = vector.multi_reduction <add>, %313, %cst_109 [2] : vector<2x8x4xf32> to vector<2x8xf32>
    %315 = vector.shape_cast %314 : vector<2x8xf32> to vector<2x8x1xf32>
    %316 = tpu.reciprocal %315 {approx = true} : vector<2x8x1xf32> -> vector<2x8x1xf32>
    %317 = vector.broadcast %316 : vector<2x8x1xf32> to vector<2x8x4xf32>
    %318 = arith.mulf %313, %317 : vector<2x8x4xf32>
    %319 = vector.extract_strided_slice %214 {offsets = [0, 0, 24], sizes = [2, 4, 4], strides = [1, 1, 1]} : vector<2x4x32xf32> to vector<2x4x4xf32>
    "tpu.trace_start"() <{level = 10 : i32, message = "bqk,bkd->bqd"}> : () -> ()
    %cst_110 = arith.constant dense<0.000000e+00> : vector<2x8x4xf32>
    %320 = tpu.matmul %318, %319, %cst_110 {dimension_numbers = #tpu.dot_dimension_numbers<[2], [1], [1], [2], [0, 0, 0, 1, 1, 2], [0], [0]>} : vector<2x8x4xf32>, vector<2x4x4xf32>, vector<2x8x4xf32> -> vector<2x8x4xf32>
    "tpu.trace_stop"() : () -> ()
    %321 = vector.extract_strided_slice %215 {offsets = [0, 0, 28], sizes = [2, 8, 4], strides = [1, 1, 1]} : vector<2x8x32xf32> to vector<2x8x4xf32>
    %322 = vector.extract_strided_slice %211 {offsets = [0, 0, 28], sizes = [2, 4, 4], strides = [1, 1, 1]} : vector<2x4x32xf32> to vector<2x4x4xf32>
    "tpu.trace_start"() <{level = 10 : i32, message = "bqd,bkd->bqk"}> : () -> ()
    %cst_111 = arith.constant dense<0.000000e+00> : vector<2x8x4xf32>
    %323 = tpu.matmul %321, %322, %cst_111 {dimension_numbers = #tpu.dot_dimension_numbers<[2], [2], [1], [1], [0, 0, 0, 1, 1, 1], [0], [0]>} : vector<2x8x4xf32>, vector<2x4x4xf32>, vector<2x8x4xf32> -> vector<2x8x4xf32>
    "tpu.trace_stop"() : () -> ()
    %cst_112 = arith.constant dense<0xFF800000> : vector<2x8xf32>
    %324 = vector.multi_reduction <maximumf>, %323, %cst_112 [2] : vector<2x8x4xf32> to vector<2x8xf32>
    %325 = vector.shape_cast %324 : vector<2x8xf32> to vector<2x8x1xf32>
    %326 = vector.broadcast %325 : vector<2x8x1xf32> to vector<2x8x4xf32>
    %327 = arith.subf %323, %326 : vector<2x8x4xf32>
    %328 = math.exp %327 : vector<2x8x4xf32>
    %cst_113 = arith.constant dense<0.000000e+00> : vector<2x8xf32>
    %329 = vector.multi_reduction <add>, %328, %cst_113 [2] : vector<2x8x4xf32> to vector<2x8xf32>
    %330 = vector.shape_cast %329 : vector<2x8xf32> to vector<2x8x1xf32>
    %331 = tpu.reciprocal %330 {approx = true} : vector<2x8x1xf32> -> vector<2x8x1xf32>
    %332 = vector.broadcast %331 : vector<2x8x1xf32> to vector<2x8x4xf32>
    %333 = arith.mulf %328, %332 : vector<2x8x4xf32>
    %334 = vector.extract_strided_slice %214 {offsets = [0, 0, 28], sizes = [2, 4, 4], strides = [1, 1, 1]} : vector<2x4x32xf32> to vector<2x4x4xf32>
    "tpu.trace_start"() <{level = 10 : i32, message = "bqk,bkd->bqd"}> : () -> ()
    %cst_114 = arith.constant dense<0.000000e+00> : vector<2x8x4xf32>
    %335 = tpu.matmul %333, %334, %cst_114 {dimension_numbers = #tpu.dot_dimension_numbers<[2], [1], [1], [2], [0, 0, 0, 1, 1, 2], [0], [0]>} : vector<2x8x4xf32>, vector<2x4x4xf32>, vector<2x8x4xf32> -> vector<2x8x4xf32>
    "tpu.trace_stop"() : () -> ()
    %336 = tpu.concatenate %230, %245, %260, %275, %290, %305, %320, %335 in 2 : vector<2x8x4xf32>, vector<2x8x4xf32>, vector<2x8x4xf32>, vector<2x8x4xf32>, vector<2x8x4xf32>, vector<2x8x4xf32>, vector<2x8x4xf32>, vector<2x8x4xf32> -> vector<2x8x32xf32>
    %337 = vector.shape_cast %336 : vector<2x8x32xf32> to vector<16x32xf32>
    %cst_115 = arith.constant dense<0.000000e+00> : vector<16x32xf32>
    %338 = tpu.matmul %337, %177, %cst_115 {dimension_numbers = #tpu.dot_dimension_numbers<[1], [0], [0], [1], [0, 0, 1, 1], [], []>} : vector<16x32xf32>, vector<32x32xf32>, vector<16x32xf32> -> vector<16x32xf32>
    %339 = vector.broadcast %179 : vector<1x32xf32> to vector<16x32xf32>
    %340 = arith.addf %338, %339 : vector<16x32xf32>
    %341 = arith.addf %340, %171 : vector<16x32xf32>
    %cst_116 = arith.constant dense<0.000000e+00> : vector<16xf32>
    %342 = vector.multi_reduction <add>, %341, %cst_116 [1] : vector<16x32xf32> to vector<16xf32>
    %343 = vector.shape_cast %342 : vector<16xf32> to vector<16x1xf32>
    %cst_117 = arith.constant 3.200000e+01 : f32
    %344 = vector.broadcast %cst_117 : f32 to vector<16x1xf32>
    %345 = arith.divf %343, %344 : vector<16x1xf32>
    %346 = vector.broadcast %345 : vector<16x1xf32> to vector<16x32xf32>
    %347 = arith.subf %341, %346 : vector<16x32xf32>
    %348 = arith.mulf %347, %347 : vector<16x32xf32>
    %cst_118 = arith.constant dense<0.000000e+00> : vector<16xf32>
    %349 = vector.multi_reduction <add>, %348, %cst_118 [1] : vector<16x32xf32> to vector<16xf32>
    %350 = vector.shape_cast %349 : vector<16xf32> to vector<16x1xf32>
    %cst_119 = arith.constant 3.200000e+01 : f32
    %351 = vector.broadcast %cst_119 : f32 to vector<16x1xf32>
    %352 = arith.divf %350, %351 : vector<16x1xf32>
    %cst_120 = arith.constant 9.99999974E-6 : f32
    %353 = vector.broadcast %cst_120 : f32 to vector<16x1xf32>
    %354 = arith.addf %352, %353 : vector<16x1xf32>
    %355 = math.rsqrt %354 : vector<16x1xf32>
    %356 = vector.broadcast %355 : vector<16x1xf32> to vector<16x32xf32>
    %357 = arith.mulf %347, %356 : vector<16x32xf32>
    %358 = vector.broadcast %181 : vector<1x32xf32> to vector<16x32xf32>
    %359 = arith.mulf %357, %358 : vector<16x32xf32>
    %360 = vector.broadcast %183 : vector<1x32xf32> to vector<16x32xf32>
    %361 = arith.addf %359, %360 : vector<16x32xf32>
    %c2 = arith.constant 2 : index
    %c0_121 = arith.constant 0 : index
    %c0_122 = arith.constant 0 : index
    %362 = vector.load %arg3[%c2, %c0_121, %c0_122] : memref<4x32x96xf32, #tpu.memory_space<vmem>>, vector<1x32x96xf32>
    %363 = vector.shape_cast %362 : vector<1x32x96xf32> to vector<32x96xf32>
    %c2_123 = arith.constant 2 : index
    %c0_124 = arith.constant 0 : index
    %c0_125 = arith.constant 0 : index
    %364 = vector.load %arg4[%c2_123, %c0_124, %c0_125] : memref<4x1x96xf32, #tpu.memory_space<vmem>>, vector<1x1x96xf32>
    %365 = vector.shape_cast %364 : vector<1x1x96xf32> to vector<1x96xf32>
    %c2_126 = arith.constant 2 : index
    %c0_127 = arith.constant 0 : index
    %c0_128 = arith.constant 0 : index
    %366 = vector.load %arg5[%c2_126, %c0_127, %c0_128] : memref<4x32x32xf32, #tpu.memory_space<vmem>>, vector<1x32x32xf32>
    %367 = vector.shape_cast %366 : vector<1x32x32xf32> to vector<32x32xf32>
    %c2_129 = arith.constant 2 : index
    %c0_130 = arith.constant 0 : index
    %c0_131 = arith.constant 0 : index
    %368 = vector.load %arg6[%c2_129, %c0_130, %c0_131] : memref<4x1x32xf32, #tpu.memory_space<vmem>>, vector<1x1x32xf32>
    %369 = vector.shape_cast %368 : vector<1x1x32xf32> to vector<1x32xf32>
    %c2_132 = arith.constant 2 : index
    %c0_133 = arith.constant 0 : index
    %c0_134 = arith.constant 0 : index
    %370 = vector.load %arg7[%c2_132, %c0_133, %c0_134] : memref<4x1x32xf32, #tpu.memory_space<vmem>>, vector<1x1x32xf32>
    %371 = vector.shape_cast %370 : vector<1x1x32xf32> to vector<1x32xf32>
    %c2_135 = arith.constant 2 : index
    %c0_136 = arith.constant 0 : index
    %c0_137 = arith.constant 0 : index
    %372 = vector.load %arg8[%c2_135, %c0_136, %c0_137] : memref<4x1x32xf32, #tpu.memory_space<vmem>>, vector<1x1x32xf32>
    %373 = vector.shape_cast %372 : vector<1x1x32xf32> to vector<1x32xf32>
    %cst_138 = arith.constant dense<0.000000e+00> : vector<16x96xf32>
    %374 = tpu.matmul %361, %363, %cst_138 {dimension_numbers = #tpu.dot_dimension_numbers<[1], [0], [0], [1], [0, 0, 1, 1], [], []>} : vector<16x32xf32>, vector<32x96xf32>, vector<16x96xf32> -> vector<16x96xf32>
    %375 = vector.broadcast %365 : vector<1x96xf32> to vector<16x96xf32>
    %376 = arith.addf %374, %375 : vector<16x96xf32>
    %377 = vector.extract_strided_slice %376 {offsets = [0, 0], sizes = [16, 32], strides = [1, 1]} : vector<16x96xf32> to vector<16x32xf32>
    %cst_139 = arith.constant 5.000000e-01 : f32
    %378 = vector.broadcast %cst_139 : f32 to vector<16x32xf32>
    %379 = arith.mulf %377, %378 : vector<16x32xf32>
    %380 = vector.extract_strided_slice %376 {offsets = [0, 32], sizes = [16, 32], strides = [1, 1]} : vector<16x96xf32> to vector<16x32xf32>
    %381 = vector.shape_cast %380 : vector<16x32xf32> to vector<2x8x32xf32>
    %382 = vector.extract_strided_slice %376 {offsets = [0, 64], sizes = [16, 32], strides = [1, 1]} : vector<16x96xf32> to vector<16x32xf32>
    %383 = vector.shape_cast %382 : vector<16x32xf32> to vector<2x8x32xf32>
    %384 = vector.shape_cast %379 : vector<16x32xf32> to vector<2x8x32xf32>
    %385 = vector.extract_strided_slice %384 {offsets = [0, 0, 0], sizes = [2, 8, 4], strides = [1, 1, 1]} : vector<2x8x32xf32> to vector<2x8x4xf32>
    %386 = vector.extract_strided_slice %381 {offsets = [0, 0, 0], sizes = [2, 8, 4], strides = [1, 1, 1]} : vector<2x8x32xf32> to vector<2x8x4xf32>
    "tpu.trace_start"() <{level = 10 : i32, message = "bqd,bkd->bqk"}> : () -> ()
    %cst_140 = arith.constant dense<0.000000e+00> : vector<2x8x8xf32>
    %387 = tpu.matmul %385, %386, %cst_140 {dimension_numbers = #tpu.dot_dimension_numbers<[2], [2], [1], [1], [0, 0, 0, 1, 1, 1], [0], [0]>} : vector<2x8x4xf32>, vector<2x8x4xf32>, vector<2x8x8xf32> -> vector<2x8x8xf32>
    "tpu.trace_stop"() : () -> ()
    %cst_141 = arith.constant dense<0xFF800000> : vector<2x8xf32>
    %388 = vector.multi_reduction <maximumf>, %387, %cst_141 [2] : vector<2x8x8xf32> to vector<2x8xf32>
    %389 = vector.shape_cast %388 : vector<2x8xf32> to vector<2x8x1xf32>
    %390 = vector.broadcast %389 : vector<2x8x1xf32> to vector<2x8x8xf32>
    %391 = arith.subf %387, %390 : vector<2x8x8xf32>
    %392 = math.exp %391 : vector<2x8x8xf32>
    %cst_142 = arith.constant dense<0.000000e+00> : vector<2x8xf32>
    %393 = vector.multi_reduction <add>, %392, %cst_142 [2] : vector<2x8x8xf32> to vector<2x8xf32>
    %394 = vector.shape_cast %393 : vector<2x8xf32> to vector<2x8x1xf32>
    %395 = tpu.reciprocal %394 {approx = true} : vector<2x8x1xf32> -> vector<2x8x1xf32>
    %396 = vector.broadcast %395 : vector<2x8x1xf32> to vector<2x8x8xf32>
    %397 = arith.mulf %392, %396 : vector<2x8x8xf32>
    %398 = vector.extract_strided_slice %383 {offsets = [0, 0, 0], sizes = [2, 8, 4], strides = [1, 1, 1]} : vector<2x8x32xf32> to vector<2x8x4xf32>
    "tpu.trace_start"() <{level = 10 : i32, message = "bqk,bkd->bqd"}> : () -> ()
    %cst_143 = arith.constant dense<0.000000e+00> : vector<2x8x4xf32>
    %399 = tpu.matmul %397, %398, %cst_143 {dimension_numbers = #tpu.dot_dimension_numbers<[2], [1], [1], [2], [0, 0, 0, 1, 1, 2], [0], [0]>} : vector<2x8x8xf32>, vector<2x8x4xf32>, vector<2x8x4xf32> -> vector<2x8x4xf32>
    "tpu.trace_stop"() : () -> ()
    %400 = vector.extract_strided_slice %384 {offsets = [0, 0, 4], sizes = [2, 8, 4], strides = [1, 1, 1]} : vector<2x8x32xf32> to vector<2x8x4xf32>
    %401 = vector.extract_strided_slice %381 {offsets = [0, 0, 4], sizes = [2, 8, 4], strides = [1, 1, 1]} : vector<2x8x32xf32> to vector<2x8x4xf32>
    "tpu.trace_start"() <{level = 10 : i32, message = "bqd,bkd->bqk"}> : () -> ()
    %cst_144 = arith.constant dense<0.000000e+00> : vector<2x8x8xf32>
    %402 = tpu.matmul %400, %401, %cst_144 {dimension_numbers = #tpu.dot_dimension_numbers<[2], [2], [1], [1], [0, 0, 0, 1, 1, 1], [0], [0]>} : vector<2x8x4xf32>, vector<2x8x4xf32>, vector<2x8x8xf32> -> vector<2x8x8xf32>
    "tpu.trace_stop"() : () -> ()
    %cst_145 = arith.constant dense<0xFF800000> : vector<2x8xf32>
    %403 = vector.multi_reduction <maximumf>, %402, %cst_145 [2] : vector<2x8x8xf32> to vector<2x8xf32>
    %404 = vector.shape_cast %403 : vector<2x8xf32> to vector<2x8x1xf32>
    %405 = vector.broadcast %404 : vector<2x8x1xf32> to vector<2x8x8xf32>
    %406 = arith.subf %402, %405 : vector<2x8x8xf32>
    %407 = math.exp %406 : vector<2x8x8xf32>
    %cst_146 = arith.constant dense<0.000000e+00> : vector<2x8xf32>
    %408 = vector.multi_reduction <add>, %407, %cst_146 [2] : vector<2x8x8xf32> to vector<2x8xf32>
    %409 = vector.shape_cast %408 : vector<2x8xf32> to vector<2x8x1xf32>
    %410 = tpu.reciprocal %409 {approx = true} : vector<2x8x1xf32> -> vector<2x8x1xf32>
    %411 = vector.broadcast %410 : vector<2x8x1xf32> to vector<2x8x8xf32>
    %412 = arith.mulf %407, %411 : vector<2x8x8xf32>
    %413 = vector.extract_strided_slice %383 {offsets = [0, 0, 4], sizes = [2, 8, 4], strides = [1, 1, 1]} : vector<2x8x32xf32> to vector<2x8x4xf32>
    "tpu.trace_start"() <{level = 10 : i32, message = "bqk,bkd->bqd"}> : () -> ()
    %cst_147 = arith.constant dense<0.000000e+00> : vector<2x8x4xf32>
    %414 = tpu.matmul %412, %413, %cst_147 {dimension_numbers = #tpu.dot_dimension_numbers<[2], [1], [1], [2], [0, 0, 0, 1, 1, 2], [0], [0]>} : vector<2x8x8xf32>, vector<2x8x4xf32>, vector<2x8x4xf32> -> vector<2x8x4xf32>
    "tpu.trace_stop"() : () -> ()
    %415 = vector.extract_strided_slice %384 {offsets = [0, 0, 8], sizes = [2, 8, 4], strides = [1, 1, 1]} : vector<2x8x32xf32> to vector<2x8x4xf32>
    %416 = vector.extract_strided_slice %381 {offsets = [0, 0, 8], sizes = [2, 8, 4], strides = [1, 1, 1]} : vector<2x8x32xf32> to vector<2x8x4xf32>
    "tpu.trace_start"() <{level = 10 : i32, message = "bqd,bkd->bqk"}> : () -> ()
    %cst_148 = arith.constant dense<0.000000e+00> : vector<2x8x8xf32>
    %417 = tpu.matmul %415, %416, %cst_148 {dimension_numbers = #tpu.dot_dimension_numbers<[2], [2], [1], [1], [0, 0, 0, 1, 1, 1], [0], [0]>} : vector<2x8x4xf32>, vector<2x8x4xf32>, vector<2x8x8xf32> -> vector<2x8x8xf32>
    "tpu.trace_stop"() : () -> ()
    %cst_149 = arith.constant dense<0xFF800000> : vector<2x8xf32>
    %418 = vector.multi_reduction <maximumf>, %417, %cst_149 [2] : vector<2x8x8xf32> to vector<2x8xf32>
    %419 = vector.shape_cast %418 : vector<2x8xf32> to vector<2x8x1xf32>
    %420 = vector.broadcast %419 : vector<2x8x1xf32> to vector<2x8x8xf32>
    %421 = arith.subf %417, %420 : vector<2x8x8xf32>
    %422 = math.exp %421 : vector<2x8x8xf32>
    %cst_150 = arith.constant dense<0.000000e+00> : vector<2x8xf32>
    %423 = vector.multi_reduction <add>, %422, %cst_150 [2] : vector<2x8x8xf32> to vector<2x8xf32>
    %424 = vector.shape_cast %423 : vector<2x8xf32> to vector<2x8x1xf32>
    %425 = tpu.reciprocal %424 {approx = true} : vector<2x8x1xf32> -> vector<2x8x1xf32>
    %426 = vector.broadcast %425 : vector<2x8x1xf32> to vector<2x8x8xf32>
    %427 = arith.mulf %422, %426 : vector<2x8x8xf32>
    %428 = vector.extract_strided_slice %383 {offsets = [0, 0, 8], sizes = [2, 8, 4], strides = [1, 1, 1]} : vector<2x8x32xf32> to vector<2x8x4xf32>
    "tpu.trace_start"() <{level = 10 : i32, message = "bqk,bkd->bqd"}> : () -> ()
    %cst_151 = arith.constant dense<0.000000e+00> : vector<2x8x4xf32>
    %429 = tpu.matmul %427, %428, %cst_151 {dimension_numbers = #tpu.dot_dimension_numbers<[2], [1], [1], [2], [0, 0, 0, 1, 1, 2], [0], [0]>} : vector<2x8x8xf32>, vector<2x8x4xf32>, vector<2x8x4xf32> -> vector<2x8x4xf32>
    "tpu.trace_stop"() : () -> ()
    %430 = vector.extract_strided_slice %384 {offsets = [0, 0, 12], sizes = [2, 8, 4], strides = [1, 1, 1]} : vector<2x8x32xf32> to vector<2x8x4xf32>
    %431 = vector.extract_strided_slice %381 {offsets = [0, 0, 12], sizes = [2, 8, 4], strides = [1, 1, 1]} : vector<2x8x32xf32> to vector<2x8x4xf32>
    "tpu.trace_start"() <{level = 10 : i32, message = "bqd,bkd->bqk"}> : () -> ()
    %cst_152 = arith.constant dense<0.000000e+00> : vector<2x8x8xf32>
    %432 = tpu.matmul %430, %431, %cst_152 {dimension_numbers = #tpu.dot_dimension_numbers<[2], [2], [1], [1], [0, 0, 0, 1, 1, 1], [0], [0]>} : vector<2x8x4xf32>, vector<2x8x4xf32>, vector<2x8x8xf32> -> vector<2x8x8xf32>
    "tpu.trace_stop"() : () -> ()
    %cst_153 = arith.constant dense<0xFF800000> : vector<2x8xf32>
    %433 = vector.multi_reduction <maximumf>, %432, %cst_153 [2] : vector<2x8x8xf32> to vector<2x8xf32>
    %434 = vector.shape_cast %433 : vector<2x8xf32> to vector<2x8x1xf32>
    %435 = vector.broadcast %434 : vector<2x8x1xf32> to vector<2x8x8xf32>
    %436 = arith.subf %432, %435 : vector<2x8x8xf32>
    %437 = math.exp %436 : vector<2x8x8xf32>
    %cst_154 = arith.constant dense<0.000000e+00> : vector<2x8xf32>
    %438 = vector.multi_reduction <add>, %437, %cst_154 [2] : vector<2x8x8xf32> to vector<2x8xf32>
    %439 = vector.shape_cast %438 : vector<2x8xf32> to vector<2x8x1xf32>
    %440 = tpu.reciprocal %439 {approx = true} : vector<2x8x1xf32> -> vector<2x8x1xf32>
    %441 = vector.broadcast %440 : vector<2x8x1xf32> to vector<2x8x8xf32>
    %442 = arith.mulf %437, %441 : vector<2x8x8xf32>
    %443 = vector.extract_strided_slice %383 {offsets = [0, 0, 12], sizes = [2, 8, 4], strides = [1, 1, 1]} : vector<2x8x32xf32> to vector<2x8x4xf32>
    "tpu.trace_start"() <{level = 10 : i32, message = "bqk,bkd->bqd"}> : () -> ()
    %cst_155 = arith.constant dense<0.000000e+00> : vector<2x8x4xf32>
    %444 = tpu.matmul %442, %443, %cst_155 {dimension_numbers = #tpu.dot_dimension_numbers<[2], [1], [1], [2], [0, 0, 0, 1, 1, 2], [0], [0]>} : vector<2x8x8xf32>, vector<2x8x4xf32>, vector<2x8x4xf32> -> vector<2x8x4xf32>
    "tpu.trace_stop"() : () -> ()
    %445 = vector.extract_strided_slice %384 {offsets = [0, 0, 16], sizes = [2, 8, 4], strides = [1, 1, 1]} : vector<2x8x32xf32> to vector<2x8x4xf32>
    %446 = vector.extract_strided_slice %381 {offsets = [0, 0, 16], sizes = [2, 8, 4], strides = [1, 1, 1]} : vector<2x8x32xf32> to vector<2x8x4xf32>
    "tpu.trace_start"() <{level = 10 : i32, message = "bqd,bkd->bqk"}> : () -> ()
    %cst_156 = arith.constant dense<0.000000e+00> : vector<2x8x8xf32>
    %447 = tpu.matmul %445, %446, %cst_156 {dimension_numbers = #tpu.dot_dimension_numbers<[2], [2], [1], [1], [0, 0, 0, 1, 1, 1], [0], [0]>} : vector<2x8x4xf32>, vector<2x8x4xf32>, vector<2x8x8xf32> -> vector<2x8x8xf32>
    "tpu.trace_stop"() : () -> ()
    %cst_157 = arith.constant dense<0xFF800000> : vector<2x8xf32>
    %448 = vector.multi_reduction <maximumf>, %447, %cst_157 [2] : vector<2x8x8xf32> to vector<2x8xf32>
    %449 = vector.shape_cast %448 : vector<2x8xf32> to vector<2x8x1xf32>
    %450 = vector.broadcast %449 : vector<2x8x1xf32> to vector<2x8x8xf32>
    %451 = arith.subf %447, %450 : vector<2x8x8xf32>
    %452 = math.exp %451 : vector<2x8x8xf32>
    %cst_158 = arith.constant dense<0.000000e+00> : vector<2x8xf32>
    %453 = vector.multi_reduction <add>, %452, %cst_158 [2] : vector<2x8x8xf32> to vector<2x8xf32>
    %454 = vector.shape_cast %453 : vector<2x8xf32> to vector<2x8x1xf32>
    %455 = tpu.reciprocal %454 {approx = true} : vector<2x8x1xf32> -> vector<2x8x1xf32>
    %456 = vector.broadcast %455 : vector<2x8x1xf32> to vector<2x8x8xf32>
    %457 = arith.mulf %452, %456 : vector<2x8x8xf32>
    %458 = vector.extract_strided_slice %383 {offsets = [0, 0, 16], sizes = [2, 8, 4], strides = [1, 1, 1]} : vector<2x8x32xf32> to vector<2x8x4xf32>
    "tpu.trace_start"() <{level = 10 : i32, message = "bqk,bkd->bqd"}> : () -> ()
    %cst_159 = arith.constant dense<0.000000e+00> : vector<2x8x4xf32>
    %459 = tpu.matmul %457, %458, %cst_159 {dimension_numbers = #tpu.dot_dimension_numbers<[2], [1], [1], [2], [0, 0, 0, 1, 1, 2], [0], [0]>} : vector<2x8x8xf32>, vector<2x8x4xf32>, vector<2x8x4xf32> -> vector<2x8x4xf32>
    "tpu.trace_stop"() : () -> ()
    %460 = vector.extract_strided_slice %384 {offsets = [0, 0, 20], sizes = [2, 8, 4], strides = [1, 1, 1]} : vector<2x8x32xf32> to vector<2x8x4xf32>
    %461 = vector.extract_strided_slice %381 {offsets = [0, 0, 20], sizes = [2, 8, 4], strides = [1, 1, 1]} : vector<2x8x32xf32> to vector<2x8x4xf32>
    "tpu.trace_start"() <{level = 10 : i32, message = "bqd,bkd->bqk"}> : () -> ()
    %cst_160 = arith.constant dense<0.000000e+00> : vector<2x8x8xf32>
    %462 = tpu.matmul %460, %461, %cst_160 {dimension_numbers = #tpu.dot_dimension_numbers<[2], [2], [1], [1], [0, 0, 0, 1, 1, 1], [0], [0]>} : vector<2x8x4xf32>, vector<2x8x4xf32>, vector<2x8x8xf32> -> vector<2x8x8xf32>
    "tpu.trace_stop"() : () -> ()
    %cst_161 = arith.constant dense<0xFF800000> : vector<2x8xf32>
    %463 = vector.multi_reduction <maximumf>, %462, %cst_161 [2] : vector<2x8x8xf32> to vector<2x8xf32>
    %464 = vector.shape_cast %463 : vector<2x8xf32> to vector<2x8x1xf32>
    %465 = vector.broadcast %464 : vector<2x8x1xf32> to vector<2x8x8xf32>
    %466 = arith.subf %462, %465 : vector<2x8x8xf32>
    %467 = math.exp %466 : vector<2x8x8xf32>
    %cst_162 = arith.constant dense<0.000000e+00> : vector<2x8xf32>
    %468 = vector.multi_reduction <add>, %467, %cst_162 [2] : vector<2x8x8xf32> to vector<2x8xf32>
    %469 = vector.shape_cast %468 : vector<2x8xf32> to vector<2x8x1xf32>
    %470 = tpu.reciprocal %469 {approx = true} : vector<2x8x1xf32> -> vector<2x8x1xf32>
    %471 = vector.broadcast %470 : vector<2x8x1xf32> to vector<2x8x8xf32>
    %472 = arith.mulf %467, %471 : vector<2x8x8xf32>
    %473 = vector.extract_strided_slice %383 {offsets = [0, 0, 20], sizes = [2, 8, 4], strides = [1, 1, 1]} : vector<2x8x32xf32> to vector<2x8x4xf32>
    "tpu.trace_start"() <{level = 10 : i32, message = "bqk,bkd->bqd"}> : () -> ()
    %cst_163 = arith.constant dense<0.000000e+00> : vector<2x8x4xf32>
    %474 = tpu.matmul %472, %473, %cst_163 {dimension_numbers = #tpu.dot_dimension_numbers<[2], [1], [1], [2], [0, 0, 0, 1, 1, 2], [0], [0]>} : vector<2x8x8xf32>, vector<2x8x4xf32>, vector<2x8x4xf32> -> vector<2x8x4xf32>
    "tpu.trace_stop"() : () -> ()
    %475 = vector.extract_strided_slice %384 {offsets = [0, 0, 24], sizes = [2, 8, 4], strides = [1, 1, 1]} : vector<2x8x32xf32> to vector<2x8x4xf32>
    %476 = vector.extract_strided_slice %381 {offsets = [0, 0, 24], sizes = [2, 8, 4], strides = [1, 1, 1]} : vector<2x8x32xf32> to vector<2x8x4xf32>
    "tpu.trace_start"() <{level = 10 : i32, message = "bqd,bkd->bqk"}> : () -> ()
    %cst_164 = arith.constant dense<0.000000e+00> : vector<2x8x8xf32>
    %477 = tpu.matmul %475, %476, %cst_164 {dimension_numbers = #tpu.dot_dimension_numbers<[2], [2], [1], [1], [0, 0, 0, 1, 1, 1], [0], [0]>} : vector<2x8x4xf32>, vector<2x8x4xf32>, vector<2x8x8xf32> -> vector<2x8x8xf32>
    "tpu.trace_stop"() : () -> ()
    %cst_165 = arith.constant dense<0xFF800000> : vector<2x8xf32>
    %478 = vector.multi_reduction <maximumf>, %477, %cst_165 [2] : vector<2x8x8xf32> to vector<2x8xf32>
    %479 = vector.shape_cast %478 : vector<2x8xf32> to vector<2x8x1xf32>
    %480 = vector.broadcast %479 : vector<2x8x1xf32> to vector<2x8x8xf32>
    %481 = arith.subf %477, %480 : vector<2x8x8xf32>
    %482 = math.exp %481 : vector<2x8x8xf32>
    %cst_166 = arith.constant dense<0.000000e+00> : vector<2x8xf32>
    %483 = vector.multi_reduction <add>, %482, %cst_166 [2] : vector<2x8x8xf32> to vector<2x8xf32>
    %484 = vector.shape_cast %483 : vector<2x8xf32> to vector<2x8x1xf32>
    %485 = tpu.reciprocal %484 {approx = true} : vector<2x8x1xf32> -> vector<2x8x1xf32>
    %486 = vector.broadcast %485 : vector<2x8x1xf32> to vector<2x8x8xf32>
    %487 = arith.mulf %482, %486 : vector<2x8x8xf32>
    %488 = vector.extract_strided_slice %383 {offsets = [0, 0, 24], sizes = [2, 8, 4], strides = [1, 1, 1]} : vector<2x8x32xf32> to vector<2x8x4xf32>
    "tpu.trace_start"() <{level = 10 : i32, message = "bqk,bkd->bqd"}> : () -> ()
    %cst_167 = arith.constant dense<0.000000e+00> : vector<2x8x4xf32>
    %489 = tpu.matmul %487, %488, %cst_167 {dimension_numbers = #tpu.dot_dimension_numbers<[2], [1], [1], [2], [0, 0, 0, 1, 1, 2], [0], [0]>} : vector<2x8x8xf32>, vector<2x8x4xf32>, vector<2x8x4xf32> -> vector<2x8x4xf32>
    "tpu.trace_stop"() : () -> ()
    %490 = vector.extract_strided_slice %384 {offsets = [0, 0, 28], sizes = [2, 8, 4], strides = [1, 1, 1]} : vector<2x8x32xf32> to vector<2x8x4xf32>
    %491 = vector.extract_strided_slice %381 {offsets = [0, 0, 28], sizes = [2, 8, 4], strides = [1, 1, 1]} : vector<2x8x32xf32> to vector<2x8x4xf32>
    "tpu.trace_start"() <{level = 10 : i32, message = "bqd,bkd->bqk"}> : () -> ()
    %cst_168 = arith.constant dense<0.000000e+00> : vector<2x8x8xf32>
    %492 = tpu.matmul %490, %491, %cst_168 {dimension_numbers = #tpu.dot_dimension_numbers<[2], [2], [1], [1], [0, 0, 0, 1, 1, 1], [0], [0]>} : vector<2x8x4xf32>, vector<2x8x4xf32>, vector<2x8x8xf32> -> vector<2x8x8xf32>
    "tpu.trace_stop"() : () -> ()
    %cst_169 = arith.constant dense<0xFF800000> : vector<2x8xf32>
    %493 = vector.multi_reduction <maximumf>, %492, %cst_169 [2] : vector<2x8x8xf32> to vector<2x8xf32>
    %494 = vector.shape_cast %493 : vector<2x8xf32> to vector<2x8x1xf32>
    %495 = vector.broadcast %494 : vector<2x8x1xf32> to vector<2x8x8xf32>
    %496 = arith.subf %492, %495 : vector<2x8x8xf32>
    %497 = math.exp %496 : vector<2x8x8xf32>
    %cst_170 = arith.constant dense<0.000000e+00> : vector<2x8xf32>
    %498 = vector.multi_reduction <add>, %497, %cst_170 [2] : vector<2x8x8xf32> to vector<2x8xf32>
    %499 = vector.shape_cast %498 : vector<2x8xf32> to vector<2x8x1xf32>
    %500 = tpu.reciprocal %499 {approx = true} : vector<2x8x1xf32> -> vector<2x8x1xf32>
    %501 = vector.broadcast %500 : vector<2x8x1xf32> to vector<2x8x8xf32>
    %502 = arith.mulf %497, %501 : vector<2x8x8xf32>
    %503 = vector.extract_strided_slice %383 {offsets = [0, 0, 28], sizes = [2, 8, 4], strides = [1, 1, 1]} : vector<2x8x32xf32> to vector<2x8x4xf32>
    "tpu.trace_start"() <{level = 10 : i32, message = "bqk,bkd->bqd"}> : () -> ()
    %cst_171 = arith.constant dense<0.000000e+00> : vector<2x8x4xf32>
    %504 = tpu.matmul %502, %503, %cst_171 {dimension_numbers = #tpu.dot_dimension_numbers<[2], [1], [1], [2], [0, 0, 0, 1, 1, 2], [0], [0]>} : vector<2x8x8xf32>, vector<2x8x4xf32>, vector<2x8x4xf32> -> vector<2x8x4xf32>
    "tpu.trace_stop"() : () -> ()
    %505 = tpu.concatenate %399, %414, %429, %444, %459, %474, %489, %504 in 2 : vector<2x8x4xf32>, vector<2x8x4xf32>, vector<2x8x4xf32>, vector<2x8x4xf32>, vector<2x8x4xf32>, vector<2x8x4xf32>, vector<2x8x4xf32>, vector<2x8x4xf32> -> vector<2x8x32xf32>
    %506 = vector.shape_cast %505 : vector<2x8x32xf32> to vector<16x32xf32>
    %cst_172 = arith.constant dense<0.000000e+00> : vector<16x32xf32>
    %507 = tpu.matmul %506, %367, %cst_172 {dimension_numbers = #tpu.dot_dimension_numbers<[1], [0], [0], [1], [0, 0, 1, 1], [], []>} : vector<16x32xf32>, vector<32x32xf32>, vector<16x32xf32> -> vector<16x32xf32>
    %508 = vector.broadcast %369 : vector<1x32xf32> to vector<16x32xf32>
    %509 = arith.addf %507, %508 : vector<16x32xf32>
    %510 = arith.addf %509, %361 : vector<16x32xf32>
    %cst_173 = arith.constant dense<0.000000e+00> : vector<16xf32>
    %511 = vector.multi_reduction <add>, %510, %cst_173 [1] : vector<16x32xf32> to vector<16xf32>
    %512 = vector.shape_cast %511 : vector<16xf32> to vector<16x1xf32>
    %cst_174 = arith.constant 3.200000e+01 : f32
    %513 = vector.broadcast %cst_174 : f32 to vector<16x1xf32>
    %514 = arith.divf %512, %513 : vector<16x1xf32>
    %515 = vector.broadcast %514 : vector<16x1xf32> to vector<16x32xf32>
    %516 = arith.subf %510, %515 : vector<16x32xf32>
    %517 = arith.mulf %516, %516 : vector<16x32xf32>
    %cst_175 = arith.constant dense<0.000000e+00> : vector<16xf32>
    %518 = vector.multi_reduction <add>, %517, %cst_175 [1] : vector<16x32xf32> to vector<16xf32>
    %519 = vector.shape_cast %518 : vector<16xf32> to vector<16x1xf32>
    %cst_176 = arith.constant 3.200000e+01 : f32
    %520 = vector.broadcast %cst_176 : f32 to vector<16x1xf32>
    %521 = arith.divf %519, %520 : vector<16x1xf32>
    %cst_177 = arith.constant 9.99999974E-6 : f32
    %522 = vector.broadcast %cst_177 : f32 to vector<16x1xf32>
    %523 = arith.addf %521, %522 : vector<16x1xf32>
    %524 = math.rsqrt %523 : vector<16x1xf32>
    %525 = vector.broadcast %524 : vector<16x1xf32> to vector<16x32xf32>
    %526 = arith.mulf %516, %525 : vector<16x32xf32>
    %527 = vector.broadcast %371 : vector<1x32xf32> to vector<16x32xf32>
    %528 = arith.mulf %526, %527 : vector<16x32xf32>
    %529 = vector.broadcast %373 : vector<1x32xf32> to vector<16x32xf32>
    %530 = arith.addf %528, %529 : vector<16x32xf32>
    %c3 = arith.constant 3 : index
    %c0_178 = arith.constant 0 : index
    %c0_179 = arith.constant 0 : index
    %531 = vector.load %arg3[%c3, %c0_178, %c0_179] : memref<4x32x96xf32, #tpu.memory_space<vmem>>, vector<1x32x96xf32>
    %532 = vector.shape_cast %531 : vector<1x32x96xf32> to vector<32x96xf32>
    %c3_180 = arith.constant 3 : index
    %c0_181 = arith.constant 0 : index
    %c0_182 = arith.constant 0 : index
    %533 = vector.load %arg4[%c3_180, %c0_181, %c0_182] : memref<4x1x96xf32, #tpu.memory_space<vmem>>, vector<1x1x96xf32>
    %534 = vector.shape_cast %533 : vector<1x1x96xf32> to vector<1x96xf32>
    %c3_183 = arith.constant 3 : index
    %c0_184 = arith.constant 0 : index
    %c0_185 = arith.constant 0 : index
    %535 = vector.load %arg5[%c3_183, %c0_184, %c0_185] : memref<4x32x32xf32, #tpu.memory_space<vmem>>, vector<1x32x32xf32>
    %536 = vector.shape_cast %535 : vector<1x32x32xf32> to vector<32x32xf32>
    %c3_186 = arith.constant 3 : index
    %c0_187 = arith.constant 0 : index
    %c0_188 = arith.constant 0 : index
    %537 = vector.load %arg6[%c3_186, %c0_187, %c0_188] : memref<4x1x32xf32, #tpu.memory_space<vmem>>, vector<1x1x32xf32>
    %538 = vector.shape_cast %537 : vector<1x1x32xf32> to vector<1x32xf32>
    %c3_189 = arith.constant 3 : index
    %c0_190 = arith.constant 0 : index
    %c0_191 = arith.constant 0 : index
    %539 = vector.load %arg7[%c3_189, %c0_190, %c0_191] : memref<4x1x32xf32, #tpu.memory_space<vmem>>, vector<1x1x32xf32>
    %540 = vector.shape_cast %539 : vector<1x1x32xf32> to vector<1x32xf32>
    %c3_192 = arith.constant 3 : index
    %c0_193 = arith.constant 0 : index
    %c0_194 = arith.constant 0 : index
    %541 = vector.load %arg8[%c3_192, %c0_193, %c0_194] : memref<4x1x32xf32, #tpu.memory_space<vmem>>, vector<1x1x32xf32>
    %542 = vector.shape_cast %541 : vector<1x1x32xf32> to vector<1x32xf32>
    %543 = vector.extract_strided_slice %532 {offsets = [0, 0], sizes = [32, 32], strides = [1, 1]} : vector<32x96xf32> to vector<32x32xf32>
    %cst_195 = arith.constant dense<0.000000e+00> : vector<16x32xf32>
    %544 = tpu.matmul %530, %543, %cst_195 {dimension_numbers = #tpu.dot_dimension_numbers<[1], [0], [0], [1], [0, 0, 1, 1], [], []>} : vector<16x32xf32>, vector<32x32xf32>, vector<16x32xf32> -> vector<16x32xf32>
    %545 = vector.extract_strided_slice %534 {offsets = [0, 0], sizes = [1, 32], strides = [1, 1]} : vector<1x96xf32> to vector<1x32xf32>
    %546 = vector.broadcast %545 : vector<1x32xf32> to vector<16x32xf32>
    %547 = arith.addf %544, %546 : vector<16x32xf32>
    %cst_196 = arith.constant 5.000000e-01 : f32
    %548 = vector.broadcast %cst_196 : f32 to vector<16x32xf32>
    %549 = arith.mulf %547, %548 : vector<16x32xf32>
    %550 = vector.extract_strided_slice %2 {offsets = [0, 0, 0], sizes = [1, 4, 32], strides = [1, 1, 1]} : vector<2x4x32xf32> to vector<1x4x32xf32>
    %551 = vector.shape_cast %550 : vector<1x4x32xf32> to vector<4x32xf32>
    %552 = vector.extract_strided_slice %532 {offsets = [0, 32], sizes = [32, 64], strides = [1, 1]} : vector<32x96xf32> to vector<32x64xf32>
    %cst_197 = arith.constant dense<0.000000e+00> : vector<4x64xf32>
    %553 = tpu.matmul %551, %552, %cst_197 {dimension_numbers = #tpu.dot_dimension_numbers<[1], [0], [0], [1], [0, 0, 1, 1], [], []>} : vector<4x32xf32>, vector<32x64xf32>, vector<4x64xf32> -> vector<4x64xf32>
    %554 = vector.extract_strided_slice %534 {offsets = [0, 32], sizes = [1, 64], strides = [1, 1]} : vector<1x96xf32> to vector<1x64xf32>
    %555 = vector.broadcast %554 : vector<1x64xf32> to vector<4x64xf32>
    %556 = arith.addf %553, %555 : vector<4x64xf32>
    %557 = vector.extract_strided_slice %556 {offsets = [0, 0], sizes = [4, 32], strides = [1, 1]} : vector<4x64xf32> to vector<4x32xf32>
    %558 = vector.extract_strided_slice %556 {offsets = [0, 32], sizes = [4, 32], strides = [1, 1]} : vector<4x64xf32> to vector<4x32xf32>
    %559 = vector.extract_strided_slice %2 {offsets = [1, 0, 0], sizes = [1, 4, 32], strides = [1, 1, 1]} : vector<2x4x32xf32> to vector<1x4x32xf32>
    %560 = vector.shape_cast %559 : vector<1x4x32xf32> to vector<4x32xf32>
    %561 = vector.extract_strided_slice %532 {offsets = [0, 32], sizes = [32, 64], strides = [1, 1]} : vector<32x96xf32> to vector<32x64xf32>
    %cst_198 = arith.constant dense<0.000000e+00> : vector<4x64xf32>
    %562 = tpu.matmul %560, %561, %cst_198 {dimension_numbers = #tpu.dot_dimension_numbers<[1], [0], [0], [1], [0, 0, 1, 1], [], []>} : vector<4x32xf32>, vector<32x64xf32>, vector<4x64xf32> -> vector<4x64xf32>
    %563 = vector.extract_strided_slice %534 {offsets = [0, 32], sizes = [1, 64], strides = [1, 1]} : vector<1x96xf32> to vector<1x64xf32>
    %564 = vector.broadcast %563 : vector<1x64xf32> to vector<4x64xf32>
    %565 = arith.addf %562, %564 : vector<4x64xf32>
    %566 = vector.extract_strided_slice %565 {offsets = [0, 0], sizes = [4, 32], strides = [1, 1]} : vector<4x64xf32> to vector<4x32xf32>
    %567 = vector.extract_strided_slice %565 {offsets = [0, 32], sizes = [4, 32], strides = [1, 1]} : vector<4x64xf32> to vector<4x32xf32>
    %568 = vector.shape_cast %557 : vector<4x32xf32> to vector<1x4x32xf32>
    %569 = vector.shape_cast %566 : vector<4x32xf32> to vector<1x4x32xf32>
    %570 = tpu.concatenate %568, %569 in 0 : vector<1x4x32xf32>, vector<1x4x32xf32> -> vector<2x4x32xf32>
    %571 = vector.shape_cast %558 : vector<4x32xf32> to vector<1x4x32xf32>
    %572 = vector.shape_cast %567 : vector<4x32xf32> to vector<1x4x32xf32>
    %573 = tpu.concatenate %571, %572 in 0 : vector<1x4x32xf32>, vector<1x4x32xf32> -> vector<2x4x32xf32>
    %574 = vector.shape_cast %549 : vector<16x32xf32> to vector<2x8x32xf32>
    %575 = vector.extract_strided_slice %574 {offsets = [0, 0, 0], sizes = [2, 8, 4], strides = [1, 1, 1]} : vector<2x8x32xf32> to vector<2x8x4xf32>
    %576 = vector.extract_strided_slice %570 {offsets = [0, 0, 0], sizes = [2, 4, 4], strides = [1, 1, 1]} : vector<2x4x32xf32> to vector<2x4x4xf32>
    "tpu.trace_start"() <{level = 10 : i32, message = "bqd,bkd->bqk"}> : () -> ()
    %cst_199 = arith.constant dense<0.000000e+00> : vector<2x8x4xf32>
    %577 = tpu.matmul %575, %576, %cst_199 {dimension_numbers = #tpu.dot_dimension_numbers<[2], [2], [1], [1], [0, 0, 0, 1, 1, 1], [0], [0]>} : vector<2x8x4xf32>, vector<2x4x4xf32>, vector<2x8x4xf32> -> vector<2x8x4xf32>
    "tpu.trace_stop"() : () -> ()
    %cst_200 = arith.constant dense<0xFF800000> : vector<2x8xf32>
    %578 = vector.multi_reduction <maximumf>, %577, %cst_200 [2] : vector<2x8x4xf32> to vector<2x8xf32>
    %579 = vector.shape_cast %578 : vector<2x8xf32> to vector<2x8x1xf32>
    %580 = vector.broadcast %579 : vector<2x8x1xf32> to vector<2x8x4xf32>
    %581 = arith.subf %577, %580 : vector<2x8x4xf32>
    %582 = math.exp %581 : vector<2x8x4xf32>
    %cst_201 = arith.constant dense<0.000000e+00> : vector<2x8xf32>
    %583 = vector.multi_reduction <add>, %582, %cst_201 [2] : vector<2x8x4xf32> to vector<2x8xf32>
    %584 = vector.shape_cast %583 : vector<2x8xf32> to vector<2x8x1xf32>
    %585 = tpu.reciprocal %584 {approx = true} : vector<2x8x1xf32> -> vector<2x8x1xf32>
    %586 = vector.broadcast %585 : vector<2x8x1xf32> to vector<2x8x4xf32>
    %587 = arith.mulf %582, %586 : vector<2x8x4xf32>
    %588 = vector.extract_strided_slice %573 {offsets = [0, 0, 0], sizes = [2, 4, 4], strides = [1, 1, 1]} : vector<2x4x32xf32> to vector<2x4x4xf32>
    "tpu.trace_start"() <{level = 10 : i32, message = "bqk,bkd->bqd"}> : () -> ()
    %cst_202 = arith.constant dense<0.000000e+00> : vector<2x8x4xf32>
    %589 = tpu.matmul %587, %588, %cst_202 {dimension_numbers = #tpu.dot_dimension_numbers<[2], [1], [1], [2], [0, 0, 0, 1, 1, 2], [0], [0]>} : vector<2x8x4xf32>, vector<2x4x4xf32>, vector<2x8x4xf32> -> vector<2x8x4xf32>
    "tpu.trace_stop"() : () -> ()
    %590 = vector.extract_strided_slice %574 {offsets = [0, 0, 4], sizes = [2, 8, 4], strides = [1, 1, 1]} : vector<2x8x32xf32> to vector<2x8x4xf32>
    %591 = vector.extract_strided_slice %570 {offsets = [0, 0, 4], sizes = [2, 4, 4], strides = [1, 1, 1]} : vector<2x4x32xf32> to vector<2x4x4xf32>
    "tpu.trace_start"() <{level = 10 : i32, message = "bqd,bkd->bqk"}> : () -> ()
    %cst_203 = arith.constant dense<0.000000e+00> : vector<2x8x4xf32>
    %592 = tpu.matmul %590, %591, %cst_203 {dimension_numbers = #tpu.dot_dimension_numbers<[2], [2], [1], [1], [0, 0, 0, 1, 1, 1], [0], [0]>} : vector<2x8x4xf32>, vector<2x4x4xf32>, vector<2x8x4xf32> -> vector<2x8x4xf32>
    "tpu.trace_stop"() : () -> ()
    %cst_204 = arith.constant dense<0xFF800000> : vector<2x8xf32>
    %593 = vector.multi_reduction <maximumf>, %592, %cst_204 [2] : vector<2x8x4xf32> to vector<2x8xf32>
    %594 = vector.shape_cast %593 : vector<2x8xf32> to vector<2x8x1xf32>
    %595 = vector.broadcast %594 : vector<2x8x1xf32> to vector<2x8x4xf32>
    %596 = arith.subf %592, %595 : vector<2x8x4xf32>
    %597 = math.exp %596 : vector<2x8x4xf32>
    %cst_205 = arith.constant dense<0.000000e+00> : vector<2x8xf32>
    %598 = vector.multi_reduction <add>, %597, %cst_205 [2] : vector<2x8x4xf32> to vector<2x8xf32>
    %599 = vector.shape_cast %598 : vector<2x8xf32> to vector<2x8x1xf32>
    %600 = tpu.reciprocal %599 {approx = true} : vector<2x8x1xf32> -> vector<2x8x1xf32>
    %601 = vector.broadcast %600 : vector<2x8x1xf32> to vector<2x8x4xf32>
    %602 = arith.mulf %597, %601 : vector<2x8x4xf32>
    %603 = vector.extract_strided_slice %573 {offsets = [0, 0, 4], sizes = [2, 4, 4], strides = [1, 1, 1]} : vector<2x4x32xf32> to vector<2x4x4xf32>
    "tpu.trace_start"() <{level = 10 : i32, message = "bqk,bkd->bqd"}> : () -> ()
    %cst_206 = arith.constant dense<0.000000e+00> : vector<2x8x4xf32>
    %604 = tpu.matmul %602, %603, %cst_206 {dimension_numbers = #tpu.dot_dimension_numbers<[2], [1], [1], [2], [0, 0, 0, 1, 1, 2], [0], [0]>} : vector<2x8x4xf32>, vector<2x4x4xf32>, vector<2x8x4xf32> -> vector<2x8x4xf32>
    "tpu.trace_stop"() : () -> ()
    %605 = vector.extract_strided_slice %574 {offsets = [0, 0, 8], sizes = [2, 8, 4], strides = [1, 1, 1]} : vector<2x8x32xf32> to vector<2x8x4xf32>
    %606 = vector.extract_strided_slice %570 {offsets = [0, 0, 8], sizes = [2, 4, 4], strides = [1, 1, 1]} : vector<2x4x32xf32> to vector<2x4x4xf32>
    "tpu.trace_start"() <{level = 10 : i32, message = "bqd,bkd->bqk"}> : () -> ()
    %cst_207 = arith.constant dense<0.000000e+00> : vector<2x8x4xf32>
    %607 = tpu.matmul %605, %606, %cst_207 {dimension_numbers = #tpu.dot_dimension_numbers<[2], [2], [1], [1], [0, 0, 0, 1, 1, 1], [0], [0]>} : vector<2x8x4xf32>, vector<2x4x4xf32>, vector<2x8x4xf32> -> vector<2x8x4xf32>
    "tpu.trace_stop"() : () -> ()
    %cst_208 = arith.constant dense<0xFF800000> : vector<2x8xf32>
    %608 = vector.multi_reduction <maximumf>, %607, %cst_208 [2] : vector<2x8x4xf32> to vector<2x8xf32>
    %609 = vector.shape_cast %608 : vector<2x8xf32> to vector<2x8x1xf32>
    %610 = vector.broadcast %609 : vector<2x8x1xf32> to vector<2x8x4xf32>
    %611 = arith.subf %607, %610 : vector<2x8x4xf32>
    %612 = math.exp %611 : vector<2x8x4xf32>
    %cst_209 = arith.constant dense<0.000000e+00> : vector<2x8xf32>
    %613 = vector.multi_reduction <add>, %612, %cst_209 [2] : vector<2x8x4xf32> to vector<2x8xf32>
    %614 = vector.shape_cast %613 : vector<2x8xf32> to vector<2x8x1xf32>
    %615 = tpu.reciprocal %614 {approx = true} : vector<2x8x1xf32> -> vector<2x8x1xf32>
    %616 = vector.broadcast %615 : vector<2x8x1xf32> to vector<2x8x4xf32>
    %617 = arith.mulf %612, %616 : vector<2x8x4xf32>
    %618 = vector.extract_strided_slice %573 {offsets = [0, 0, 8], sizes = [2, 4, 4], strides = [1, 1, 1]} : vector<2x4x32xf32> to vector<2x4x4xf32>
    "tpu.trace_start"() <{level = 10 : i32, message = "bqk,bkd->bqd"}> : () -> ()
    %cst_210 = arith.constant dense<0.000000e+00> : vector<2x8x4xf32>
    %619 = tpu.matmul %617, %618, %cst_210 {dimension_numbers = #tpu.dot_dimension_numbers<[2], [1], [1], [2], [0, 0, 0, 1, 1, 2], [0], [0]>} : vector<2x8x4xf32>, vector<2x4x4xf32>, vector<2x8x4xf32> -> vector<2x8x4xf32>
    "tpu.trace_stop"() : () -> ()
    %620 = vector.extract_strided_slice %574 {offsets = [0, 0, 12], sizes = [2, 8, 4], strides = [1, 1, 1]} : vector<2x8x32xf32> to vector<2x8x4xf32>
    %621 = vector.extract_strided_slice %570 {offsets = [0, 0, 12], sizes = [2, 4, 4], strides = [1, 1, 1]} : vector<2x4x32xf32> to vector<2x4x4xf32>
    "tpu.trace_start"() <{level = 10 : i32, message = "bqd,bkd->bqk"}> : () -> ()
    %cst_211 = arith.constant dense<0.000000e+00> : vector<2x8x4xf32>
    %622 = tpu.matmul %620, %621, %cst_211 {dimension_numbers = #tpu.dot_dimension_numbers<[2], [2], [1], [1], [0, 0, 0, 1, 1, 1], [0], [0]>} : vector<2x8x4xf32>, vector<2x4x4xf32>, vector<2x8x4xf32> -> vector<2x8x4xf32>
    "tpu.trace_stop"() : () -> ()
    %cst_212 = arith.constant dense<0xFF800000> : vector<2x8xf32>
    %623 = vector.multi_reduction <maximumf>, %622, %cst_212 [2] : vector<2x8x4xf32> to vector<2x8xf32>
    %624 = vector.shape_cast %623 : vector<2x8xf32> to vector<2x8x1xf32>
    %625 = vector.broadcast %624 : vector<2x8x1xf32> to vector<2x8x4xf32>
    %626 = arith.subf %622, %625 : vector<2x8x4xf32>
    %627 = math.exp %626 : vector<2x8x4xf32>
    %cst_213 = arith.constant dense<0.000000e+00> : vector<2x8xf32>
    %628 = vector.multi_reduction <add>, %627, %cst_213 [2] : vector<2x8x4xf32> to vector<2x8xf32>
    %629 = vector.shape_cast %628 : vector<2x8xf32> to vector<2x8x1xf32>
    %630 = tpu.reciprocal %629 {approx = true} : vector<2x8x1xf32> -> vector<2x8x1xf32>
    %631 = vector.broadcast %630 : vector<2x8x1xf32> to vector<2x8x4xf32>
    %632 = arith.mulf %627, %631 : vector<2x8x4xf32>
    %633 = vector.extract_strided_slice %573 {offsets = [0, 0, 12], sizes = [2, 4, 4], strides = [1, 1, 1]} : vector<2x4x32xf32> to vector<2x4x4xf32>
    "tpu.trace_start"() <{level = 10 : i32, message = "bqk,bkd->bqd"}> : () -> ()
    %cst_214 = arith.constant dense<0.000000e+00> : vector<2x8x4xf32>
    %634 = tpu.matmul %632, %633, %cst_214 {dimension_numbers = #tpu.dot_dimension_numbers<[2], [1], [1], [2], [0, 0, 0, 1, 1, 2], [0], [0]>} : vector<2x8x4xf32>, vector<2x4x4xf32>, vector<2x8x4xf32> -> vector<2x8x4xf32>
    "tpu.trace_stop"() : () -> ()
    %635 = vector.extract_strided_slice %574 {offsets = [0, 0, 16], sizes = [2, 8, 4], strides = [1, 1, 1]} : vector<2x8x32xf32> to vector<2x8x4xf32>
    %636 = vector.extract_strided_slice %570 {offsets = [0, 0, 16], sizes = [2, 4, 4], strides = [1, 1, 1]} : vector<2x4x32xf32> to vector<2x4x4xf32>
    "tpu.trace_start"() <{level = 10 : i32, message = "bqd,bkd->bqk"}> : () -> ()
    %cst_215 = arith.constant dense<0.000000e+00> : vector<2x8x4xf32>
    %637 = tpu.matmul %635, %636, %cst_215 {dimension_numbers = #tpu.dot_dimension_numbers<[2], [2], [1], [1], [0, 0, 0, 1, 1, 1], [0], [0]>} : vector<2x8x4xf32>, vector<2x4x4xf32>, vector<2x8x4xf32> -> vector<2x8x4xf32>
    "tpu.trace_stop"() : () -> ()
    %cst_216 = arith.constant dense<0xFF800000> : vector<2x8xf32>
    %638 = vector.multi_reduction <maximumf>, %637, %cst_216 [2] : vector<2x8x4xf32> to vector<2x8xf32>
    %639 = vector.shape_cast %638 : vector<2x8xf32> to vector<2x8x1xf32>
    %640 = vector.broadcast %639 : vector<2x8x1xf32> to vector<2x8x4xf32>
    %641 = arith.subf %637, %640 : vector<2x8x4xf32>
    %642 = math.exp %641 : vector<2x8x4xf32>
    %cst_217 = arith.constant dense<0.000000e+00> : vector<2x8xf32>
    %643 = vector.multi_reduction <add>, %642, %cst_217 [2] : vector<2x8x4xf32> to vector<2x8xf32>
    %644 = vector.shape_cast %643 : vector<2x8xf32> to vector<2x8x1xf32>
    %645 = tpu.reciprocal %644 {approx = true} : vector<2x8x1xf32> -> vector<2x8x1xf32>
    %646 = vector.broadcast %645 : vector<2x8x1xf32> to vector<2x8x4xf32>
    %647 = arith.mulf %642, %646 : vector<2x8x4xf32>
    %648 = vector.extract_strided_slice %573 {offsets = [0, 0, 16], sizes = [2, 4, 4], strides = [1, 1, 1]} : vector<2x4x32xf32> to vector<2x4x4xf32>
    "tpu.trace_start"() <{level = 10 : i32, message = "bqk,bkd->bqd"}> : () -> ()
    %cst_218 = arith.constant dense<0.000000e+00> : vector<2x8x4xf32>
    %649 = tpu.matmul %647, %648, %cst_218 {dimension_numbers = #tpu.dot_dimension_numbers<[2], [1], [1], [2], [0, 0, 0, 1, 1, 2], [0], [0]>} : vector<2x8x4xf32>, vector<2x4x4xf32>, vector<2x8x4xf32> -> vector<2x8x4xf32>
    "tpu.trace_stop"() : () -> ()
    %650 = vector.extract_strided_slice %574 {offsets = [0, 0, 20], sizes = [2, 8, 4], strides = [1, 1, 1]} : vector<2x8x32xf32> to vector<2x8x4xf32>
    %651 = vector.extract_strided_slice %570 {offsets = [0, 0, 20], sizes = [2, 4, 4], strides = [1, 1, 1]} : vector<2x4x32xf32> to vector<2x4x4xf32>
    "tpu.trace_start"() <{level = 10 : i32, message = "bqd,bkd->bqk"}> : () -> ()
    %cst_219 = arith.constant dense<0.000000e+00> : vector<2x8x4xf32>
    %652 = tpu.matmul %650, %651, %cst_219 {dimension_numbers = #tpu.dot_dimension_numbers<[2], [2], [1], [1], [0, 0, 0, 1, 1, 1], [0], [0]>} : vector<2x8x4xf32>, vector<2x4x4xf32>, vector<2x8x4xf32> -> vector<2x8x4xf32>
    "tpu.trace_stop"() : () -> ()
    %cst_220 = arith.constant dense<0xFF800000> : vector<2x8xf32>
    %653 = vector.multi_reduction <maximumf>, %652, %cst_220 [2] : vector<2x8x4xf32> to vector<2x8xf32>
    %654 = vector.shape_cast %653 : vector<2x8xf32> to vector<2x8x1xf32>
    %655 = vector.broadcast %654 : vector<2x8x1xf32> to vector<2x8x4xf32>
    %656 = arith.subf %652, %655 : vector<2x8x4xf32>
    %657 = math.exp %656 : vector<2x8x4xf32>
    %cst_221 = arith.constant dense<0.000000e+00> : vector<2x8xf32>
    %658 = vector.multi_reduction <add>, %657, %cst_221 [2] : vector<2x8x4xf32> to vector<2x8xf32>
    %659 = vector.shape_cast %658 : vector<2x8xf32> to vector<2x8x1xf32>
    %660 = tpu.reciprocal %659 {approx = true} : vector<2x8x1xf32> -> vector<2x8x1xf32>
    %661 = vector.broadcast %660 : vector<2x8x1xf32> to vector<2x8x4xf32>
    %662 = arith.mulf %657, %661 : vector<2x8x4xf32>
    %663 = vector.extract_strided_slice %573 {offsets = [0, 0, 20], sizes = [2, 4, 4], strides = [1, 1, 1]} : vector<2x4x32xf32> to vector<2x4x4xf32>
    "tpu.trace_start"() <{level = 10 : i32, message = "bqk,bkd->bqd"}> : () -> ()
    %cst_222 = arith.constant dense<0.000000e+00> : vector<2x8x4xf32>
    %664 = tpu.matmul %662, %663, %cst_222 {dimension_numbers = #tpu.dot_dimension_numbers<[2], [1], [1], [2], [0, 0, 0, 1, 1, 2], [0], [0]>} : vector<2x8x4xf32>, vector<2x4x4xf32>, vector<2x8x4xf32> -> vector<2x8x4xf32>
    "tpu.trace_stop"() : () -> ()
    %665 = vector.extract_strided_slice %574 {offsets = [0, 0, 24], sizes = [2, 8, 4], strides = [1, 1, 1]} : vector<2x8x32xf32> to vector<2x8x4xf32>
    %666 = vector.extract_strided_slice %570 {offsets = [0, 0, 24], sizes = [2, 4, 4], strides = [1, 1, 1]} : vector<2x4x32xf32> to vector<2x4x4xf32>
    "tpu.trace_start"() <{level = 10 : i32, message = "bqd,bkd->bqk"}> : () -> ()
    %cst_223 = arith.constant dense<0.000000e+00> : vector<2x8x4xf32>
    %667 = tpu.matmul %665, %666, %cst_223 {dimension_numbers = #tpu.dot_dimension_numbers<[2], [2], [1], [1], [0, 0, 0, 1, 1, 1], [0], [0]>} : vector<2x8x4xf32>, vector<2x4x4xf32>, vector<2x8x4xf32> -> vector<2x8x4xf32>
    "tpu.trace_stop"() : () -> ()
    %cst_224 = arith.constant dense<0xFF800000> : vector<2x8xf32>
    %668 = vector.multi_reduction <maximumf>, %667, %cst_224 [2] : vector<2x8x4xf32> to vector<2x8xf32>
    %669 = vector.shape_cast %668 : vector<2x8xf32> to vector<2x8x1xf32>
    %670 = vector.broadcast %669 : vector<2x8x1xf32> to vector<2x8x4xf32>
    %671 = arith.subf %667, %670 : vector<2x8x4xf32>
    %672 = math.exp %671 : vector<2x8x4xf32>
    %cst_225 = arith.constant dense<0.000000e+00> : vector<2x8xf32>
    %673 = vector.multi_reduction <add>, %672, %cst_225 [2] : vector<2x8x4xf32> to vector<2x8xf32>
    %674 = vector.shape_cast %673 : vector<2x8xf32> to vector<2x8x1xf32>
    %675 = tpu.reciprocal %674 {approx = true} : vector<2x8x1xf32> -> vector<2x8x1xf32>
    %676 = vector.broadcast %675 : vector<2x8x1xf32> to vector<2x8x4xf32>
    %677 = arith.mulf %672, %676 : vector<2x8x4xf32>
    %678 = vector.extract_strided_slice %573 {offsets = [0, 0, 24], sizes = [2, 4, 4], strides = [1, 1, 1]} : vector<2x4x32xf32> to vector<2x4x4xf32>
    "tpu.trace_start"() <{level = 10 : i32, message = "bqk,bkd->bqd"}> : () -> ()
    %cst_226 = arith.constant dense<0.000000e+00> : vector<2x8x4xf32>
    %679 = tpu.matmul %677, %678, %cst_226 {dimension_numbers = #tpu.dot_dimension_numbers<[2], [1], [1], [2], [0, 0, 0, 1, 1, 2], [0], [0]>} : vector<2x8x4xf32>, vector<2x4x4xf32>, vector<2x8x4xf32> -> vector<2x8x4xf32>
    "tpu.trace_stop"() : () -> ()
    %680 = vector.extract_strided_slice %574 {offsets = [0, 0, 28], sizes = [2, 8, 4], strides = [1, 1, 1]} : vector<2x8x32xf32> to vector<2x8x4xf32>
    %681 = vector.extract_strided_slice %570 {offsets = [0, 0, 28], sizes = [2, 4, 4], strides = [1, 1, 1]} : vector<2x4x32xf32> to vector<2x4x4xf32>
    "tpu.trace_start"() <{level = 10 : i32, message = "bqd,bkd->bqk"}> : () -> ()
    %cst_227 = arith.constant dense<0.000000e+00> : vector<2x8x4xf32>
    %682 = tpu.matmul %680, %681, %cst_227 {dimension_numbers = #tpu.dot_dimension_numbers<[2], [2], [1], [1], [0, 0, 0, 1, 1, 1], [0], [0]>} : vector<2x8x4xf32>, vector<2x4x4xf32>, vector<2x8x4xf32> -> vector<2x8x4xf32>
    "tpu.trace_stop"() : () -> ()
    %cst_228 = arith.constant dense<0xFF800000> : vector<2x8xf32>
    %683 = vector.multi_reduction <maximumf>, %682, %cst_228 [2] : vector<2x8x4xf32> to vector<2x8xf32>
    %684 = vector.shape_cast %683 : vector<2x8xf32> to vector<2x8x1xf32>
    %685 = vector.broadcast %684 : vector<2x8x1xf32> to vector<2x8x4xf32>
    %686 = arith.subf %682, %685 : vector<2x8x4xf32>
    %687 = math.exp %686 : vector<2x8x4xf32>
    %cst_229 = arith.constant dense<0.000000e+00> : vector<2x8xf32>
    %688 = vector.multi_reduction <add>, %687, %cst_229 [2] : vector<2x8x4xf32> to vector<2x8xf32>
    %689 = vector.shape_cast %688 : vector<2x8xf32> to vector<2x8x1xf32>
    %690 = tpu.reciprocal %689 {approx = true} : vector<2x8x1xf32> -> vector<2x8x1xf32>
    %691 = vector.broadcast %690 : vector<2x8x1xf32> to vector<2x8x4xf32>
    %692 = arith.mulf %687, %691 : vector<2x8x4xf32>
    %693 = vector.extract_strided_slice %573 {offsets = [0, 0, 28], sizes = [2, 4, 4], strides = [1, 1, 1]} : vector<2x4x32xf32> to vector<2x4x4xf32>
    "tpu.trace_start"() <{level = 10 : i32, message = "bqk,bkd->bqd"}> : () -> ()
    %cst_230 = arith.constant dense<0.000000e+00> : vector<2x8x4xf32>
    %694 = tpu.matmul %692, %693, %cst_230 {dimension_numbers = #tpu.dot_dimension_numbers<[2], [1], [1], [2], [0, 0, 0, 1, 1, 2], [0], [0]>} : vector<2x8x4xf32>, vector<2x4x4xf32>, vector<2x8x4xf32> -> vector<2x8x4xf32>
    "tpu.trace_stop"() : () -> ()
    %695 = tpu.concatenate %589, %604, %619, %634, %649, %664, %679, %694 in 2 : vector<2x8x4xf32>, vector<2x8x4xf32>, vector<2x8x4xf32>, vector<2x8x4xf32>, vector<2x8x4xf32>, vector<2x8x4xf32>, vector<2x8x4xf32>, vector<2x8x4xf32> -> vector<2x8x32xf32>
    %696 = vector.shape_cast %695 : vector<2x8x32xf32> to vector<16x32xf32>
    %cst_231 = arith.constant dense<0.000000e+00> : vector<16x32xf32>
    %697 = tpu.matmul %696, %536, %cst_231 {dimension_numbers = #tpu.dot_dimension_numbers<[1], [0], [0], [1], [0, 0, 1, 1], [], []>} : vector<16x32xf32>, vector<32x32xf32>, vector<16x32xf32> -> vector<16x32xf32>
    %698 = vector.broadcast %538 : vector<1x32xf32> to vector<16x32xf32>
    %699 = arith.addf %697, %698 : vector<16x32xf32>
    %700 = arith.addf %699, %530 : vector<16x32xf32>
    %cst_232 = arith.constant dense<0.000000e+00> : vector<16xf32>
    %701 = vector.multi_reduction <add>, %700, %cst_232 [1] : vector<16x32xf32> to vector<16xf32>
    %702 = vector.shape_cast %701 : vector<16xf32> to vector<16x1xf32>
    %cst_233 = arith.constant 3.200000e+01 : f32
    %703 = vector.broadcast %cst_233 : f32 to vector<16x1xf32>
    %704 = arith.divf %702, %703 : vector<16x1xf32>
    %705 = vector.broadcast %704 : vector<16x1xf32> to vector<16x32xf32>
    %706 = arith.subf %700, %705 : vector<16x32xf32>
    %707 = arith.mulf %706, %706 : vector<16x32xf32>
    %cst_234 = arith.constant dense<0.000000e+00> : vector<16xf32>
    %708 = vector.multi_reduction <add>, %707, %cst_234 [1] : vector<16x32xf32> to vector<16xf32>
    %709 = vector.shape_cast %708 : vector<16xf32> to vector<16x1xf32>
    %cst_235 = arith.constant 3.200000e+01 : f32
    %710 = vector.broadcast %cst_235 : f32 to vector<16x1xf32>
    %711 = arith.divf %709, %710 : vector<16x1xf32>
    %cst_236 = arith.constant 9.99999974E-6 : f32
    %712 = vector.broadcast %cst_236 : f32 to vector<16x1xf32>
    %713 = arith.addf %711, %712 : vector<16x1xf32>
    %714 = math.rsqrt %713 : vector<16x1xf32>
    %715 = vector.broadcast %714 : vector<16x1xf32> to vector<16x32xf32>
    %716 = arith.mulf %706, %715 : vector<16x32xf32>
    %717 = vector.broadcast %540 : vector<1x32xf32> to vector<16x32xf32>
    %718 = arith.mulf %716, %717 : vector<16x32xf32>
    %719 = vector.broadcast %542 : vector<1x32xf32> to vector<16x32xf32>
    %720 = arith.addf %718, %719 : vector<16x32xf32>
    %721 = vector.shape_cast %720 : vector<16x32xf32> to vector<2x8x32xf32>
    %c0_237 = arith.constant 0 : index
    %c0_238 = arith.constant 0 : index
    %c0_239 = arith.constant 0 : index
    %722 = vector.load %arg9[%c0_237, %c0_238, %c0_239] : memref<2x8x32xf32, #tpu.memory_space<vmem>>, vector<2x8x32xf32>
    tpu.vector_store %arg9[%c0_237, %c0_238, %c0_239], %721 {strides = array<i32>} : memref<2x8x32xf32, #tpu.memory_space<vmem>>, vector<2x8x32xf32>,
    return
  }
  func.func @transform_0(%arg0: i32) -> (i32, i32, i32) {
    %c0_i32 = arith.constant 0 : i32
    %c0_i32_0 = arith.constant 0 : i32
    %c0_i32_1 = arith.constant 0 : i32
    %c0_i32_2 = arith.constant 0 : i32
    return %c0_i32, %c0_i32_0, %c0_i32_1 : i32, i32, i32
  }
  func.func @transform_1(%arg0: i32) -> (i32, i32, i32) {
    %c0_i32 = arith.constant 0 : i32
    %c0_i32_0 = arith.constant 0 : i32
    %c0_i32_1 = arith.constant 0 : i32
    %c0_i32_2 = arith.constant 0 : i32
    return %c0_i32, %c0_i32_0, %c0_i32_1 : i32, i32, i32
  }
  func.func @transform_2(%arg0: i32) -> (i32, i32, i32) {
    %c0_i32 = arith.constant 0 : i32
    %c0_i32_0 = arith.constant 0 : i32
    %c0_i32_1 = arith.constant 0 : i32
    %c0_i32_2 = arith.constant 0 : i32
    return %c0_i32, %c0_i32_0, %c0_i32_1 : i32, i32, i32
  }
  func.func @transform_3(%arg0: i32) -> (i32, i32, i32) {
    %c0_i32 = arith.constant 0 : i32
    %c0_i32_0 = arith.constant 0 : i32
    %c0_i32_1 = arith.constant 0 : i32
    %c0_i32_2 = arith.constant 0 : i32
    return %c0_i32, %c0_i32_0, %c0_i32_1 : i32, i32, i32
  }
  func.func @transform_4(%arg0: i32) -> (i32, i32, i32) {
    %c0_i32 = arith.constant 0 : i32
    %c0_i32_0 = arith.constant 0 : i32
    %c0_i32_1 = arith.constant 0 : i32
    %c0_i32_2 = arith.constant 0 : i32
    return %c0_i32, %c0_i32_0, %c0_i32_1 : i32, i32, i32
  }
  func.func @transform_5(%arg0: i32) -> (i32, i32, i32) {
    %c0_i32 = arith.constant 0 : i32
    %c0_i32_0 = arith.constant 0 : i32
    %c0_i32_1 = arith.constant 0 : i32
    %c0_i32_2 = arith.constant 0 : i32
    return %c0_i32, %c0_i32_0, %c0_i32_1 : i32, i32, i32
  }
  func.func @transform_6(%arg0: i32) -> (i32, i32, i32) {
    %c0_i32 = arith.constant 0 : i32
    %c0_i32_0 = arith.constant 0 : i32
    %c0_i32_1 = arith.constant 0 : i32
    %c0_i32_2 = arith.constant 0 : i32
    return %c0_i32, %c0_i32_0, %c0_i32_1 : i32, i32, i32
  }
  func.func @transform_7(%arg0: i32) -> (i32, i32, i32) {
    %c0_i32 = arith.constant 0 : i32
    %c0_i32_0 = arith.constant 0 : i32
    %c0_i32_1 = arith.constant 0 : i32
    %c0_i32_2 = arith.constant 0 : i32
    return %c0_i32, %c0_i32_0, %c0_i32_1 : i32, i32, i32
  }
  func.func @transform_8(%arg0: i32) -> (i32, i32, i32) {
    %c0_i32 = arith.constant 0 : i32
    %c0_i32_0 = arith.constant 0 : i32
    %c0_i32_1 = arith.constant 0 : i32
    %c0_i32_2 = arith.constant 0 : i32
    return %c0_i32, %c0_i32_0, %c0_i32_1 : i32, i32, i32
  }
}

</mosaic_0001>

<llo_original>
// kernel: tpu_custom_call.1
$region0: #{tpu_custom_call.1}
  #allocation0 [shape = 'u32[]', space=smem, size = 0x4, offset = 0x4, fixed_abs, tag = 'smem constant byte address 0x4 - core index']
  #allocation1 [shape = 'u32[72,128]{1,0:T(1,128)}', space=vmem, size = 0x9000, scoped, tag = 'internal scratch']
  %s0 = inlined_call_operand.hbm [shape: f32[2,8,32], index: 0, kind: input, shape index: {}]
  %s1 = inlined_call_operand.hbm [shape: f32[2,4,32], index: 1, kind: input, shape index: {}]
  %s2 = inlined_call_operand.hbm [shape: f32[4,32,96], index: 2, kind: input, shape index: {}]
  %s3 = inlined_call_operand.hbm [shape: f32[4,1,96], index: 3, kind: input, shape index: {}]
  %s4 = inlined_call_operand.hbm [shape: f32[4,32,32], index: 4, kind: input, shape index: {}]
  %s5 = inlined_call_operand.vmem [shape: f32[4,1,32], index: 5, kind: input, shape index: {}]
  %s6 = inlined_call_operand.hbm [shape: f32[4,1,32], index: 6, kind: input, shape index: {}]
  %s7 = inlined_call_operand.hbm [shape: f32[4,1,32], index: 7, kind: input, shape index: {}]
  %s8 = inlined_call_operand.hbm [shape: f32[2,8,32], index: 8, kind: output, shape index: {}]
  %s9 = sld [smem:[#allocation0]]
  $region70: #{tpu_custom_call.1} parent=0
    _
  %s11 = ssub.s32 1, %s9
  %s12 = scalar_select 0, %s11, %s9
  $region1: #{tpu_custom_call.1} parent=0
    #allocation2 [shape = 'u8[8192]{0}', space=vmem, size = 0x2000, scoped, tag = 'input window, operand 0, single buffered']
    #allocation3 [shape = 's32[1]{0}', space=sflag, size = 0x4, scoped, tag = 'scoped memory for tpu_custom_call.1']
    #allocation4 [shape = 's32[1]{0}', space=sflag, size = 0x4, scoped, tag = 'scoped memory for tpu_custom_call.1']
    #allocation5 [shape = 'u8[4096]{0}', space=vmem, size = 0x1000, scoped, tag = 'input window, operand 1, single buffered']
    #allocation6 [shape = 's32[1]{0}', space=sflag, size = 0x4, scoped, tag = 'scoped memory for tpu_custom_call.1']
    #allocation7 [shape = 'u8[65536]{0}', space=vmem, size = 0x10000, scoped, tag = 'input window, operand 2, single buffered']
    #allocation8 [shape = 'u8[2048]{0}', space=vmem, size = 0x800, scoped, tag = 'input window, operand 3, single buffered']
    #allocation9 [shape = 's32[1]{0}', space=sflag, size = 0x4, scoped, tag = 'scoped memory for tpu_custom_call.1']
    #allocation10 [shape = 'u8[65536]{0}', space=vmem, size = 0x10000, scoped, tag = 'input window, operand 4, single buffered']
    #allocation11 [shape = 'u8[2048]{0}', space=vmem, size = 0x800, scoped, tag = 'input window, operand 6, single buffered']
    #allocation12 [shape = 's32[1]{0}', space=sflag, size = 0x4, scoped, tag = 'scoped memory for tpu_custom_call.1']
    #allocation13 [shape = 'u8[2048]{0}', space=vmem, size = 0x800, scoped, tag = 'input window, operand 7, single buffered']
    #allocation14 [shape = 'u8[8192]{0}', space=vmem, size = 0x2000, scoped, tag = 'output window, operand 0, single buffered']
    %13 = vsyncpa [#allocation3], 0
    %14 = vsyncpa [#allocation6], 0
    %15 = vsyncpa [#allocation9], 0
    %16 = vsyncpa [#allocation12], 0
    %17 = vsyncpa [#allocation4], 0
    // Predicated region
    $region2: #{tpu_custom_call.1} parent=1 // pred_check
      _
    $region3: #{tpu_custom_call.1} parent=1 // pred_check_branch
      %19 = sbr.rel (0) target = $region5
    $region4: #{tpu_custom_call.1} parent=1 // pred_region
      %21 = vsyncadd [#allocation3], 0
      %s22 = sshll.u32 %s0, 4
      %s23 = int_to_ptr.hbm [resolvable:$true] %s22
      %s24 = sshll.u32 [#allocation2], 4
      %s25 = int_to_ptr.vmem [resolvable:$true] %s24
      %30 = dma.hbm_to_vmem [thread:$0]  %s23, 256, %s25, [#allocation3], 128, 128, 8
    $region5: #{tpu_custom_call.1} parent=1 // pred_fallthru
      _
    // Predicated region
    $region6: #{tpu_custom_call.1} parent=1 // pred_check
      _
    $region7: #{tpu_custom_call.1} parent=1 // pred_check_branch
      %32 = sbr.rel (0) target = $region9
    $region8: #{tpu_custom_call.1} parent=1 // pred_region
      %34 = vsyncadd [#allocation6], 0
      %s35 = sshll.u32 %s1, 4
      %s36 = int_to_ptr.hbm [resolvable:$true] %s35
      %s37 = sshll.u32 [#allocation5], 4
      %s38 = int_to_ptr.vmem [resolvable:$true] %s37
      %43 = dma.hbm_to_vmem [thread:$0]  %s36, 128, %s38, [#allocation6], 64, 64, 4
    $region9: #{tpu_custom_call.1} parent=1 // pred_fallthru
      _
    // Predicated region
    $region10: #{tpu_custom_call.1} parent=1 // pred_check
      _
    $region11: #{tpu_custom_call.1} parent=1 // pred_check_branch
      %45 = sbr.rel (0) target = $region13
    $region12: #{tpu_custom_call.1} parent=1 // pred_region
      %47 = vsyncadd [#allocation6], 0
      %s48 = sshll.u32 %s2, 4
      %s49 = int_to_ptr.hbm [resolvable:$true] %s48
      %s50 = sshll.u32 [#allocation7], 4
      %s51 = int_to_ptr.vmem [resolvable:$true] %s50
      %56 = dma.hbm_to_vmem [thread:$0]  %s49, 2048, %s51, [#allocation6], 128, 128, 8
    $region13: #{tpu_custom_call.1} parent=1 // pred_fallthru
      _
    // Predicated region
    $region14: #{tpu_custom_call.1} parent=1 // pred_check
      _
    $region15: #{tpu_custom_call.1} parent=1 // pred_check_branch
      %58 = sbr.rel (0) target = $region17
    $region16: #{tpu_custom_call.1} parent=1 // pred_region
      %60 = vsyncadd [#allocation9], 0
      %s61 = sshll.u32 %s3, 4
      %s62 = int_to_ptr.hbm [resolvable:$true] %s61
      %s63 = sshll.u32 [#allocation8], 4
      %s64 = int_to_ptr.vmem [resolvable:$true] %s63
      %69 = dma.hbm_to_vmem [thread:$0]  %s62, 64, %s64, [#allocation9], 16, 16, 1
    $region17: #{tpu_custom_call.1} parent=1 // pred_fallthru
      _
    // Predicated region
    $region18: #{tpu_custom_call.1} parent=1 // pred_check
      _
    $region19: #{tpu_custom_call.1} parent=1 // pred_check_branch
      %71 = sbr.rel (0) target = $region21
    $region20: #{tpu_custom_call.1} parent=1 // pred_region
      %73 = vsyncadd [#allocation9], 0
      %s74 = sshll.u32 %s4, 4
      %s75 = int_to_ptr.hbm [resolvable:$true] %s74
      %s76 = sshll.u32 [#allocation10], 4
      %s77 = int_to_ptr.vmem [resolvable:$true] %s76
      %82 = dma.hbm_to_vmem [thread:$0]  %s75, 2048, %s77, [#allocation9], 128, 128, 8
    $region21: #{tpu_custom_call.1} parent=1 // pred_fallthru
      _
    // Predicated region
    $region22: #{tpu_custom_call.1} parent=1 // pred_check
      _
    $region23: #{tpu_custom_call.1} parent=1 // pred_check_branch
      %84 = sbr.rel (0) target = $region25
    $region24: #{tpu_custom_call.1} parent=1 // pred_region
      _
    $region25: #{tpu_custom_call.1} parent=1 // pred_fallthru
      _
    // Predicated region
    $region26: #{tpu_custom_call.1} parent=1 // pred_check
      _
    $region27: #{tpu_custom_call.1} parent=1 // pred_check_branch
      %86 = sbr.rel (0) target = $region29
    $region28: #{tpu_custom_call.1} parent=1 // pred_region
      %88 = vsyncadd [#allocation12], 0
      %s89 = sshll.u32 %s6, 4
      %s90 = int_to_ptr.hbm [resolvable:$true] %s89
      %s91 = sshll.u32 [#allocation11], 4
      %s92 = int_to_ptr.vmem [resolvable:$true] %s91
      %97 = dma.hbm_to_vmem [thread:$0]  %s90, 64, %s92, [#allocation12], 16, 16, 1
    $region29: #{tpu_custom_call.1} parent=1 // pred_fallthru
      _
    // Predicated region
    $region30: #{tpu_custom_call.1} parent=1 // pred_check
      _
    $region31: #{tpu_custom_call.1} parent=1 // pred_check_branch
      %99 = sbr.rel (0) target = $region33
    $region32: #{tpu_custom_call.1} parent=1 // pred_region
      %101 = vsyncadd [#allocation12], 0
      %s102 = sshll.u32 %s7, 4
      %s103 = int_to_ptr.hbm [resolvable:$true] %s102
      %s104 = sshll.u32 [#allocation13], 4
      %s105 = int_to_ptr.vmem [resolvable:$true] %s104
      %110 = dma.hbm_to_vmem [thread:$0]  %s103, 64, %s105, [#allocation12], 16, 16, 1
    $region33: #{tpu_custom_call.1} parent=1 // pred_fallthru
      _
    // Predicated region
    $region34: #{tpu_custom_call.1} parent=1 // pred_check
      _
    $region35: #{tpu_custom_call.1} parent=1 // pred_check_branch
      %112 = sbr.rel (0) target = $region37
    $region36: #{tpu_custom_call.1} parent=1 // pred_region
      %114 = dma.done [#allocation3], 256
    $region37: #{tpu_custom_call.1} parent=1 // pred_fallthru
      _
    // Predicated region
    $region38: #{tpu_custom_call.1} parent=1 // pred_check
      _
    $region39: #{tpu_custom_call.1} parent=1 // pred_check_branch
      %116 = sbr.rel (0) target = $region41
    $region40: #{tpu_custom_call.1} parent=1 // pred_region
      %118 = dma.done [#allocation6], 128
    $region41: #{tpu_custom_call.1} parent=1 // pred_fallthru
      _
    // Predicated region
    $region42: #{tpu_custom_call.1} parent=1 // pred_check
      _
    $region43: #{tpu_custom_call.1} parent=1 // pred_check_branch
      %120 = sbr.rel (0) target = $region45
    $region44: #{tpu_custom_call.1} parent=1 // pred_region
      %122 = dma.done [#allocation6], 2048
    $region45: #{tpu_custom_call.1} parent=1 // pred_fallthru
      _
    // Predicated region
    $region46: #{tpu_custom_call.1} parent=1 // pred_check
      _
    $region47: #{tpu_custom_call.1} parent=1 // pred_check_branch
      %124 = sbr.rel (0) target = $region49
    $region48: #{tpu_custom_call.1} parent=1 // pred_region
      %126 = dma.done [#allocation9], 64
    $region49: #{tpu_custom_call.1} parent=1 // pred_fallthru
      _
    // Predicated region
    $region50: #{tpu_custom_call.1} parent=1 // pred_check
      _
    $region51: #{tpu_custom_call.1} parent=1 // pred_check_branch
      %128 = sbr.rel (0) target = $region53
    $region52: #{tpu_custom_call.1} parent=1 // pred_region
      %130 = dma.done [#allocation9], 2048
    $region53: #{tpu_custom_call.1} parent=1 // pred_fallthru
      _
    // Predicated region
    $region54: #{tpu_custom_call.1} parent=1 // pred_check
      _
    $region55: #{tpu_custom_call.1} parent=1 // pred_check_branch
      %132 = sbr.rel (0) target = $region57
    $region56: #{tpu_custom_call.1} parent=1 // pred_region
      %134 = dma.done [#allocation12], 64
    $region57: #{tpu_custom_call.1} parent=1 // pred_fallthru
      _
    // Predicated region
    $region58: #{tpu_custom_call.1} parent=1 // pred_check
      _
    $region59: #{tpu_custom_call.1} parent=1 // pred_check_branch
      %136 = sbr.rel (0) target = $region61
    $region60: #{tpu_custom_call.1} parent=1 // pred_region
      %138 = dma.done [#allocation12], 64
    $region61: #{tpu_custom_call.1} parent=1 // pred_fallthru
      _
    %v139 = vld [vmem:[#allocation2] sm:$0xff]
    %v140 = vld [vmem:[#allocation2 + $0x8] sm:$0xff]
    %v141 = vld [vmem:[#allocation5] sm:$0xf]
    %v142 = vld [vmem:[#allocation5 + $0x4] sm:$0xf]
    %v143 = vld [vmem:[#allocation7] sm:$0xff]
    %v144 = vld [vmem:[#allocation7 + $0x8] sm:$0xff]
    %v145 = vld [vmem:[#allocation7 + $0x10] sm:$0xff]
    %v146 = vld [vmem:[#allocation7 + $0x18] sm:$0xff]
    %v147 = vld [vmem:[#allocation8] sm:$0x1]
    %v148 = vld [vmem:[#allocation10] sm:$0xff]
    %v149 = vld [vmem:[#allocation10 + $0x8] sm:$0xff]
    %v150 = vld [vmem:[#allocation10 + $0x10] sm:$0xff]
    %v151 = vld [vmem:[#allocation10 + $0x18] sm:$0xff]
    %v152 = vld [vmem:[%s5] sm:$0x1]
    %v153 = vld [vmem:[#allocation11] sm:$0x1]
    %v154 = vld [vmem:[#allocation13] sm:$0x1]
    %v156 = vperm.slane %v147, 0
    %vm158 = vcmask 261120
    %v160 = vsel %vm158, %v139, 0
    %v163 = vsel %vm158, %v140, 0
    %165 = vmatpush.msra.mxu0 0.0
    %166 = vmatpush.msra.mxu0 0.0
    %167 = vmatpush.msra.mxu0 0.0
    %168 = vmatpush.msra.mxu0 0.0
    %169 = vmatpush.msra.mxu0 0.0
    %170 = vmatpush.msra.mxu0 0.0
    %171 = vmatpush.msra.mxu0 0.0
    %172 = vmatpush.msra.mxu0 0.0
    %173 = vmatpush.msra.mxu0 0.0
    %174 = vmatpush.msra.mxu0 0.0
    %175 = vmatpush.msra.mxu0 0.0
    %176 = vmatpush.msra.mxu0 0.0
    %177 = vmatpush.msra.mxu0 %v146
    %178 = vmatpush.msra.mxu0 %v145
    %179 = vmatpush.msra.mxu0 %v144
    %180 = vmatpush.msra.mxu0 %v143
    %181 = vmatmul.f32.gmra.mxu0 %v160
    %v182 = vpop.f32.mrf.mxu0
    %v183 = vadd.f32 %v156, %v182
    %184 = vmatmul.f32.gmra.mxu0 %v163
    %v185 = vpop.f32.mrf.mxu0
    %v186 = vadd.f32 %v156, %v185
    %187 = vdwg.mxu0
    %v188 = vmul.f32 %v183, 0.5
    %v189 = vmul.f32 %v186, 0.5
    %191 = vrot.lane.b32.xlu0 %v183, 96
    %v192 = vpop.permute.xlu0 %191
    %vm193 = vcmask 31744
    %v195 = vsel %vm193, %v188, 0
    %v197 = vsel %vm193, %v192, 0
    %199 = vmatpush.xpose.msra.mxu0 0.0
    %200 = vmatpush.xpose.msra.mxu0 0.0
    %201 = vmatpush.xpose.msra.mxu0 0.0
    %202 = vmatpush.xpose.msra.mxu0 0.0
    %203 = vmatpush.xpose.msra.mxu0 0.0
    %204 = vmatpush.xpose.msra.mxu0 0.0
    %205 = vmatpush.xpose.msra.mxu0 0.0
    %206 = vmatpush.xpose.msra.mxu0 0.0
    %207 = vmatpush.xpose.msra.mxu0 0.0
    %208 = vmatpush.xpose.msra.mxu0 0.0
    %209 = vmatpush.xpose.msra.mxu0 0.0
    %210 = vmatpush.xpose.msra.mxu0 0.0
    %211 = vmatpush.xpose.msra.mxu0 0.0
    %212 = vmatpush.xpose.msra.mxu0 0.0
    %213 = vmatpush.xpose.msra.mxu0 0.0
    %214 = vmatpush.xpose.msra.mxu0 %v197
    %215 = vmatmul.f32.gmra.mxu0 %v195
    %v216 = vpop.f32.mrf.mxu0
    %v217 = vadd.f32 0.0, %v216
    %218 = vdwg.mxu0
    %220 = vrot.lane.b32.xlu0 %v186, 96
    %v221 = vpop.permute.xlu0 %220
    %v223 = vsel %vm193, %v189, 0
    %v225 = vsel %vm193, %v221, 0
    %227 = vmatpush.xpose.msra.mxu0 0.0
    %228 = vmatpush.xpose.msra.mxu0 0.0
    %229 = vmatpush.xpose.msra.mxu0 0.0
    %230 = vmatpush.xpose.msra.mxu0 0.0
    %231 = vmatpush.xpose.msra.mxu0 0.0
    %232 = vmatpush.xpose.msra.mxu0 0.0
    %233 = vmatpush.xpose.msra.mxu0 0.0
    %234 = vmatpush.xpose.msra.mxu0 0.0
    %235 = vmatpush.xpose.msra.mxu0 0.0
    %236 = vmatpush.xpose.msra.mxu0 0.0
    %237 = vmatpush.xpose.msra.mxu0 0.0
    %238 = vmatpush.xpose.msra.mxu0 0.0
    %239 = vmatpush.xpose.msra.mxu0 0.0
    %240 = vmatpush.xpose.msra.mxu0 0.0
    %241 = vmatpush.xpose.msra.mxu0 0.0
    %242 = vmatpush.xpose.msra.mxu0 %v225
    %243 = vmatmul.f32.gmra.mxu0 %v223
    %v244 = vpop.f32.mrf.mxu0
    %v245 = vadd.f32 0.0, %v244
    %246 = vdwg.mxu0
    %vm247 = vcmask 64512
    %v248 = vsel %vm247, %v217, -inf
    %249 = vmax.xlane.f32.xlu0 %v248
    %v250 = vpop.xlane.xlu0 %249
    %v251 = vsel %vm247, %v245, -inf
    %252 = vmax.xlane.f32.xlu0 %v251
    %v253 = vpop.xlane.xlu0 %252
    %v254 = vsub.f32 %v217, %v250
    %v255 = vsub.f32 %v245, %v253
    %v256 = vmul.f32 %v254, 1.442695
    %v257 = vpow.pop %v256
    %v258 = vmul.f32 %v255, 1.442695
    %v259 = vpow.pop %v258
    %v260 = vsel %vm247, %v257, 0.0
    %261 = vadd.xlane.f32.xlu0 %v260
    %v262 = vpop.xlane.xlu0 %261
    %v263 = vsel %vm247, %v259, 0.0
    %264 = vadd.xlane.f32.xlu0 %v263
    %v265 = vpop.xlane.xlu0 %264
    %v266 = vrcp.pop %v262
    %v267 = vrcp.pop %v265
    %v268 = vmul.f32 %v257, %v266
    %v269 = vmul.f32 %v259, %v267
    %270 = vrot.lane.b32.xlu0 %v183, 64
    %v271 = vpop.permute.xlu0 %270
    %v274 = vsel %vm247, %v268, 0
    %276 = vmatpush.msra.mxu0 0.0
    %277 = vmatpush.msra.mxu0 0.0
    %278 = vmatpush.msra.mxu0 0.0
    %279 = vmatpush.msra.mxu0 0.0
    %280 = vmatpush.msra.mxu0 0.0
    %281 = vmatpush.msra.mxu0 0.0
    %282 = vmatpush.msra.mxu0 0.0
    %283 = vmatpush.msra.mxu0 0.0
    %284 = vmatpush.msra.mxu0 0.0
    %285 = vmatpush.msra.mxu0 0.0
    %286 = vmatpush.msra.mxu0 0.0
    %287 = vmatpush.msra.mxu0 0.0
    %288 = vmatpush.msra.mxu0 0.0
    %289 = vmatpush.msra.mxu0 0.0
    %290 = vmatpush.msra.mxu0 0.0
    %291 = vmatpush.msra.mxu0 %v271
    %292 = vmatmul.f32.gmra.mxu0 %v274
    %v293 = vpop.f32.mrf.mxu0
    %v294 = vadd.f32 0.0, %v293
    %295 = vdwg.mxu0
    %296 = vrot.lane.b32.xlu0 %v186, 64
    %v297 = vpop.permute.xlu0 %296
    %v300 = vsel %vm247, %v269, 0
    %302 = vmatpush.msra.mxu0 0.0
    %303 = vmatpush.msra.mxu0 0.0
    %304 = vmatpush.msra.mxu0 0.0
    %305 = vmatpush.msra.mxu0 0.0
    %306 = vmatpush.msra.mxu0 0.0
    %307 = vmatpush.msra.mxu0 0.0
    %308 = vmatpush.msra.mxu0 0.0
    %309 = vmatpush.msra.mxu0 0.0
    %310 = vmatpush.msra.mxu0 0.0
    %311 = vmatpush.msra.mxu0 0.0
    %312 = vmatpush.msra.mxu0 0.0
    %313 = vmatpush.msra.mxu0 0.0
    %314 = vmatpush.msra.mxu0 0.0
    %315 = vmatpush.msra.mxu0 0.0
    %316 = vmatpush.msra.mxu0 0.0
    %317 = vmatpush.msra.mxu0 %v297
    %318 = vmatmul.f32.gmra.mxu0 %v300
    %v319 = vpop.f32.mrf.mxu0
    %v320 = vadd.f32 0.0, %v319
    %321 = vdwg.mxu0
    %322 = vrot.lane.b32.xlu0 %v188, 124
    %v323 = vpop.permute.xlu0 %322
    %324 = vrot.lane.b32.xlu0 %v183, 92
    %v325 = vpop.permute.xlu0 %324
    %v326 = vsel %vm193, %v323, 0
    %v328 = vsel %vm193, %v325, 0
    %330 = vmatpush.xpose.msra.mxu0 0.0
    %331 = vmatpush.xpose.msra.mxu0 0.0
    %332 = vmatpush.xpose.msra.mxu0 0.0
    %333 = vmatpush.xpose.msra.mxu0 0.0
    %334 = vmatpush.xpose.msra.mxu0 0.0
    %335 = vmatpush.xpose.msra.mxu0 0.0
    %336 = vmatpush.xpose.msra.mxu0 0.0
    %337 = vmatpush.xpose.msra.mxu0 0.0
    %338 = vmatpush.xpose.msra.mxu0 0.0
    %339 = vmatpush.xpose.msra.mxu0 0.0
    %340 = vmatpush.xpose.msra.mxu0 0.0
    %341 = vmatpush.xpose.msra.mxu0 0.0
    %342 = vmatpush.xpose.msra.mxu0 0.0
    %343 = vmatpush.xpose.msra.mxu0 0.0
    %344 = vmatpush.xpose.msra.mxu0 0.0
    %345 = vmatpush.xpose.msra.mxu0 %v328
    %346 = vmatmul.f32.gmra.mxu0 %v326
    %v347 = vpop.f32.mrf.mxu0
    %v348 = vadd.f32 0.0, %v347
    %349 = vdwg.mxu0
    %350 = vrot.lane.b32.xlu0 %v189, 124
    %v351 = vpop.permute.xlu0 %350
    %352 = vrot.lane.b32.xlu0 %v186, 92
    %v353 = vpop.permute.xlu0 %352
    %v354 = vsel %vm193, %v351, 0
    %v356 = vsel %vm193, %v353, 0
    %358 = vmatpush.xpose.msra.mxu0 0.0
    %359 = vmatpush.xpose.msra.mxu0 0.0
    %360 = vmatpush.xpose.msra.mxu0 0.0
    %361 = vmatpush.xpose.msra.mxu0 0.0
    %362 = vmatpush.xpose.msra.mxu0 0.0
    %363 = vmatpush.xpose.msra.mxu0 0.0
    %364 = vmatpush.xpose.msra.mxu0 0.0
    %365 = vmatpush.xpose.msra.mxu0 0.0
    %366 = vmatpush.xpose.msra.mxu0 0.0
    %367 = vmatpush.xpose.msra.mxu0 0.0
    %368 = vmatpush.xpose.msra.mxu0 0.0
    %369 = vmatpush.xpose.msra.mxu0 0.0
    %370 = vmatpush.xpose.msra.mxu0 0.0
    %371 = vmatpush.xpose.msra.mxu0 0.0
    %372 = vmatpush.xpose.msra.mxu0 0.0
    %373 = vmatpush.xpose.msra.mxu0 %v356
    %374 = vmatmul.f32.gmra.mxu0 %v354
    %v375 = vpop.f32.mrf.mxu0
    %v376 = vadd.f32 0.0, %v375
    %377 = vdwg.mxu0
    %v378 = vsel %vm247, %v348, -inf
    %379 = vmax.xlane.f32.xlu0 %v378
    %v380 = vpop.xlane.xlu0 %379
    %v381 = vsel %vm247, %v376, -inf
    %382 = vmax.xlane.f32.xlu0 %v381
    %v383 = vpop.xlane.xlu0 %382
    %v384 = vsub.f32 %v348, %v380
    %v385 = vsub.f32 %v376, %v383
    %v386 = vmul.f32 %v384, 1.442695
    %v387 = vpow.pop %v386
    %v388 = vmul.f32 %v385, 1.442695
    %v389 = vpow.pop %v388
    %v390 = vsel %vm247, %v387, 0.0
    %391 = vadd.xlane.f32.xlu0 %v390
    %v392 = vpop.xlane.xlu0 %391
    %v393 = vsel %vm247, %v389, 0.0
    %394 = vadd.xlane.f32.xlu0 %v393
    %v395 = vpop.xlane.xlu0 %394
    %v396 = vrcp.pop %v392
    %v397 = vrcp.pop %v395
    %v398 = vmul.f32 %v387, %v396
    %v399 = vmul.f32 %v389, %v397
    %400 = vrot.lane.b32.xlu0 %v183, 60
    %v401 = vpop.permute.xlu0 %400
    %v404 = vsel %vm247, %v398, 0
    %406 = vmatpush.msra.mxu0 0.0
    %407 = vmatpush.msra.mxu0 0.0
    %408 = vmatpush.msra.mxu0 0.0
    %409 = vmatpush.msra.mxu0 0.0
    %410 = vmatpush.msra.mxu0 0.0
    %411 = vmatpush.msra.mxu0 0.0
    %412 = vmatpush.msra.mxu0 0.0
    %413 = vmatpush.msra.mxu0 0.0
    %414 = vmatpush.msra.mxu0 0.0
    %415 = vmatpush.msra.mxu0 0.0
    %416 = vmatpush.msra.mxu0 0.0
    %417 = vmatpush.msra.mxu0 0.0
    %418 = vmatpush.msra.mxu0 0.0
    %419 = vmatpush.msra.mxu0 0.0
    %420 = vmatpush.msra.mxu0 0.0
    %421 = vmatpush.msra.mxu0 %v401
    %422 = vmatmul.f32.gmra.mxu0 %v404
    %v423 = vpop.f32.mrf.mxu0
    %v424 = vadd.f32 0.0, %v423
    %425 = vdwg.mxu0
    %426 = vrot.lane.b32.xlu0 %v186, 60
    %v427 = vpop.permute.xlu0 %426
    %v430 = vsel %vm247, %v399, 0
    %432 = vmatpush.msra.mxu0 0.0
    %433 = vmatpush.msra.mxu0 0.0
    %434 = vmatpush.msra.mxu0 0.0
    %435 = vmatpush.msra.mxu0 0.0
    %436 = vmatpush.msra.mxu0 0.0
    %437 = vmatpush.msra.mxu0 0.0
    %438 = vmatpush.msra.mxu0 0.0
    %439 = vmatpush.msra.mxu0 0.0
    %440 = vmatpush.msra.mxu0 0.0
    %441 = vmatpush.msra.mxu0 0.0
    %442 = vmatpush.msra.mxu0 0.0
    %443 = vmatpush.msra.mxu0 0.0
    %444 = vmatpush.msra.mxu0 0.0
    %445 = vmatpush.msra.mxu0 0.0
    %446 = vmatpush.msra.mxu0 0.0
    %447 = vmatpush.msra.mxu0 %v427
    %448 = vmatmul.f32.gmra.mxu0 %v430
    %v449 = vpop.f32.mrf.mxu0
    %v450 = vadd.f32 0.0, %v449
    %451 = vdwg.mxu0
    %452 = vrot.lane.b32.xlu0 %v188, 120
    %v453 = vpop.permute.xlu0 %452
    %454 = vrot.lane.b32.xlu0 %v183, 88
    %v455 = vpop.permute.xlu0 %454
    %v456 = vsel %vm193, %v453, 0
    %v458 = vsel %vm193, %v455, 0
    %460 = vmatpush.xpose.msra.mxu0 0.0
    %461 = vmatpush.xpose.msra.mxu0 0.0
    %462 = vmatpush.xpose.msra.mxu0 0.0
    %463 = vmatpush.xpose.msra.mxu0 0.0
    %464 = vmatpush.xpose.msra.mxu0 0.0
    %465 = vmatpush.xpose.msra.mxu0 0.0
    %466 = vmatpush.xpose.msra.mxu0 0.0
    %467 = vmatpush.xpose.msra.mxu0 0.0
    %468 = vmatpush.xpose.msra.mxu0 0.0
    %469 = vmatpush.xpose.msra.mxu0 0.0
    %470 = vmatpush.xpose.msra.mxu0 0.0
    %471 = vmatpush.xpose.msra.mxu0 0.0
    %472 = vmatpush.xpose.msra.mxu0 0.0
    %473 = vmatpush.xpose.msra.mxu0 0.0
    %474 = vmatpush.xpose.msra.mxu0 0.0
    %475 = vmatpush.xpose.msra.mxu0 %v458
    %476 = vmatmul.f32.gmra.mxu0 %v456
    %v477 = vpop.f32.mrf.mxu0
    %v478 = vadd.f32 0.0, %v477
    %479 = vdwg.mxu0
    %480 = vrot.lane.b32.xlu0 %v189, 120
    %v481 = vpop.permute.xlu0 %480
    %482 = vrot.lane.b32.xlu0 %v186, 88
    %v483 = vpop.permute.xlu0 %482
    %v484 = vsel %vm193, %v481, 0
    %v486 = vsel %vm193, %v483, 0
    %488 = vmatpush.xpose.msra.mxu0 0.0
    %489 = vmatpush.xpose.msra.mxu0 0.0
    %490 = vmatpush.xpose.msra.mxu0 0.0
    %491 = vmatpush.xpose.msra.mxu0 0.0
    %492 = vmatpush.xpose.msra.mxu0 0.0
    %493 = vmatpush.xpose.msra.mxu0 0.0
    %494 = vmatpush.xpose.msra.mxu0 0.0
    %495 = vmatpush.xpose.msra.mxu0 0.0
    %496 = vmatpush.xpose.msra.mxu0 0.0
    %497 = vmatpush.xpose.msra.mxu0 0.0
    %498 = vmatpush.xpose.msra.mxu0 0.0
    %499 = vmatpush.xpose.msra.mxu0 0.0
    %500 = vmatpush.xpose.msra.mxu0 0.0
    %501 = vmatpush.xpose.msra.mxu0 0.0
    %502 = vmatpush.xpose.msra.mxu0 0.0
    %503 = vmatpush.xpose.msra.mxu0 %v486
    %504 = vmatmul.f32.gmra.mxu0 %v484
    %v505 = vpop.f32.mrf.mxu0
    %v506 = vadd.f32 0.0, %v505
    %507 = vdwg.mxu0
    %v508 = vsel %vm247, %v478, -inf
    %509 = vmax.xlane.f32.xlu0 %v508
    %v510 = vpop.xlane.xlu0 %509
    %v511 = vsel %vm247, %v506, -inf
    %512 = vmax.xlane.f32.xlu0 %v511
    %v513 = vpop.xlane.xlu0 %512
    %v514 = vsub.f32 %v478, %v510
    %v515 = vsub.f32 %v506, %v513
    %v516 = vmul.f32 %v514, 1.442695
    %v517 = vpow.pop %v516
    %v518 = vmul.f32 %v515, 1.442695
    %v519 = vpow.pop %v518
    %v520 = vsel %vm247, %v517, 0.0
    %521 = vadd.xlane.f32.xlu0 %v520
    %v522 = vpop.xlane.xlu0 %521
    %v523 = vsel %vm247, %v519, 0.0
    %524 = vadd.xlane.f32.xlu0 %v523
    %v525 = vpop.xlane.xlu0 %524
    %v526 = vrcp.pop %v522
    %v527 = vrcp.pop %v525
    %v528 = vmul.f32 %v517, %v526
    %v529 = vmul.f32 %v519, %v527
    %530 = vrot.lane.b32.xlu0 %v183, 56
    %v531 = vpop.permute.xlu0 %530
    %v534 = vsel %vm247, %v528, 0
    %536 = vmatpush.msra.mxu0 0.0
    %537 = vmatpush.msra.mxu0 0.0
    %538 = vmatpush.msra.mxu0 0.0
    %539 = vmatpush.msra.mxu0 0.0
    %540 = vmatpush.msra.mxu0 0.0
    %541 = vmatpush.msra.mxu0 0.0
    %542 = vmatpush.msra.mxu0 0.0
    %543 = vmatpush.msra.mxu0 0.0
    %544 = vmatpush.msra.mxu0 0.0
    %545 = vmatpush.msra.mxu0 0.0
    %546 = vmatpush.msra.mxu0 0.0
    %547 = vmatpush.msra.mxu0 0.0
    %548 = vmatpush.msra.mxu0 0.0
    %549 = vmatpush.msra.mxu0 0.0
    %550 = vmatpush.msra.mxu0 0.0
    %551 = vmatpush.msra.mxu0 %v531
    %552 = vmatmul.f32.gmra.mxu0 %v534
    %v553 = vpop.f32.mrf.mxu0
    %v554 = vadd.f32 0.0, %v553
    %555 = vdwg.mxu0
    %556 = vrot.lane.b32.xlu0 %v186, 56
    %v557 = vpop.permute.xlu0 %556
    %v560 = vsel %vm247, %v529, 0
    %562 = vmatpush.msra.mxu0 0.0
    %563 = vmatpush.msra.mxu0 0.0
    %564 = vmatpush.msra.mxu0 0.0
    %565 = vmatpush.msra.mxu0 0.0
    %566 = vmatpush.msra.mxu0 0.0
    %567 = vmatpush.msra.mxu0 0.0
    %568 = vmatpush.msra.mxu0 0.0
    %569 = vmatpush.msra.mxu0 0.0
    %570 = vmatpush.msra.mxu0 0.0
    %571 = vmatpush.msra.mxu0 0.0
    %572 = vmatpush.msra.mxu0 0.0
    %573 = vmatpush.msra.mxu0 0.0
    %574 = vmatpush.msra.mxu0 0.0
    %575 = vmatpush.msra.mxu0 0.0
    %576 = vmatpush.msra.mxu0 0.0
    %577 = vmatpush.msra.mxu0 %v557
    %578 = vmatmul.f32.gmra.mxu0 %v560
    %v579 = vpop.f32.mrf.mxu0
    %v580 = vadd.f32 0.0, %v579
    %581 = vdwg.mxu0
    %582 = vrot.lane.b32.xlu0 %v188, 116
    %v583 = vpop.permute.xlu0 %582
    %584 = vrot.lane.b32.xlu0 %v183, 84
    %v585 = vpop.permute.xlu0 %584
    %v586 = vsel %vm193, %v583, 0
    %v588 = vsel %vm193, %v585, 0
    %590 = vmatpush.xpose.msra.mxu0 0.0
    %591 = vmatpush.xpose.msra.mxu0 0.0
    %592 = vmatpush.xpose.msra.mxu0 0.0
    %593 = vmatpush.xpose.msra.mxu0 0.0
    %594 = vmatpush.xpose.msra.mxu0 0.0
    %595 = vmatpush.xpose.msra.mxu0 0.0
    %596 = vmatpush.xpose.msra.mxu0 0.0
    %597 = vmatpush.xpose.msra.mxu0 0.0
    %598 = vmatpush.xpose.msra.mxu0 0.0
    %599 = vmatpush.xpose.msra.mxu0 0.0
    %600 = vmatpush.xpose.msra.mxu0 0.0
    %601 = vmatpush.xpose.msra.mxu0 0.0
    %602 = vmatpush.xpose.msra.mxu0 0.0
    %603 = vmatpush.xpose.msra.mxu0 0.0
    %604 = vmatpush.xpose.msra.mxu0 0.0
    %605 = vmatpush.xpose.msra.mxu0 %v588
    %606 = vmatmul.f32.gmra.mxu0 %v586
    %v607 = vpop.f32.mrf.mxu0
    %v608 = vadd.f32 0.0, %v607
    %609 = vdwg.mxu0
    %610 = vrot.lane.b32.xlu0 %v189, 116
    %v611 = vpop.permute.xlu0 %610
    %612 = vrot.lane.b32.xlu0 %v186, 84
    %v613 = vpop.permute.xlu0 %612
    %v614 = vsel %vm193, %v611, 0
    %v616 = vsel %vm193, %v613, 0
    %618 = vmatpush.xpose.msra.mxu0 0.0
    %619 = vmatpush.xpose.msra.mxu0 0.0
    %620 = vmatpush.xpose.msra.mxu0 0.0
    %621 = vmatpush.xpose.msra.mxu0 0.0
    %622 = vmatpush.xpose.msra.mxu0 0.0
    %623 = vmatpush.xpose.msra.mxu0 0.0
    %624 = vmatpush.xpose.msra.mxu0 0.0
    %625 = vmatpush.xpose.msra.mxu0 0.0
    %626 = vmatpush.xpose.msra.mxu0 0.0
    %627 = vmatpush.xpose.msra.mxu0 0.0
    %628 = vmatpush.xpose.msra.mxu0 0.0
    %629 = vmatpush.xpose.msra.mxu0 0.0
    %630 = vmatpush.xpose.msra.mxu0 0.0
    %631 = vmatpush.xpose.msra.mxu0 0.0
    %632 = vmatpush.xpose.msra.mxu0 0.0
    %633 = vmatpush.xpose.msra.mxu0 %v616
    %634 = vmatmul.f32.gmra.mxu0 %v614
    %v635 = vpop.f32.mrf.mxu0
    %v636 = vadd.f32 0.0, %v635
    %637 = vdwg.mxu0
    %v638 = vsel %vm247, %v608, -inf
    %639 = vmax.xlane.f32.xlu0 %v638
    %v640 = vpop.xlane.xlu0 %639
    %v641 = vsel %vm247, %v636, -inf
    %642 = vmax.xlane.f32.xlu0 %v641
    %v643 = vpop.xlane.xlu0 %642
    %v644 = vsub.f32 %v608, %v640
    %v645 = vsub.f32 %v636, %v643
    %v646 = vmul.f32 %v644, 1.442695
    %v647 = vpow.pop %v646
    %v648 = vmul.f32 %v645, 1.442695
    %v649 = vpow.pop %v648
    %v650 = vsel %vm247, %v647, 0.0
    %651 = vadd.xlane.f32.xlu0 %v650
    %v652 = vpop.xlane.xlu0 %651
    %v653 = vsel %vm247, %v649, 0.0
    %654 = vadd.xlane.f32.xlu0 %v653
    %v655 = vpop.xlane.xlu0 %654
    %v656 = vrcp.pop %v652
    %v657 = vrcp.pop %v655
    %v658 = vmul.f32 %v647, %v656
    %v659 = vmul.f32 %v649, %v657
    %660 = vrot.lane.b32.xlu0 %v183, 52
    %v661 = vpop.permute.xlu0 %660
    %v664 = vsel %vm247, %v658, 0
    %666 = vmatpush.msra.mxu0 0.0
    %667 = vmatpush.msra.mxu0 0.0
    %668 = vmatpush.msra.mxu0 0.0
    %669 = vmatpush.msra.mxu0 0.0
    %670 = vmatpush.msra.mxu0 0.0
    %671 = vmatpush.msra.mxu0 0.0
    %672 = vmatpush.msra.mxu0 0.0
    %673 = vmatpush.msra.mxu0 0.0
    %674 = vmatpush.msra.mxu0 0.0
    %675 = vmatpush.msra.mxu0 0.0
    %676 = vmatpush.msra.mxu0 0.0
    %677 = vmatpush.msra.mxu0 0.0
    %678 = vmatpush.msra.mxu0 0.0
    %679 = vmatpush.msra.mxu0 0.0
    %680 = vmatpush.msra.mxu0 0.0
    %681 = vmatpush.msra.mxu0 %v661
    %682 = vmatmul.f32.gmra.mxu0 %v664
    %v683 = vpop.f32.mrf.mxu0
    %v684 = vadd.f32 0.0, %v683
    %685 = vdwg.mxu0
    %686 = vrot.lane.b32.xlu0 %v186, 52
    %v687 = vpop.permute.xlu0 %686
    %v690 = vsel %vm247, %v659, 0
    %692 = vmatpush.msra.mxu0 0.0
    %693 = vmatpush.msra.mxu0 0.0
    %694 = vmatpush.msra.mxu0 0.0
    %695 = vmatpush.msra.mxu0 0.0
    %696 = vmatpush.msra.mxu0 0.0
    %697 = vmatpush.msra.mxu0 0.0
    %698 = vmatpush.msra.mxu0 0.0
    %699 = vmatpush.msra.mxu0 0.0
    %700 = vmatpush.msra.mxu0 0.0
    %701 = vmatpush.msra.mxu0 0.0
    %702 = vmatpush.msra.mxu0 0.0
    %703 = vmatpush.msra.mxu0 0.0
    %704 = vmatpush.msra.mxu0 0.0
    %705 = vmatpush.msra.mxu0 0.0
    %706 = vmatpush.msra.mxu0 0.0
    %707 = vmatpush.msra.mxu0 %v687
    %708 = vmatmul.f32.gmra.mxu0 %v690
    %v709 = vpop.f32.mrf.mxu0
    %v710 = vadd.f32 0.0, %v709
    %711 = vdwg.mxu0
    %712 = vrot.lane.b32.xlu0 %v188, 112
    %v713 = vpop.permute.xlu0 %712
    %714 = vrot.lane.b32.xlu0 %v183, 80
    %v715 = vpop.permute.xlu0 %714
    %v716 = vsel %vm193, %v713, 0
    %v718 = vsel %vm193, %v715, 0
    %720 = vmatpush.xpose.msra.mxu0 0.0
    %721 = vmatpush.xpose.msra.mxu0 0.0
    %722 = vmatpush.xpose.msra.mxu0 0.0
    %723 = vmatpush.xpose.msra.mxu0 0.0
    %724 = vmatpush.xpose.msra.mxu0 0.0
    %725 = vmatpush.xpose.msra.mxu0 0.0
    %726 = vmatpush.xpose.msra.mxu0 0.0
    %727 = vmatpush.xpose.msra.mxu0 0.0
    %728 = vmatpush.xpose.msra.mxu0 0.0
    %729 = vmatpush.xpose.msra.mxu0 0.0
    %730 = vmatpush.xpose.msra.mxu0 0.0
    %731 = vmatpush.xpose.msra.mxu0 0.0
    %732 = vmatpush.xpose.msra.mxu0 0.0
    %733 = vmatpush.xpose.msra.mxu0 0.0
    %734 = vmatpush.xpose.msra.mxu0 0.0
    %735 = vmatpush.xpose.msra.mxu0 %v718
    %736 = vmatmul.f32.gmra.mxu0 %v716
    %v737 = vpop.f32.mrf.mxu0
    %v738 = vadd.f32 0.0, %v737
    %739 = vdwg.mxu0
    %740 = vrot.lane.b32.xlu0 %v189, 112
    %v741 = vpop.permute.xlu0 %740
    %742 = vrot.lane.b32.xlu0 %v186, 80
    %v743 = vpop.permute.xlu0 %742
    %v744 = vsel %vm193, %v741, 0
    %v746 = vsel %vm193, %v743, 0
    %748 = vmatpush.xpose.msra.mxu0 0.0
    %749 = vmatpush.xpose.msra.mxu0 0.0
    %750 = vmatpush.xpose.msra.mxu0 0.0
    %751 = vmatpush.xpose.msra.mxu0 0.0
    %752 = vmatpush.xpose.msra.mxu0 0.0
    %753 = vmatpush.xpose.msra.mxu0 0.0
    %754 = vmatpush.xpose.msra.mxu0 0.0
    %755 = vmatpush.xpose.msra.mxu0 0.0
    %756 = vmatpush.xpose.msra.mxu0 0.0
    %757 = vmatpush.xpose.msra.mxu0 0.0
    %758 = vmatpush.xpose.msra.mxu0 0.0
    %759 = vmatpush.xpose.msra.mxu0 0.0
    %760 = vmatpush.xpose.msra.mxu0 0.0
    %761 = vmatpush.xpose.msra.mxu0 0.0
    %762 = vmatpush.xpose.msra.mxu0 0.0
    %763 = vmatpush.xpose.msra.mxu0 %v746
    %764 = vmatmul.f32.gmra.mxu0 %v744
    %v765 = vpop.f32.mrf.mxu0
    %v766 = vadd.f32 0.0, %v765
    %767 = vdwg.mxu0
    %v768 = vsel %vm247, %v738, -inf
    %769 = vmax.xlane.f32.xlu0 %v768
    %v770 = vpop.xlane.xlu0 %769
    %v771 = vsel %vm247, %v766, -inf
    %772 = vmax.xlane.f32.xlu0 %v771
    %v773 = vpop.xlane.xlu0 %772
    %v774 = vsub.f32 %v738, %v770
    %v775 = vsub.f32 %v766, %v773
    %v776 = vmul.f32 %v774, 1.442695
    %v777 = vpow.pop %v776
    %v778 = vmul.f32 %v775, 1.442695
    %v779 = vpow.pop %v778
    %v780 = vsel %vm247, %v777, 0.0
    %781 = vadd.xlane.f32.xlu0 %v780
    %v782 = vpop.xlane.xlu0 %781
    %v783 = vsel %vm247, %v779, 0.0
    %784 = vadd.xlane.f32.xlu0 %v783
    %v785 = vpop.xlane.xlu0 %784
    %v786 = vrcp.pop %v782
    %v787 = vrcp.pop %v785
    %v788 = vmul.f32 %v777, %v786
    %v789 = vmul.f32 %v779, %v787
    %790 = vrot.lane.b32.xlu0 %v183, 48
    %v791 = vpop.permute.xlu0 %790
    %v794 = vsel %vm247, %v788, 0
    %796 = vmatpush.msra.mxu0 0.0
    %797 = vmatpush.msra.mxu0 0.0
    %798 = vmatpush.msra.mxu0 0.0
    %799 = vmatpush.msra.mxu0 0.0
    %800 = vmatpush.msra.mxu0 0.0
    %801 = vmatpush.msra.mxu0 0.0
    %802 = vmatpush.msra.mxu0 0.0
    %803 = vmatpush.msra.mxu0 0.0
    %804 = vmatpush.msra.mxu0 0.0
    %805 = vmatpush.msra.mxu0 0.0
    %806 = vmatpush.msra.mxu0 0.0
    %807 = vmatpush.msra.mxu0 0.0
    %808 = vmatpush.msra.mxu0 0.0
    %809 = vmatpush.msra.mxu0 0.0
    %810 = vmatpush.msra.mxu0 0.0
    %811 = vmatpush.msra.mxu0 %v791
    %812 = vmatmul.f32.gmra.mxu0 %v794
    %v813 = vpop.f32.mrf.mxu0
    %v814 = vadd.f32 0.0, %v813
    %815 = vdwg.mxu0
    %816 = vrot.lane.b32.xlu0 %v186, 48
    %v817 = vpop.permute.xlu0 %816
    %v820 = vsel %vm247, %v789, 0
    %822 = vmatpush.msra.mxu0 0.0
    %823 = vmatpush.msra.mxu0 0.0
    %824 = vmatpush.msra.mxu0 0.0
    %825 = vmatpush.msra.mxu0 0.0
    %826 = vmatpush.msra.mxu0 0.0
    %827 = vmatpush.msra.mxu0 0.0
    %828 = vmatpush.msra.mxu0 0.0
    %829 = vmatpush.msra.mxu0 0.0
    %830 = vmatpush.msra.mxu0 0.0
    %831 = vmatpush.msra.mxu0 0.0
    %832 = vmatpush.msra.mxu0 0.0
    %833 = vmatpush.msra.mxu0 0.0
    %834 = vmatpush.msra.mxu0 0.0
    %835 = vmatpush.msra.mxu0 0.0
    %836 = vmatpush.msra.mxu0 0.0
    %837 = vmatpush.msra.mxu0 %v817
    %838 = vmatmul.f32.gmra.mxu0 %v820
    %v839 = vpop.f32.mrf.mxu0
    %v840 = vadd.f32 0.0, %v839
    %841 = vdwg.mxu0
    %842 = vrot.lane.b32.xlu0 %v188, 108
    %v843 = vpop.permute.xlu0 %842
    %844 = vrot.lane.b32.xlu0 %v183, 76
    %v845 = vpop.permute.xlu0 %844
    %v846 = vsel %vm193, %v843, 0
    %v848 = vsel %vm193, %v845, 0
    %850 = vmatpush.xpose.msra.mxu0 0.0
    %851 = vmatpush.xpose.msra.mxu0 0.0
    %852 = vmatpush.xpose.msra.mxu0 0.0
    %853 = vmatpush.xpose.msra.mxu0 0.0
    %854 = vmatpush.xpose.msra.mxu0 0.0
    %855 = vmatpush.xpose.msra.mxu0 0.0
    %856 = vmatpush.xpose.msra.mxu0 0.0
    %857 = vmatpush.xpose.msra.mxu0 0.0
    %858 = vmatpush.xpose.msra.mxu0 0.0
    %859 = vmatpush.xpose.msra.mxu0 0.0
    %860 = vmatpush.xpose.msra.mxu0 0.0
    %861 = vmatpush.xpose.msra.mxu0 0.0
    %862 = vmatpush.xpose.msra.mxu0 0.0
    %863 = vmatpush.xpose.msra.mxu0 0.0
    %864 = vmatpush.xpose.msra.mxu0 0.0
    %865 = vmatpush.xpose.msra.mxu0 %v848
    %866 = vmatmul.f32.gmra.mxu0 %v846
    %v867 = vpop.f32.mrf.mxu0
    %v868 = vadd.f32 0.0, %v867
    %869 = vdwg.mxu0
    %870 = vrot.lane.b32.xlu0 %v189, 108
    %v871 = vpop.permute.xlu0 %870
    %872 = vrot.lane.b32.xlu0 %v186, 76
    %v873 = vpop.permute.xlu0 %872
    %v874 = vsel %vm193, %v871, 0
    %v876 = vsel %vm193, %v873, 0
    %878 = vmatpush.xpose.msra.mxu0 0.0
    %879 = vmatpush.xpose.msra.mxu0 0.0
    %880 = vmatpush.xpose.msra.mxu0 0.0
    %881 = vmatpush.xpose.msra.mxu0 0.0
    %882 = vmatpush.xpose.msra.mxu0 0.0
    %883 = vmatpush.xpose.msra.mxu0 0.0
    %884 = vmatpush.xpose.msra.mxu0 0.0
    %885 = vmatpush.xpose.msra.mxu0 0.0
    %886 = vmatpush.xpose.msra.mxu0 0.0
    %887 = vmatpush.xpose.msra.mxu0 0.0
    %888 = vmatpush.xpose.msra.mxu0 0.0
    %889 = vmatpush.xpose.msra.mxu0 0.0
    %890 = vmatpush.xpose.msra.mxu0 0.0
    %891 = vmatpush.xpose.msra.mxu0 0.0
    %892 = vmatpush.xpose.msra.mxu0 0.0
    %893 = vmatpush.xpose.msra.mxu0 %v876
    %894 = vmatmul.f32.gmra.mxu0 %v874
    %v895 = vpop.f32.mrf.mxu0
    %v896 = vadd.f32 0.0, %v895
    %897 = vdwg.mxu0
    %v898 = vsel %vm247, %v868, -inf
    %899 = vmax.xlane.f32.xlu0 %v898
    %v900 = vpop.xlane.xlu0 %899
    %v901 = vsel %vm247, %v896, -inf
    %902 = vmax.xlane.f32.xlu0 %v901
    %v903 = vpop.xlane.xlu0 %902
    %v904 = vsub.f32 %v868, %v900
    %v905 = vsub.f32 %v896, %v903
    %v906 = vmul.f32 %v904, 1.442695
    %v907 = vpow.pop %v906
    %v908 = vmul.f32 %v905, 1.442695
    %v909 = vpow.pop %v908
    %v910 = vsel %vm247, %v907, 0.0
    %911 = vadd.xlane.f32.xlu0 %v910
    %v912 = vpop.xlane.xlu0 %911
    %v913 = vsel %vm247, %v909, 0.0
    %914 = vadd.xlane.f32.xlu0 %v913
    %v915 = vpop.xlane.xlu0 %914
    %v916 = vrcp.pop %v912
    %v917 = vrcp.pop %v915
    %v918 = vmul.f32 %v907, %v916
    %v919 = vmul.f32 %v909, %v917
    %920 = vrot.lane.b32.xlu0 %v183, 44
    %v921 = vpop.permute.xlu0 %920
    %v924 = vsel %vm247, %v918, 0
    %926 = vmatpush.msra.mxu0 0.0
    %927 = vmatpush.msra.mxu0 0.0
    %928 = vmatpush.msra.mxu0 0.0
    %929 = vmatpush.msra.mxu0 0.0
    %930 = vmatpush.msra.mxu0 0.0
    %931 = vmatpush.msra.mxu0 0.0
    %932 = vmatpush.msra.mxu0 0.0
    %933 = vmatpush.msra.mxu0 0.0
    %934 = vmatpush.msra.mxu0 0.0
    %935 = vmatpush.msra.mxu0 0.0
    %936 = vmatpush.msra.mxu0 0.0
    %937 = vmatpush.msra.mxu0 0.0
    %938 = vmatpush.msra.mxu0 0.0
    %939 = vmatpush.msra.mxu0 0.0
    %940 = vmatpush.msra.mxu0 0.0
    %941 = vmatpush.msra.mxu0 %v921
    %942 = vmatmul.f32.gmra.mxu0 %v924
    %v943 = vpop.f32.mrf.mxu0
    %v944 = vadd.f32 0.0, %v943
    %945 = vdwg.mxu0
    %946 = vrot.lane.b32.xlu0 %v186, 44
    %v947 = vpop.permute.xlu0 %946
    %v950 = vsel %vm247, %v919, 0
    %952 = vmatpush.msra.mxu0 0.0
    %953 = vmatpush.msra.mxu0 0.0
    %954 = vmatpush.msra.mxu0 0.0
    %955 = vmatpush.msra.mxu0 0.0
    %956 = vmatpush.msra.mxu0 0.0
    %957 = vmatpush.msra.mxu0 0.0
    %958 = vmatpush.msra.mxu0 0.0
    %959 = vmatpush.msra.mxu0 0.0
    %960 = vmatpush.msra.mxu0 0.0
    %961 = vmatpush.msra.mxu0 0.0
    %962 = vmatpush.msra.mxu0 0.0
    %963 = vmatpush.msra.mxu0 0.0
    %964 = vmatpush.msra.mxu0 0.0
    %965 = vmatpush.msra.mxu0 0.0
    %966 = vmatpush.msra.mxu0 0.0
    %967 = vmatpush.msra.mxu0 %v947
    %968 = vmatmul.f32.gmra.mxu0 %v950
    %v969 = vpop.f32.mrf.mxu0
    %v970 = vadd.f32 0.0, %v969
    %971 = vdwg.mxu0
    %972 = vrot.lane.b32.xlu0 %v188, 104
    %v973 = vpop.permute.xlu0 %972
    %974 = vrot.lane.b32.xlu0 %v183, 72
    %v975 = vpop.permute.xlu0 %974
    %v976 = vsel %vm193, %v973, 0
    %v978 = vsel %vm193, %v975, 0
    %980 = vmatpush.xpose.msra.mxu0 0.0
    %981 = vmatpush.xpose.msra.mxu0 0.0
    %982 = vmatpush.xpose.msra.mxu0 0.0
    %983 = vmatpush.xpose.msra.mxu0 0.0
    %984 = vmatpush.xpose.msra.mxu0 0.0
    %985 = vmatpush.xpose.msra.mxu0 0.0
    %986 = vmatpush.xpose.msra.mxu0 0.0
    %987 = vmatpush.xpose.msra.mxu0 0.0
    %988 = vmatpush.xpose.msra.mxu0 0.0
    %989 = vmatpush.xpose.msra.mxu0 0.0
    %990 = vmatpush.xpose.msra.mxu0 0.0
    %991 = vmatpush.xpose.msra.mxu0 0.0
    %992 = vmatpush.xpose.msra.mxu0 0.0
    %993 = vmatpush.xpose.msra.mxu0 0.0
    %994 = vmatpush.xpose.msra.mxu0 0.0
    %995 = vmatpush.xpose.msra.mxu0 %v978
    %996 = vmatmul.f32.gmra.mxu0 %v976
    %v997 = vpop.f32.mrf.mxu0
    %v998 = vadd.f32 0.0, %v997
    %999 = vdwg.mxu0
    %1000 = vrot.lane.b32.xlu0 %v189, 104
    %v1001 = vpop.permute.xlu0 %1000
    %1002 = vrot.lane.b32.xlu0 %v186, 72
    %v1003 = vpop.permute.xlu0 %1002
    %v1004 = vsel %vm193, %v1001, 0
    %v1006 = vsel %vm193, %v1003, 0
    %1008 = vmatpush.xpose.msra.mxu0 0.0
    %1009 = vmatpush.xpose.msra.mxu0 0.0
    %1010 = vmatpush.xpose.msra.mxu0 0.0
    %1011 = vmatpush.xpose.msra.mxu0 0.0
    %1012 = vmatpush.xpose.msra.mxu0 0.0
    %1013 = vmatpush.xpose.msra.mxu0 0.0
    %1014 = vmatpush.xpose.msra.mxu0 0.0
    %1015 = vmatpush.xpose.msra.mxu0 0.0
    %1016 = vmatpush.xpose.msra.mxu0 0.0
    %1017 = vmatpush.xpose.msra.mxu0 0.0
    %1018 = vmatpush.xpose.msra.mxu0 0.0
    %1019 = vmatpush.xpose.msra.mxu0 0.0
    %1020 = vmatpush.xpose.msra.mxu0 0.0
    %1021 = vmatpush.xpose.msra.mxu0 0.0
    %1022 = vmatpush.xpose.msra.mxu0 0.0
    %1023 = vmatpush.xpose.msra.mxu0 %v1006
    %1024 = vmatmul.f32.gmra.mxu0 %v1004
    %v1025 = vpop.f32.mrf.mxu0
    %v1026 = vadd.f32 0.0, %v1025
    %1027 = vdwg.mxu0
    %v1028 = vsel %vm247, %v998, -inf
    %1029 = vmax.xlane.f32.xlu0 %v1028
    %v1030 = vpop.xlane.xlu0 %1029
    %v1031 = vsel %vm247, %v1026, -inf
    %1032 = vmax.xlane.f32.xlu0 %v1031
    %v1033 = vpop.xlane.xlu0 %1032
    %v1034 = vsub.f32 %v998, %v1030
    %v1035 = vsub.f32 %v1026, %v1033
    %v1036 = vmul.f32 %v1034, 1.442695
    %v1037 = vpow.pop %v1036
    %v1038 = vmul.f32 %v1035, 1.442695
    %v1039 = vpow.pop %v1038
    %v1040 = vsel %vm247, %v1037, 0.0
    %1041 = vadd.xlane.f32.xlu0 %v1040
    %v1042 = vpop.xlane.xlu0 %1041
    %v1043 = vsel %vm247, %v1039, 0.0
    %1044 = vadd.xlane.f32.xlu0 %v1043
    %v1045 = vpop.xlane.xlu0 %1044
    %v1046 = vrcp.pop %v1042
    %v1047 = vrcp.pop %v1045
    %v1048 = vmul.f32 %v1037, %v1046
    %v1049 = vmul.f32 %v1039, %v1047
    %1050 = vrot.lane.b32.xlu0 %v183, 40
    %v1051 = vpop.permute.xlu0 %1050
    %v1054 = vsel %vm247, %v1048, 0
    %1056 = vmatpush.msra.mxu0 0.0
    %1057 = vmatpush.msra.mxu0 0.0
    %1058 = vmatpush.msra.mxu0 0.0
    %1059 = vmatpush.msra.mxu0 0.0
    %1060 = vmatpush.msra.mxu0 0.0
    %1061 = vmatpush.msra.mxu0 0.0
    %1062 = vmatpush.msra.mxu0 0.0
    %1063 = vmatpush.msra.mxu0 0.0
    %1064 = vmatpush.msra.mxu0 0.0
    %1065 = vmatpush.msra.mxu0 0.0
    %1066 = vmatpush.msra.mxu0 0.0
    %1067 = vmatpush.msra.mxu0 0.0
    %1068 = vmatpush.msra.mxu0 0.0
    %1069 = vmatpush.msra.mxu0 0.0
    %1070 = vmatpush.msra.mxu0 0.0
    %1071 = vmatpush.msra.mxu0 %v1051
    %1072 = vmatmul.f32.gmra.mxu0 %v1054
    %v1073 = vpop.f32.mrf.mxu0
    %v1074 = vadd.f32 0.0, %v1073
    %1075 = vdwg.mxu0
    %1076 = vrot.lane.b32.xlu0 %v186, 40
    %v1077 = vpop.permute.xlu0 %1076
    %v1080 = vsel %vm247, %v1049, 0
    %1082 = vmatpush.msra.mxu0 0.0
    %1083 = vmatpush.msra.mxu0 0.0
    %1084 = vmatpush.msra.mxu0 0.0
    %1085 = vmatpush.msra.mxu0 0.0
    %1086 = vmatpush.msra.mxu0 0.0
    %1087 = vmatpush.msra.mxu0 0.0
    %1088 = vmatpush.msra.mxu0 0.0
    %1089 = vmatpush.msra.mxu0 0.0
    %1090 = vmatpush.msra.mxu0 0.0
    %1091 = vmatpush.msra.mxu0 0.0
    %1092 = vmatpush.msra.mxu0 0.0
    %1093 = vmatpush.msra.mxu0 0.0
    %1094 = vmatpush.msra.mxu0 0.0
    %1095 = vmatpush.msra.mxu0 0.0
    %1096 = vmatpush.msra.mxu0 0.0
    %1097 = vmatpush.msra.mxu0 %v1077
    %1098 = vmatmul.f32.gmra.mxu0 %v1080
    %v1099 = vpop.f32.mrf.mxu0
    %v1100 = vadd.f32 0.0, %v1099
    %1101 = vdwg.mxu0
    %1102 = vrot.lane.b32.xlu0 %v188, 100
    %v1103 = vpop.permute.xlu0 %1102
    %1104 = vrot.lane.b32.xlu0 %v183, 68
    %v1105 = vpop.permute.xlu0 %1104
    %v1106 = vsel %vm193, %v1103, 0
    %v1108 = vsel %vm193, %v1105, 0
    %1110 = vmatpush.xpose.msra.mxu0 0.0
    %1111 = vmatpush.xpose.msra.mxu0 0.0
    %1112 = vmatpush.xpose.msra.mxu0 0.0
    %1113 = vmatpush.xpose.msra.mxu0 0.0
    %1114 = vmatpush.xpose.msra.mxu0 0.0
    %1115 = vmatpush.xpose.msra.mxu0 0.0
    %1116 = vmatpush.xpose.msra.mxu0 0.0
    %1117 = vmatpush.xpose.msra.mxu0 0.0
    %1118 = vmatpush.xpose.msra.mxu0 0.0
    %1119 = vmatpush.xpose.msra.mxu0 0.0
    %1120 = vmatpush.xpose.msra.mxu0 0.0
    %1121 = vmatpush.xpose.msra.mxu0 0.0
    %1122 = vmatpush.xpose.msra.mxu0 0.0
    %1123 = vmatpush.xpose.msra.mxu0 0.0
    %1124 = vmatpush.xpose.msra.mxu0 0.0
    %1125 = vmatpush.xpose.msra.mxu0 %v1108
    %1126 = vmatmul.f32.gmra.mxu0 %v1106
    %v1127 = vpop.f32.mrf.mxu0
    %v1128 = vadd.f32 0.0, %v1127
    %1129 = vdwg.mxu0
    %1130 = vrot.lane.b32.xlu0 %v189, 100
    %v1131 = vpop.permute.xlu0 %1130
    %1132 = vrot.lane.b32.xlu0 %v186, 68
    %v1133 = vpop.permute.xlu0 %1132
    %v1134 = vsel %vm193, %v1131, 0
    %v1136 = vsel %vm193, %v1133, 0
    %1138 = vmatpush.xpose.msra.mxu0 0.0
    %1139 = vmatpush.xpose.msra.mxu0 0.0
    %1140 = vmatpush.xpose.msra.mxu0 0.0
    %1141 = vmatpush.xpose.msra.mxu0 0.0
    %1142 = vmatpush.xpose.msra.mxu0 0.0
    %1143 = vmatpush.xpose.msra.mxu0 0.0
    %1144 = vmatpush.xpose.msra.mxu0 0.0
    %1145 = vmatpush.xpose.msra.mxu0 0.0
    %1146 = vmatpush.xpose.msra.mxu0 0.0
    %1147 = vmatpush.xpose.msra.mxu0 0.0
    %1148 = vmatpush.xpose.msra.mxu0 0.0
    %1149 = vmatpush.xpose.msra.mxu0 0.0
    %1150 = vmatpush.xpose.msra.mxu0 0.0
    %1151 = vmatpush.xpose.msra.mxu0 0.0
    %1152 = vmatpush.xpose.msra.mxu0 0.0
    %1153 = vmatpush.xpose.msra.mxu0 %v1136
    %1154 = vmatmul.f32.gmra.mxu0 %v1134
    %v1155 = vpop.f32.mrf.mxu0
    %v1156 = vadd.f32 0.0, %v1155
    %1157 = vdwg.mxu0
    %v1158 = vsel %vm247, %v1128, -inf
    %1159 = vmax.xlane.f32.xlu0 %v1158
    %v1160 = vpop.xlane.xlu0 %1159
    %v1161 = vsel %vm247, %v1156, -inf
    %1162 = vmax.xlane.f32.xlu0 %v1161
    %v1163 = vpop.xlane.xlu0 %1162
    %v1164 = vsub.f32 %v1128, %v1160
    %v1165 = vsub.f32 %v1156, %v1163
    %v1166 = vmul.f32 %v1164, 1.442695
    %v1167 = vpow.pop %v1166
    %v1168 = vmul.f32 %v1165, 1.442695
    %v1169 = vpow.pop %v1168
    %v1170 = vsel %vm247, %v1167, 0.0
    %1171 = vadd.xlane.f32.xlu0 %v1170
    %v1172 = vpop.xlane.xlu0 %1171
    %v1173 = vsel %vm247, %v1169, 0.0
    %1174 = vadd.xlane.f32.xlu0 %v1173
    %v1175 = vpop.xlane.xlu0 %1174
    %v1176 = vrcp.pop %v1172
    %v1177 = vrcp.pop %v1175
    %v1178 = vmul.f32 %v1167, %v1176
    %v1179 = vmul.f32 %v1169, %v1177
    %1180 = vrot.lane.b32.xlu0 %v183, 36
    %v1181 = vpop.permute.xlu0 %1180
    %v1184 = vsel %vm247, %v1178, 0
    %1186 = vmatpush.msra.mxu0 0.0
    %1187 = vmatpush.msra.mxu0 0.0
    %1188 = vmatpush.msra.mxu0 0.0
    %1189 = vmatpush.msra.mxu0 0.0
    %1190 = vmatpush.msra.mxu0 0.0
    %1191 = vmatpush.msra.mxu0 0.0
    %1192 = vmatpush.msra.mxu0 0.0
    %1193 = vmatpush.msra.mxu0 0.0
    %1194 = vmatpush.msra.mxu0 0.0
    %1195 = vmatpush.msra.mxu0 0.0
    %1196 = vmatpush.msra.mxu0 0.0
    %1197 = vmatpush.msra.mxu0 0.0
    %1198 = vmatpush.msra.mxu0 0.0
    %1199 = vmatpush.msra.mxu0 0.0
    %1200 = vmatpush.msra.mxu0 0.0
    %1201 = vmatpush.msra.mxu0 %v1181
    %1202 = vmatmul.f32.gmra.mxu0 %v1184
    %v1203 = vpop.f32.mrf.mxu0
    %v1204 = vadd.f32 0.0, %v1203
    %1205 = vdwg.mxu0
    %1206 = vrot.lane.b32.xlu0 %v186, 36
    %v1207 = vpop.permute.xlu0 %1206
    %v1210 = vsel %vm247, %v1179, 0
    %1212 = vmatpush.msra.mxu0 0.0
    %1213 = vmatpush.msra.mxu0 0.0
    %1214 = vmatpush.msra.mxu0 0.0
    %1215 = vmatpush.msra.mxu0 0.0
    %1216 = vmatpush.msra.mxu0 0.0
    %1217 = vmatpush.msra.mxu0 0.0
    %1218 = vmatpush.msra.mxu0 0.0
    %1219 = vmatpush.msra.mxu0 0.0
    %1220 = vmatpush.msra.mxu0 0.0
    %1221 = vmatpush.msra.mxu0 0.0
    %1222 = vmatpush.msra.mxu0 0.0
    %1223 = vmatpush.msra.mxu0 0.0
    %1224 = vmatpush.msra.mxu0 0.0
    %1225 = vmatpush.msra.mxu0 0.0
    %1226 = vmatpush.msra.mxu0 0.0
    %1227 = vmatpush.msra.mxu0 %v1207
    %1228 = vmatmul.f32.gmra.mxu0 %v1210
    %v1229 = vpop.f32.mrf.mxu0
    %v1230 = vadd.f32 0.0, %v1229
    %1231 = vdwg.mxu0
    %1234 = vrot.lane.b32.xlu0 %v424, 4
    %v1235 = vpop.permute.xlu0 %1234
    %1236 = vrot.lane.b32.xlu0 %v450, 4
    %v1237 = vpop.permute.xlu0 %1236
    %1242 = vrot.lane.b32.xlu0 %v554, 8
    %v1243 = vpop.permute.xlu0 %1242
    %1244 = vrot.lane.b32.xlu0 %v580, 8
    %v1245 = vpop.permute.xlu0 %1244
    %1250 = vrot.lane.b32.xlu0 %v684, 12
    %v1251 = vpop.permute.xlu0 %1250
    %1252 = vrot.lane.b32.xlu0 %v710, 12
    %v1253 = vpop.permute.xlu0 %1252
    %1258 = vrot.lane.b32.xlu0 %v814, 16
    %v1259 = vpop.permute.xlu0 %1258
    %1260 = vrot.lane.b32.xlu0 %v840, 16
    %v1261 = vpop.permute.xlu0 %1260
    %1266 = vrot.lane.b32.xlu0 %v944, 20
    %v1267 = vpop.permute.xlu0 %1266
    %1268 = vrot.lane.b32.xlu0 %v970, 20
    %v1269 = vpop.permute.xlu0 %1268
    %1274 = vrot.lane.b32.xlu0 %v1074, 24
    %v1275 = vpop.permute.xlu0 %1274
    %1276 = vrot.lane.b32.xlu0 %v1100, 24
    %v1277 = vpop.permute.xlu0 %1276
    %1282 = vrot.lane.b32.xlu0 %v1204, 28
    %v1283 = vpop.permute.xlu0 %1282
    %1284 = vrot.lane.b32.xlu0 %v1230, 28
    %v1285 = vpop.permute.xlu0 %1284
    %v1288 = vsel %vm193, %v294, %v1235
    %v1289 = vsel %vm193, %v320, %v1237
    %v1290 = vsel %vm247, %v1288, %v1243
    %v1291 = vsel %vm247, %v1289, %v1245
    %vm1292 = vcmask 97280
    %v1293 = vsel %vm1292, %v1290, %v1251
    %v1294 = vsel %vm1292, %v1291, %v1253
    %vm1295 = vcmask 130048
    %v1296 = vsel %vm1295, %v1293, %v1259
    %v1297 = vsel %vm1295, %v1294, %v1261
    %vm1298 = vcmask 162816
    %v1299 = vsel %vm1298, %v1296, %v1267
    %v1300 = vsel %vm1298, %v1297, %v1269
    %vm1301 = vcmask 195584
    %v1302 = vsel %vm1301, %v1299, %v1275
    %v1303 = vsel %vm1301, %v1300, %v1277
    %vm1304 = vcmask 228352
    %v1305 = vsel %vm1304, %v1302, %v1283
    %v1306 = vsel %vm1304, %v1303, %v1285
    %v1308 = vperm.slane %v152, 0
    %v1311 = vsel %vm158, %v1305, 0
    %v1314 = vsel %vm158, %v1306, 0
    %1316 = vmatpush.msra.mxu0 0.0
    %1317 = vmatpush.msra.mxu0 0.0
    %1318 = vmatpush.msra.mxu0 0.0
    %1319 = vmatpush.msra.mxu0 0.0
    %1320 = vmatpush.msra.mxu0 0.0
    %1321 = vmatpush.msra.mxu0 0.0
    %1322 = vmatpush.msra.mxu0 0.0
    %1323 = vmatpush.msra.mxu0 0.0
    %1324 = vmatpush.msra.mxu0 0.0
    %1325 = vmatpush.msra.mxu0 0.0
    %1326 = vmatpush.msra.mxu0 0.0
    %1327 = vmatpush.msra.mxu0 0.0
    %1328 = vmatpush.msra.mxu0 %v151
    %1329 = vmatpush.msra.mxu0 %v150
    %1330 = vmatpush.msra.mxu0 %v149
    %1331 = vmatpush.msra.mxu0 %v148
    %1332 = vmatmul.f32.gmra.mxu0 %v1311
    %v1333 = vpop.f32.mrf.mxu0
    %v1334 = vadd.f32 %v1308, %v1333
    %1335 = vmatmul.f32.gmra.mxu0 %v1314
    %v1336 = vpop.f32.mrf.mxu0
    %v1337 = vadd.f32 %v1308, %v1336
    %1338 = vdwg.mxu0
    %v1339 = vadd.f32 %v1334, %v139
    %v1340 = vadd.f32 %v1337, %v140
    %v1341 = vsel %vm158, %v1339, 0.0
    %1342 = vadd.xlane.f32.xlu0 %v1341
    %v1343 = vpop.xlane.xlu0 %1342
    %v1344 = vsel %vm158, %v1340, 0.0
    %1345 = vadd.xlane.f32.xlu0 %v1344
    %v1346 = vpop.xlane.xlu0 %1345
    %v1347 = vrcp.pop 32.0
    %v1348 = vmul.f32 32.0, %v1347
    %v1349 = vsub.f32 1.0, %v1348
    %v1350 = vmul.f32 %v1347, %v1349
    %v1351 = vadd.f32 %v1347, %v1350
    %vm1352 = vweird.f32 %v1347
    %v1353 = vsel %vm1352, %v1347, %v1351
    %v1354 = vmul.f32 %v1343, %v1353
    %v1355 = vmul.f32 %v1346, %v1353
    %v1356 = vsub.f32 %v1339, %v1354
    %v1357 = vsub.f32 %v1340, %v1355
    %v1358 = vmul.f32 %v1356, %v1356
    %v1359 = vmul.f32 %v1357, %v1357
    %v1360 = vsel %vm158, %v1358, 0.0
    %1361 = vadd.xlane.f32.xlu0 %v1360
    %v1362 = vpop.xlane.xlu0 %1361
    %v1363 = vsel %vm158, %v1359, 0.0
    %1364 = vadd.xlane.f32.xlu0 %v1363
    %v1365 = vpop.xlane.xlu0 %1364
    %v1366 = vmul.f32 %v1362, %v1353
    %v1367 = vmul.f32 %v1365, %v1353
    %v1368 = vadd.f32 %v1366, 1e-05
    %v1369 = vadd.f32 %v1367, 1e-05
    %v1370 = vrsqrt.pop %v1368
    %v1371 = vmul.f32 %v1370, %v1368
    %v1372 = vmul.f32 %v1371, %v1370
    %v1373 = vmul.f32 0.5, %v1372
    %v1374 = vsub.f32 1.5, %v1373
    %v1375 = vmul.f32 %v1370, %v1374
    %vm1376 = vweird.f32 %v1368
    %vm1377 = vweird.f32 %v1370
    %vm1378 = vmor %vm1376, %vm1377
    %v1379 = vsel %vm1378, %v1370, %v1375
    %v1380 = vrsqrt.pop %v1369
    %v1381 = vmul.f32 %v1380, %v1369
    %v1382 = vmul.f32 %v1381, %v1380
    %v1383 = vmul.f32 0.5, %v1382
    %v1384 = vsub.f32 1.5, %v1383
    %v1385 = vmul.f32 %v1380, %v1384
    %vm1386 = vweird.f32 %v1369
    %vm1387 = vweird.f32 %v1380
    %vm1388 = vmor %vm1386, %vm1387
    %v1389 = vsel %vm1388, %v1380, %v1385
    %v1390 = vmul.f32 %v1356, %v1379
    %v1391 = vmul.f32 %v1357, %v1389
    %v1393 = vperm.slane %v153, 0
    %v1395 = vmul.f32 %v1390, %v1393
    %v1396 = vmul.f32 %v1391, %v1393
    %v1398 = vperm.slane %v154, 0
    %v1400 = vadd.f32 %v1395, %v1398
    %v1401 = vadd.f32 %v1396, %v1398
    %s1402 = scalar_lea.vmem [#allocation7], 32
    %v1403 = vld [vmem:[%s1402] sm:$0xff]
    %v1404 = vld [vmem:[%s1402 + $0x8] sm:$0xff]
    %v1405 = vld [vmem:[%s1402 + $0x10] sm:$0xff]
    %v1406 = vld [vmem:[%s1402 + $0x18] sm:$0xff]
    %s1407 = scalar_lea.vmem [#allocation8], 1
    %v1408 = vld [vmem:[%s1407] sm:$0x1]
    %s1409 = scalar_lea.vmem [#allocation10], 32
    %v1410 = vld [vmem:[%s1409] sm:$0xff]
    %v1411 = vld [vmem:[%s1409 + $0x8] sm:$0xff]
    %v1412 = vld [vmem:[%s1409 + $0x10] sm:$0xff]
    %v1413 = vld [vmem:[%s1409 + $0x18] sm:$0xff]
    %s1414 = scalar_lea.vmem %s5, 1
    %v1415 = vld [vmem:[%s1414] sm:$0x1]
    %s1416 = scalar_lea.vmem [#allocation11], 1
    %v1417 = vld [vmem:[%s1416] sm:$0x1]
    %s1418 = scalar_lea.vmem [#allocation13], 1
    %v1419 = vld [vmem:[%s1418] sm:$0x1]
    %v1421 = vperm.slane %v1408, 0
    %v1424 = vsel %vm158, %v1400, 0
    %v1427 = vsel %vm158, %v1401, 0
    %1429 = vmatpush.msra.mxu0 0.0
    %1430 = vmatpush.msra.mxu0 0.0
    %1431 = vmatpush.msra.mxu0 0.0
    %1432 = vmatpush.msra.mxu0 0.0
    %1433 = vmatpush.msra.mxu0 0.0
    %1434 = vmatpush.msra.mxu0 0.0
    %1435 = vmatpush.msra.mxu0 0.0
    %1436 = vmatpush.msra.mxu0 0.0
    %1437 = vmatpush.msra.mxu0 0.0
    %1438 = vmatpush.msra.mxu0 0.0
    %1439 = vmatpush.msra.mxu0 0.0
    %1440 = vmatpush.msra.mxu0 0.0
    %1441 = vmatpush.msra.mxu0 %v1406
    %1442 = vmatpush.msra.mxu0 %v1405
    %1443 = vmatpush.msra.mxu0 %v1404
    %1444 = vmatpush.msra.mxu0 %v1403
    %1445 = vmatmul.f32.gmra.mxu0 %v1424
    %v1446 = vpop.f32.mrf.mxu0
    %v1447 = vadd.f32 %v1421, %v1446
    %1448 = vmatmul.f32.gmra.mxu0 %v1427
    %v1449 = vpop.f32.mrf.mxu0
    %v1450 = vadd.f32 %v1421, %v1449
    %1451 = vdwg.mxu0
    %v1452 = vmul.f32 %v1447, 0.5
    %v1453 = vmul.f32 %v1450, 0.5
    %1458 = vrot.lane.b32.xlu0 %v1403, 96
    %v1459 = vpop.permute.xlu0 %1458
    %1460 = vrot.lane.b32.xlu0 %v1404, 96
    %v1461 = vpop.permute.xlu0 %1460
    %1462 = vrot.lane.b32.xlu0 %v1405, 96
    %v1463 = vpop.permute.xlu0 %1462
    %1464 = vrot.lane.b32.xlu0 %v1406, 96
    %v1465 = vpop.permute.xlu0 %1464
    %1470 = vrot.lane.b32.xlu0 %v1421, 96
    %v1471 = vpop.permute.xlu0 %1470
    %v1474 = vsel %vm158, %v141, 0
    %1476 = vmatpush.msra.mxu0 0.0
    %1477 = vmatpush.msra.mxu0 0.0
    %1478 = vmatpush.msra.mxu0 0.0
    %1479 = vmatpush.msra.mxu0 0.0
    %1480 = vmatpush.msra.mxu0 0.0
    %1481 = vmatpush.msra.mxu0 0.0
    %1482 = vmatpush.msra.mxu0 0.0
    %1483 = vmatpush.msra.mxu0 0.0
    %1484 = vmatpush.msra.mxu0 0.0
    %1485 = vmatpush.msra.mxu0 0.0
    %1486 = vmatpush.msra.mxu0 0.0
    %1487 = vmatpush.msra.mxu0 0.0
    %1488 = vmatpush.msra.mxu0 %v1465
    %1489 = vmatpush.msra.mxu0 %v1463
    %1490 = vmatpush.msra.mxu0 %v1461
    %1491 = vmatpush.msra.mxu0 %v1459
    %1492 = vmatmul.f32.gmra.mxu0 %v1474
    %v1493 = vpop.f32.mrf.mxu0
    %v1494 = vadd.f32 %v1471, %v1493
    %1495 = vdwg.mxu0
    %v1497 = vsel %vm158, %v142, 0
    %1499 = vmatpush.msra.mxu0 0.0
    %1500 = vmatpush.msra.mxu0 0.0
    %1501 = vmatpush.msra.mxu0 0.0
    %1502 = vmatpush.msra.mxu0 0.0
    %1503 = vmatpush.msra.mxu0 0.0
    %1504 = vmatpush.msra.mxu0 0.0
    %1505 = vmatpush.msra.mxu0 0.0
    %1506 = vmatpush.msra.mxu0 0.0
    %1507 = vmatpush.msra.mxu0 0.0
    %1508 = vmatpush.msra.mxu0 0.0
    %1509 = vmatpush.msra.mxu0 0.0
    %1510 = vmatpush.msra.mxu0 0.0
    %1511 = vmatpush.msra.mxu0 %v1465
    %1512 = vmatpush.msra.mxu0 %v1463
    %1513 = vmatpush.msra.mxu0 %v1461
    %1514 = vmatpush.msra.mxu0 %v1459
    %1515 = vmatmul.f32.gmra.mxu0 %v1497
    %v1516 = vpop.f32.mrf.mxu0
    %v1517 = vadd.f32 %v1471, %v1516
    %1518 = vdwg.mxu0
    %v1520 = vsel %vm193, %v1452, 0
    %v1523 = vsel %vm193, %v1494, 0
    %1525 = vmatpush.xpose.msra.mxu0 0.0
    %1526 = vmatpush.xpose.msra.mxu0 0.0
    %1527 = vmatpush.xpose.msra.mxu0 0.0
    %1528 = vmatpush.xpose.msra.mxu0 0.0
    %1529 = vmatpush.xpose.msra.mxu0 0.0
    %1530 = vmatpush.xpose.msra.mxu0 0.0
    %1531 = vmatpush.xpose.msra.mxu0 0.0
    %1532 = vmatpush.xpose.msra.mxu0 0.0
    %1533 = vmatpush.xpose.msra.mxu0 0.0
    %1534 = vmatpush.xpose.msra.mxu0 0.0
    %1535 = vmatpush.xpose.msra.mxu0 0.0
    %1536 = vmatpush.xpose.msra.mxu0 0.0
    %1537 = vmatpush.xpose.msra.mxu0 0.0
    %1538 = vmatpush.xpose.msra.mxu0 0.0
    %1539 = vmatpush.xpose.msra.mxu0 0.0
    %1540 = vmatpush.xpose.msra.mxu0 %v1523
    %1541 = vmatmul.f32.gmra.mxu0 %v1520
    %v1542 = vpop.f32.mrf.mxu0
    %v1543 = vadd.f32 0.0, %v1542
    %1544 = vdwg.mxu0
    %v1546 = vsel %vm193, %v1453, 0
    %v1549 = vsel %vm193, %v1517, 0
    %1551 = vmatpush.xpose.msra.mxu0 0.0
    %1552 = vmatpush.xpose.msra.mxu0 0.0
    %1553 = vmatpush.xpose.msra.mxu0 0.0
    %1554 = vmatpush.xpose.msra.mxu0 0.0
    %1555 = vmatpush.xpose.msra.mxu0 0.0
    %1556 = vmatpush.xpose.msra.mxu0 0.0
    %1557 = vmatpush.xpose.msra.mxu0 0.0
    %1558 = vmatpush.xpose.msra.mxu0 0.0
    %1559 = vmatpush.xpose.msra.mxu0 0.0
    %1560 = vmatpush.xpose.msra.mxu0 0.0
    %1561 = vmatpush.xpose.msra.mxu0 0.0
    %1562 = vmatpush.xpose.msra.mxu0 0.0
    %1563 = vmatpush.xpose.msra.mxu0 0.0
    %1564 = vmatpush.xpose.msra.mxu0 0.0
    %1565 = vmatpush.xpose.msra.mxu0 0.0
    %1566 = vmatpush.xpose.msra.mxu0 %v1549
    %1567 = vmatmul.f32.gmra.mxu0 %v1546
    %v1568 = vpop.f32.mrf.mxu0
    %v1569 = vadd.f32 0.0, %v1568
    %1570 = vdwg.mxu0
    %v1571 = vsel %vm193, %v1543, -inf
    %1572 = vmax.xlane.f32.xlu0 %v1571
    %v1573 = vpop.xlane.xlu0 %1572
    %v1574 = vsel %vm193, %v1569, -inf
    %1575 = vmax.xlane.f32.xlu0 %v1574
    %v1576 = vpop.xlane.xlu0 %1575
    %v1577 = vsub.f32 %v1543, %v1573
    %v1578 = vsub.f32 %v1569, %v1576
    %v1579 = vmul.f32 %v1577, 1.442695
    %v1580 = vpow.pop %v1579
    %v1581 = vmul.f32 %v1578, 1.442695
    %v1582 = vpow.pop %v1581
    %v1583 = vsel %vm193, %v1580, 0.0
    %1584 = vadd.xlane.f32.xlu0 %v1583
    %v1585 = vpop.xlane.xlu0 %1584
    %v1586 = vsel %vm193, %v1582, 0.0
    %1587 = vadd.xlane.f32.xlu0 %v1586
    %v1588 = vpop.xlane.xlu0 %1587
    %v1589 = vrcp.pop %v1585
    %v1590 = vrcp.pop %v1588
    %v1591 = vmul.f32 %v1580, %v1589
    %v1592 = vmul.f32 %v1582, %v1590
    %1593 = vrot.lane.b32.xlu0 %v1494, 96
    %v1594 = vpop.permute.xlu0 %1593
    %v1596 = vsel %vm193, %v1591, 0
    %vm1598 = vcmask 1043456
    %v1599 = vsel %vm1598, %v1594, 0
    %1601 = vmatpush.msra.mxu0 0.0
    %1602 = vmatpush.msra.mxu0 0.0
    %1603 = vmatpush.msra.mxu0 0.0
    %1604 = vmatpush.msra.mxu0 0.0
    %1605 = vmatpush.msra.mxu0 0.0
    %1606 = vmatpush.msra.mxu0 0.0
    %1607 = vmatpush.msra.mxu0 0.0
    %1608 = vmatpush.msra.mxu0 0.0
    %1609 = vmatpush.msra.mxu0 0.0
    %1610 = vmatpush.msra.mxu0 0.0
    %1611 = vmatpush.msra.mxu0 0.0
    %1612 = vmatpush.msra.mxu0 0.0
    %1613 = vmatpush.msra.mxu0 0.0
    %1614 = vmatpush.msra.mxu0 0.0
    %1615 = vmatpush.msra.mxu0 0.0
    %1616 = vmatpush.msra.mxu0 %v1599
    %1617 = vmatmul.f32.gmra.mxu0 %v1596
    %v1618 = vpop.f32.mrf.mxu0
    %v1619 = vadd.f32 0.0, %v1618
    %1620 = vdwg.mxu0
    %1621 = vrot.lane.b32.xlu0 %v1517, 96
    %v1622 = vpop.permute.xlu0 %1621
    %v1624 = vsel %vm193, %v1592, 0
    %v1626 = vsel %vm1598, %v1622, 0
    %1628 = vmatpush.msra.mxu0 0.0
    %1629 = vmatpush.msra.mxu0 0.0
    %1630 = vmatpush.msra.mxu0 0.0
    %1631 = vmatpush.msra.mxu0 0.0
    %1632 = vmatpush.msra.mxu0 0.0
    %1633 = vmatpush.msra.mxu0 0.0
    %1634 = vmatpush.msra.mxu0 0.0
    %1635 = vmatpush.msra.mxu0 0.0
    %1636 = vmatpush.msra.mxu0 0.0
    %1637 = vmatpush.msra.mxu0 0.0
    %1638 = vmatpush.msra.mxu0 0.0
    %1639 = vmatpush.msra.mxu0 0.0
    %1640 = vmatpush.msra.mxu0 0.0
    %1641 = vmatpush.msra.mxu0 0.0
    %1642 = vmatpush.msra.mxu0 0.0
    %1643 = vmatpush.msra.mxu0 %v1626
    %1644 = vmatmul.f32.gmra.mxu0 %v1624
    %v1645 = vpop.f32.mrf.mxu0
    %v1646 = vadd.f32 0.0, %v1645
    %1647 = vdwg.mxu0
    %1648 = vrot.lane.b32.xlu0 %v1452, 124
    %v1649 = vpop.permute.xlu0 %1648
    %1650 = vrot.lane.b32.xlu0 %v1494, 124
    %v1651 = vpop.permute.xlu0 %1650
    %v1652 = vsel %vm193, %v1649, 0
    %v1654 = vsel %vm193, %v1651, 0
    %1656 = vmatpush.xpose.msra.mxu0 0.0
    %1657 = vmatpush.xpose.msra.mxu0 0.0
    %1658 = vmatpush.xpose.msra.mxu0 0.0
    %1659 = vmatpush.xpose.msra.mxu0 0.0
    %1660 = vmatpush.xpose.msra.mxu0 0.0
    %1661 = vmatpush.xpose.msra.mxu0 0.0
    %1662 = vmatpush.xpose.msra.mxu0 0.0
    %1663 = vmatpush.xpose.msra.mxu0 0.0
    %1664 = vmatpush.xpose.msra.mxu0 0.0
    %1665 = vmatpush.xpose.msra.mxu0 0.0
    %1666 = vmatpush.xpose.msra.mxu0 0.0
    %1667 = vmatpush.xpose.msra.mxu0 0.0
    %1668 = vmatpush.xpose.msra.mxu0 0.0
    %1669 = vmatpush.xpose.msra.mxu0 0.0
    %1670 = vmatpush.xpose.msra.mxu0 0.0
    %1671 = vmatpush.xpose.msra.mxu0 %v1654
    %1672 = vmatmul.f32.gmra.mxu0 %v1652
    %v1673 = vpop.f32.mrf.mxu0
    %v1674 = vadd.f32 0.0, %v1673
    %1675 = vdwg.mxu0
    %1676 = vrot.lane.b32.xlu0 %v1453, 124
    %v1677 = vpop.permute.xlu0 %1676
    %1678 = vrot.lane.b32.xlu0 %v1517, 124
    %v1679 = vpop.permute.xlu0 %1678
    %v1680 = vsel %vm193, %v1677, 0
    %v1682 = vsel %vm193, %v1679, 0
    %1684 = vmatpush.xpose.msra.mxu0 0.0
    %1685 = vmatpush.xpose.msra.mxu0 0.0
    %1686 = vmatpush.xpose.msra.mxu0 0.0
    %1687 = vmatpush.xpose.msra.mxu0 0.0
    %1688 = vmatpush.xpose.msra.mxu0 0.0
    %1689 = vmatpush.xpose.msra.mxu0 0.0
    %1690 = vmatpush.xpose.msra.mxu0 0.0
    %1691 = vmatpush.xpose.msra.mxu0 0.0
    %1692 = vmatpush.xpose.msra.mxu0 0.0
    %1693 = vmatpush.xpose.msra.mxu0 0.0
    %1694 = vmatpush.xpose.msra.mxu0 0.0
    %1695 = vmatpush.xpose.msra.mxu0 0.0
    %1696 = vmatpush.xpose.msra.mxu0 0.0
    %1697 = vmatpush.xpose.msra.mxu0 0.0
    %1698 = vmatpush.xpose.msra.mxu0 0.0
    %1699 = vmatpush.xpose.msra.mxu0 %v1682
    %1700 = vmatmul.f32.gmra.mxu0 %v1680
    %v1701 = vpop.f32.mrf.mxu0
    %v1702 = vadd.f32 0.0, %v1701
    %1703 = vdwg.mxu0
    %v1704 = vsel %vm193, %v1674, -inf
    %1705 = vmax.xlane.f32.xlu0 %v1704
    %v1706 = vpop.xlane.xlu0 %1705
    %v1707 = vsel %vm193, %v1702, -inf
    %1708 = vmax.xlane.f32.xlu0 %v1707
    %v1709 = vpop.xlane.xlu0 %1708
    %v1710 = vsub.f32 %v1674, %v1706
    %v1711 = vsub.f32 %v1702, %v1709
    %v1712 = vmul.f32 %v1710, 1.442695
    %v1713 = vpow.pop %v1712
    %v1714 = vmul.f32 %v1711, 1.442695
    %v1715 = vpow.pop %v1714
    %v1716 = vsel %vm193, %v1713, 0.0
    %1717 = vadd.xlane.f32.xlu0 %v1716
    %v1718 = vpop.xlane.xlu0 %1717
    %v1719 = vsel %vm193, %v1715, 0.0
    %1720 = vadd.xlane.f32.xlu0 %v1719
    %v1721 = vpop.xlane.xlu0 %1720
    %v1722 = vrcp.pop %v1718
    %v1723 = vrcp.pop %v1721
    %v1724 = vmul.f32 %v1713, %v1722
    %v1725 = vmul.f32 %v1715, %v1723
    %1726 = vrot.lane.b32.xlu0 %v1494, 92
    %v1727 = vpop.permute.xlu0 %1726
    %v1729 = vsel %vm193, %v1724, 0
    %v1731 = vsel %vm1598, %v1727, 0
    %1733 = vmatpush.msra.mxu0 0.0
    %1734 = vmatpush.msra.mxu0 0.0
    %1735 = vmatpush.msra.mxu0 0.0
    %1736 = vmatpush.msra.mxu0 0.0
    %1737 = vmatpush.msra.mxu0 0.0
    %1738 = vmatpush.msra.mxu0 0.0
    %1739 = vmatpush.msra.mxu0 0.0
    %1740 = vmatpush.msra.mxu0 0.0
    %1741 = vmatpush.msra.mxu0 0.0
    %1742 = vmatpush.msra.mxu0 0.0
    %1743 = vmatpush.msra.mxu0 0.0
    %1744 = vmatpush.msra.mxu0 0.0
    %1745 = vmatpush.msra.mxu0 0.0
    %1746 = vmatpush.msra.mxu0 0.0
    %1747 = vmatpush.msra.mxu0 0.0
    %1748 = vmatpush.msra.mxu0 %v1731
    %1749 = vmatmul.f32.gmra.mxu0 %v1729
    %v1750 = vpop.f32.mrf.mxu0
    %v1751 = vadd.f32 0.0, %v1750
    %1752 = vdwg.mxu0
    %1753 = vrot.lane.b32.xlu0 %v1517, 92
    %v1754 = vpop.permute.xlu0 %1753
    %v1756 = vsel %vm193, %v1725, 0
    %v1758 = vsel %vm1598, %v1754, 0
    %1760 = vmatpush.msra.mxu0 0.0
    %1761 = vmatpush.msra.mxu0 0.0
    %1762 = vmatpush.msra.mxu0 0.0
    %1763 = vmatpush.msra.mxu0 0.0
    %1764 = vmatpush.msra.mxu0 0.0
    %1765 = vmatpush.msra.mxu0 0.0
    %1766 = vmatpush.msra.mxu0 0.0
    %1767 = vmatpush.msra.mxu0 0.0
    %1768 = vmatpush.msra.mxu0 0.0
    %1769 = vmatpush.msra.mxu0 0.0
    %1770 = vmatpush.msra.mxu0 0.0
    %1771 = vmatpush.msra.mxu0 0.0
    %1772 = vmatpush.msra.mxu0 0.0
    %1773 = vmatpush.msra.mxu0 0.0
    %1774 = vmatpush.msra.mxu0 0.0
    %1775 = vmatpush.msra.mxu0 %v1758
    %1776 = vmatmul.f32.gmra.mxu0 %v1756
    %v1777 = vpop.f32.mrf.mxu0
    %v1778 = vadd.f32 0.0, %v1777
    %1779 = vdwg.mxu0
    %1780 = vrot.lane.b32.xlu0 %v1452, 120
    %v1781 = vpop.permute.xlu0 %1780
    %1782 = vrot.lane.b32.xlu0 %v1494, 120
    %v1783 = vpop.permute.xlu0 %1782
    %v1784 = vsel %vm193, %v1781, 0
    %v1786 = vsel %vm193, %v1783, 0
    %1788 = vmatpush.xpose.msra.mxu0 0.0
    %1789 = vmatpush.xpose.msra.mxu0 0.0
    %1790 = vmatpush.xpose.msra.mxu0 0.0
    %1791 = vmatpush.xpose.msra.mxu0 0.0
    %1792 = vmatpush.xpose.msra.mxu0 0.0
    %1793 = vmatpush.xpose.msra.mxu0 0.0
    %1794 = vmatpush.xpose.msra.mxu0 0.0
    %1795 = vmatpush.xpose.msra.mxu0 0.0
    %1796 = vmatpush.xpose.msra.mxu0 0.0
    %1797 = vmatpush.xpose.msra.mxu0 0.0
    %1798 = vmatpush.xpose.msra.mxu0 0.0
    %1799 = vmatpush.xpose.msra.mxu0 0.0
    %1800 = vmatpush.xpose.msra.mxu0 0.0
    %1801 = vmatpush.xpose.msra.mxu0 0.0
    %1802 = vmatpush.xpose.msra.mxu0 0.0
    %1803 = vmatpush.xpose.msra.mxu0 %v1786
    %1804 = vmatmul.f32.gmra.mxu0 %v1784
    %v1805 = vpop.f32.mrf.mxu0
    %v1806 = vadd.f32 0.0, %v1805
    %1807 = vdwg.mxu0
    %1808 = vrot.lane.b32.xlu0 %v1453, 120
    %v1809 = vpop.permute.xlu0 %1808
    %1810 = vrot.lane.b32.xlu0 %v1517, 120
    %v1811 = vpop.permute.xlu0 %1810
    %v1812 = vsel %vm193, %v1809, 0
    %v1814 = vsel %vm193, %v1811, 0
    %1816 = vmatpush.xpose.msra.mxu0 0.0
    %1817 = vmatpush.xpose.msra.mxu0 0.0
    %1818 = vmatpush.xpose.msra.mxu0 0.0
    %1819 = vmatpush.xpose.msra.mxu0 0.0
    %1820 = vmatpush.xpose.msra.mxu0 0.0
    %1821 = vmatpush.xpose.msra.mxu0 0.0
    %1822 = vmatpush.xpose.msra.mxu0 0.0
    %1823 = vmatpush.xpose.msra.mxu0 0.0
    %1824 = vmatpush.xpose.msra.mxu0 0.0
    %1825 = vmatpush.xpose.msra.mxu0 0.0
    %1826 = vmatpush.xpose.msra.mxu0 0.0
    %1827 = vmatpush.xpose.msra.mxu0 0.0
    %1828 = vmatpush.xpose.msra.mxu0 0.0
    %1829 = vmatpush.xpose.msra.mxu0 0.0
    %1830 = vmatpush.xpose.msra.mxu0 0.0
    %1831 = vmatpush.xpose.msra.mxu0 %v1814
    %1832 = vmatmul.f32.gmra.mxu0 %v1812
    %v1833 = vpop.f32.mrf.mxu0
    %v1834 = vadd.f32 0.0, %v1833
    %1835 = vdwg.mxu0
    %v1836 = vsel %vm193, %v1806, -inf
    %1837 = vmax.xlane.f32.xlu0 %v1836
    %v1838 = vpop.xlane.xlu0 %1837
    %v1839 = vsel %vm193, %v1834, -inf
    %1840 = vmax.xlane.f32.xlu0 %v1839
    %v1841 = vpop.xlane.xlu0 %1840
    %v1842 = vsub.f32 %v1806, %v1838
    %v1843 = vsub.f32 %v1834, %v1841
    %v1844 = vmul.f32 %v1842, 1.442695
    %v1845 = vpow.pop %v1844
    %v1846 = vmul.f32 %v1843, 1.442695
    %v1847 = vpow.pop %v1846
    %v1848 = vsel %vm193, %v1845, 0.0
    %1849 = vadd.xlane.f32.xlu0 %v1848
    %v1850 = vpop.xlane.xlu0 %1849
    %v1851 = vsel %vm193, %v1847, 0.0
    %1852 = vadd.xlane.f32.xlu0 %v1851
    %v1853 = vpop.xlane.xlu0 %1852
    %v1854 = vrcp.pop %v1850
    %v1855 = vrcp.pop %v1853
    %v1856 = vmul.f32 %v1845, %v1854
    %v1857 = vmul.f32 %v1847, %v1855
    %1858 = vrot.lane.b32.xlu0 %v1494, 88
    %v1859 = vpop.permute.xlu0 %1858
    %v1861 = vsel %vm193, %v1856, 0
    %v1863 = vsel %vm1598, %v1859, 0
    %1865 = vmatpush.msra.mxu0 0.0
    %1866 = vmatpush.msra.mxu0 0.0
    %1867 = vmatpush.msra.mxu0 0.0
    %1868 = vmatpush.msra.mxu0 0.0
    %1869 = vmatpush.msra.mxu0 0.0
    %1870 = vmatpush.msra.mxu0 0.0
    %1871 = vmatpush.msra.mxu0 0.0
    %1872 = vmatpush.msra.mxu0 0.0
    %1873 = vmatpush.msra.mxu0 0.0
    %1874 = vmatpush.msra.mxu0 0.0
    %1875 = vmatpush.msra.mxu0 0.0
    %1876 = vmatpush.msra.mxu0 0.0
    %1877 = vmatpush.msra.mxu0 0.0
    %1878 = vmatpush.msra.mxu0 0.0
    %1879 = vmatpush.msra.mxu0 0.0
    %1880 = vmatpush.msra.mxu0 %v1863
    %1881 = vmatmul.f32.gmra.mxu0 %v1861
    %v1882 = vpop.f32.mrf.mxu0
    %v1883 = vadd.f32 0.0, %v1882
    %1884 = vdwg.mxu0
    %1885 = vrot.lane.b32.xlu0 %v1517, 88
    %v1886 = vpop.permute.xlu0 %1885
    %v1888 = vsel %vm193, %v1857, 0
    %v1890 = vsel %vm1598, %v1886, 0
    %1892 = vmatpush.msra.mxu0 0.0
    %1893 = vmatpush.msra.mxu0 0.0
    %1894 = vmatpush.msra.mxu0 0.0
    %1895 = vmatpush.msra.mxu0 0.0
    %1896 = vmatpush.msra.mxu0 0.0
    %1897 = vmatpush.msra.mxu0 0.0
    %1898 = vmatpush.msra.mxu0 0.0
    %1899 = vmatpush.msra.mxu0 0.0
    %1900 = vmatpush.msra.mxu0 0.0
    %1901 = vmatpush.msra.mxu0 0.0
    %1902 = vmatpush.msra.mxu0 0.0
    %1903 = vmatpush.msra.mxu0 0.0
    %1904 = vmatpush.msra.mxu0 0.0
    %1905 = vmatpush.msra.mxu0 0.0
    %1906 = vmatpush.msra.mxu0 0.0
    %1907 = vmatpush.msra.mxu0 %v1890
    %1908 = vmatmul.f32.gmra.mxu0 %v1888
    %v1909 = vpop.f32.mrf.mxu0
    %v1910 = vadd.f32 0.0, %v1909
    %1911 = vdwg.mxu0
    %1912 = vrot.lane.b32.xlu0 %v1452, 116
    %v1913 = vpop.permute.xlu0 %1912
    %1914 = vrot.lane.b32.xlu0 %v1494, 116
    %v1915 = vpop.permute.xlu0 %1914
    %v1916 = vsel %vm193, %v1913, 0
    %v1918 = vsel %vm193, %v1915, 0
    %1920 = vmatpush.xpose.msra.mxu0 0.0
    %1921 = vmatpush.xpose.msra.mxu0 0.0
    %1922 = vmatpush.xpose.msra.mxu0 0.0
    %1923 = vmatpush.xpose.msra.mxu0 0.0
    %1924 = vmatpush.xpose.msra.mxu0 0.0
    %1925 = vmatpush.xpose.msra.mxu0 0.0
    %1926 = vmatpush.xpose.msra.mxu0 0.0
    %1927 = vmatpush.xpose.msra.mxu0 0.0
    %1928 = vmatpush.xpose.msra.mxu0 0.0
    %1929 = vmatpush.xpose.msra.mxu0 0.0
    %1930 = vmatpush.xpose.msra.mxu0 0.0
    %1931 = vmatpush.xpose.msra.mxu0 0.0
    %1932 = vmatpush.xpose.msra.mxu0 0.0
    %1933 = vmatpush.xpose.msra.mxu0 0.0
    %1934 = vmatpush.xpose.msra.mxu0 0.0
    %1935 = vmatpush.xpose.msra.mxu0 %v1918
    %1936 = vmatmul.f32.gmra.mxu0 %v1916
    %v1937 = vpop.f32.mrf.mxu0
    %v1938 = vadd.f32 0.0, %v1937
    %1939 = vdwg.mxu0
    %1940 = vrot.lane.b32.xlu0 %v1453, 116
    %v1941 = vpop.permute.xlu0 %1940
    %1942 = vrot.lane.b32.xlu0 %v1517, 116
    %v1943 = vpop.permute.xlu0 %1942
    %v1944 = vsel %vm193, %v1941, 0
    %v1946 = vsel %vm193, %v1943, 0
    %1948 = vmatpush.xpose.msra.mxu0 0.0
    %1949 = vmatpush.xpose.msra.mxu0 0.0
    %1950 = vmatpush.xpose.msra.mxu0 0.0
    %1951 = vmatpush.xpose.msra.mxu0 0.0
    %1952 = vmatpush.xpose.msra.mxu0 0.0
    %1953 = vmatpush.xpose.msra.mxu0 0.0
    %1954 = vmatpush.xpose.msra.mxu0 0.0
    %1955 = vmatpush.xpose.msra.mxu0 0.0
    %1956 = vmatpush.xpose.msra.mxu0 0.0
    %1957 = vmatpush.xpose.msra.mxu0 0.0
    %1958 = vmatpush.xpose.msra.mxu0 0.0
    %1959 = vmatpush.xpose.msra.mxu0 0.0
    %1960 = vmatpush.xpose.msra.mxu0 0.0
    %1961 = vmatpush.xpose.msra.mxu0 0.0
    %1962 = vmatpush.xpose.msra.mxu0 0.0
    %1963 = vmatpush.xpose.msra.mxu0 %v1946
    %1964 = vmatmul.f32.gmra.mxu0 %v1944
    %v1965 = vpop.f32.mrf.mxu0
    %v1966 = vadd.f32 0.0, %v1965
    %1967 = vdwg.mxu0
    %v1968 = vsel %vm193, %v1938, -inf
    %1969 = vmax.xlane.f32.xlu0 %v1968
    %v1970 = vpop.xlane.xlu0 %1969
    %v1971 = vsel %vm193, %v1966, -inf
    %1972 = vmax.xlane.f32.xlu0 %v1971
    %v1973 = vpop.xlane.xlu0 %1972
    %v1974 = vsub.f32 %v1938, %v1970
    %v1975 = vsub.f32 %v1966, %v1973
    %v1976 = vmul.f32 %v1974, 1.442695
    %v1977 = vpow.pop %v1976
    %v1978 = vmul.f32 %v1975, 1.442695
    %v1979 = vpow.pop %v1978
    %v1980 = vsel %vm193, %v1977, 0.0
    %1981 = vadd.xlane.f32.xlu0 %v1980
    %v1982 = vpop.xlane.xlu0 %1981
    %v1983 = vsel %vm193, %v1979, 0.0
    %1984 = vadd.xlane.f32.xlu0 %v1983
    %v1985 = vpop.xlane.xlu0 %1984
    %v1986 = vrcp.pop %v1982
    %v1987 = vrcp.pop %v1985
    %v1988 = vmul.f32 %v1977, %v1986
    %v1989 = vmul.f32 %v1979, %v1987
    %1990 = vrot.lane.b32.xlu0 %v1494, 84
    %v1991 = vpop.permute.xlu0 %1990
    %v1993 = vsel %vm193, %v1988, 0
    %v1995 = vsel %vm1598, %v1991, 0
    %1997 = vmatpush.msra.mxu0 0.0
    %1998 = vmatpush.msra.mxu0 0.0
    %1999 = vmatpush.msra.mxu0 0.0
    %2000 = vmatpush.msra.mxu0 0.0
    %2001 = vmatpush.msra.mxu0 0.0
    %2002 = vmatpush.msra.mxu0 0.0
    %2003 = vmatpush.msra.mxu0 0.0
    %2004 = vmatpush.msra.mxu0 0.0
    %2005 = vmatpush.msra.mxu0 0.0
    %2006 = vmatpush.msra.mxu0 0.0
    %2007 = vmatpush.msra.mxu0 0.0
    %2008 = vmatpush.msra.mxu0 0.0
    %2009 = vmatpush.msra.mxu0 0.0
    %2010 = vmatpush.msra.mxu0 0.0
    %2011 = vmatpush.msra.mxu0 0.0
    %2012 = vmatpush.msra.mxu0 %v1995
    %2013 = vmatmul.f32.gmra.mxu0 %v1993
    %v2014 = vpop.f32.mrf.mxu0
    %v2015 = vadd.f32 0.0, %v2014
    %2016 = vdwg.mxu0
    %2017 = vrot.lane.b32.xlu0 %v1517, 84
    %v2018 = vpop.permute.xlu0 %2017
    %v2020 = vsel %vm193, %v1989, 0
    %v2022 = vsel %vm1598, %v2018, 0
    %2024 = vmatpush.msra.mxu0 0.0
    %2025 = vmatpush.msra.mxu0 0.0
    %2026 = vmatpush.msra.mxu0 0.0
    %2027 = vmatpush.msra.mxu0 0.0
    %2028 = vmatpush.msra.mxu0 0.0
    %2029 = vmatpush.msra.mxu0 0.0
    %2030 = vmatpush.msra.mxu0 0.0
    %2031 = vmatpush.msra.mxu0 0.0
    %2032 = vmatpush.msra.mxu0 0.0
    %2033 = vmatpush.msra.mxu0 0.0
    %2034 = vmatpush.msra.mxu0 0.0
    %2035 = vmatpush.msra.mxu0 0.0
    %2036 = vmatpush.msra.mxu0 0.0
    %2037 = vmatpush.msra.mxu0 0.0
    %2038 = vmatpush.msra.mxu0 0.0
    %2039 = vmatpush.msra.mxu0 %v2022
    %2040 = vmatmul.f32.gmra.mxu0 %v2020
    %v2041 = vpop.f32.mrf.mxu0
    %v2042 = vadd.f32 0.0, %v2041
    %2043 = vdwg.mxu0
    %2044 = vrot.lane.b32.xlu0 %v1452, 112
    %v2045 = vpop.permute.xlu0 %2044
    %2046 = vrot.lane.b32.xlu0 %v1494, 112
    %v2047 = vpop.permute.xlu0 %2046
    %v2048 = vsel %vm193, %v2045, 0
    %v2050 = vsel %vm193, %v2047, 0
    %2052 = vmatpush.xpose.msra.mxu0 0.0
    %2053 = vmatpush.xpose.msra.mxu0 0.0
    %2054 = vmatpush.xpose.msra.mxu0 0.0
    %2055 = vmatpush.xpose.msra.mxu0 0.0
    %2056 = vmatpush.xpose.msra.mxu0 0.0
    %2057 = vmatpush.xpose.msra.mxu0 0.0
    %2058 = vmatpush.xpose.msra.mxu0 0.0
    %2059 = vmatpush.xpose.msra.mxu0 0.0
    %2060 = vmatpush.xpose.msra.mxu0 0.0
    %2061 = vmatpush.xpose.msra.mxu0 0.0
    %2062 = vmatpush.xpose.msra.mxu0 0.0
    %2063 = vmatpush.xpose.msra.mxu0 0.0
    %2064 = vmatpush.xpose.msra.mxu0 0.0
    %2065 = vmatpush.xpose.msra.mxu0 0.0
    %2066 = vmatpush.xpose.msra.mxu0 0.0
    %2067 = vmatpush.xpose.msra.mxu0 %v2050
    %2068 = vmatmul.f32.gmra.mxu0 %v2048
    %v2069 = vpop.f32.mrf.mxu0
    %v2070 = vadd.f32 0.0, %v2069
    %2071 = vdwg.mxu0
    %2072 = vrot.lane.b32.xlu0 %v1453, 112
    %v2073 = vpop.permute.xlu0 %2072
    %2074 = vrot.lane.b32.xlu0 %v1517, 112
    %v2075 = vpop.permute.xlu0 %2074
    %v2076 = vsel %vm193, %v2073, 0
    %v2078 = vsel %vm193, %v2075, 0
    %2080 = vmatpush.xpose.msra.mxu0 0.0
    %2081 = vmatpush.xpose.msra.mxu0 0.0
    %2082 = vmatpush.xpose.msra.mxu0 0.0
    %2083 = vmatpush.xpose.msra.mxu0 0.0
    %2084 = vmatpush.xpose.msra.mxu0 0.0
    %2085 = vmatpush.xpose.msra.mxu0 0.0
    %2086 = vmatpush.xpose.msra.mxu0 0.0
    %2087 = vmatpush.xpose.msra.mxu0 0.0
    %2088 = vmatpush.xpose.msra.mxu0 0.0
    %2089 = vmatpush.xpose.msra.mxu0 0.0
    %2090 = vmatpush.xpose.msra.mxu0 0.0
    %2091 = vmatpush.xpose.msra.mxu0 0.0
    %2092 = vmatpush.xpose.msra.mxu0 0.0
    %2093 = vmatpush.xpose.msra.mxu0 0.0
    %2094 = vmatpush.xpose.msra.mxu0 0.0
    %2095 = vmatpush.xpose.msra.mxu0 %v2078
    %2096 = vmatmul.f32.gmra.mxu0 %v2076
    %v2097 = vpop.f32.mrf.mxu0
    %v2098 = vadd.f32 0.0, %v2097
    %2099 = vdwg.mxu0
    %v2100 = vsel %vm193, %v2070, -inf
    %2101 = vmax.xlane.f32.xlu0 %v2100
    %v2102 = vpop.xlane.xlu0 %2101
    %v2103 = vsel %vm193, %v2098, -inf
    %2104 = vmax.xlane.f32.xlu0 %v2103
    %v2105 = vpop.xlane.xlu0 %2104
    %v2106 = vsub.f32 %v2070, %v2102
    %v2107 = vsub.f32 %v2098, %v2105
    %v2108 = vmul.f32 %v2106, 1.442695
    %v2109 = vpow.pop %v2108
    %v2110 = vmul.f32 %v2107, 1.442695
    %v2111 = vpow.pop %v2110
    %v2112 = vsel %vm193, %v2109, 0.0
    %2113 = vadd.xlane.f32.xlu0 %v2112
    %v2114 = vpop.xlane.xlu0 %2113
    %v2115 = vsel %vm193, %v2111, 0.0
    %2116 = vadd.xlane.f32.xlu0 %v2115
    %v2117 = vpop.xlane.xlu0 %2116
    %v2118 = vrcp.pop %v2114
    %v2119 = vrcp.pop %v2117
    %v2120 = vmul.f32 %v2109, %v2118
    %v2121 = vmul.f32 %v2111, %v2119
    %2122 = vrot.lane.b32.xlu0 %v1494, 80
    %v2123 = vpop.permute.xlu0 %2122
    %v2125 = vsel %vm193, %v2120, 0
    %v2127 = vsel %vm1598, %v2123, 0
    %2129 = vmatpush.msra.mxu0 0.0
    %2130 = vmatpush.msra.mxu0 0.0
    %2131 = vmatpush.msra.mxu0 0.0
    %2132 = vmatpush.msra.mxu0 0.0
    %2133 = vmatpush.msra.mxu0 0.0
    %2134 = vmatpush.msra.mxu0 0.0
    %2135 = vmatpush.msra.mxu0 0.0
    %2136 = vmatpush.msra.mxu0 0.0
    %2137 = vmatpush.msra.mxu0 0.0
    %2138 = vmatpush.msra.mxu0 0.0
    %2139 = vmatpush.msra.mxu0 0.0
    %2140 = vmatpush.msra.mxu0 0.0
    %2141 = vmatpush.msra.mxu0 0.0
    %2142 = vmatpush.msra.mxu0 0.0
    %2143 = vmatpush.msra.mxu0 0.0
    %2144 = vmatpush.msra.mxu0 %v2127
    %2145 = vmatmul.f32.gmra.mxu0 %v2125
    %v2146 = vpop.f32.mrf.mxu0
    %v2147 = vadd.f32 0.0, %v2146
    %2148 = vdwg.mxu0
    %2149 = vrot.lane.b32.xlu0 %v1517, 80
    %v2150 = vpop.permute.xlu0 %2149
    %v2152 = vsel %vm193, %v2121, 0
    %v2154 = vsel %vm1598, %v2150, 0
    %2156 = vmatpush.msra.mxu0 0.0
    %2157 = vmatpush.msra.mxu0 0.0
    %2158 = vmatpush.msra.mxu0 0.0
    %2159 = vmatpush.msra.mxu0 0.0
    %2160 = vmatpush.msra.mxu0 0.0
    %2161 = vmatpush.msra.mxu0 0.0
    %2162 = vmatpush.msra.mxu0 0.0
    %2163 = vmatpush.msra.mxu0 0.0
    %2164 = vmatpush.msra.mxu0 0.0
    %2165 = vmatpush.msra.mxu0 0.0
    %2166 = vmatpush.msra.mxu0 0.0
    %2167 = vmatpush.msra.mxu0 0.0
    %2168 = vmatpush.msra.mxu0 0.0
    %2169 = vmatpush.msra.mxu0 0.0
    %2170 = vmatpush.msra.mxu0 0.0
    %2171 = vmatpush.msra.mxu0 %v2154
    %2172 = vmatmul.f32.gmra.mxu0 %v2152
    %v2173 = vpop.f32.mrf.mxu0
    %v2174 = vadd.f32 0.0, %v2173
    %2175 = vdwg.mxu0
    %2176 = vrot.lane.b32.xlu0 %v1452, 108
    %v2177 = vpop.permute.xlu0 %2176
    %2178 = vrot.lane.b32.xlu0 %v1494, 108
    %v2179 = vpop.permute.xlu0 %2178
    %v2180 = vsel %vm193, %v2177, 0
    %v2182 = vsel %vm193, %v2179, 0
    %2184 = vmatpush.xpose.msra.mxu0 0.0
    %2185 = vmatpush.xpose.msra.mxu0 0.0
    %2186 = vmatpush.xpose.msra.mxu0 0.0
    %2187 = vmatpush.xpose.msra.mxu0 0.0
    %2188 = vmatpush.xpose.msra.mxu0 0.0
    %2189 = vmatpush.xpose.msra.mxu0 0.0
    %2190 = vmatpush.xpose.msra.mxu0 0.0
    %2191 = vmatpush.xpose.msra.mxu0 0.0
    %2192 = vmatpush.xpose.msra.mxu0 0.0
    %2193 = vmatpush.xpose.msra.mxu0 0.0
    %2194 = vmatpush.xpose.msra.mxu0 0.0
    %2195 = vmatpush.xpose.msra.mxu0 0.0
    %2196 = vmatpush.xpose.msra.mxu0 0.0
    %2197 = vmatpush.xpose.msra.mxu0 0.0
    %2198 = vmatpush.xpose.msra.mxu0 0.0
    %2199 = vmatpush.xpose.msra.mxu0 %v2182
    %2200 = vmatmul.f32.gmra.mxu0 %v2180
    %v2201 = vpop.f32.mrf.mxu0
    %v2202 = vadd.f32 0.0, %v2201
    %2203 = vdwg.mxu0
    %2204 = vrot.lane.b32.xlu0 %v1453, 108
    %v2205 = vpop.permute.xlu0 %2204
    %2206 = vrot.lane.b32.xlu0 %v1517, 108
    %v2207 = vpop.permute.xlu0 %2206
    %v2208 = vsel %vm193, %v2205, 0
    %v2210 = vsel %vm193, %v2207, 0
    %2212 = vmatpush.xpose.msra.mxu0 0.0
    %2213 = vmatpush.xpose.msra.mxu0 0.0
    %2214 = vmatpush.xpose.msra.mxu0 0.0
    %2215 = vmatpush.xpose.msra.mxu0 0.0
    %2216 = vmatpush.xpose.msra.mxu0 0.0
    %2217 = vmatpush.xpose.msra.mxu0 0.0
    %2218 = vmatpush.xpose.msra.mxu0 0.0
    %2219 = vmatpush.xpose.msra.mxu0 0.0
    %2220 = vmatpush.xpose.msra.mxu0 0.0
    %2221 = vmatpush.xpose.msra.mxu0 0.0
    %2222 = vmatpush.xpose.msra.mxu0 0.0
    %2223 = vmatpush.xpose.msra.mxu0 0.0
    %2224 = vmatpush.xpose.msra.mxu0 0.0
    %2225 = vmatpush.xpose.msra.mxu0 0.0
    %2226 = vmatpush.xpose.msra.mxu0 0.0
    %2227 = vmatpush.xpose.msra.mxu0 %v2210
    %2228 = vmatmul.f32.gmra.mxu0 %v2208
    %v2229 = vpop.f32.mrf.mxu0
    %v2230 = vadd.f32 0.0, %v2229
    %2231 = vdwg.mxu0
    %v2232 = vsel %vm193, %v2202, -inf
    %2233 = vmax.xlane.f32.xlu0 %v2232
    %v2234 = vpop.xlane.xlu0 %2233
    %v2235 = vsel %vm193, %v2230, -inf
    %2236 = vmax.xlane.f32.xlu0 %v2235
    %v2237 = vpop.xlane.xlu0 %2236
    %v2238 = vsub.f32 %v2202, %v2234
    %v2239 = vsub.f32 %v2230, %v2237
    %v2240 = vmul.f32 %v2238, 1.442695
    %v2241 = vpow.pop %v2240
    %v2242 = vmul.f32 %v2239, 1.442695
    %v2243 = vpow.pop %v2242
    %v2244 = vsel %vm193, %v2241, 0.0
    %2245 = vadd.xlane.f32.xlu0 %v2244
    %v2246 = vpop.xlane.xlu0 %2245
    %v2247 = vsel %vm193, %v2243, 0.0
    %2248 = vadd.xlane.f32.xlu0 %v2247
    %v2249 = vpop.xlane.xlu0 %2248
    %v2250 = vrcp.pop %v2246
    %v2251 = vrcp.pop %v2249
    %v2252 = vmul.f32 %v2241, %v2250
    %v2253 = vmul.f32 %v2243, %v2251
    %2254 = vrot.lane.b32.xlu0 %v1494, 76
    %v2255 = vpop.permute.xlu0 %2254
    %v2257 = vsel %vm193, %v2252, 0
    %v2259 = vsel %vm1598, %v2255, 0
    %2261 = vmatpush.msra.mxu0 0.0
    %2262 = vmatpush.msra.mxu0 0.0
    %2263 = vmatpush.msra.mxu0 0.0
    %2264 = vmatpush.msra.mxu0 0.0
    %2265 = vmatpush.msra.mxu0 0.0
    %2266 = vmatpush.msra.mxu0 0.0
    %2267 = vmatpush.msra.mxu0 0.0
    %2268 = vmatpush.msra.mxu0 0.0
    %2269 = vmatpush.msra.mxu0 0.0
    %2270 = vmatpush.msra.mxu0 0.0
    %2271 = vmatpush.msra.mxu0 0.0
    %2272 = vmatpush.msra.mxu0 0.0
    %2273 = vmatpush.msra.mxu0 0.0
    %2274 = vmatpush.msra.mxu0 0.0
    %2275 = vmatpush.msra.mxu0 0.0
    %2276 = vmatpush.msra.mxu0 %v2259
    %2277 = vmatmul.f32.gmra.mxu0 %v2257
    %v2278 = vpop.f32.mrf.mxu0
    %v2279 = vadd.f32 0.0, %v2278
    %2280 = vdwg.mxu0
    %2281 = vrot.lane.b32.xlu0 %v1517, 76
    %v2282 = vpop.permute.xlu0 %2281
    %v2284 = vsel %vm193, %v2253, 0
    %v2286 = vsel %vm1598, %v2282, 0
    %2288 = vmatpush.msra.mxu0 0.0
    %2289 = vmatpush.msra.mxu0 0.0
    %2290 = vmatpush.msra.mxu0 0.0
    %2291 = vmatpush.msra.mxu0 0.0
    %2292 = vmatpush.msra.mxu0 0.0
    %2293 = vmatpush.msra.mxu0 0.0
    %2294 = vmatpush.msra.mxu0 0.0
    %2295 = vmatpush.msra.mxu0 0.0
    %2296 = vmatpush.msra.mxu0 0.0
    %2297 = vmatpush.msra.mxu0 0.0
    %2298 = vmatpush.msra.mxu0 0.0
    %2299 = vmatpush.msra.mxu0 0.0
    %2300 = vmatpush.msra.mxu0 0.0
    %2301 = vmatpush.msra.mxu0 0.0
    %2302 = vmatpush.msra.mxu0 0.0
    %2303 = vmatpush.msra.mxu0 %v2286
    %2304 = vmatmul.f32.gmra.mxu0 %v2284
    %v2305 = vpop.f32.mrf.mxu0
    %v2306 = vadd.f32 0.0, %v2305
    %2307 = vdwg.mxu0
    %2308 = vrot.lane.b32.xlu0 %v1452, 104
    %v2309 = vpop.permute.xlu0 %2308
    %2310 = vrot.lane.b32.xlu0 %v1494, 104
    %v2311 = vpop.permute.xlu0 %2310
    %v2312 = vsel %vm193, %v2309, 0
    %v2314 = vsel %vm193, %v2311, 0
    %2316 = vmatpush.xpose.msra.mxu0 0.0
    %2317 = vmatpush.xpose.msra.mxu0 0.0
    %2318 = vmatpush.xpose.msra.mxu0 0.0
    %2319 = vmatpush.xpose.msra.mxu0 0.0
    %2320 = vmatpush.xpose.msra.mxu0 0.0
    %2321 = vmatpush.xpose.msra.mxu0 0.0
    %2322 = vmatpush.xpose.msra.mxu0 0.0
    %2323 = vmatpush.xpose.msra.mxu0 0.0
    %2324 = vmatpush.xpose.msra.mxu0 0.0
    %2325 = vmatpush.xpose.msra.mxu0 0.0
    %2326 = vmatpush.xpose.msra.mxu0 0.0
    %2327 = vmatpush.xpose.msra.mxu0 0.0
    %2328 = vmatpush.xpose.msra.mxu0 0.0
    %2329 = vmatpush.xpose.msra.mxu0 0.0
    %2330 = vmatpush.xpose.msra.mxu0 0.0
    %2331 = vmatpush.xpose.msra.mxu0 %v2314
    %2332 = vmatmul.f32.gmra.mxu0 %v2312
    %v2333 = vpop.f32.mrf.mxu0
    %v2334 = vadd.f32 0.0, %v2333
    %2335 = vdwg.mxu0
    %2336 = vrot.lane.b32.xlu0 %v1453, 104
    %v2337 = vpop.permute.xlu0 %2336
    %2338 = vrot.lane.b32.xlu0 %v1517, 104
    %v2339 = vpop.permute.xlu0 %2338
    %v2340 = vsel %vm193, %v2337, 0
    %v2342 = vsel %vm193, %v2339, 0
    %2344 = vmatpush.xpose.msra.mxu0 0.0
    %2345 = vmatpush.xpose.msra.mxu0 0.0
    %2346 = vmatpush.xpose.msra.mxu0 0.0
    %2347 = vmatpush.xpose.msra.mxu0 0.0
    %2348 = vmatpush.xpose.msra.mxu0 0.0
    %2349 = vmatpush.xpose.msra.mxu0 0.0
    %2350 = vmatpush.xpose.msra.mxu0 0.0
    %2351 = vmatpush.xpose.msra.mxu0 0.0
    %2352 = vmatpush.xpose.msra.mxu0 0.0
    %2353 = vmatpush.xpose.msra.mxu0 0.0
    %2354 = vmatpush.xpose.msra.mxu0 0.0
    %2355 = vmatpush.xpose.msra.mxu0 0.0
    %2356 = vmatpush.xpose.msra.mxu0 0.0
    %2357 = vmatpush.xpose.msra.mxu0 0.0
    %2358 = vmatpush.xpose.msra.mxu0 0.0
    %2359 = vmatpush.xpose.msra.mxu0 %v2342
    %2360 = vmatmul.f32.gmra.mxu0 %v2340
    %v2361 = vpop.f32.mrf.mxu0
    %v2362 = vadd.f32 0.0, %v2361
    %2363 = vdwg.mxu0
    %v2364 = vsel %vm193, %v2334, -inf
    %2365 = vmax.xlane.f32.xlu0 %v2364
    %v2366 = vpop.xlane.xlu0 %2365
    %v2367 = vsel %vm193, %v2362, -inf
    %2368 = vmax.xlane.f32.xlu0 %v2367
    %v2369 = vpop.xlane.xlu0 %2368
    %v2370 = vsub.f32 %v2334, %v2366
    %v2371 = vsub.f32 %v2362, %v2369
    %v2372 = vmul.f32 %v2370, 1.442695
    %v2373 = vpow.pop %v2372
    %v2374 = vmul.f32 %v2371, 1.442695
    %v2375 = vpow.pop %v2374
    %v2376 = vsel %vm193, %v2373, 0.0
    %2377 = vadd.xlane.f32.xlu0 %v2376
    %v2378 = vpop.xlane.xlu0 %2377
    %v2379 = vsel %vm193, %v2375, 0.0
    %2380 = vadd.xlane.f32.xlu0 %v2379
    %v2381 = vpop.xlane.xlu0 %2380
    %v2382 = vrcp.pop %v2378
    %v2383 = vrcp.pop %v2381
    %v2384 = vmul.f32 %v2373, %v2382
    %v2385 = vmul.f32 %v2375, %v2383
    %2386 = vrot.lane.b32.xlu0 %v1494, 72
    %v2387 = vpop.permute.xlu0 %2386
    %v2389 = vsel %vm193, %v2384, 0
    %v2391 = vsel %vm1598, %v2387, 0
    %2393 = vmatpush.msra.mxu0 0.0
    %2394 = vmatpush.msra.mxu0 0.0
    %2395 = vmatpush.msra.mxu0 0.0
    %2396 = vmatpush.msra.mxu0 0.0
    %2397 = vmatpush.msra.mxu0 0.0
    %2398 = vmatpush.msra.mxu0 0.0
    %2399 = vmatpush.msra.mxu0 0.0
    %2400 = vmatpush.msra.mxu0 0.0
    %2401 = vmatpush.msra.mxu0 0.0
    %2402 = vmatpush.msra.mxu0 0.0
    %2403 = vmatpush.msra.mxu0 0.0
    %2404 = vmatpush.msra.mxu0 0.0
    %2405 = vmatpush.msra.mxu0 0.0
    %2406 = vmatpush.msra.mxu0 0.0
    %2407 = vmatpush.msra.mxu0 0.0
    %2408 = vmatpush.msra.mxu0 %v2391
    %2409 = vmatmul.f32.gmra.mxu0 %v2389
    %v2410 = vpop.f32.mrf.mxu0
    %v2411 = vadd.f32 0.0, %v2410
    %2412 = vdwg.mxu0
    %2413 = vrot.lane.b32.xlu0 %v1517, 72
    %v2414 = vpop.permute.xlu0 %2413
    %v2416 = vsel %vm193, %v2385, 0
    %v2418 = vsel %vm1598, %v2414, 0
    %2420 = vmatpush.msra.mxu0 0.0
    %2421 = vmatpush.msra.mxu0 0.0
    %2422 = vmatpush.msra.mxu0 0.0
    %2423 = vmatpush.msra.mxu0 0.0
    %2424 = vmatpush.msra.mxu0 0.0
    %2425 = vmatpush.msra.mxu0 0.0
    %2426 = vmatpush.msra.mxu0 0.0
    %2427 = vmatpush.msra.mxu0 0.0
    %2428 = vmatpush.msra.mxu0 0.0
    %2429 = vmatpush.msra.mxu0 0.0
    %2430 = vmatpush.msra.mxu0 0.0
    %2431 = vmatpush.msra.mxu0 0.0
    %2432 = vmatpush.msra.mxu0 0.0
    %2433 = vmatpush.msra.mxu0 0.0
    %2434 = vmatpush.msra.mxu0 0.0
    %2435 = vmatpush.msra.mxu0 %v2418
    %2436 = vmatmul.f32.gmra.mxu0 %v2416
    %v2437 = vpop.f32.mrf.mxu0
    %v2438 = vadd.f32 0.0, %v2437
    %2439 = vdwg.mxu0
    %2440 = vrot.lane.b32.xlu0 %v1452, 100
    %v2441 = vpop.permute.xlu0 %2440
    %2442 = vrot.lane.b32.xlu0 %v1494, 100
    %v2443 = vpop.permute.xlu0 %2442
    %v2444 = vsel %vm193, %v2441, 0
    %v2446 = vsel %vm193, %v2443, 0
    %2448 = vmatpush.xpose.msra.mxu0 0.0
    %2449 = vmatpush.xpose.msra.mxu0 0.0
    %2450 = vmatpush.xpose.msra.mxu0 0.0
    %2451 = vmatpush.xpose.msra.mxu0 0.0
    %2452 = vmatpush.xpose.msra.mxu0 0.0
    %2453 = vmatpush.xpose.msra.mxu0 0.0
    %2454 = vmatpush.xpose.msra.mxu0 0.0
    %2455 = vmatpush.xpose.msra.mxu0 0.0
    %2456 = vmatpush.xpose.msra.mxu0 0.0
    %2457 = vmatpush.xpose.msra.mxu0 0.0
    %2458 = vmatpush.xpose.msra.mxu0 0.0
    %2459 = vmatpush.xpose.msra.mxu0 0.0
    %2460 = vmatpush.xpose.msra.mxu0 0.0
    %2461 = vmatpush.xpose.msra.mxu0 0.0
    %2462 = vmatpush.xpose.msra.mxu0 0.0
    %2463 = vmatpush.xpose.msra.mxu0 %v2446
    %2464 = vmatmul.f32.gmra.mxu0 %v2444
    %v2465 = vpop.f32.mrf.mxu0
    %v2466 = vadd.f32 0.0, %v2465
    %2467 = vdwg.mxu0
    %2468 = vrot.lane.b32.xlu0 %v1453, 100
    %v2469 = vpop.permute.xlu0 %2468
    %2470 = vrot.lane.b32.xlu0 %v1517, 100
    %v2471 = vpop.permute.xlu0 %2470
    %v2472 = vsel %vm193, %v2469, 0
    %v2474 = vsel %vm193, %v2471, 0
    %2476 = vmatpush.xpose.msra.mxu0 0.0
    %2477 = vmatpush.xpose.msra.mxu0 0.0
    %2478 = vmatpush.xpose.msra.mxu0 0.0
    %2479 = vmatpush.xpose.msra.mxu0 0.0
    %2480 = vmatpush.xpose.msra.mxu0 0.0
    %2481 = vmatpush.xpose.msra.mxu0 0.0
    %2482 = vmatpush.xpose.msra.mxu0 0.0
    %2483 = vmatpush.xpose.msra.mxu0 0.0
    %2484 = vmatpush.xpose.msra.mxu0 0.0
    %2485 = vmatpush.xpose.msra.mxu0 0.0
    %2486 = vmatpush.xpose.msra.mxu0 0.0
    %2487 = vmatpush.xpose.msra.mxu0 0.0
    %2488 = vmatpush.xpose.msra.mxu0 0.0
    %2489 = vmatpush.xpose.msra.mxu0 0.0
    %2490 = vmatpush.xpose.msra.mxu0 0.0
    %2491 = vmatpush.xpose.msra.mxu0 %v2474
    %2492 = vmatmul.f32.gmra.mxu0 %v2472
    %v2493 = vpop.f32.mrf.mxu0
    %v2494 = vadd.f32 0.0, %v2493
    %2495 = vdwg.mxu0
    %v2496 = vsel %vm193, %v2466, -inf
    %2497 = vmax.xlane.f32.xlu0 %v2496
    %v2498 = vpop.xlane.xlu0 %2497
    %v2499 = vsel %vm193, %v2494, -inf
    %2500 = vmax.xlane.f32.xlu0 %v2499
    %v2501 = vpop.xlane.xlu0 %2500
    %v2502 = vsub.f32 %v2466, %v2498
    %v2503 = vsub.f32 %v2494, %v2501
    %v2504 = vmul.f32 %v2502, 1.442695
    %v2505 = vpow.pop %v2504
    %v2506 = vmul.f32 %v2503, 1.442695
    %v2507 = vpow.pop %v2506
    %v2508 = vsel %vm193, %v2505, 0.0
    %2509 = vadd.xlane.f32.xlu0 %v2508
    %v2510 = vpop.xlane.xlu0 %2509
    %v2511 = vsel %vm193, %v2507, 0.0
    %2512 = vadd.xlane.f32.xlu0 %v2511
    %v2513 = vpop.xlane.xlu0 %2512
    %v2514 = vrcp.pop %v2510
    %v2515 = vrcp.pop %v2513
    %v2516 = vmul.f32 %v2505, %v2514
    %v2517 = vmul.f32 %v2507, %v2515
    %2518 = vrot.lane.b32.xlu0 %v1494, 68
    %v2519 = vpop.permute.xlu0 %2518
    %v2521 = vsel %vm193, %v2516, 0
    %v2523 = vsel %vm1598, %v2519, 0
    %2525 = vmatpush.msra.mxu0 0.0
    %2526 = vmatpush.msra.mxu0 0.0
    %2527 = vmatpush.msra.mxu0 0.0
    %2528 = vmatpush.msra.mxu0 0.0
    %2529 = vmatpush.msra.mxu0 0.0
    %2530 = vmatpush.msra.mxu0 0.0
    %2531 = vmatpush.msra.mxu0 0.0
    %2532 = vmatpush.msra.mxu0 0.0
    %2533 = vmatpush.msra.mxu0 0.0
    %2534 = vmatpush.msra.mxu0 0.0
    %2535 = vmatpush.msra.mxu0 0.0
    %2536 = vmatpush.msra.mxu0 0.0
    %2537 = vmatpush.msra.mxu0 0.0
    %2538 = vmatpush.msra.mxu0 0.0
    %2539 = vmatpush.msra.mxu0 0.0
    %2540 = vmatpush.msra.mxu0 %v2523
    %2541 = vmatmul.f32.gmra.mxu0 %v2521
    %v2542 = vpop.f32.mrf.mxu0
    %v2543 = vadd.f32 0.0, %v2542
    %2544 = vdwg.mxu0
    %2545 = vrot.lane.b32.xlu0 %v1517, 68
    %v2546 = vpop.permute.xlu0 %2545
    %v2548 = vsel %vm193, %v2517, 0
    %v2550 = vsel %vm1598, %v2546, 0
    %2552 = vmatpush.msra.mxu0 0.0
    %2553 = vmatpush.msra.mxu0 0.0
    %2554 = vmatpush.msra.mxu0 0.0
    %2555 = vmatpush.msra.mxu0 0.0
    %2556 = vmatpush.msra.mxu0 0.0
    %2557 = vmatpush.msra.mxu0 0.0
    %2558 = vmatpush.msra.mxu0 0.0
    %2559 = vmatpush.msra.mxu0 0.0
    %2560 = vmatpush.msra.mxu0 0.0
    %2561 = vmatpush.msra.mxu0 0.0
    %2562 = vmatpush.msra.mxu0 0.0
    %2563 = vmatpush.msra.mxu0 0.0
    %2564 = vmatpush.msra.mxu0 0.0
    %2565 = vmatpush.msra.mxu0 0.0
    %2566 = vmatpush.msra.mxu0 0.0
    %2567 = vmatpush.msra.mxu0 %v2550
    %2568 = vmatmul.f32.gmra.mxu0 %v2548
    %v2569 = vpop.f32.mrf.mxu0
    %v2570 = vadd.f32 0.0, %v2569
    %2571 = vdwg.mxu0
    %2574 = vrot.lane.b32.xlu0 %v1751, 4
    %v2575 = vpop.permute.xlu0 %2574
    %2576 = vrot.lane.b32.xlu0 %v1778, 4
    %v2577 = vpop.permute.xlu0 %2576
    %2582 = vrot.lane.b32.xlu0 %v1883, 8
    %v2583 = vpop.permute.xlu0 %2582
    %2584 = vrot.lane.b32.xlu0 %v1910, 8
    %v2585 = vpop.permute.xlu0 %2584
    %2590 = vrot.lane.b32.xlu0 %v2015, 12
    %v2591 = vpop.permute.xlu0 %2590
    %2592 = vrot.lane.b32.xlu0 %v2042, 12
    %v2593 = vpop.permute.xlu0 %2592
    %2598 = vrot.lane.b32.xlu0 %v2147, 16
    %v2599 = vpop.permute.xlu0 %2598
    %2600 = vrot.lane.b32.xlu0 %v2174, 16
    %v2601 = vpop.permute.xlu0 %2600
    %2606 = vrot.lane.b32.xlu0 %v2279, 20
    %v2607 = vpop.permute.xlu0 %2606
    %2608 = vrot.lane.b32.xlu0 %v2306, 20
    %v2609 = vpop.permute.xlu0 %2608
    %2614 = vrot.lane.b32.xlu0 %v2411, 24
    %v2615 = vpop.permute.xlu0 %2614
    %2616 = vrot.lane.b32.xlu0 %v2438, 24
    %v2617 = vpop.permute.xlu0 %2616
    %2622 = vrot.lane.b32.xlu0 %v2543, 28
    %v2623 = vpop.permute.xlu0 %2622
    %2624 = vrot.lane.b32.xlu0 %v2570, 28
    %v2625 = vpop.permute.xlu0 %2624
    %v2628 = vsel %vm193, %v1619, %v2575
    %v2629 = vsel %vm193, %v1646, %v2577
    %v2630 = vsel %vm247, %v2628, %v2583
    %v2631 = vsel %vm247, %v2629, %v2585
    %v2632 = vsel %vm1292, %v2630, %v2591
    %v2633 = vsel %vm1292, %v2631, %v2593
    %v2634 = vsel %vm1295, %v2632, %v2599
    %v2635 = vsel %vm1295, %v2633, %v2601
    %v2636 = vsel %vm1298, %v2634, %v2607
    %v2637 = vsel %vm1298, %v2635, %v2609
    %v2638 = vsel %vm1301, %v2636, %v2615
    %v2639 = vsel %vm1301, %v2637, %v2617
    %v2640 = vsel %vm1304, %v2638, %v2623
    %v2641 = vsel %vm1304, %v2639, %v2625
    %v2643 = vperm.slane %v1415, 0
    %v2646 = vsel %vm158, %v2640, 0
    %v2649 = vsel %vm158, %v2641, 0
    %2651 = vmatpush.msra.mxu0 0.0
    %2652 = vmatpush.msra.mxu0 0.0
    %2653 = vmatpush.msra.mxu0 0.0
    %2654 = vmatpush.msra.mxu0 0.0
    %2655 = vmatpush.msra.mxu0 0.0
    %2656 = vmatpush.msra.mxu0 0.0
    %2657 = vmatpush.msra.mxu0 0.0
    %2658 = vmatpush.msra.mxu0 0.0
    %2659 = vmatpush.msra.mxu0 0.0
    %2660 = vmatpush.msra.mxu0 0.0
    %2661 = vmatpush.msra.mxu0 0.0
    %2662 = vmatpush.msra.mxu0 0.0
    %2663 = vmatpush.msra.mxu0 %v1413
    %2664 = vmatpush.msra.mxu0 %v1412
    %2665 = vmatpush.msra.mxu0 %v1411
    %2666 = vmatpush.msra.mxu0 %v1410
    %2667 = vmatmul.f32.gmra.mxu0 %v2646
    %v2668 = vpop.f32.mrf.mxu0
    %v2669 = vadd.f32 %v2643, %v2668
    %2670 = vmatmul.f32.gmra.mxu0 %v2649
    %v2671 = vpop.f32.mrf.mxu0
    %v2672 = vadd.f32 %v2643, %v2671
    %2673 = vdwg.mxu0
    %v2674 = vadd.f32 %v2669, %v1400
    %v2675 = vadd.f32 %v2672, %v1401
    %v2676 = vsel %vm158, %v2674, 0.0
    %2677 = vadd.xlane.f32.xlu0 %v2676
    %v2678 = vpop.xlane.xlu0 %2677
    %v2679 = vsel %vm158, %v2675, 0.0
    %2680 = vadd.xlane.f32.xlu0 %v2679
    %v2681 = vpop.xlane.xlu0 %2680
    %v2682 = vmul.f32 %v2678, %v1353
    %v2683 = vmul.f32 %v2681, %v1353
    %v2684 = vsub.f32 %v2674, %v2682
    %v2685 = vsub.f32 %v2675, %v2683
    %v2686 = vmul.f32 %v2684, %v2684
    %v2687 = vmul.f32 %v2685, %v2685
    %v2688 = vsel %vm158, %v2686, 0.0
    %2689 = vadd.xlane.f32.xlu0 %v2688
    %v2690 = vpop.xlane.xlu0 %2689
    %v2691 = vsel %vm158, %v2687, 0.0
    %2692 = vadd.xlane.f32.xlu0 %v2691
    %v2693 = vpop.xlane.xlu0 %2692
    %v2694 = vmul.f32 %v2690, %v1353
    %v2695 = vmul.f32 %v2693, %v1353
    %v2696 = vadd.f32 %v2694, 1e-05
    %v2697 = vadd.f32 %v2695, 1e-05
    %v2698 = vrsqrt.pop %v2696
    %v2699 = vmul.f32 %v2698, %v2696
    %v2700 = vmul.f32 %v2699, %v2698
    %v2701 = vmul.f32 0.5, %v2700
    %v2702 = vsub.f32 1.5, %v2701
    %v2703 = vmul.f32 %v2698, %v2702
    %vm2704 = vweird.f32 %v2696
    %vm2705 = vweird.f32 %v2698
    %vm2706 = vmor %vm2704, %vm2705
    %v2707 = vsel %vm2706, %v2698, %v2703
    %v2708 = vrsqrt.pop %v2697
    %v2709 = vmul.f32 %v2708, %v2697
    %v2710 = vmul.f32 %v2709, %v2708
    %v2711 = vmul.f32 0.5, %v2710
    %v2712 = vsub.f32 1.5, %v2711
    %v2713 = vmul.f32 %v2708, %v2712
    %vm2714 = vweird.f32 %v2697
    %vm2715 = vweird.f32 %v2708
    %vm2716 = vmor %vm2714, %vm2715
    %v2717 = vsel %vm2716, %v2708, %v2713
    %v2718 = vmul.f32 %v2684, %v2707
    %v2719 = vmul.f32 %v2685, %v2717
    %v2721 = vperm.slane %v1417, 0
    %v2723 = vmul.f32 %v2718, %v2721
    %v2724 = vmul.f32 %v2719, %v2721
    %v2726 = vperm.slane %v1419, 0
    %v2728 = vadd.f32 %v2723, %v2726
    %v2729 = vadd.f32 %v2724, %v2726
    %s2730 = scalar_lea.vmem [#allocation7], 64
    %v2731 = vld [vmem:[%s2730] sm:$0xff]
    %v2732 = vld [vmem:[%s2730 + $0x8] sm:$0xff]
    %v2733 = vld [vmem:[%s2730 + $0x10] sm:$0xff]
    %v2734 = vld [vmem:[%s2730 + $0x18] sm:$0xff]
    %s2735 = scalar_lea.vmem [#allocation8], 2
    %v2736 = vld [vmem:[%s2735] sm:$0x1]
    %s2737 = scalar_lea.vmem [#allocation10], 64
    %v2738 = vld [vmem:[%s2737] sm:$0xff]
    %v2739 = vld [vmem:[%s2737 + $0x8] sm:$0xff]
    %v2740 = vld [vmem:[%s2737 + $0x10] sm:$0xff]
    %v2741 = vld [vmem:[%s2737 + $0x18] sm:$0xff]
    %s2742 = scalar_lea.vmem %s5, 2
    %v2743 = vld [vmem:[%s2742] sm:$0x1]
    %s2744 = scalar_lea.vmem [#allocation11], 2
    %v2745 = vld [vmem:[%s2744] sm:$0x1]
    %s2746 = scalar_lea.vmem [#allocation13], 2
    %v2747 = vld [vmem:[%s2746] sm:$0x1]
    %v2749 = vperm.slane %v2736, 0
    %v2752 = vsel %vm158, %v2728, 0
    %v2755 = vsel %vm158, %v2729, 0
    %2757 = vmatpush.msra.mxu0 0.0
    %2758 = vmatpush.msra.mxu0 0.0
    %2759 = vmatpush.msra.mxu0 0.0
    %2760 = vmatpush.msra.mxu0 0.0
    %2761 = vmatpush.msra.mxu0 0.0
    %2762 = vmatpush.msra.mxu0 0.0
    %2763 = vmatpush.msra.mxu0 0.0
    %2764 = vmatpush.msra.mxu0 0.0
    %2765 = vmatpush.msra.mxu0 0.0
    %2766 = vmatpush.msra.mxu0 0.0
    %2767 = vmatpush.msra.mxu0 0.0
    %2768 = vmatpush.msra.mxu0 0.0
    %2769 = vmatpush.msra.mxu0 %v2734
    %2770 = vmatpush.msra.mxu0 %v2733
    %2771 = vmatpush.msra.mxu0 %v2732
    %2772 = vmatpush.msra.mxu0 %v2731
    %2773 = vmatmul.f32.gmra.mxu0 %v2752
    %v2774 = vpop.f32.mrf.mxu0
    %v2775 = vadd.f32 %v2749, %v2774
    %2776 = vmatmul.f32.gmra.mxu0 %v2755
    %v2777 = vpop.f32.mrf.mxu0
    %v2778 = vadd.f32 %v2749, %v2777
    %2779 = vdwg.mxu0
    %v2780 = vmul.f32 %v2775, 0.5
    %v2781 = vmul.f32 %v2778, 0.5
    %2783 = vrot.lane.b32.xlu0 %v2775, 96
    %v2784 = vpop.permute.xlu0 %2783
    %v2786 = vsel %vm193, %v2780, 0
    %v2788 = vsel %vm193, %v2784, 0
    %2790 = vmatpush.xpose.msra.mxu0 0.0
    %2791 = vmatpush.xpose.msra.mxu0 0.0
    %2792 = vmatpush.xpose.msra.mxu0 0.0
    %2793 = vmatpush.xpose.msra.mxu0 0.0
    %2794 = vmatpush.xpose.msra.mxu0 0.0
    %2795 = vmatpush.xpose.msra.mxu0 0.0
    %2796 = vmatpush.xpose.msra.mxu0 0.0
    %2797 = vmatpush.xpose.msra.mxu0 0.0
    %2798 = vmatpush.xpose.msra.mxu0 0.0
    %2799 = vmatpush.xpose.msra.mxu0 0.0
    %2800 = vmatpush.xpose.msra.mxu0 0.0
    %2801 = vmatpush.xpose.msra.mxu0 0.0
    %2802 = vmatpush.xpose.msra.mxu0 0.0
    %2803 = vmatpush.xpose.msra.mxu0 0.0
    %2804 = vmatpush.xpose.msra.mxu0 0.0
    %2805 = vmatpush.xpose.msra.mxu0 %v2788
    %2806 = vmatmul.f32.gmra.mxu0 %v2786
    %v2807 = vpop.f32.mrf.mxu0
    %v2808 = vadd.f32 0.0, %v2807
    %2809 = vdwg.mxu0
    %2811 = vrot.lane.b32.xlu0 %v2778, 96
    %v2812 = vpop.permute.xlu0 %2811
    %v2814 = vsel %vm193, %v2781, 0
    %v2816 = vsel %vm193, %v2812, 0
    %2818 = vmatpush.xpose.msra.mxu0 0.0
    %2819 = vmatpush.xpose.msra.mxu0 0.0
    %2820 = vmatpush.xpose.msra.mxu0 0.0
    %2821 = vmatpush.xpose.msra.mxu0 0.0
    %2822 = vmatpush.xpose.msra.mxu0 0.0
    %2823 = vmatpush.xpose.msra.mxu0 0.0
    %2824 = vmatpush.xpose.msra.mxu0 0.0
    %2825 = vmatpush.xpose.msra.mxu0 0.0
    %2826 = vmatpush.xpose.msra.mxu0 0.0
    %2827 = vmatpush.xpose.msra.mxu0 0.0
    %2828 = vmatpush.xpose.msra.mxu0 0.0
    %2829 = vmatpush.xpose.msra.mxu0 0.0
    %2830 = vmatpush.xpose.msra.mxu0 0.0
    %2831 = vmatpush.xpose.msra.mxu0 0.0
    %2832 = vmatpush.xpose.msra.mxu0 0.0
    %2833 = vmatpush.xpose.msra.mxu0 %v2816
    %2834 = vmatmul.f32.gmra.mxu0 %v2814
    %v2835 = vpop.f32.mrf.mxu0
    %v2836 = vadd.f32 0.0, %v2835
    %2837 = vdwg.mxu0
    %v2838 = vsel %vm247, %v2808, -inf
    %2839 = vmax.xlane.f32.xlu0 %v2838
    %v2840 = vpop.xlane.xlu0 %2839
    %v2841 = vsel %vm247, %v2836, -inf
    %2842 = vmax.xlane.f32.xlu0 %v2841
    %v2843 = vpop.xlane.xlu0 %2842
    %v2844 = vsub.f32 %v2808, %v2840
    %v2845 = vsub.f32 %v2836, %v2843
    %v2846 = vmul.f32 %v2844, 1.442695
    %v2847 = vpow.pop %v2846
    %v2848 = vmul.f32 %v2845, 1.442695
    %v2849 = vpow.pop %v2848
    %v2850 = vsel %vm247, %v2847, 0.0
    %2851 = vadd.xlane.f32.xlu0 %v2850
    %v2852 = vpop.xlane.xlu0 %2851
    %v2853 = vsel %vm247, %v2849, 0.0
    %2854 = vadd.xlane.f32.xlu0 %v2853
    %v2855 = vpop.xlane.xlu0 %2854
    %v2856 = vrcp.pop %v2852
    %v2857 = vrcp.pop %v2855
    %v2858 = vmul.f32 %v2847, %v2856
    %v2859 = vmul.f32 %v2849, %v2857
    %2860 = vrot.lane.b32.xlu0 %v2775, 64
    %v2861 = vpop.permute.xlu0 %2860
    %v2864 = vsel %vm247, %v2858, 0
    %2866 = vmatpush.msra.mxu0 0.0
    %2867 = vmatpush.msra.mxu0 0.0
    %2868 = vmatpush.msra.mxu0 0.0
    %2869 = vmatpush.msra.mxu0 0.0
    %2870 = vmatpush.msra.mxu0 0.0
    %2871 = vmatpush.msra.mxu0 0.0
    %2872 = vmatpush.msra.mxu0 0.0
    %2873 = vmatpush.msra.mxu0 0.0
    %2874 = vmatpush.msra.mxu0 0.0
    %2875 = vmatpush.msra.mxu0 0.0
    %2876 = vmatpush.msra.mxu0 0.0
    %2877 = vmatpush.msra.mxu0 0.0
    %2878 = vmatpush.msra.mxu0 0.0
    %2879 = vmatpush.msra.mxu0 0.0
    %2880 = vmatpush.msra.mxu0 0.0
    %2881 = vmatpush.msra.mxu0 %v2861
    %2882 = vmatmul.f32.gmra.mxu0 %v2864
    %v2883 = vpop.f32.mrf.mxu0
    %v2884 = vadd.f32 0.0, %v2883
    %2885 = vdwg.mxu0
    %2886 = vrot.lane.b32.xlu0 %v2778, 64
    %v2887 = vpop.permute.xlu0 %2886
    %v2890 = vsel %vm247, %v2859, 0
    %2892 = vmatpush.msra.mxu0 0.0
    %2893 = vmatpush.msra.mxu0 0.0
    %2894 = vmatpush.msra.mxu0 0.0
    %2895 = vmatpush.msra.mxu0 0.0
    %2896 = vmatpush.msra.mxu0 0.0
    %2897 = vmatpush.msra.mxu0 0.0
    %2898 = vmatpush.msra.mxu0 0.0
    %2899 = vmatpush.msra.mxu0 0.0
    %2900 = vmatpush.msra.mxu0 0.0
    %2901 = vmatpush.msra.mxu0 0.0
    %2902 = vmatpush.msra.mxu0 0.0
    %2903 = vmatpush.msra.mxu0 0.0
    %2904 = vmatpush.msra.mxu0 0.0
    %2905 = vmatpush.msra.mxu0 0.0
    %2906 = vmatpush.msra.mxu0 0.0
    %2907 = vmatpush.msra.mxu0 %v2887
    %2908 = vmatmul.f32.gmra.mxu0 %v2890
    %v2909 = vpop.f32.mrf.mxu0
    %v2910 = vadd.f32 0.0, %v2909
    %2911 = vdwg.mxu0
    %2912 = vrot.lane.b32.xlu0 %v2780, 124
    %v2913 = vpop.permute.xlu0 %2912
    %2914 = vrot.lane.b32.xlu0 %v2775, 92
    %v2915 = vpop.permute.xlu0 %2914
    %v2916 = vsel %vm193, %v2913, 0
    %v2918 = vsel %vm193, %v2915, 0
    %2920 = vmatpush.xpose.msra.mxu0 0.0
    %2921 = vmatpush.xpose.msra.mxu0 0.0
    %2922 = vmatpush.xpose.msra.mxu0 0.0
    %2923 = vmatpush.xpose.msra.mxu0 0.0
    %2924 = vmatpush.xpose.msra.mxu0 0.0
    %2925 = vmatpush.xpose.msra.mxu0 0.0
    %2926 = vmatpush.xpose.msra.mxu0 0.0
    %2927 = vmatpush.xpose.msra.mxu0 0.0
    %2928 = vmatpush.xpose.msra.mxu0 0.0
    %2929 = vmatpush.xpose.msra.mxu0 0.0
    %2930 = vmatpush.xpose.msra.mxu0 0.0
    %2931 = vmatpush.xpose.msra.mxu0 0.0
    %2932 = vmatpush.xpose.msra.mxu0 0.0
    %2933 = vmatpush.xpose.msra.mxu0 0.0
    %2934 = vmatpush.xpose.msra.mxu0 0.0
    %2935 = vmatpush.xpose.msra.mxu0 %v2918
    %2936 = vmatmul.f32.gmra.mxu0 %v2916
    %v2937 = vpop.f32.mrf.mxu0
    %v2938 = vadd.f32 0.0, %v2937
    %2939 = vdwg.mxu0
    %2940 = vrot.lane.b32.xlu0 %v2781, 124
    %v2941 = vpop.permute.xlu0 %2940
    %2942 = vrot.lane.b32.xlu0 %v2778, 92
    %v2943 = vpop.permute.xlu0 %2942
    %v2944 = vsel %vm193, %v2941, 0
    %v2946 = vsel %vm193, %v2943, 0
    %2948 = vmatpush.xpose.msra.mxu0 0.0
    %2949 = vmatpush.xpose.msra.mxu0 0.0
    %2950 = vmatpush.xpose.msra.mxu0 0.0
    %2951 = vmatpush.xpose.msra.mxu0 0.0
    %2952 = vmatpush.xpose.msra.mxu0 0.0
    %2953 = vmatpush.xpose.msra.mxu0 0.0
    %2954 = vmatpush.xpose.msra.mxu0 0.0
    %2955 = vmatpush.xpose.msra.mxu0 0.0
    %2956 = vmatpush.xpose.msra.mxu0 0.0
    %2957 = vmatpush.xpose.msra.mxu0 0.0
    %2958 = vmatpush.xpose.msra.mxu0 0.0
    %2959 = vmatpush.xpose.msra.mxu0 0.0
    %2960 = vmatpush.xpose.msra.mxu0 0.0
    %2961 = vmatpush.xpose.msra.mxu0 0.0
    %2962 = vmatpush.xpose.msra.mxu0 0.0
    %2963 = vmatpush.xpose.msra.mxu0 %v2946
    %2964 = vmatmul.f32.gmra.mxu0 %v2944
    %v2965 = vpop.f32.mrf.mxu0
    %v2966 = vadd.f32 0.0, %v2965
    %2967 = vdwg.mxu0
    %v2968 = vsel %vm247, %v2938, -inf
    %2969 = vmax.xlane.f32.xlu0 %v2968
    %v2970 = vpop.xlane.xlu0 %2969
    %v2971 = vsel %vm247, %v2966, -inf
    %2972 = vmax.xlane.f32.xlu0 %v2971
    %v2973 = vpop.xlane.xlu0 %2972
    %v2974 = vsub.f32 %v2938, %v2970
    %v2975 = vsub.f32 %v2966, %v2973
    %v2976 = vmul.f32 %v2974, 1.442695
    %v2977 = vpow.pop %v2976
    %v2978 = vmul.f32 %v2975, 1.442695
    %v2979 = vpow.pop %v2978
    %v2980 = vsel %vm247, %v2977, 0.0
    %2981 = vadd.xlane.f32.xlu0 %v2980
    %v2982 = vpop.xlane.xlu0 %2981
    %v2983 = vsel %vm247, %v2979, 0.0
    %2984 = vadd.xlane.f32.xlu0 %v2983
    %v2985 = vpop.xlane.xlu0 %2984
    %v2986 = vrcp.pop %v2982
    %v2987 = vrcp.pop %v2985
    %v2988 = vmul.f32 %v2977, %v2986
    %v2989 = vmul.f32 %v2979, %v2987
    %2990 = vrot.lane.b32.xlu0 %v2775, 60
    %v2991 = vpop.permute.xlu0 %2990
    %v2994 = vsel %vm247, %v2988, 0
    %2996 = vmatpush.msra.mxu0 0.0
    %2997 = vmatpush.msra.mxu0 0.0
    %2998 = vmatpush.msra.mxu0 0.0
    %2999 = vmatpush.msra.mxu0 0.0
    %3000 = vmatpush.msra.mxu0 0.0
    %3001 = vmatpush.msra.mxu0 0.0
    %3002 = vmatpush.msra.mxu0 0.0
    %3003 = vmatpush.msra.mxu0 0.0
    %3004 = vmatpush.msra.mxu0 0.0
    %3005 = vmatpush.msra.mxu0 0.0
    %3006 = vmatpush.msra.mxu0 0.0
    %3007 = vmatpush.msra.mxu0 0.0
    %3008 = vmatpush.msra.mxu0 0.0
    %3009 = vmatpush.msra.mxu0 0.0
    %3010 = vmatpush.msra.mxu0 0.0
    %3011 = vmatpush.msra.mxu0 %v2991
    %3012 = vmatmul.f32.gmra.mxu0 %v2994
    %v3013 = vpop.f32.mrf.mxu0
    %v3014 = vadd.f32 0.0, %v3013
    %3015 = vdwg.mxu0
    %3016 = vrot.lane.b32.xlu0 %v2778, 60
    %v3017 = vpop.permute.xlu0 %3016
    %v3020 = vsel %vm247, %v2989, 0
    %3022 = vmatpush.msra.mxu0 0.0
    %3023 = vmatpush.msra.mxu0 0.0
    %3024 = vmatpush.msra.mxu0 0.0
    %3025 = vmatpush.msra.mxu0 0.0
    %3026 = vmatpush.msra.mxu0 0.0
    %3027 = vmatpush.msra.mxu0 0.0
    %3028 = vmatpush.msra.mxu0 0.0
    %3029 = vmatpush.msra.mxu0 0.0
    %3030 = vmatpush.msra.mxu0 0.0
    %3031 = vmatpush.msra.mxu0 0.0
    %3032 = vmatpush.msra.mxu0 0.0
    %3033 = vmatpush.msra.mxu0 0.0
    %3034 = vmatpush.msra.mxu0 0.0
    %3035 = vmatpush.msra.mxu0 0.0
    %3036 = vmatpush.msra.mxu0 0.0
    %3037 = vmatpush.msra.mxu0 %v3017
    %3038 = vmatmul.f32.gmra.mxu0 %v3020
    %v3039 = vpop.f32.mrf.mxu0
    %v3040 = vadd.f32 0.0, %v3039
    %3041 = vdwg.mxu0
    %3042 = vrot.lane.b32.xlu0 %v2780, 120
    %v3043 = vpop.permute.xlu0 %3042
    %3044 = vrot.lane.b32.xlu0 %v2775, 88
    %v3045 = vpop.permute.xlu0 %3044
    %v3046 = vsel %vm193, %v3043, 0
    %v3048 = vsel %vm193, %v3045, 0
    %3050 = vmatpush.xpose.msra.mxu0 0.0
    %3051 = vmatpush.xpose.msra.mxu0 0.0
    %3052 = vmatpush.xpose.msra.mxu0 0.0
    %3053 = vmatpush.xpose.msra.mxu0 0.0
    %3054 = vmatpush.xpose.msra.mxu0 0.0
    %3055 = vmatpush.xpose.msra.mxu0 0.0
    %3056 = vmatpush.xpose.msra.mxu0 0.0
    %3057 = vmatpush.xpose.msra.mxu0 0.0
    %3058 = vmatpush.xpose.msra.mxu0 0.0
    %3059 = vmatpush.xpose.msra.mxu0 0.0
    %3060 = vmatpush.xpose.msra.mxu0 0.0
    %3061 = vmatpush.xpose.msra.mxu0 0.0
    %3062 = vmatpush.xpose.msra.mxu0 0.0
    %3063 = vmatpush.xpose.msra.mxu0 0.0
    %3064 = vmatpush.xpose.msra.mxu0 0.0
    %3065 = vmatpush.xpose.msra.mxu0 %v3048
    %3066 = vmatmul.f32.gmra.mxu0 %v3046
    %v3067 = vpop.f32.mrf.mxu0
    %v3068 = vadd.f32 0.0, %v3067
    %3069 = vdwg.mxu0
    %3070 = vrot.lane.b32.xlu0 %v2781, 120
    %v3071 = vpop.permute.xlu0 %3070
    %3072 = vrot.lane.b32.xlu0 %v2778, 88
    %v3073 = vpop.permute.xlu0 %3072
    %v3074 = vsel %vm193, %v3071, 0
    %v3076 = vsel %vm193, %v3073, 0
    %3078 = vmatpush.xpose.msra.mxu0 0.0
    %3079 = vmatpush.xpose.msra.mxu0 0.0
    %3080 = vmatpush.xpose.msra.mxu0 0.0
    %3081 = vmatpush.xpose.msra.mxu0 0.0
    %3082 = vmatpush.xpose.msra.mxu0 0.0
    %3083 = vmatpush.xpose.msra.mxu0 0.0
    %3084 = vmatpush.xpose.msra.mxu0 0.0
    %3085 = vmatpush.xpose.msra.mxu0 0.0
    %3086 = vmatpush.xpose.msra.mxu0 0.0
    %3087 = vmatpush.xpose.msra.mxu0 0.0
    %3088 = vmatpush.xpose.msra.mxu0 0.0
    %3089 = vmatpush.xpose.msra.mxu0 0.0
    %3090 = vmatpush.xpose.msra.mxu0 0.0
    %3091 = vmatpush.xpose.msra.mxu0 0.0
    %3092 = vmatpush.xpose.msra.mxu0 0.0
    %3093 = vmatpush.xpose.msra.mxu0 %v3076
    %3094 = vmatmul.f32.gmra.mxu0 %v3074
    %v3095 = vpop.f32.mrf.mxu0
    %v3096 = vadd.f32 0.0, %v3095
    %3097 = vdwg.mxu0
    %v3098 = vsel %vm247, %v3068, -inf
    %3099 = vmax.xlane.f32.xlu0 %v3098
    %v3100 = vpop.xlane.xlu0 %3099
    %v3101 = vsel %vm247, %v3096, -inf
    %3102 = vmax.xlane.f32.xlu0 %v3101
    %v3103 = vpop.xlane.xlu0 %3102
    %v3104 = vsub.f32 %v3068, %v3100
    %v3105 = vsub.f32 %v3096, %v3103
    %v3106 = vmul.f32 %v3104, 1.442695
    %v3107 = vpow.pop %v3106
    %v3108 = vmul.f32 %v3105, 1.442695
    %v3109 = vpow.pop %v3108
    %v3110 = vsel %vm247, %v3107, 0.0
    %3111 = vadd.xlane.f32.xlu0 %v3110
    %v3112 = vpop.xlane.xlu0 %3111
    %v3113 = vsel %vm247, %v3109, 0.0
    %3114 = vadd.xlane.f32.xlu0 %v3113
    %v3115 = vpop.xlane.xlu0 %3114
    %v3116 = vrcp.pop %v3112
    %v3117 = vrcp.pop %v3115
    %v3118 = vmul.f32 %v3107, %v3116
    %v3119 = vmul.f32 %v3109, %v3117
    %3120 = vrot.lane.b32.xlu0 %v2775, 56
    %v3121 = vpop.permute.xlu0 %3120
    %v3124 = vsel %vm247, %v3118, 0
    %3126 = vmatpush.msra.mxu0 0.0
    %3127 = vmatpush.msra.mxu0 0.0
    %3128 = vmatpush.msra.mxu0 0.0
    %3129 = vmatpush.msra.mxu0 0.0
    %3130 = vmatpush.msra.mxu0 0.0
    %3131 = vmatpush.msra.mxu0 0.0
    %3132 = vmatpush.msra.mxu0 0.0
    %3133 = vmatpush.msra.mxu0 0.0
    %3134 = vmatpush.msra.mxu0 0.0
    %3135 = vmatpush.msra.mxu0 0.0
    %3136 = vmatpush.msra.mxu0 0.0
    %3137 = vmatpush.msra.mxu0 0.0
    %3138 = vmatpush.msra.mxu0 0.0
    %3139 = vmatpush.msra.mxu0 0.0
    %3140 = vmatpush.msra.mxu0 0.0
    %3141 = vmatpush.msra.mxu0 %v3121
    %3142 = vmatmul.f32.gmra.mxu0 %v3124
    %v3143 = vpop.f32.mrf.mxu0
    %v3144 = vadd.f32 0.0, %v3143
    %3145 = vdwg.mxu0
    %3146 = vrot.lane.b32.xlu0 %v2778, 56
    %v3147 = vpop.permute.xlu0 %3146
    %v3150 = vsel %vm247, %v3119, 0
    %3152 = vmatpush.msra.mxu0 0.0
    %3153 = vmatpush.msra.mxu0 0.0
    %3154 = vmatpush.msra.mxu0 0.0
    %3155 = vmatpush.msra.mxu0 0.0
    %3156 = vmatpush.msra.mxu0 0.0
    %3157 = vmatpush.msra.mxu0 0.0
    %3158 = vmatpush.msra.mxu0 0.0
    %3159 = vmatpush.msra.mxu0 0.0
    %3160 = vmatpush.msra.mxu0 0.0
    %3161 = vmatpush.msra.mxu0 0.0
    %3162 = vmatpush.msra.mxu0 0.0
    %3163 = vmatpush.msra.mxu0 0.0
    %3164 = vmatpush.msra.mxu0 0.0
    %3165 = vmatpush.msra.mxu0 0.0
    %3166 = vmatpush.msra.mxu0 0.0
    %3167 = vmatpush.msra.mxu0 %v3147
    %3168 = vmatmul.f32.gmra.mxu0 %v3150
    %v3169 = vpop.f32.mrf.mxu0
    %v3170 = vadd.f32 0.0, %v3169
    %3171 = vdwg.mxu0
    %3172 = vrot.lane.b32.xlu0 %v2780, 116
    %v3173 = vpop.permute.xlu0 %3172
    %3174 = vrot.lane.b32.xlu0 %v2775, 84
    %v3175 = vpop.permute.xlu0 %3174
    %v3176 = vsel %vm193, %v3173, 0
    %v3178 = vsel %vm193, %v3175, 0
    %3180 = vmatpush.xpose.msra.mxu0 0.0
    %3181 = vmatpush.xpose.msra.mxu0 0.0
    %3182 = vmatpush.xpose.msra.mxu0 0.0
    %3183 = vmatpush.xpose.msra.mxu0 0.0
    %3184 = vmatpush.xpose.msra.mxu0 0.0
    %3185 = vmatpush.xpose.msra.mxu0 0.0
    %3186 = vmatpush.xpose.msra.mxu0 0.0
    %3187 = vmatpush.xpose.msra.mxu0 0.0
    %3188 = vmatpush.xpose.msra.mxu0 0.0
    %3189 = vmatpush.xpose.msra.mxu0 0.0
    %3190 = vmatpush.xpose.msra.mxu0 0.0
    %3191 = vmatpush.xpose.msra.mxu0 0.0
    %3192 = vmatpush.xpose.msra.mxu0 0.0
    %3193 = vmatpush.xpose.msra.mxu0 0.0
    %3194 = vmatpush.xpose.msra.mxu0 0.0
    %3195 = vmatpush.xpose.msra.mxu0 %v3178
    %3196 = vmatmul.f32.gmra.mxu0 %v3176
    %v3197 = vpop.f32.mrf.mxu0
    %v3198 = vadd.f32 0.0, %v3197
    %3199 = vdwg.mxu0
    %3200 = vrot.lane.b32.xlu0 %v2781, 116
    %v3201 = vpop.permute.xlu0 %3200
    %3202 = vrot.lane.b32.xlu0 %v2778, 84
    %v3203 = vpop.permute.xlu0 %3202
    %v3204 = vsel %vm193, %v3201, 0
    %v3206 = vsel %vm193, %v3203, 0
    %3208 = vmatpush.xpose.msra.mxu0 0.0
    %3209 = vmatpush.xpose.msra.mxu0 0.0
    %3210 = vmatpush.xpose.msra.mxu0 0.0
    %3211 = vmatpush.xpose.msra.mxu0 0.0
    %3212 = vmatpush.xpose.msra.mxu0 0.0
    %3213 = vmatpush.xpose.msra.mxu0 0.0
    %3214 = vmatpush.xpose.msra.mxu0 0.0
    %3215 = vmatpush.xpose.msra.mxu0 0.0
    %3216 = vmatpush.xpose.msra.mxu0 0.0
    %3217 = vmatpush.xpose.msra.mxu0 0.0
    %3218 = vmatpush.xpose.msra.mxu0 0.0
    %3219 = vmatpush.xpose.msra.mxu0 0.0
    %3220 = vmatpush.xpose.msra.mxu0 0.0
    %3221 = vmatpush.xpose.msra.mxu0 0.0
    %3222 = vmatpush.xpose.msra.mxu0 0.0
    %3223 = vmatpush.xpose.msra.mxu0 %v3206
    %3224 = vmatmul.f32.gmra.mxu0 %v3204
    %v3225 = vpop.f32.mrf.mxu0
    %v3226 = vadd.f32 0.0, %v3225
    %3227 = vdwg.mxu0
    %v3228 = vsel %vm247, %v3198, -inf
    %3229 = vmax.xlane.f32.xlu0 %v3228
    %v3230 = vpop.xlane.xlu0 %3229
    %v3231 = vsel %vm247, %v3226, -inf
    %3232 = vmax.xlane.f32.xlu0 %v3231
    %v3233 = vpop.xlane.xlu0 %3232
    %v3234 = vsub.f32 %v3198, %v3230
    %v3235 = vsub.f32 %v3226, %v3233
    %v3236 = vmul.f32 %v3234, 1.442695
    %v3237 = vpow.pop %v3236
    %v3238 = vmul.f32 %v3235, 1.442695
    %v3239 = vpow.pop %v3238
    %v3240 = vsel %vm247, %v3237, 0.0
    %3241 = vadd.xlane.f32.xlu0 %v3240
    %v3242 = vpop.xlane.xlu0 %3241
    %v3243 = vsel %vm247, %v3239, 0.0
    %3244 = vadd.xlane.f32.xlu0 %v3243
    %v3245 = vpop.xlane.xlu0 %3244
    %v3246 = vrcp.pop %v3242
    %v3247 = vrcp.pop %v3245
    %v3248 = vmul.f32 %v3237, %v3246
    %v3249 = vmul.f32 %v3239, %v3247
    %3250 = vrot.lane.b32.xlu0 %v2775, 52
    %v3251 = vpop.permute.xlu0 %3250
    %v3254 = vsel %vm247, %v3248, 0
    %3256 = vmatpush.msra.mxu0 0.0
    %3257 = vmatpush.msra.mxu0 0.0
    %3258 = vmatpush.msra.mxu0 0.0
    %3259 = vmatpush.msra.mxu0 0.0
    %3260 = vmatpush.msra.mxu0 0.0
    %3261 = vmatpush.msra.mxu0 0.0
    %3262 = vmatpush.msra.mxu0 0.0
    %3263 = vmatpush.msra.mxu0 0.0
    %3264 = vmatpush.msra.mxu0 0.0
    %3265 = vmatpush.msra.mxu0 0.0
    %3266 = vmatpush.msra.mxu0 0.0
    %3267 = vmatpush.msra.mxu0 0.0
    %3268 = vmatpush.msra.mxu0 0.0
    %3269 = vmatpush.msra.mxu0 0.0
    %3270 = vmatpush.msra.mxu0 0.0
    %3271 = vmatpush.msra.mxu0 %v3251
    %3272 = vmatmul.f32.gmra.mxu0 %v3254
    %v3273 = vpop.f32.mrf.mxu0
    %v3274 = vadd.f32 0.0, %v3273
    %3275 = vdwg.mxu0
    %3276 = vrot.lane.b32.xlu0 %v2778, 52
    %v3277 = vpop.permute.xlu0 %3276
    %v3280 = vsel %vm247, %v3249, 0
    %3282 = vmatpush.msra.mxu0 0.0
    %3283 = vmatpush.msra.mxu0 0.0
    %3284 = vmatpush.msra.mxu0 0.0
    %3285 = vmatpush.msra.mxu0 0.0
    %3286 = vmatpush.msra.mxu0 0.0
    %3287 = vmatpush.msra.mxu0 0.0
    %3288 = vmatpush.msra.mxu0 0.0
    %3289 = vmatpush.msra.mxu0 0.0
    %3290 = vmatpush.msra.mxu0 0.0
    %3291 = vmatpush.msra.mxu0 0.0
    %3292 = vmatpush.msra.mxu0 0.0
    %3293 = vmatpush.msra.mxu0 0.0
    %3294 = vmatpush.msra.mxu0 0.0
    %3295 = vmatpush.msra.mxu0 0.0
    %3296 = vmatpush.msra.mxu0 0.0
    %3297 = vmatpush.msra.mxu0 %v3277
    %3298 = vmatmul.f32.gmra.mxu0 %v3280
    %v3299 = vpop.f32.mrf.mxu0
    %v3300 = vadd.f32 0.0, %v3299
    %3301 = vdwg.mxu0
    %3302 = vrot.lane.b32.xlu0 %v2780, 112
    %v3303 = vpop.permute.xlu0 %3302
    %3304 = vrot.lane.b32.xlu0 %v2775, 80
    %v3305 = vpop.permute.xlu0 %3304
    %v3306 = vsel %vm193, %v3303, 0
    %v3308 = vsel %vm193, %v3305, 0
    %3310 = vmatpush.xpose.msra.mxu0 0.0
    %3311 = vmatpush.xpose.msra.mxu0 0.0
    %3312 = vmatpush.xpose.msra.mxu0 0.0
    %3313 = vmatpush.xpose.msra.mxu0 0.0
    %3314 = vmatpush.xpose.msra.mxu0 0.0
    %3315 = vmatpush.xpose.msra.mxu0 0.0
    %3316 = vmatpush.xpose.msra.mxu0 0.0
    %3317 = vmatpush.xpose.msra.mxu0 0.0
    %3318 = vmatpush.xpose.msra.mxu0 0.0
    %3319 = vmatpush.xpose.msra.mxu0 0.0
    %3320 = vmatpush.xpose.msra.mxu0 0.0
    %3321 = vmatpush.xpose.msra.mxu0 0.0
    %3322 = vmatpush.xpose.msra.mxu0 0.0
    %3323 = vmatpush.xpose.msra.mxu0 0.0
    %3324 = vmatpush.xpose.msra.mxu0 0.0
    %3325 = vmatpush.xpose.msra.mxu0 %v3308
    %3326 = vmatmul.f32.gmra.mxu0 %v3306
    %v3327 = vpop.f32.mrf.mxu0
    %v3328 = vadd.f32 0.0, %v3327
    %3329 = vdwg.mxu0
    %3330 = vrot.lane.b32.xlu0 %v2781, 112
    %v3331 = vpop.permute.xlu0 %3330
    %3332 = vrot.lane.b32.xlu0 %v2778, 80
    %v3333 = vpop.permute.xlu0 %3332
    %v3334 = vsel %vm193, %v3331, 0
    %v3336 = vsel %vm193, %v3333, 0
    %3338 = vmatpush.xpose.msra.mxu0 0.0
    %3339 = vmatpush.xpose.msra.mxu0 0.0
    %3340 = vmatpush.xpose.msra.mxu0 0.0
    %3341 = vmatpush.xpose.msra.mxu0 0.0
    %3342 = vmatpush.xpose.msra.mxu0 0.0
    %3343 = vmatpush.xpose.msra.mxu0 0.0
    %3344 = vmatpush.xpose.msra.mxu0 0.0
    %3345 = vmatpush.xpose.msra.mxu0 0.0
    %3346 = vmatpush.xpose.msra.mxu0 0.0
    %3347 = vmatpush.xpose.msra.mxu0 0.0
    %3348 = vmatpush.xpose.msra.mxu0 0.0
    %3349 = vmatpush.xpose.msra.mxu0 0.0
    %3350 = vmatpush.xpose.msra.mxu0 0.0
    %3351 = vmatpush.xpose.msra.mxu0 0.0
    %3352 = vmatpush.xpose.msra.mxu0 0.0
    %3353 = vmatpush.xpose.msra.mxu0 %v3336
    %3354 = vmatmul.f32.gmra.mxu0 %v3334
    %v3355 = vpop.f32.mrf.mxu0
    %v3356 = vadd.f32 0.0, %v3355
    %3357 = vdwg.mxu0
    %v3358 = vsel %vm247, %v3328, -inf
    %3359 = vmax.xlane.f32.xlu0 %v3358
    %v3360 = vpop.xlane.xlu0 %3359
    %v3361 = vsel %vm247, %v3356, -inf
    %3362 = vmax.xlane.f32.xlu0 %v3361
    %v3363 = vpop.xlane.xlu0 %3362
    %v3364 = vsub.f32 %v3328, %v3360
    %v3365 = vsub.f32 %v3356, %v3363
    %v3366 = vmul.f32 %v3364, 1.442695
    %v3367 = vpow.pop %v3366
    %v3368 = vmul.f32 %v3365, 1.442695
    %v3369 = vpow.pop %v3368
    %v3370 = vsel %vm247, %v3367, 0.0
    %3371 = vadd.xlane.f32.xlu0 %v3370
    %v3372 = vpop.xlane.xlu0 %3371
    %v3373 = vsel %vm247, %v3369, 0.0
    %3374 = vadd.xlane.f32.xlu0 %v3373
    %v3375 = vpop.xlane.xlu0 %3374
    %v3376 = vrcp.pop %v3372
    %v3377 = vrcp.pop %v3375
    %v3378 = vmul.f32 %v3367, %v3376
    %v3379 = vmul.f32 %v3369, %v3377
    %3380 = vrot.lane.b32.xlu0 %v2775, 48
    %v3381 = vpop.permute.xlu0 %3380
    %v3384 = vsel %vm247, %v3378, 0
    %3386 = vmatpush.msra.mxu0 0.0
    %3387 = vmatpush.msra.mxu0 0.0
    %3388 = vmatpush.msra.mxu0 0.0
    %3389 = vmatpush.msra.mxu0 0.0
    %3390 = vmatpush.msra.mxu0 0.0
    %3391 = vmatpush.msra.mxu0 0.0
    %3392 = vmatpush.msra.mxu0 0.0
    %3393 = vmatpush.msra.mxu0 0.0
    %3394 = vmatpush.msra.mxu0 0.0
    %3395 = vmatpush.msra.mxu0 0.0
    %3396 = vmatpush.msra.mxu0 0.0
    %3397 = vmatpush.msra.mxu0 0.0
    %3398 = vmatpush.msra.mxu0 0.0
    %3399 = vmatpush.msra.mxu0 0.0
    %3400 = vmatpush.msra.mxu0 0.0
    %3401 = vmatpush.msra.mxu0 %v3381
    %3402 = vmatmul.f32.gmra.mxu0 %v3384
    %v3403 = vpop.f32.mrf.mxu0
    %v3404 = vadd.f32 0.0, %v3403
    %3405 = vdwg.mxu0
    %3406 = vrot.lane.b32.xlu0 %v2778, 48
    %v3407 = vpop.permute.xlu0 %3406
    %v3410 = vsel %vm247, %v3379, 0
    %3412 = vmatpush.msra.mxu0 0.0
    %3413 = vmatpush.msra.mxu0 0.0
    %3414 = vmatpush.msra.mxu0 0.0
    %3415 = vmatpush.msra.mxu0 0.0
    %3416 = vmatpush.msra.mxu0 0.0
    %3417 = vmatpush.msra.mxu0 0.0
    %3418 = vmatpush.msra.mxu0 0.0
    %3419 = vmatpush.msra.mxu0 0.0
    %3420 = vmatpush.msra.mxu0 0.0
    %3421 = vmatpush.msra.mxu0 0.0
    %3422 = vmatpush.msra.mxu0 0.0
    %3423 = vmatpush.msra.mxu0 0.0
    %3424 = vmatpush.msra.mxu0 0.0
    %3425 = vmatpush.msra.mxu0 0.0
    %3426 = vmatpush.msra.mxu0 0.0
    %3427 = vmatpush.msra.mxu0 %v3407
    %3428 = vmatmul.f32.gmra.mxu0 %v3410
    %v3429 = vpop.f32.mrf.mxu0
    %v3430 = vadd.f32 0.0, %v3429
    %3431 = vdwg.mxu0
    %3432 = vrot.lane.b32.xlu0 %v2780, 108
    %v3433 = vpop.permute.xlu0 %3432
    %3434 = vrot.lane.b32.xlu0 %v2775, 76
    %v3435 = vpop.permute.xlu0 %3434
    %v3436 = vsel %vm193, %v3433, 0
    %v3438 = vsel %vm193, %v3435, 0
    %3440 = vmatpush.xpose.msra.mxu0 0.0
    %3441 = vmatpush.xpose.msra.mxu0 0.0
    %3442 = vmatpush.xpose.msra.mxu0 0.0
    %3443 = vmatpush.xpose.msra.mxu0 0.0
    %3444 = vmatpush.xpose.msra.mxu0 0.0
    %3445 = vmatpush.xpose.msra.mxu0 0.0
    %3446 = vmatpush.xpose.msra.mxu0 0.0
    %3447 = vmatpush.xpose.msra.mxu0 0.0
    %3448 = vmatpush.xpose.msra.mxu0 0.0
    %3449 = vmatpush.xpose.msra.mxu0 0.0
    %3450 = vmatpush.xpose.msra.mxu0 0.0
    %3451 = vmatpush.xpose.msra.mxu0 0.0
    %3452 = vmatpush.xpose.msra.mxu0 0.0
    %3453 = vmatpush.xpose.msra.mxu0 0.0
    %3454 = vmatpush.xpose.msra.mxu0 0.0
    %3455 = vmatpush.xpose.msra.mxu0 %v3438
    %3456 = vmatmul.f32.gmra.mxu0 %v3436
    %v3457 = vpop.f32.mrf.mxu0
    %v3458 = vadd.f32 0.0, %v3457
    %3459 = vdwg.mxu0
    %3460 = vrot.lane.b32.xlu0 %v2781, 108
    %v3461 = vpop.permute.xlu0 %3460
    %3462 = vrot.lane.b32.xlu0 %v2778, 76
    %v3463 = vpop.permute.xlu0 %3462
    %v3464 = vsel %vm193, %v3461, 0
    %v3466 = vsel %vm193, %v3463, 0
    %3468 = vmatpush.xpose.msra.mxu0 0.0
    %3469 = vmatpush.xpose.msra.mxu0 0.0
    %3470 = vmatpush.xpose.msra.mxu0 0.0
    %3471 = vmatpush.xpose.msra.mxu0 0.0
    %3472 = vmatpush.xpose.msra.mxu0 0.0
    %3473 = vmatpush.xpose.msra.mxu0 0.0
    %3474 = vmatpush.xpose.msra.mxu0 0.0
    %3475 = vmatpush.xpose.msra.mxu0 0.0
    %3476 = vmatpush.xpose.msra.mxu0 0.0
    %3477 = vmatpush.xpose.msra.mxu0 0.0
    %3478 = vmatpush.xpose.msra.mxu0 0.0
    %3479 = vmatpush.xpose.msra.mxu0 0.0
    %3480 = vmatpush.xpose.msra.mxu0 0.0
    %3481 = vmatpush.xpose.msra.mxu0 0.0
    %3482 = vmatpush.xpose.msra.mxu0 0.0
    %3483 = vmatpush.xpose.msra.mxu0 %v3466
    %3484 = vmatmul.f32.gmra.mxu0 %v3464
    %v3485 = vpop.f32.mrf.mxu0
    %v3486 = vadd.f32 0.0, %v3485
    %3487 = vdwg.mxu0
    %v3488 = vsel %vm247, %v3458, -inf
    %3489 = vmax.xlane.f32.xlu0 %v3488
    %v3490 = vpop.xlane.xlu0 %3489
    %v3491 = vsel %vm247, %v3486, -inf
    %3492 = vmax.xlane.f32.xlu0 %v3491
    %v3493 = vpop.xlane.xlu0 %3492
    %v3494 = vsub.f32 %v3458, %v3490
    %v3495 = vsub.f32 %v3486, %v3493
    %v3496 = vmul.f32 %v3494, 1.442695
    %v3497 = vpow.pop %v3496
    %v3498 = vmul.f32 %v3495, 1.442695
    %v3499 = vpow.pop %v3498
    %v3500 = vsel %vm247, %v3497, 0.0
    %3501 = vadd.xlane.f32.xlu0 %v3500
    %v3502 = vpop.xlane.xlu0 %3501
    %v3503 = vsel %vm247, %v3499, 0.0
    %3504 = vadd.xlane.f32.xlu0 %v3503
    %v3505 = vpop.xlane.xlu0 %3504
    %v3506 = vrcp.pop %v3502
    %v3507 = vrcp.pop %v3505
    %v3508 = vmul.f32 %v3497, %v3506
    %v3509 = vmul.f32 %v3499, %v3507
    %3510 = vrot.lane.b32.xlu0 %v2775, 44
    %v3511 = vpop.permute.xlu0 %3510
    %v3514 = vsel %vm247, %v3508, 0
    %3516 = vmatpush.msra.mxu0 0.0
    %3517 = vmatpush.msra.mxu0 0.0
    %3518 = vmatpush.msra.mxu0 0.0
    %3519 = vmatpush.msra.mxu0 0.0
    %3520 = vmatpush.msra.mxu0 0.0
    %3521 = vmatpush.msra.mxu0 0.0
    %3522 = vmatpush.msra.mxu0 0.0
    %3523 = vmatpush.msra.mxu0 0.0
    %3524 = vmatpush.msra.mxu0 0.0
    %3525 = vmatpush.msra.mxu0 0.0
    %3526 = vmatpush.msra.mxu0 0.0
    %3527 = vmatpush.msra.mxu0 0.0
    %3528 = vmatpush.msra.mxu0 0.0
    %3529 = vmatpush.msra.mxu0 0.0
    %3530 = vmatpush.msra.mxu0 0.0
    %3531 = vmatpush.msra.mxu0 %v3511
    %3532 = vmatmul.f32.gmra.mxu0 %v3514
    %v3533 = vpop.f32.mrf.mxu0
    %v3534 = vadd.f32 0.0, %v3533
    %3535 = vdwg.mxu0
    %3536 = vrot.lane.b32.xlu0 %v2778, 44
    %v3537 = vpop.permute.xlu0 %3536
    %v3540 = vsel %vm247, %v3509, 0
    %3542 = vmatpush.msra.mxu0 0.0
    %3543 = vmatpush.msra.mxu0 0.0
    %3544 = vmatpush.msra.mxu0 0.0
    %3545 = vmatpush.msra.mxu0 0.0
    %3546 = vmatpush.msra.mxu0 0.0
    %3547 = vmatpush.msra.mxu0 0.0
    %3548 = vmatpush.msra.mxu0 0.0
    %3549 = vmatpush.msra.mxu0 0.0
    %3550 = vmatpush.msra.mxu0 0.0
    %3551 = vmatpush.msra.mxu0 0.0
    %3552 = vmatpush.msra.mxu0 0.0
    %3553 = vmatpush.msra.mxu0 0.0
    %3554 = vmatpush.msra.mxu0 0.0
    %3555 = vmatpush.msra.mxu0 0.0
    %3556 = vmatpush.msra.mxu0 0.0
    %3557 = vmatpush.msra.mxu0 %v3537
    %3558 = vmatmul.f32.gmra.mxu0 %v3540
    %v3559 = vpop.f32.mrf.mxu0
    %v3560 = vadd.f32 0.0, %v3559
    %3561 = vdwg.mxu0
    %3562 = vrot.lane.b32.xlu0 %v2780, 104
    %v3563 = vpop.permute.xlu0 %3562
    %3564 = vrot.lane.b32.xlu0 %v2775, 72
    %v3565 = vpop.permute.xlu0 %3564
    %v3566 = vsel %vm193, %v3563, 0
    %v3568 = vsel %vm193, %v3565, 0
    %3570 = vmatpush.xpose.msra.mxu0 0.0
    %3571 = vmatpush.xpose.msra.mxu0 0.0
    %3572 = vmatpush.xpose.msra.mxu0 0.0
    %3573 = vmatpush.xpose.msra.mxu0 0.0
    %3574 = vmatpush.xpose.msra.mxu0 0.0
    %3575 = vmatpush.xpose.msra.mxu0 0.0
    %3576 = vmatpush.xpose.msra.mxu0 0.0
    %3577 = vmatpush.xpose.msra.mxu0 0.0
    %3578 = vmatpush.xpose.msra.mxu0 0.0
    %3579 = vmatpush.xpose.msra.mxu0 0.0
    %3580 = vmatpush.xpose.msra.mxu0 0.0
    %3581 = vmatpush.xpose.msra.mxu0 0.0
    %3582 = vmatpush.xpose.msra.mxu0 0.0
    %3583 = vmatpush.xpose.msra.mxu0 0.0
    %3584 = vmatpush.xpose.msra.mxu0 0.0
    %3585 = vmatpush.xpose.msra.mxu0 %v3568
    %3586 = vmatmul.f32.gmra.mxu0 %v3566
    %v3587 = vpop.f32.mrf.mxu0
    %v3588 = vadd.f32 0.0, %v3587
    %3589 = vdwg.mxu0
    %3590 = vrot.lane.b32.xlu0 %v2781, 104
    %v3591 = vpop.permute.xlu0 %3590
    %3592 = vrot.lane.b32.xlu0 %v2778, 72
    %v3593 = vpop.permute.xlu0 %3592
    %v3594 = vsel %vm193, %v3591, 0
    %v3596 = vsel %vm193, %v3593, 0
    %3598 = vmatpush.xpose.msra.mxu0 0.0
    %3599 = vmatpush.xpose.msra.mxu0 0.0
    %3600 = vmatpush.xpose.msra.mxu0 0.0
    %3601 = vmatpush.xpose.msra.mxu0 0.0
    %3602 = vmatpush.xpose.msra.mxu0 0.0
    %3603 = vmatpush.xpose.msra.mxu0 0.0
    %3604 = vmatpush.xpose.msra.mxu0 0.0
    %3605 = vmatpush.xpose.msra.mxu0 0.0
    %3606 = vmatpush.xpose.msra.mxu0 0.0
    %3607 = vmatpush.xpose.msra.mxu0 0.0
    %3608 = vmatpush.xpose.msra.mxu0 0.0
    %3609 = vmatpush.xpose.msra.mxu0 0.0
    %3610 = vmatpush.xpose.msra.mxu0 0.0
    %3611 = vmatpush.xpose.msra.mxu0 0.0
    %3612 = vmatpush.xpose.msra.mxu0 0.0
    %3613 = vmatpush.xpose.msra.mxu0 %v3596
    %3614 = vmatmul.f32.gmra.mxu0 %v3594
    %v3615 = vpop.f32.mrf.mxu0
    %v3616 = vadd.f32 0.0, %v3615
    %3617 = vdwg.mxu0
    %v3618 = vsel %vm247, %v3588, -inf
    %3619 = vmax.xlane.f32.xlu0 %v3618
    %v3620 = vpop.xlane.xlu0 %3619
    %v3621 = vsel %vm247, %v3616, -inf
    %3622 = vmax.xlane.f32.xlu0 %v3621
    %v3623 = vpop.xlane.xlu0 %3622
    %v3624 = vsub.f32 %v3588, %v3620
    %v3625 = vsub.f32 %v3616, %v3623
    %v3626 = vmul.f32 %v3624, 1.442695
    %v3627 = vpow.pop %v3626
    %v3628 = vmul.f32 %v3625, 1.442695
    %v3629 = vpow.pop %v3628
    %v3630 = vsel %vm247, %v3627, 0.0
    %3631 = vadd.xlane.f32.xlu0 %v3630
    %v3632 = vpop.xlane.xlu0 %3631
    %v3633 = vsel %vm247, %v3629, 0.0
    %3634 = vadd.xlane.f32.xlu0 %v3633
    %v3635 = vpop.xlane.xlu0 %3634
    %v3636 = vrcp.pop %v3632
    %v3637 = vrcp.pop %v3635
    %v3638 = vmul.f32 %v3627, %v3636
    %v3639 = vmul.f32 %v3629, %v3637
    %3640 = vrot.lane.b32.xlu0 %v2775, 40
    %v3641 = vpop.permute.xlu0 %3640
    %v3644 = vsel %vm247, %v3638, 0
    %3646 = vmatpush.msra.mxu0 0.0
    %3647 = vmatpush.msra.mxu0 0.0
    %3648 = vmatpush.msra.mxu0 0.0
    %3649 = vmatpush.msra.mxu0 0.0
    %3650 = vmatpush.msra.mxu0 0.0
    %3651 = vmatpush.msra.mxu0 0.0
    %3652 = vmatpush.msra.mxu0 0.0
    %3653 = vmatpush.msra.mxu0 0.0
    %3654 = vmatpush.msra.mxu0 0.0
    %3655 = vmatpush.msra.mxu0 0.0
    %3656 = vmatpush.msra.mxu0 0.0
    %3657 = vmatpush.msra.mxu0 0.0
    %3658 = vmatpush.msra.mxu0 0.0
    %3659 = vmatpush.msra.mxu0 0.0
    %3660 = vmatpush.msra.mxu0 0.0
    %3661 = vmatpush.msra.mxu0 %v3641
    %3662 = vmatmul.f32.gmra.mxu0 %v3644
    %v3663 = vpop.f32.mrf.mxu0
    %v3664 = vadd.f32 0.0, %v3663
    %3665 = vdwg.mxu0
    %3666 = vrot.lane.b32.xlu0 %v2778, 40
    %v3667 = vpop.permute.xlu0 %3666
    %v3670 = vsel %vm247, %v3639, 0
    %3672 = vmatpush.msra.mxu0 0.0
    %3673 = vmatpush.msra.mxu0 0.0
    %3674 = vmatpush.msra.mxu0 0.0
    %3675 = vmatpush.msra.mxu0 0.0
    %3676 = vmatpush.msra.mxu0 0.0
    %3677 = vmatpush.msra.mxu0 0.0
    %3678 = vmatpush.msra.mxu0 0.0
    %3679 = vmatpush.msra.mxu0 0.0
    %3680 = vmatpush.msra.mxu0 0.0
    %3681 = vmatpush.msra.mxu0 0.0
    %3682 = vmatpush.msra.mxu0 0.0
    %3683 = vmatpush.msra.mxu0 0.0
    %3684 = vmatpush.msra.mxu0 0.0
    %3685 = vmatpush.msra.mxu0 0.0
    %3686 = vmatpush.msra.mxu0 0.0
    %3687 = vmatpush.msra.mxu0 %v3667
    %3688 = vmatmul.f32.gmra.mxu0 %v3670
    %v3689 = vpop.f32.mrf.mxu0
    %v3690 = vadd.f32 0.0, %v3689
    %3691 = vdwg.mxu0
    %3692 = vrot.lane.b32.xlu0 %v2780, 100
    %v3693 = vpop.permute.xlu0 %3692
    %3694 = vrot.lane.b32.xlu0 %v2775, 68
    %v3695 = vpop.permute.xlu0 %3694
    %v3696 = vsel %vm193, %v3693, 0
    %v3698 = vsel %vm193, %v3695, 0
    %3700 = vmatpush.xpose.msra.mxu0 0.0
    %3701 = vmatpush.xpose.msra.mxu0 0.0
    %3702 = vmatpush.xpose.msra.mxu0 0.0
    %3703 = vmatpush.xpose.msra.mxu0 0.0
    %3704 = vmatpush.xpose.msra.mxu0 0.0
    %3705 = vmatpush.xpose.msra.mxu0 0.0
    %3706 = vmatpush.xpose.msra.mxu0 0.0
    %3707 = vmatpush.xpose.msra.mxu0 0.0
    %3708 = vmatpush.xpose.msra.mxu0 0.0
    %3709 = vmatpush.xpose.msra.mxu0 0.0
    %3710 = vmatpush.xpose.msra.mxu0 0.0
    %3711 = vmatpush.xpose.msra.mxu0 0.0
    %3712 = vmatpush.xpose.msra.mxu0 0.0
    %3713 = vmatpush.xpose.msra.mxu0 0.0
    %3714 = vmatpush.xpose.msra.mxu0 0.0
    %3715 = vmatpush.xpose.msra.mxu0 %v3698
    %3716 = vmatmul.f32.gmra.mxu0 %v3696
    %v3717 = vpop.f32.mrf.mxu0
    %v3718 = vadd.f32 0.0, %v3717
    %3719 = vdwg.mxu0
    %3720 = vrot.lane.b32.xlu0 %v2781, 100
    %v3721 = vpop.permute.xlu0 %3720
    %3722 = vrot.lane.b32.xlu0 %v2778, 68
    %v3723 = vpop.permute.xlu0 %3722
    %v3724 = vsel %vm193, %v3721, 0
    %v3726 = vsel %vm193, %v3723, 0
    %3728 = vmatpush.xpose.msra.mxu0 0.0
    %3729 = vmatpush.xpose.msra.mxu0 0.0
    %3730 = vmatpush.xpose.msra.mxu0 0.0
    %3731 = vmatpush.xpose.msra.mxu0 0.0
    %3732 = vmatpush.xpose.msra.mxu0 0.0
    %3733 = vmatpush.xpose.msra.mxu0 0.0
    %3734 = vmatpush.xpose.msra.mxu0 0.0
    %3735 = vmatpush.xpose.msra.mxu0 0.0
    %3736 = vmatpush.xpose.msra.mxu0 0.0
    %3737 = vmatpush.xpose.msra.mxu0 0.0
    %3738 = vmatpush.xpose.msra.mxu0 0.0
    %3739 = vmatpush.xpose.msra.mxu0 0.0
    %3740 = vmatpush.xpose.msra.mxu0 0.0
    %3741 = vmatpush.xpose.msra.mxu0 0.0
    %3742 = vmatpush.xpose.msra.mxu0 0.0
    %3743 = vmatpush.xpose.msra.mxu0 %v3726
    %3744 = vmatmul.f32.gmra.mxu0 %v3724
    %v3745 = vpop.f32.mrf.mxu0
    %v3746 = vadd.f32 0.0, %v3745
    %3747 = vdwg.mxu0
    %v3748 = vsel %vm247, %v3718, -inf
    %3749 = vmax.xlane.f32.xlu0 %v3748
    %v3750 = vpop.xlane.xlu0 %3749
    %v3751 = vsel %vm247, %v3746, -inf
    %3752 = vmax.xlane.f32.xlu0 %v3751
    %v3753 = vpop.xlane.xlu0 %3752
    %v3754 = vsub.f32 %v3718, %v3750
    %v3755 = vsub.f32 %v3746, %v3753
    %v3756 = vmul.f32 %v3754, 1.442695
    %v3757 = vpow.pop %v3756
    %v3758 = vmul.f32 %v3755, 1.442695
    %v3759 = vpow.pop %v3758
    %v3760 = vsel %vm247, %v3757, 0.0
    %3761 = vadd.xlane.f32.xlu0 %v3760
    %v3762 = vpop.xlane.xlu0 %3761
    %v3763 = vsel %vm247, %v3759, 0.0
    %3764 = vadd.xlane.f32.xlu0 %v3763
    %v3765 = vpop.xlane.xlu0 %3764
    %v3766 = vrcp.pop %v3762
    %v3767 = vrcp.pop %v3765
    %v3768 = vmul.f32 %v3757, %v3766
    %v3769 = vmul.f32 %v3759, %v3767
    %3770 = vrot.lane.b32.xlu0 %v2775, 36
    %v3771 = vpop.permute.xlu0 %3770
    %v3774 = vsel %vm247, %v3768, 0
    %3776 = vmatpush.msra.mxu0 0.0
    %3777 = vmatpush.msra.mxu0 0.0
    %3778 = vmatpush.msra.mxu0 0.0
    %3779 = vmatpush.msra.mxu0 0.0
    %3780 = vmatpush.msra.mxu0 0.0
    %3781 = vmatpush.msra.mxu0 0.0
    %3782 = vmatpush.msra.mxu0 0.0
    %3783 = vmatpush.msra.mxu0 0.0
    %3784 = vmatpush.msra.mxu0 0.0
    %3785 = vmatpush.msra.mxu0 0.0
    %3786 = vmatpush.msra.mxu0 0.0
    %3787 = vmatpush.msra.mxu0 0.0
    %3788 = vmatpush.msra.mxu0 0.0
    %3789 = vmatpush.msra.mxu0 0.0
    %3790 = vmatpush.msra.mxu0 0.0
    %3791 = vmatpush.msra.mxu0 %v3771
    %3792 = vmatmul.f32.gmra.mxu0 %v3774
    %v3793 = vpop.f32.mrf.mxu0
    %v3794 = vadd.f32 0.0, %v3793
    %3795 = vdwg.mxu0
    %3796 = vrot.lane.b32.xlu0 %v2778, 36
    %v3797 = vpop.permute.xlu0 %3796
    %v3800 = vsel %vm247, %v3769, 0
    %3802 = vmatpush.msra.mxu0 0.0
    %3803 = vmatpush.msra.mxu0 0.0
    %3804 = vmatpush.msra.mxu0 0.0
    %3805 = vmatpush.msra.mxu0 0.0
    %3806 = vmatpush.msra.mxu0 0.0
    %3807 = vmatpush.msra.mxu0 0.0
    %3808 = vmatpush.msra.mxu0 0.0
    %3809 = vmatpush.msra.mxu0 0.0
    %3810 = vmatpush.msra.mxu0 0.0
    %3811 = vmatpush.msra.mxu0 0.0
    %3812 = vmatpush.msra.mxu0 0.0
    %3813 = vmatpush.msra.mxu0 0.0
    %3814 = vmatpush.msra.mxu0 0.0
    %3815 = vmatpush.msra.mxu0 0.0
    %3816 = vmatpush.msra.mxu0 0.0
    %3817 = vmatpush.msra.mxu0 %v3797
    %3818 = vmatmul.f32.gmra.mxu0 %v3800
    %v3819 = vpop.f32.mrf.mxu0
    %v3820 = vadd.f32 0.0, %v3819
    %3821 = vdwg.mxu0
    %3824 = vrot.lane.b32.xlu0 %v3014, 4
    %v3825 = vpop.permute.xlu0 %3824
    %3826 = vrot.lane.b32.xlu0 %v3040, 4
    %v3827 = vpop.permute.xlu0 %3826
    %3832 = vrot.lane.b32.xlu0 %v3144, 8
    %v3833 = vpop.permute.xlu0 %3832
    %3834 = vrot.lane.b32.xlu0 %v3170, 8
    %v3835 = vpop.permute.xlu0 %3834
    %3840 = vrot.lane.b32.xlu0 %v3274, 12
    %v3841 = vpop.permute.xlu0 %3840
    %3842 = vrot.lane.b32.xlu0 %v3300, 12
    %v3843 = vpop.permute.xlu0 %3842
    %3848 = vrot.lane.b32.xlu0 %v3404, 16
    %v3849 = vpop.permute.xlu0 %3848
    %3850 = vrot.lane.b32.xlu0 %v3430, 16
    %v3851 = vpop.permute.xlu0 %3850
    %3856 = vrot.lane.b32.xlu0 %v3534, 20
    %v3857 = vpop.permute.xlu0 %3856
    %3858 = vrot.lane.b32.xlu0 %v3560, 20
    %v3859 = vpop.permute.xlu0 %3858
    %3864 = vrot.lane.b32.xlu0 %v3664, 24
    %v3865 = vpop.permute.xlu0 %3864
    %3866 = vrot.lane.b32.xlu0 %v3690, 24
    %v3867 = vpop.permute.xlu0 %3866
    %3872 = vrot.lane.b32.xlu0 %v3794, 28
    %v3873 = vpop.permute.xlu0 %3872
    %3874 = vrot.lane.b32.xlu0 %v3820, 28
    %v3875 = vpop.permute.xlu0 %3874
    %v3878 = vsel %vm193, %v2884, %v3825
    %v3879 = vsel %vm193, %v2910, %v3827
    %v3880 = vsel %vm247, %v3878, %v3833
    %v3881 = vsel %vm247, %v3879, %v3835
    %v3882 = vsel %vm1292, %v3880, %v3841
    %v3883 = vsel %vm1292, %v3881, %v3843
    %v3884 = vsel %vm1295, %v3882, %v3849
    %v3885 = vsel %vm1295, %v3883, %v3851
    %v3886 = vsel %vm1298, %v3884, %v3857
    %v3887 = vsel %vm1298, %v3885, %v3859
    %v3888 = vsel %vm1301, %v3886, %v3865
    %v3889 = vsel %vm1301, %v3887, %v3867
    %v3890 = vsel %vm1304, %v3888, %v3873
    %v3891 = vsel %vm1304, %v3889, %v3875
    %v3893 = vperm.slane %v2743, 0
    %v3896 = vsel %vm158, %v3890, 0
    %v3899 = vsel %vm158, %v3891, 0
    %3901 = vmatpush.msra.mxu0 0.0
    %3902 = vmatpush.msra.mxu0 0.0
    %3903 = vmatpush.msra.mxu0 0.0
    %3904 = vmatpush.msra.mxu0 0.0
    %3905 = vmatpush.msra.mxu0 0.0
    %3906 = vmatpush.msra.mxu0 0.0
    %3907 = vmatpush.msra.mxu0 0.0
    %3908 = vmatpush.msra.mxu0 0.0
    %3909 = vmatpush.msra.mxu0 0.0
    %3910 = vmatpush.msra.mxu0 0.0
    %3911 = vmatpush.msra.mxu0 0.0
    %3912 = vmatpush.msra.mxu0 0.0
    %3913 = vmatpush.msra.mxu0 %v2741
    %3914 = vmatpush.msra.mxu0 %v2740
    %3915 = vmatpush.msra.mxu0 %v2739
    %3916 = vmatpush.msra.mxu0 %v2738
    %3917 = vmatmul.f32.gmra.mxu0 %v3896
    %v3918 = vpop.f32.mrf.mxu0
    %v3919 = vadd.f32 %v3893, %v3918
    %3920 = vmatmul.f32.gmra.mxu0 %v3899
    %v3921 = vpop.f32.mrf.mxu0
    %v3922 = vadd.f32 %v3893, %v3921
    %3923 = vdwg.mxu0
    %v3924 = vadd.f32 %v3919, %v2728
    %v3925 = vadd.f32 %v3922, %v2729
    %v3926 = vsel %vm158, %v3924, 0.0
    %3927 = vadd.xlane.f32.xlu0 %v3926
    %v3928 = vpop.xlane.xlu0 %3927
    %v3929 = vsel %vm158, %v3925, 0.0
    %3930 = vadd.xlane.f32.xlu0 %v3929
    %v3931 = vpop.xlane.xlu0 %3930
    %v3932 = vmul.f32 %v3928, %v1353
    %v3933 = vmul.f32 %v3931, %v1353
    %v3934 = vsub.f32 %v3924, %v3932
    %v3935 = vsub.f32 %v3925, %v3933
    %v3936 = vmul.f32 %v3934, %v3934
    %v3937 = vmul.f32 %v3935, %v3935
    %v3938 = vsel %vm158, %v3936, 0.0
    %3939 = vadd.xlane.f32.xlu0 %v3938
    %v3940 = vpop.xlane.xlu0 %3939
    %v3941 = vsel %vm158, %v3937, 0.0
    %3942 = vadd.xlane.f32.xlu0 %v3941
    %v3943 = vpop.xlane.xlu0 %3942
    %v3944 = vmul.f32 %v3940, %v1353
    %v3945 = vmul.f32 %v3943, %v1353
    %v3946 = vadd.f32 %v3944, 1e-05
    %v3947 = vadd.f32 %v3945, 1e-05
    %v3948 = vrsqrt.pop %v3946
    %v3949 = vmul.f32 %v3948, %v3946
    %v3950 = vmul.f32 %v3949, %v3948
    %v3951 = vmul.f32 0.5, %v3950
    %v3952 = vsub.f32 1.5, %v3951
    %v3953 = vmul.f32 %v3948, %v3952
    %vm3954 = vweird.f32 %v3946
    %vm3955 = vweird.f32 %v3948
    %vm3956 = vmor %vm3954, %vm3955
    %v3957 = vsel %vm3956, %v3948, %v3953
    %v3958 = vrsqrt.pop %v3947
    %v3959 = vmul.f32 %v3958, %v3947
    %v3960 = vmul.f32 %v3959, %v3958
    %v3961 = vmul.f32 0.5, %v3960
    %v3962 = vsub.f32 1.5, %v3961
    %v3963 = vmul.f32 %v3958, %v3962
    %vm3964 = vweird.f32 %v3947
    %vm3965 = vweird.f32 %v3958
    %vm3966 = vmor %vm3964, %vm3965
    %v3967 = vsel %vm3966, %v3958, %v3963
    %v3968 = vmul.f32 %v3934, %v3957
    %v3969 = vmul.f32 %v3935, %v3967
    %v3971 = vperm.slane %v2745, 0
    %v3973 = vmul.f32 %v3968, %v3971
    %v3974 = vmul.f32 %v3969, %v3971
    %v3976 = vperm.slane %v2747, 0
    %v3978 = vadd.f32 %v3973, %v3976
    %v3979 = vadd.f32 %v3974, %v3976
    %s3980 = scalar_lea.vmem [#allocation7], 96
    %v3981 = vld [vmem:[%s3980] sm:$0xff]
    %v3982 = vld [vmem:[%s3980 + $0x8] sm:$0xff]
    %v3983 = vld [vmem:[%s3980 + $0x10] sm:$0xff]
    %v3984 = vld [vmem:[%s3980 + $0x18] sm:$0xff]
    %s3985 = scalar_lea.vmem [#allocation8], 3
    %v3986 = vld [vmem:[%s3985] sm:$0x1]
    %s3987 = scalar_lea.vmem [#allocation10], 96
    %v3988 = vld [vmem:[%s3987] sm:$0xff]
    %v3989 = vld [vmem:[%s3987 + $0x8] sm:$0xff]
    %v3990 = vld [vmem:[%s3987 + $0x10] sm:$0xff]
    %v3991 = vld [vmem:[%s3987 + $0x18] sm:$0xff]
    %s3992 = scalar_lea.vmem %s5, 3
    %v3993 = vld [vmem:[%s3992] sm:$0x1]
    %s3994 = scalar_lea.vmem [#allocation11], 3
    %v3995 = vld [vmem:[%s3994] sm:$0x1]
    %s3996 = scalar_lea.vmem [#allocation13], 3
    %v3997 = vld [vmem:[%s3996] sm:$0x1]
    %v3999 = vperm.slane %v3986, 0
    %v4002 = vsel %vm158, %v3978, 0
    %v4005 = vsel %vm158, %v3979, 0
    %4007 = vmatpush.msra.mxu0 0.0
    %4008 = vmatpush.msra.mxu0 0.0
    %4009 = vmatpush.msra.mxu0 0.0
    %4010 = vmatpush.msra.mxu0 0.0
    %4011 = vmatpush.msra.mxu0 0.0
    %4012 = vmatpush.msra.mxu0 0.0
    %4013 = vmatpush.msra.mxu0 0.0
    %4014 = vmatpush.msra.mxu0 0.0
    %4015 = vmatpush.msra.mxu0 0.0
    %4016 = vmatpush.msra.mxu0 0.0
    %4017 = vmatpush.msra.mxu0 0.0
    %4018 = vmatpush.msra.mxu0 0.0
    %4019 = vmatpush.msra.mxu0 %v3984
    %4020 = vmatpush.msra.mxu0 %v3983
    %4021 = vmatpush.msra.mxu0 %v3982
    %4022 = vmatpush.msra.mxu0 %v3981
    %4023 = vmatmul.f32.gmra.mxu0 %v4002
    %v4024 = vpop.f32.mrf.mxu0
    %v4025 = vadd.f32 %v3999, %v4024
    %4026 = vmatmul.f32.gmra.mxu0 %v4005
    %v4027 = vpop.f32.mrf.mxu0
    %v4028 = vadd.f32 %v3999, %v4027
    %4029 = vdwg.mxu0
    %v4030 = vmul.f32 %v4025, 0.5
    %v4031 = vmul.f32 %v4028, 0.5
    %4036 = vrot.lane.b32.xlu0 %v3981, 96
    %v4037 = vpop.permute.xlu0 %4036
    %4038 = vrot.lane.b32.xlu0 %v3982, 96
    %v4039 = vpop.permute.xlu0 %4038
    %4040 = vrot.lane.b32.xlu0 %v3983, 96
    %v4041 = vpop.permute.xlu0 %4040
    %4042 = vrot.lane.b32.xlu0 %v3984, 96
    %v4043 = vpop.permute.xlu0 %4042
    %4048 = vrot.lane.b32.xlu0 %v3999, 96
    %v4049 = vpop.permute.xlu0 %4048
    %4051 = vmatpush.msra.mxu0 0.0
    %4052 = vmatpush.msra.mxu0 0.0
    %4053 = vmatpush.msra.mxu0 0.0
    %4054 = vmatpush.msra.mxu0 0.0
    %4055 = vmatpush.msra.mxu0 0.0
    %4056 = vmatpush.msra.mxu0 0.0
    %4057 = vmatpush.msra.mxu0 0.0
    %4058 = vmatpush.msra.mxu0 0.0
    %4059 = vmatpush.msra.mxu0 0.0
    %4060 = vmatpush.msra.mxu0 0.0
    %4061 = vmatpush.msra.mxu0 0.0
    %4062 = vmatpush.msra.mxu0 0.0
    %4063 = vmatpush.msra.mxu0 %v4043
    %4064 = vmatpush.msra.mxu0 %v4041
    %4065 = vmatpush.msra.mxu0 %v4039
    %4066 = vmatpush.msra.mxu0 %v4037
    %4067 = vmatmul.f32.gmra.mxu0 %v1474
    %v4068 = vpop.f32.mrf.mxu0
    %v4069 = vadd.f32 %v4049, %v4068
    %4070 = vdwg.mxu0
    %4071 = vmatpush.msra.mxu0 0.0
    %4072 = vmatpush.msra.mxu0 0.0
    %4073 = vmatpush.msra.mxu0 0.0
    %4074 = vmatpush.msra.mxu0 0.0
    %4075 = vmatpush.msra.mxu0 0.0
    %4076 = vmatpush.msra.mxu0 0.0
    %4077 = vmatpush.msra.mxu0 0.0
    %4078 = vmatpush.msra.mxu0 0.0
    %4079 = vmatpush.msra.mxu0 0.0
    %4080 = vmatpush.msra.mxu0 0.0
    %4081 = vmatpush.msra.mxu0 0.0
    %4082 = vmatpush.msra.mxu0 0.0
    %4083 = vmatpush.msra.mxu0 %v4043
    %4084 = vmatpush.msra.mxu0 %v4041
    %4085 = vmatpush.msra.mxu0 %v4039
    %4086 = vmatpush.msra.mxu0 %v4037
    %4087 = vmatmul.f32.gmra.mxu0 %v1497
    %v4088 = vpop.f32.mrf.mxu0
    %v4089 = vadd.f32 %v4049, %v4088
    %4090 = vdwg.mxu0
    %v4092 = vsel %vm193, %v4030, 0
    %v4095 = vsel %vm193, %v4069, 0
    %4097 = vmatpush.xpose.msra.mxu0 0.0
    %4098 = vmatpush.xpose.msra.mxu0 0.0
    %4099 = vmatpush.xpose.msra.mxu0 0.0
    %4100 = vmatpush.xpose.msra.mxu0 0.0
    %4101 = vmatpush.xpose.msra.mxu0 0.0
    %4102 = vmatpush.xpose.msra.mxu0 0.0
    %4103 = vmatpush.xpose.msra.mxu0 0.0
    %4104 = vmatpush.xpose.msra.mxu0 0.0
    %4105 = vmatpush.xpose.msra.mxu0 0.0
    %4106 = vmatpush.xpose.msra.mxu0 0.0
    %4107 = vmatpush.xpose.msra.mxu0 0.0
    %4108 = vmatpush.xpose.msra.mxu0 0.0
    %4109 = vmatpush.xpose.msra.mxu0 0.0
    %4110 = vmatpush.xpose.msra.mxu0 0.0
    %4111 = vmatpush.xpose.msra.mxu0 0.0
    %4112 = vmatpush.xpose.msra.mxu0 %v4095
    %4113 = vmatmul.f32.gmra.mxu0 %v4092
    %v4114 = vpop.f32.mrf.mxu0
    %v4115 = vadd.f32 0.0, %v4114
    %4116 = vdwg.mxu0
    %v4118 = vsel %vm193, %v4031, 0
    %v4121 = vsel %vm193, %v4089, 0
    %4123 = vmatpush.xpose.msra.mxu0 0.0
    %4124 = vmatpush.xpose.msra.mxu0 0.0
    %4125 = vmatpush.xpose.msra.mxu0 0.0
    %4126 = vmatpush.xpose.msra.mxu0 0.0
    %4127 = vmatpush.xpose.msra.mxu0 0.0
    %4128 = vmatpush.xpose.msra.mxu0 0.0
    %4129 = vmatpush.xpose.msra.mxu0 0.0
    %4130 = vmatpush.xpose.msra.mxu0 0.0
    %4131 = vmatpush.xpose.msra.mxu0 0.0
    %4132 = vmatpush.xpose.msra.mxu0 0.0
    %4133 = vmatpush.xpose.msra.mxu0 0.0
    %4134 = vmatpush.xpose.msra.mxu0 0.0
    %4135 = vmatpush.xpose.msra.mxu0 0.0
    %4136 = vmatpush.xpose.msra.mxu0 0.0
    %4137 = vmatpush.xpose.msra.mxu0 0.0
    %4138 = vmatpush.xpose.msra.mxu0 %v4121
    %4139 = vmatmul.f32.gmra.mxu0 %v4118
    %v4140 = vpop.f32.mrf.mxu0
    %v4141 = vadd.f32 0.0, %v4140
    %4142 = vdwg.mxu0
    %v4143 = vsel %vm193, %v4115, -inf
    %4144 = vmax.xlane.f32.xlu0 %v4143
    %v4145 = vpop.xlane.xlu0 %4144
    %v4146 = vsel %vm193, %v4141, -inf
    %4147 = vmax.xlane.f32.xlu0 %v4146
    %v4148 = vpop.xlane.xlu0 %4147
    %v4149 = vsub.f32 %v4115, %v4145
    %v4150 = vsub.f32 %v4141, %v4148
    %v4151 = vmul.f32 %v4149, 1.442695
    %v4152 = vpow.pop %v4151
    %v4153 = vmul.f32 %v4150, 1.442695
    %v4154 = vpow.pop %v4153
    %v4155 = vsel %vm193, %v4152, 0.0
    %4156 = vadd.xlane.f32.xlu0 %v4155
    %v4157 = vpop.xlane.xlu0 %4156
    %v4158 = vsel %vm193, %v4154, 0.0
    %4159 = vadd.xlane.f32.xlu0 %v4158
    %v4160 = vpop.xlane.xlu0 %4159
    %v4161 = vrcp.pop %v4157
    %v4162 = vrcp.pop %v4160
    %v4163 = vmul.f32 %v4152, %v4161
    %v4164 = vmul.f32 %v4154, %v4162
    %4165 = vrot.lane.b32.xlu0 %v4069, 96
    %v4166 = vpop.permute.xlu0 %4165
    %v4168 = vsel %vm193, %v4163, 0
    %v4170 = vsel %vm1598, %v4166, 0
    %4172 = vmatpush.msra.mxu0 0.0
    %4173 = vmatpush.msra.mxu0 0.0
    %4174 = vmatpush.msra.mxu0 0.0
    %4175 = vmatpush.msra.mxu0 0.0
    %4176 = vmatpush.msra.mxu0 0.0
    %4177 = vmatpush.msra.mxu0 0.0
    %4178 = vmatpush.msra.mxu0 0.0
    %4179 = vmatpush.msra.mxu0 0.0
    %4180 = vmatpush.msra.mxu0 0.0
    %4181 = vmatpush.msra.mxu0 0.0
    %4182 = vmatpush.msra.mxu0 0.0
    %4183 = vmatpush.msra.mxu0 0.0
    %4184 = vmatpush.msra.mxu0 0.0
    %4185 = vmatpush.msra.mxu0 0.0
    %4186 = vmatpush.msra.mxu0 0.0
    %4187 = vmatpush.msra.mxu0 %v4170
    %4188 = vmatmul.f32.gmra.mxu0 %v4168
    %v4189 = vpop.f32.mrf.mxu0
    %v4190 = vadd.f32 0.0, %v4189
    %4191 = vdwg.mxu0
    %4192 = vrot.lane.b32.xlu0 %v4089, 96
    %v4193 = vpop.permute.xlu0 %4192
    %v4195 = vsel %vm193, %v4164, 0
    %v4197 = vsel %vm1598, %v4193, 0
    %4199 = vmatpush.msra.mxu0 0.0
    %4200 = vmatpush.msra.mxu0 0.0
    %4201 = vmatpush.msra.mxu0 0.0
    %4202 = vmatpush.msra.mxu0 0.0
    %4203 = vmatpush.msra.mxu0 0.0
    %4204 = vmatpush.msra.mxu0 0.0
    %4205 = vmatpush.msra.mxu0 0.0
    %4206 = vmatpush.msra.mxu0 0.0
    %4207 = vmatpush.msra.mxu0 0.0
    %4208 = vmatpush.msra.mxu0 0.0
    %4209 = vmatpush.msra.mxu0 0.0
    %4210 = vmatpush.msra.mxu0 0.0
    %4211 = vmatpush.msra.mxu0 0.0
    %4212 = vmatpush.msra.mxu0 0.0
    %4213 = vmatpush.msra.mxu0 0.0
    %4214 = vmatpush.msra.mxu0 %v4197
    %4215 = vmatmul.f32.gmra.mxu0 %v4195
    %v4216 = vpop.f32.mrf.mxu0
    %v4217 = vadd.f32 0.0, %v4216
    %4218 = vdwg.mxu0
    %4219 = vrot.lane.b32.xlu0 %v4030, 124
    %v4220 = vpop.permute.xlu0 %4219
    %4221 = vrot.lane.b32.xlu0 %v4069, 124
    %v4222 = vpop.permute.xlu0 %4221
    %v4223 = vsel %vm193, %v4220, 0
    %v4225 = vsel %vm193, %v4222, 0
    %4227 = vmatpush.xpose.msra.mxu0 0.0
    %4228 = vmatpush.xpose.msra.mxu0 0.0
    %4229 = vmatpush.xpose.msra.mxu0 0.0
    %4230 = vmatpush.xpose.msra.mxu0 0.0
    %4231 = vmatpush.xpose.msra.mxu0 0.0
    %4232 = vmatpush.xpose.msra.mxu0 0.0
    %4233 = vmatpush.xpose.msra.mxu0 0.0
    %4234 = vmatpush.xpose.msra.mxu0 0.0
    %4235 = vmatpush.xpose.msra.mxu0 0.0
    %4236 = vmatpush.xpose.msra.mxu0 0.0
    %4237 = vmatpush.xpose.msra.mxu0 0.0
    %4238 = vmatpush.xpose.msra.mxu0 0.0
    %4239 = vmatpush.xpose.msra.mxu0 0.0
    %4240 = vmatpush.xpose.msra.mxu0 0.0
    %4241 = vmatpush.xpose.msra.mxu0 0.0
    %4242 = vmatpush.xpose.msra.mxu0 %v4225
    %4243 = vmatmul.f32.gmra.mxu0 %v4223
    %v4244 = vpop.f32.mrf.mxu0
    %v4245 = vadd.f32 0.0, %v4244
    %4246 = vdwg.mxu0
    %4247 = vrot.lane.b32.xlu0 %v4031, 124
    %v4248 = vpop.permute.xlu0 %4247
    %4249 = vrot.lane.b32.xlu0 %v4089, 124
    %v4250 = vpop.permute.xlu0 %4249
    %v4251 = vsel %vm193, %v4248, 0
    %v4253 = vsel %vm193, %v4250, 0
    %4255 = vmatpush.xpose.msra.mxu0 0.0
    %4256 = vmatpush.xpose.msra.mxu0 0.0
    %4257 = vmatpush.xpose.msra.mxu0 0.0
    %4258 = vmatpush.xpose.msra.mxu0 0.0
    %4259 = vmatpush.xpose.msra.mxu0 0.0
    %4260 = vmatpush.xpose.msra.mxu0 0.0
    %4261 = vmatpush.xpose.msra.mxu0 0.0
    %4262 = vmatpush.xpose.msra.mxu0 0.0
    %4263 = vmatpush.xpose.msra.mxu0 0.0
    %4264 = vmatpush.xpose.msra.mxu0 0.0
    %4265 = vmatpush.xpose.msra.mxu0 0.0
    %4266 = vmatpush.xpose.msra.mxu0 0.0
    %4267 = vmatpush.xpose.msra.mxu0 0.0
    %4268 = vmatpush.xpose.msra.mxu0 0.0
    %4269 = vmatpush.xpose.msra.mxu0 0.0
    %4270 = vmatpush.xpose.msra.mxu0 %v4253
    %4271 = vmatmul.f32.gmra.mxu0 %v4251
    %v4272 = vpop.f32.mrf.mxu0
    %v4273 = vadd.f32 0.0, %v4272
    %4274 = vdwg.mxu0
    %v4275 = vsel %vm193, %v4245, -inf
    %4276 = vmax.xlane.f32.xlu0 %v4275
    %v4277 = vpop.xlane.xlu0 %4276
    %v4278 = vsel %vm193, %v4273, -inf
    %4279 = vmax.xlane.f32.xlu0 %v4278
    %v4280 = vpop.xlane.xlu0 %4279
    %v4281 = vsub.f32 %v4245, %v4277
    %v4282 = vsub.f32 %v4273, %v4280
    %v4283 = vmul.f32 %v4281, 1.442695
    %v4284 = vpow.pop %v4283
    %v4285 = vmul.f32 %v4282, 1.442695
    %v4286 = vpow.pop %v4285
    %v4287 = vsel %vm193, %v4284, 0.0
    %4288 = vadd.xlane.f32.xlu0 %v4287
    %v4289 = vpop.xlane.xlu0 %4288
    %v4290 = vsel %vm193, %v4286, 0.0
    %4291 = vadd.xlane.f32.xlu0 %v4290
    %v4292 = vpop.xlane.xlu0 %4291
    %v4293 = vrcp.pop %v4289
    %v4294 = vrcp.pop %v4292
    %v4295 = vmul.f32 %v4284, %v4293
    %v4296 = vmul.f32 %v4286, %v4294
    %4297 = vrot.lane.b32.xlu0 %v4069, 92
    %v4298 = vpop.permute.xlu0 %4297
    %v4300 = vsel %vm193, %v4295, 0
    %v4302 = vsel %vm1598, %v4298, 0
    %4304 = vmatpush.msra.mxu0 0.0
    %4305 = vmatpush.msra.mxu0 0.0
    %4306 = vmatpush.msra.mxu0 0.0
    %4307 = vmatpush.msra.mxu0 0.0
    %4308 = vmatpush.msra.mxu0 0.0
    %4309 = vmatpush.msra.mxu0 0.0
    %4310 = vmatpush.msra.mxu0 0.0
    %4311 = vmatpush.msra.mxu0 0.0
    %4312 = vmatpush.msra.mxu0 0.0
    %4313 = vmatpush.msra.mxu0 0.0
    %4314 = vmatpush.msra.mxu0 0.0
    %4315 = vmatpush.msra.mxu0 0.0
    %4316 = vmatpush.msra.mxu0 0.0
    %4317 = vmatpush.msra.mxu0 0.0
    %4318 = vmatpush.msra.mxu0 0.0
    %4319 = vmatpush.msra.mxu0 %v4302
    %4320 = vmatmul.f32.gmra.mxu0 %v4300
    %v4321 = vpop.f32.mrf.mxu0
    %v4322 = vadd.f32 0.0, %v4321
    %4323 = vdwg.mxu0
    %4324 = vrot.lane.b32.xlu0 %v4089, 92
    %v4325 = vpop.permute.xlu0 %4324
    %v4327 = vsel %vm193, %v4296, 0
    %v4329 = vsel %vm1598, %v4325, 0
    %4331 = vmatpush.msra.mxu0 0.0
    %4332 = vmatpush.msra.mxu0 0.0
    %4333 = vmatpush.msra.mxu0 0.0
    %4334 = vmatpush.msra.mxu0 0.0
    %4335 = vmatpush.msra.mxu0 0.0
    %4336 = vmatpush.msra.mxu0 0.0
    %4337 = vmatpush.msra.mxu0 0.0
    %4338 = vmatpush.msra.mxu0 0.0
    %4339 = vmatpush.msra.mxu0 0.0
    %4340 = vmatpush.msra.mxu0 0.0
    %4341 = vmatpush.msra.mxu0 0.0
    %4342 = vmatpush.msra.mxu0 0.0
    %4343 = vmatpush.msra.mxu0 0.0
    %4344 = vmatpush.msra.mxu0 0.0
    %4345 = vmatpush.msra.mxu0 0.0
    %4346 = vmatpush.msra.mxu0 %v4329
    %4347 = vmatmul.f32.gmra.mxu0 %v4327
    %v4348 = vpop.f32.mrf.mxu0
    %v4349 = vadd.f32 0.0, %v4348
    %4350 = vdwg.mxu0
    %4351 = vrot.lane.b32.xlu0 %v4030, 120
    %v4352 = vpop.permute.xlu0 %4351
    %4353 = vrot.lane.b32.xlu0 %v4069, 120
    %v4354 = vpop.permute.xlu0 %4353
    %v4355 = vsel %vm193, %v4352, 0
    %v4357 = vsel %vm193, %v4354, 0
    %4359 = vmatpush.xpose.msra.mxu0 0.0
    %4360 = vmatpush.xpose.msra.mxu0 0.0
    %4361 = vmatpush.xpose.msra.mxu0 0.0
    %4362 = vmatpush.xpose.msra.mxu0 0.0
    %4363 = vmatpush.xpose.msra.mxu0 0.0
    %4364 = vmatpush.xpose.msra.mxu0 0.0
    %4365 = vmatpush.xpose.msra.mxu0 0.0
    %4366 = vmatpush.xpose.msra.mxu0 0.0
    %4367 = vmatpush.xpose.msra.mxu0 0.0
    %4368 = vmatpush.xpose.msra.mxu0 0.0
    %4369 = vmatpush.xpose.msra.mxu0 0.0
    %4370 = vmatpush.xpose.msra.mxu0 0.0
    %4371 = vmatpush.xpose.msra.mxu0 0.0
    %4372 = vmatpush.xpose.msra.mxu0 0.0
    %4373 = vmatpush.xpose.msra.mxu0 0.0
    %4374 = vmatpush.xpose.msra.mxu0 %v4357
    %4375 = vmatmul.f32.gmra.mxu0 %v4355
    %v4376 = vpop.f32.mrf.mxu0
    %v4377 = vadd.f32 0.0, %v4376
    %4378 = vdwg.mxu0
    %4379 = vrot.lane.b32.xlu0 %v4031, 120
    %v4380 = vpop.permute.xlu0 %4379
    %4381 = vrot.lane.b32.xlu0 %v4089, 120
    %v4382 = vpop.permute.xlu0 %4381
    %v4383 = vsel %vm193, %v4380, 0
    %v4385 = vsel %vm193, %v4382, 0
    %4387 = vmatpush.xpose.msra.mxu0 0.0
    %4388 = vmatpush.xpose.msra.mxu0 0.0
    %4389 = vmatpush.xpose.msra.mxu0 0.0
    %4390 = vmatpush.xpose.msra.mxu0 0.0
    %4391 = vmatpush.xpose.msra.mxu0 0.0
    %4392 = vmatpush.xpose.msra.mxu0 0.0
    %4393 = vmatpush.xpose.msra.mxu0 0.0
    %4394 = vmatpush.xpose.msra.mxu0 0.0
    %4395 = vmatpush.xpose.msra.mxu0 0.0
    %4396 = vmatpush.xpose.msra.mxu0 0.0
    %4397 = vmatpush.xpose.msra.mxu0 0.0
    %4398 = vmatpush.xpose.msra.mxu0 0.0
    %4399 = vmatpush.xpose.msra.mxu0 0.0
    %4400 = vmatpush.xpose.msra.mxu0 0.0
    %4401 = vmatpush.xpose.msra.mxu0 0.0
    %4402 = vmatpush.xpose.msra.mxu0 %v4385
    %4403 = vmatmul.f32.gmra.mxu0 %v4383
    %v4404 = vpop.f32.mrf.mxu0
    %v4405 = vadd.f32 0.0, %v4404
    %4406 = vdwg.mxu0
    %v4407 = vsel %vm193, %v4377, -inf
    %4408 = vmax.xlane.f32.xlu0 %v4407
    %v4409 = vpop.xlane.xlu0 %4408
    %v4410 = vsel %vm193, %v4405, -inf
    %4411 = vmax.xlane.f32.xlu0 %v4410
    %v4412 = vpop.xlane.xlu0 %4411
    %v4413 = vsub.f32 %v4377, %v4409
    %v4414 = vsub.f32 %v4405, %v4412
    %v4415 = vmul.f32 %v4413, 1.442695
    %v4416 = vpow.pop %v4415
    %v4417 = vmul.f32 %v4414, 1.442695
    %v4418 = vpow.pop %v4417
    %v4419 = vsel %vm193, %v4416, 0.0
    %4420 = vadd.xlane.f32.xlu0 %v4419
    %v4421 = vpop.xlane.xlu0 %4420
    %v4422 = vsel %vm193, %v4418, 0.0
    %4423 = vadd.xlane.f32.xlu0 %v4422
    %v4424 = vpop.xlane.xlu0 %4423
    %v4425 = vrcp.pop %v4421
    %v4426 = vrcp.pop %v4424
    %v4427 = vmul.f32 %v4416, %v4425
    %v4428 = vmul.f32 %v4418, %v4426
    %4429 = vrot.lane.b32.xlu0 %v4069, 88
    %v4430 = vpop.permute.xlu0 %4429
    %v4432 = vsel %vm193, %v4427, 0
    %v4434 = vsel %vm1598, %v4430, 0
    %4436 = vmatpush.msra.mxu0 0.0
    %4437 = vmatpush.msra.mxu0 0.0
    %4438 = vmatpush.msra.mxu0 0.0
    %4439 = vmatpush.msra.mxu0 0.0
    %4440 = vmatpush.msra.mxu0 0.0
    %4441 = vmatpush.msra.mxu0 0.0
    %4442 = vmatpush.msra.mxu0 0.0
    %4443 = vmatpush.msra.mxu0 0.0
    %4444 = vmatpush.msra.mxu0 0.0
    %4445 = vmatpush.msra.mxu0 0.0
    %4446 = vmatpush.msra.mxu0 0.0
    %4447 = vmatpush.msra.mxu0 0.0
    %4448 = vmatpush.msra.mxu0 0.0
    %4449 = vmatpush.msra.mxu0 0.0
    %4450 = vmatpush.msra.mxu0 0.0
    %4451 = vmatpush.msra.mxu0 %v4434
    %4452 = vmatmul.f32.gmra.mxu0 %v4432
    %v4453 = vpop.f32.mrf.mxu0
    %v4454 = vadd.f32 0.0, %v4453
    %4455 = vdwg.mxu0
    %4456 = vrot.lane.b32.xlu0 %v4089, 88
    %v4457 = vpop.permute.xlu0 %4456
    %v4459 = vsel %vm193, %v4428, 0
    %v4461 = vsel %vm1598, %v4457, 0
    %4463 = vmatpush.msra.mxu0 0.0
    %4464 = vmatpush.msra.mxu0 0.0
    %4465 = vmatpush.msra.mxu0 0.0
    %4466 = vmatpush.msra.mxu0 0.0
    %4467 = vmatpush.msra.mxu0 0.0
    %4468 = vmatpush.msra.mxu0 0.0
    %4469 = vmatpush.msra.mxu0 0.0
    %4470 = vmatpush.msra.mxu0 0.0
    %4471 = vmatpush.msra.mxu0 0.0
    %4472 = vmatpush.msra.mxu0 0.0
    %4473 = vmatpush.msra.mxu0 0.0
    %4474 = vmatpush.msra.mxu0 0.0
    %4475 = vmatpush.msra.mxu0 0.0
    %4476 = vmatpush.msra.mxu0 0.0
    %4477 = vmatpush.msra.mxu0 0.0
    %4478 = vmatpush.msra.mxu0 %v4461
    %4479 = vmatmul.f32.gmra.mxu0 %v4459
    %v4480 = vpop.f32.mrf.mxu0
    %v4481 = vadd.f32 0.0, %v4480
    %4482 = vdwg.mxu0
    %4483 = vrot.lane.b32.xlu0 %v4030, 116
    %v4484 = vpop.permute.xlu0 %4483
    %4485 = vrot.lane.b32.xlu0 %v4069, 116
    %v4486 = vpop.permute.xlu0 %4485
    %v4487 = vsel %vm193, %v4484, 0
    %v4489 = vsel %vm193, %v4486, 0
    %4491 = vmatpush.xpose.msra.mxu0 0.0
    %4492 = vmatpush.xpose.msra.mxu0 0.0
    %4493 = vmatpush.xpose.msra.mxu0 0.0
    %4494 = vmatpush.xpose.msra.mxu0 0.0
    %4495 = vmatpush.xpose.msra.mxu0 0.0
    %4496 = vmatpush.xpose.msra.mxu0 0.0
    %4497 = vmatpush.xpose.msra.mxu0 0.0
    %4498 = vmatpush.xpose.msra.mxu0 0.0
    %4499 = vmatpush.xpose.msra.mxu0 0.0
    %4500 = vmatpush.xpose.msra.mxu0 0.0
    %4501 = vmatpush.xpose.msra.mxu0 0.0
    %4502 = vmatpush.xpose.msra.mxu0 0.0
    %4503 = vmatpush.xpose.msra.mxu0 0.0
    %4504 = vmatpush.xpose.msra.mxu0 0.0
    %4505 = vmatpush.xpose.msra.mxu0 0.0
    %4506 = vmatpush.xpose.msra.mxu0 %v4489
    %4507 = vmatmul.f32.gmra.mxu0 %v4487
    %v4508 = vpop.f32.mrf.mxu0
    %v4509 = vadd.f32 0.0, %v4508
    %4510 = vdwg.mxu0
    %4511 = vrot.lane.b32.xlu0 %v4031, 116
    %v4512 = vpop.permute.xlu0 %4511
    %4513 = vrot.lane.b32.xlu0 %v4089, 116
    %v4514 = vpop.permute.xlu0 %4513
    %v4515 = vsel %vm193, %v4512, 0
    %v4517 = vsel %vm193, %v4514, 0
    %4519 = vmatpush.xpose.msra.mxu0 0.0
    %4520 = vmatpush.xpose.msra.mxu0 0.0
    %4521 = vmatpush.xpose.msra.mxu0 0.0
    %4522 = vmatpush.xpose.msra.mxu0 0.0
    %4523 = vmatpush.xpose.msra.mxu0 0.0
    %4524 = vmatpush.xpose.msra.mxu0 0.0
    %4525 = vmatpush.xpose.msra.mxu0 0.0
    %4526 = vmatpush.xpose.msra.mxu0 0.0
    %4527 = vmatpush.xpose.msra.mxu0 0.0
    %4528 = vmatpush.xpose.msra.mxu0 0.0
    %4529 = vmatpush.xpose.msra.mxu0 0.0
    %4530 = vmatpush.xpose.msra.mxu0 0.0
    %4531 = vmatpush.xpose.msra.mxu0 0.0
    %4532 = vmatpush.xpose.msra.mxu0 0.0
    %4533 = vmatpush.xpose.msra.mxu0 0.0
    %4534 = vmatpush.xpose.msra.mxu0 %v4517
    %4535 = vmatmul.f32.gmra.mxu0 %v4515
    %v4536 = vpop.f32.mrf.mxu0
    %v4537 = vadd.f32 0.0, %v4536
    %4538 = vdwg.mxu0
    %v4539 = vsel %vm193, %v4509, -inf
    %4540 = vmax.xlane.f32.xlu0 %v4539
    %v4541 = vpop.xlane.xlu0 %4540
    %v4542 = vsel %vm193, %v4537, -inf
    %4543 = vmax.xlane.f32.xlu0 %v4542
    %v4544 = vpop.xlane.xlu0 %4543
    %v4545 = vsub.f32 %v4509, %v4541
    %v4546 = vsub.f32 %v4537, %v4544
    %v4547 = vmul.f32 %v4545, 1.442695
    %v4548 = vpow.pop %v4547
    %v4549 = vmul.f32 %v4546, 1.442695
    %v4550 = vpow.pop %v4549
    %v4551 = vsel %vm193, %v4548, 0.0
    %4552 = vadd.xlane.f32.xlu0 %v4551
    %v4553 = vpop.xlane.xlu0 %4552
    %v4554 = vsel %vm193, %v4550, 0.0
    %4555 = vadd.xlane.f32.xlu0 %v4554
    %v4556 = vpop.xlane.xlu0 %4555
    %v4557 = vrcp.pop %v4553
    %v4558 = vrcp.pop %v4556
    %v4559 = vmul.f32 %v4548, %v4557
    %v4560 = vmul.f32 %v4550, %v4558
    %4561 = vrot.lane.b32.xlu0 %v4069, 84
    %v4562 = vpop.permute.xlu0 %4561
    %v4564 = vsel %vm193, %v4559, 0
    %v4566 = vsel %vm1598, %v4562, 0
    %4568 = vmatpush.msra.mxu0 0.0
    %4569 = vmatpush.msra.mxu0 0.0
    %4570 = vmatpush.msra.mxu0 0.0
    %4571 = vmatpush.msra.mxu0 0.0
    %4572 = vmatpush.msra.mxu0 0.0
    %4573 = vmatpush.msra.mxu0 0.0
    %4574 = vmatpush.msra.mxu0 0.0
    %4575 = vmatpush.msra.mxu0 0.0
    %4576 = vmatpush.msra.mxu0 0.0
    %4577 = vmatpush.msra.mxu0 0.0
    %4578 = vmatpush.msra.mxu0 0.0
    %4579 = vmatpush.msra.mxu0 0.0
    %4580 = vmatpush.msra.mxu0 0.0
    %4581 = vmatpush.msra.mxu0 0.0
    %4582 = vmatpush.msra.mxu0 0.0
    %4583 = vmatpush.msra.mxu0 %v4566
    %4584 = vmatmul.f32.gmra.mxu0 %v4564
    %v4585 = vpop.f32.mrf.mxu0
    %v4586 = vadd.f32 0.0, %v4585
    %4587 = vdwg.mxu0
    %4588 = vrot.lane.b32.xlu0 %v4089, 84
    %v4589 = vpop.permute.xlu0 %4588
    %v4591 = vsel %vm193, %v4560, 0
    %v4593 = vsel %vm1598, %v4589, 0
    %4595 = vmatpush.msra.mxu0 0.0
    %4596 = vmatpush.msra.mxu0 0.0
    %4597 = vmatpush.msra.mxu0 0.0
    %4598 = vmatpush.msra.mxu0 0.0
    %4599 = vmatpush.msra.mxu0 0.0
    %4600 = vmatpush.msra.mxu0 0.0
    %4601 = vmatpush.msra.mxu0 0.0
    %4602 = vmatpush.msra.mxu0 0.0
    %4603 = vmatpush.msra.mxu0 0.0
    %4604 = vmatpush.msra.mxu0 0.0
    %4605 = vmatpush.msra.mxu0 0.0
    %4606 = vmatpush.msra.mxu0 0.0
    %4607 = vmatpush.msra.mxu0 0.0
    %4608 = vmatpush.msra.mxu0 0.0
    %4609 = vmatpush.msra.mxu0 0.0
    %4610 = vmatpush.msra.mxu0 %v4593
    %4611 = vmatmul.f32.gmra.mxu0 %v4591
    %v4612 = vpop.f32.mrf.mxu0
    %v4613 = vadd.f32 0.0, %v4612
    %4614 = vdwg.mxu0
    %4615 = vrot.lane.b32.xlu0 %v4030, 112
    %v4616 = vpop.permute.xlu0 %4615
    %4617 = vrot.lane.b32.xlu0 %v4069, 112
    %v4618 = vpop.permute.xlu0 %4617
    %v4619 = vsel %vm193, %v4616, 0
    %v4621 = vsel %vm193, %v4618, 0
    %4623 = vmatpush.xpose.msra.mxu0 0.0
    %4624 = vmatpush.xpose.msra.mxu0 0.0
    %4625 = vmatpush.xpose.msra.mxu0 0.0
    %4626 = vmatpush.xpose.msra.mxu0 0.0
    %4627 = vmatpush.xpose.msra.mxu0 0.0
    %4628 = vmatpush.xpose.msra.mxu0 0.0
    %4629 = vmatpush.xpose.msra.mxu0 0.0
    %4630 = vmatpush.xpose.msra.mxu0 0.0
    %4631 = vmatpush.xpose.msra.mxu0 0.0
    %4632 = vmatpush.xpose.msra.mxu0 0.0
    %4633 = vmatpush.xpose.msra.mxu0 0.0
    %4634 = vmatpush.xpose.msra.mxu0 0.0
    %4635 = vmatpush.xpose.msra.mxu0 0.0
    %4636 = vmatpush.xpose.msra.mxu0 0.0
    %4637 = vmatpush.xpose.msra.mxu0 0.0
    %4638 = vmatpush.xpose.msra.mxu0 %v4621
    %4639 = vmatmul.f32.gmra.mxu0 %v4619
    %v4640 = vpop.f32.mrf.mxu0
    %v4641 = vadd.f32 0.0, %v4640
    %4642 = vdwg.mxu0
    %4643 = vrot.lane.b32.xlu0 %v4031, 112
    %v4644 = vpop.permute.xlu0 %4643
    %4645 = vrot.lane.b32.xlu0 %v4089, 112
    %v4646 = vpop.permute.xlu0 %4645
    %v4647 = vsel %vm193, %v4644, 0
    %v4649 = vsel %vm193, %v4646, 0
    %4651 = vmatpush.xpose.msra.mxu0 0.0
    %4652 = vmatpush.xpose.msra.mxu0 0.0
    %4653 = vmatpush.xpose.msra.mxu0 0.0
    %4654 = vmatpush.xpose.msra.mxu0 0.0
    %4655 = vmatpush.xpose.msra.mxu0 0.0
    %4656 = vmatpush.xpose.msra.mxu0 0.0
    %4657 = vmatpush.xpose.msra.mxu0 0.0
    %4658 = vmatpush.xpose.msra.mxu0 0.0
    %4659 = vmatpush.xpose.msra.mxu0 0.0
    %4660 = vmatpush.xpose.msra.mxu0 0.0
    %4661 = vmatpush.xpose.msra.mxu0 0.0
    %4662 = vmatpush.xpose.msra.mxu0 0.0
    %4663 = vmatpush.xpose.msra.mxu0 0.0
    %4664 = vmatpush.xpose.msra.mxu0 0.0
    %4665 = vmatpush.xpose.msra.mxu0 0.0
    %4666 = vmatpush.xpose.msra.mxu0 %v4649
    %4667 = vmatmul.f32.gmra.mxu0 %v4647
    %v4668 = vpop.f32.mrf.mxu0
    %v4669 = vadd.f32 0.0, %v4668
    %4670 = vdwg.mxu0
    %v4671 = vsel %vm193, %v4641, -inf
    %4672 = vmax.xlane.f32.xlu0 %v4671
    %v4673 = vpop.xlane.xlu0 %4672
    %v4674 = vsel %vm193, %v4669, -inf
    %4675 = vmax.xlane.f32.xlu0 %v4674
    %v4676 = vpop.xlane.xlu0 %4675
    %v4677 = vsub.f32 %v4641, %v4673
    %v4678 = vsub.f32 %v4669, %v4676
    %v4679 = vmul.f32 %v4677, 1.442695
    %v4680 = vpow.pop %v4679
    %v4681 = vmul.f32 %v4678, 1.442695
    %v4682 = vpow.pop %v4681
    %v4683 = vsel %vm193, %v4680, 0.0
    %4684 = vadd.xlane.f32.xlu0 %v4683
    %v4685 = vpop.xlane.xlu0 %4684
    %v4686 = vsel %vm193, %v4682, 0.0
    %4687 = vadd.xlane.f32.xlu0 %v4686
    %v4688 = vpop.xlane.xlu0 %4687
    %v4689 = vrcp.pop %v4685
    %v4690 = vrcp.pop %v4688
    %v4691 = vmul.f32 %v4680, %v4689
    %v4692 = vmul.f32 %v4682, %v4690
    %4693 = vrot.lane.b32.xlu0 %v4069, 80
    %v4694 = vpop.permute.xlu0 %4693
    %v4696 = vsel %vm193, %v4691, 0
    %v4698 = vsel %vm1598, %v4694, 0
    %4700 = vmatpush.msra.mxu0 0.0
    %4701 = vmatpush.msra.mxu0 0.0
    %4702 = vmatpush.msra.mxu0 0.0
    %4703 = vmatpush.msra.mxu0 0.0
    %4704 = vmatpush.msra.mxu0 0.0
    %4705 = vmatpush.msra.mxu0 0.0
    %4706 = vmatpush.msra.mxu0 0.0
    %4707 = vmatpush.msra.mxu0 0.0
    %4708 = vmatpush.msra.mxu0 0.0
    %4709 = vmatpush.msra.mxu0 0.0
    %4710 = vmatpush.msra.mxu0 0.0
    %4711 = vmatpush.msra.mxu0 0.0
    %4712 = vmatpush.msra.mxu0 0.0
    %4713 = vmatpush.msra.mxu0 0.0
    %4714 = vmatpush.msra.mxu0 0.0
    %4715 = vmatpush.msra.mxu0 %v4698
    %4716 = vmatmul.f32.gmra.mxu0 %v4696
    %v4717 = vpop.f32.mrf.mxu0
    %v4718 = vadd.f32 0.0, %v4717
    %4719 = vdwg.mxu0
    %4720 = vrot.lane.b32.xlu0 %v4089, 80
    %v4721 = vpop.permute.xlu0 %4720
    %v4723 = vsel %vm193, %v4692, 0
    %v4725 = vsel %vm1598, %v4721, 0
    %4727 = vmatpush.msra.mxu0 0.0
    %4728 = vmatpush.msra.mxu0 0.0
    %4729 = vmatpush.msra.mxu0 0.0
    %4730 = vmatpush.msra.mxu0 0.0
    %4731 = vmatpush.msra.mxu0 0.0
    %4732 = vmatpush.msra.mxu0 0.0
    %4733 = vmatpush.msra.mxu0 0.0
    %4734 = vmatpush.msra.mxu0 0.0
    %4735 = vmatpush.msra.mxu0 0.0
    %4736 = vmatpush.msra.mxu0 0.0
    %4737 = vmatpush.msra.mxu0 0.0
    %4738 = vmatpush.msra.mxu0 0.0
    %4739 = vmatpush.msra.mxu0 0.0
    %4740 = vmatpush.msra.mxu0 0.0
    %4741 = vmatpush.msra.mxu0 0.0
    %4742 = vmatpush.msra.mxu0 %v4725
    %4743 = vmatmul.f32.gmra.mxu0 %v4723
    %v4744 = vpop.f32.mrf.mxu0
    %v4745 = vadd.f32 0.0, %v4744
    %4746 = vdwg.mxu0
    %4747 = vrot.lane.b32.xlu0 %v4030, 108
    %v4748 = vpop.permute.xlu0 %4747
    %4749 = vrot.lane.b32.xlu0 %v4069, 108
    %v4750 = vpop.permute.xlu0 %4749
    %v4751 = vsel %vm193, %v4748, 0
    %v4753 = vsel %vm193, %v4750, 0
    %4755 = vmatpush.xpose.msra.mxu0 0.0
    %4756 = vmatpush.xpose.msra.mxu0 0.0
    %4757 = vmatpush.xpose.msra.mxu0 0.0
    %4758 = vmatpush.xpose.msra.mxu0 0.0
    %4759 = vmatpush.xpose.msra.mxu0 0.0
    %4760 = vmatpush.xpose.msra.mxu0 0.0
    %4761 = vmatpush.xpose.msra.mxu0 0.0
    %4762 = vmatpush.xpose.msra.mxu0 0.0
    %4763 = vmatpush.xpose.msra.mxu0 0.0
    %4764 = vmatpush.xpose.msra.mxu0 0.0
    %4765 = vmatpush.xpose.msra.mxu0 0.0
    %4766 = vmatpush.xpose.msra.mxu0 0.0
    %4767 = vmatpush.xpose.msra.mxu0 0.0
    %4768 = vmatpush.xpose.msra.mxu0 0.0
    %4769 = vmatpush.xpose.msra.mxu0 0.0
    %4770 = vmatpush.xpose.msra.mxu0 %v4753
    %4771 = vmatmul.f32.gmra.mxu0 %v4751
    %v4772 = vpop.f32.mrf.mxu0
    %v4773 = vadd.f32 0.0, %v4772
    %4774 = vdwg.mxu0
    %4775 = vrot.lane.b32.xlu0 %v4031, 108
    %v4776 = vpop.permute.xlu0 %4775
    %4777 = vrot.lane.b32.xlu0 %v4089, 108
    %v4778 = vpop.permute.xlu0 %4777
    %v4779 = vsel %vm193, %v4776, 0
    %v4781 = vsel %vm193, %v4778, 0
    %4783 = vmatpush.xpose.msra.mxu0 0.0
    %4784 = vmatpush.xpose.msra.mxu0 0.0
    %4785 = vmatpush.xpose.msra.mxu0 0.0
    %4786 = vmatpush.xpose.msra.mxu0 0.0
    %4787 = vmatpush.xpose.msra.mxu0 0.0
    %4788 = vmatpush.xpose.msra.mxu0 0.0
    %4789 = vmatpush.xpose.msra.mxu0 0.0
    %4790 = vmatpush.xpose.msra.mxu0 0.0
    %4791 = vmatpush.xpose.msra.mxu0 0.0
    %4792 = vmatpush.xpose.msra.mxu0 0.0
    %4793 = vmatpush.xpose.msra.mxu0 0.0
    %4794 = vmatpush.xpose.msra.mxu0 0.0
    %4795 = vmatpush.xpose.msra.mxu0 0.0
    %4796 = vmatpush.xpose.msra.mxu0 0.0
    %4797 = vmatpush.xpose.msra.mxu0 0.0
    %4798 = vmatpush.xpose.msra.mxu0 %v4781
    %4799 = vmatmul.f32.gmra.mxu0 %v4779
    %v4800 = vpop.f32.mrf.mxu0
    %v4801 = vadd.f32 0.0, %v4800
    %4802 = vdwg.mxu0
    %v4803 = vsel %vm193, %v4773, -inf
    %4804 = vmax.xlane.f32.xlu0 %v4803
    %v4805 = vpop.xlane.xlu0 %4804
    %v4806 = vsel %vm193, %v4801, -inf
    %4807 = vmax.xlane.f32.xlu0 %v4806
    %v4808 = vpop.xlane.xlu0 %4807
    %v4809 = vsub.f32 %v4773, %v4805
    %v4810 = vsub.f32 %v4801, %v4808
    %v4811 = vmul.f32 %v4809, 1.442695
    %v4812 = vpow.pop %v4811
    %v4813 = vmul.f32 %v4810, 1.442695
    %v4814 = vpow.pop %v4813
    %v4815 = vsel %vm193, %v4812, 0.0
    %4816 = vadd.xlane.f32.xlu0 %v4815
    %v4817 = vpop.xlane.xlu0 %4816
    %v4818 = vsel %vm193, %v4814, 0.0
    %4819 = vadd.xlane.f32.xlu0 %v4818
    %v4820 = vpop.xlane.xlu0 %4819
    %v4821 = vrcp.pop %v4817
    %v4822 = vrcp.pop %v4820
    %v4823 = vmul.f32 %v4812, %v4821
    %v4824 = vmul.f32 %v4814, %v4822
    %4825 = vrot.lane.b32.xlu0 %v4069, 76
    %v4826 = vpop.permute.xlu0 %4825
    %v4828 = vsel %vm193, %v4823, 0
    %v4830 = vsel %vm1598, %v4826, 0
    %4832 = vmatpush.msra.mxu0 0.0
    %4833 = vmatpush.msra.mxu0 0.0
    %4834 = vmatpush.msra.mxu0 0.0
    %4835 = vmatpush.msra.mxu0 0.0
    %4836 = vmatpush.msra.mxu0 0.0
    %4837 = vmatpush.msra.mxu0 0.0
    %4838 = vmatpush.msra.mxu0 0.0
    %4839 = vmatpush.msra.mxu0 0.0
    %4840 = vmatpush.msra.mxu0 0.0
    %4841 = vmatpush.msra.mxu0 0.0
    %4842 = vmatpush.msra.mxu0 0.0
    %4843 = vmatpush.msra.mxu0 0.0
    %4844 = vmatpush.msra.mxu0 0.0
    %4845 = vmatpush.msra.mxu0 0.0
    %4846 = vmatpush.msra.mxu0 0.0
    %4847 = vmatpush.msra.mxu0 %v4830
    %4848 = vmatmul.f32.gmra.mxu0 %v4828
    %v4849 = vpop.f32.mrf.mxu0
    %v4850 = vadd.f32 0.0, %v4849
    %4851 = vdwg.mxu0
    %4852 = vrot.lane.b32.xlu0 %v4089, 76
    %v4853 = vpop.permute.xlu0 %4852
    %v4855 = vsel %vm193, %v4824, 0
    %v4857 = vsel %vm1598, %v4853, 0
    %4859 = vmatpush.msra.mxu0 0.0
    %4860 = vmatpush.msra.mxu0 0.0
    %4861 = vmatpush.msra.mxu0 0.0
    %4862 = vmatpush.msra.mxu0 0.0
    %4863 = vmatpush.msra.mxu0 0.0
    %4864 = vmatpush.msra.mxu0 0.0
    %4865 = vmatpush.msra.mxu0 0.0
    %4866 = vmatpush.msra.mxu0 0.0
    %4867 = vmatpush.msra.mxu0 0.0
    %4868 = vmatpush.msra.mxu0 0.0
    %4869 = vmatpush.msra.mxu0 0.0
    %4870 = vmatpush.msra.mxu0 0.0
    %4871 = vmatpush.msra.mxu0 0.0
    %4872 = vmatpush.msra.mxu0 0.0
    %4873 = vmatpush.msra.mxu0 0.0
    %4874 = vmatpush.msra.mxu0 %v4857
    %4875 = vmatmul.f32.gmra.mxu0 %v4855
    %v4876 = vpop.f32.mrf.mxu0
    %v4877 = vadd.f32 0.0, %v4876
    %4878 = vdwg.mxu0
    %4879 = vrot.lane.b32.xlu0 %v4030, 104
    %v4880 = vpop.permute.xlu0 %4879
    %4881 = vrot.lane.b32.xlu0 %v4069, 104
    %v4882 = vpop.permute.xlu0 %4881
    %v4883 = vsel %vm193, %v4880, 0
    %v4885 = vsel %vm193, %v4882, 0
    %4887 = vmatpush.xpose.msra.mxu0 0.0
    %4888 = vmatpush.xpose.msra.mxu0 0.0
    %4889 = vmatpush.xpose.msra.mxu0 0.0
    %4890 = vmatpush.xpose.msra.mxu0 0.0
    %4891 = vmatpush.xpose.msra.mxu0 0.0
    %4892 = vmatpush.xpose.msra.mxu0 0.0
    %4893 = vmatpush.xpose.msra.mxu0 0.0
    %4894 = vmatpush.xpose.msra.mxu0 0.0
    %4895 = vmatpush.xpose.msra.mxu0 0.0
    %4896 = vmatpush.xpose.msra.mxu0 0.0
    %4897 = vmatpush.xpose.msra.mxu0 0.0
    %4898 = vmatpush.xpose.msra.mxu0 0.0
    %4899 = vmatpush.xpose.msra.mxu0 0.0
    %4900 = vmatpush.xpose.msra.mxu0 0.0
    %4901 = vmatpush.xpose.msra.mxu0 0.0
    %4902 = vmatpush.xpose.msra.mxu0 %v4885
    %4903 = vmatmul.f32.gmra.mxu0 %v4883
    %v4904 = vpop.f32.mrf.mxu0
    %v4905 = vadd.f32 0.0, %v4904
    %4906 = vdwg.mxu0
    %4907 = vrot.lane.b32.xlu0 %v4031, 104
    %v4908 = vpop.permute.xlu0 %4907
    %4909 = vrot.lane.b32.xlu0 %v4089, 104
    %v4910 = vpop.permute.xlu0 %4909
    %v4911 = vsel %vm193, %v4908, 0
    %v4913 = vsel %vm193, %v4910, 0
    %4915 = vmatpush.xpose.msra.mxu0 0.0
    %4916 = vmatpush.xpose.msra.mxu0 0.0
    %4917 = vmatpush.xpose.msra.mxu0 0.0
    %4918 = vmatpush.xpose.msra.mxu0 0.0
    %4919 = vmatpush.xpose.msra.mxu0 0.0
    %4920 = vmatpush.xpose.msra.mxu0 0.0
    %4921 = vmatpush.xpose.msra.mxu0 0.0
    %4922 = vmatpush.xpose.msra.mxu0 0.0
    %4923 = vmatpush.xpose.msra.mxu0 0.0
    %4924 = vmatpush.xpose.msra.mxu0 0.0
    %4925 = vmatpush.xpose.msra.mxu0 0.0
    %4926 = vmatpush.xpose.msra.mxu0 0.0
    %4927 = vmatpush.xpose.msra.mxu0 0.0
    %4928 = vmatpush.xpose.msra.mxu0 0.0
    %4929 = vmatpush.xpose.msra.mxu0 0.0
    %4930 = vmatpush.xpose.msra.mxu0 %v4913
    %4931 = vmatmul.f32.gmra.mxu0 %v4911
    %v4932 = vpop.f32.mrf.mxu0
    %v4933 = vadd.f32 0.0, %v4932
    %4934 = vdwg.mxu0
    %v4935 = vsel %vm193, %v4905, -inf
    %4936 = vmax.xlane.f32.xlu0 %v4935
    %v4937 = vpop.xlane.xlu0 %4936
    %v4938 = vsel %vm193, %v4933, -inf
    %4939 = vmax.xlane.f32.xlu0 %v4938
    %v4940 = vpop.xlane.xlu0 %4939
    %v4941 = vsub.f32 %v4905, %v4937
    %v4942 = vsub.f32 %v4933, %v4940
    %v4943 = vmul.f32 %v4941, 1.442695
    %v4944 = vpow.pop %v4943
    %v4945 = vmul.f32 %v4942, 1.442695
    %v4946 = vpow.pop %v4945
    %v4947 = vsel %vm193, %v4944, 0.0
    %4948 = vadd.xlane.f32.xlu0 %v4947
    %v4949 = vpop.xlane.xlu0 %4948
    %v4950 = vsel %vm193, %v4946, 0.0
    %4951 = vadd.xlane.f32.xlu0 %v4950
    %v4952 = vpop.xlane.xlu0 %4951
    %v4953 = vrcp.pop %v4949
    %v4954 = vrcp.pop %v4952
    %v4955 = vmul.f32 %v4944, %v4953
    %v4956 = vmul.f32 %v4946, %v4954
    %4957 = vrot.lane.b32.xlu0 %v4069, 72
    %v4958 = vpop.permute.xlu0 %4957
    %v4960 = vsel %vm193, %v4955, 0
    %v4962 = vsel %vm1598, %v4958, 0
    %4964 = vmatpush.msra.mxu0 0.0
    %4965 = vmatpush.msra.mxu0 0.0
    %4966 = vmatpush.msra.mxu0 0.0
    %4967 = vmatpush.msra.mxu0 0.0
    %4968 = vmatpush.msra.mxu0 0.0
    %4969 = vmatpush.msra.mxu0 0.0
    %4970 = vmatpush.msra.mxu0 0.0
    %4971 = vmatpush.msra.mxu0 0.0
    %4972 = vmatpush.msra.mxu0 0.0
    %4973 = vmatpush.msra.mxu0 0.0
    %4974 = vmatpush.msra.mxu0 0.0
    %4975 = vmatpush.msra.mxu0 0.0
    %4976 = vmatpush.msra.mxu0 0.0
    %4977 = vmatpush.msra.mxu0 0.0
    %4978 = vmatpush.msra.mxu0 0.0
    %4979 = vmatpush.msra.mxu0 %v4962
    %4980 = vmatmul.f32.gmra.mxu0 %v4960
    %v4981 = vpop.f32.mrf.mxu0
    %v4982 = vadd.f32 0.0, %v4981
    %4983 = vdwg.mxu0
    %4984 = vrot.lane.b32.xlu0 %v4089, 72
    %v4985 = vpop.permute.xlu0 %4984
    %v4987 = vsel %vm193, %v4956, 0
    %v4989 = vsel %vm1598, %v4985, 0
    %4991 = vmatpush.msra.mxu0 0.0
    %4992 = vmatpush.msra.mxu0 0.0
    %4993 = vmatpush.msra.mxu0 0.0
    %4994 = vmatpush.msra.mxu0 0.0
    %4995 = vmatpush.msra.mxu0 0.0
    %4996 = vmatpush.msra.mxu0 0.0
    %4997 = vmatpush.msra.mxu0 0.0
    %4998 = vmatpush.msra.mxu0 0.0
    %4999 = vmatpush.msra.mxu0 0.0
    %5000 = vmatpush.msra.mxu0 0.0
    %5001 = vmatpush.msra.mxu0 0.0
    %5002 = vmatpush.msra.mxu0 0.0
    %5003 = vmatpush.msra.mxu0 0.0
    %5004 = vmatpush.msra.mxu0 0.0
    %5005 = vmatpush.msra.mxu0 0.0
    %5006 = vmatpush.msra.mxu0 %v4989
    %5007 = vmatmul.f32.gmra.mxu0 %v4987
    %v5008 = vpop.f32.mrf.mxu0
    %v5009 = vadd.f32 0.0, %v5008
    %5010 = vdwg.mxu0
    %5011 = vrot.lane.b32.xlu0 %v4030, 100
    %v5012 = vpop.permute.xlu0 %5011
    %5013 = vrot.lane.b32.xlu0 %v4069, 100
    %v5014 = vpop.permute.xlu0 %5013
    %v5015 = vsel %vm193, %v5012, 0
    %v5017 = vsel %vm193, %v5014, 0
    %5019 = vmatpush.xpose.msra.mxu0 0.0
    %5020 = vmatpush.xpose.msra.mxu0 0.0
    %5021 = vmatpush.xpose.msra.mxu0 0.0
    %5022 = vmatpush.xpose.msra.mxu0 0.0
    %5023 = vmatpush.xpose.msra.mxu0 0.0
    %5024 = vmatpush.xpose.msra.mxu0 0.0
    %5025 = vmatpush.xpose.msra.mxu0 0.0
    %5026 = vmatpush.xpose.msra.mxu0 0.0
    %5027 = vmatpush.xpose.msra.mxu0 0.0
    %5028 = vmatpush.xpose.msra.mxu0 0.0
    %5029 = vmatpush.xpose.msra.mxu0 0.0
    %5030 = vmatpush.xpose.msra.mxu0 0.0
    %5031 = vmatpush.xpose.msra.mxu0 0.0
    %5032 = vmatpush.xpose.msra.mxu0 0.0
    %5033 = vmatpush.xpose.msra.mxu0 0.0
    %5034 = vmatpush.xpose.msra.mxu0 %v5017
    %5035 = vmatmul.f32.gmra.mxu0 %v5015
    %v5036 = vpop.f32.mrf.mxu0
    %v5037 = vadd.f32 0.0, %v5036
    %5038 = vdwg.mxu0
    %5039 = vrot.lane.b32.xlu0 %v4031, 100
    %v5040 = vpop.permute.xlu0 %5039
    %5041 = vrot.lane.b32.xlu0 %v4089, 100
    %v5042 = vpop.permute.xlu0 %5041
    %v5043 = vsel %vm193, %v5040, 0
    %v5045 = vsel %vm193, %v5042, 0
    %5047 = vmatpush.xpose.msra.mxu0 0.0
    %5048 = vmatpush.xpose.msra.mxu0 0.0
    %5049 = vmatpush.xpose.msra.mxu0 0.0
    %5050 = vmatpush.xpose.msra.mxu0 0.0
    %5051 = vmatpush.xpose.msra.mxu0 0.0
    %5052 = vmatpush.xpose.msra.mxu0 0.0
    %5053 = vmatpush.xpose.msra.mxu0 0.0
    %5054 = vmatpush.xpose.msra.mxu0 0.0
    %5055 = vmatpush.xpose.msra.mxu0 0.0
    %5056 = vmatpush.xpose.msra.mxu0 0.0
    %5057 = vmatpush.xpose.msra.mxu0 0.0
    %5058 = vmatpush.xpose.msra.mxu0 0.0
    %5059 = vmatpush.xpose.msra.mxu0 0.0
    %5060 = vmatpush.xpose.msra.mxu0 0.0
    %5061 = vmatpush.xpose.msra.mxu0 0.0
    %5062 = vmatpush.xpose.msra.mxu0 %v5045
    %5063 = vmatmul.f32.gmra.mxu0 %v5043
    %v5064 = vpop.f32.mrf.mxu0
    %v5065 = vadd.f32 0.0, %v5064
    %5066 = vdwg.mxu0
    %v5067 = vsel %vm193, %v5037, -inf
    %5068 = vmax.xlane.f32.xlu0 %v5067
    %v5069 = vpop.xlane.xlu0 %5068
    %v5070 = vsel %vm193, %v5065, -inf
    %5071 = vmax.xlane.f32.xlu0 %v5070
    %v5072 = vpop.xlane.xlu0 %5071
    %v5073 = vsub.f32 %v5037, %v5069
    %v5074 = vsub.f32 %v5065, %v5072
    %v5075 = vmul.f32 %v5073, 1.442695
    %v5076 = vpow.pop %v5075
    %v5077 = vmul.f32 %v5074, 1.442695
    %v5078 = vpow.pop %v5077
    %v5079 = vsel %vm193, %v5076, 0.0
    %5080 = vadd.xlane.f32.xlu0 %v5079
    %v5081 = vpop.xlane.xlu0 %5080
    %v5082 = vsel %vm193, %v5078, 0.0
    %5083 = vadd.xlane.f32.xlu0 %v5082
    %v5084 = vpop.xlane.xlu0 %5083
    %v5085 = vrcp.pop %v5081
    %v5086 = vrcp.pop %v5084
    %v5087 = vmul.f32 %v5076, %v5085
    %v5088 = vmul.f32 %v5078, %v5086
    %5089 = vrot.lane.b32.xlu0 %v4069, 68
    %v5090 = vpop.permute.xlu0 %5089
    %v5092 = vsel %vm193, %v5087, 0
    %v5094 = vsel %vm1598, %v5090, 0
    %5096 = vmatpush.msra.mxu0 0.0
    %5097 = vmatpush.msra.mxu0 0.0
    %5098 = vmatpush.msra.mxu0 0.0
    %5099 = vmatpush.msra.mxu0 0.0
    %5100 = vmatpush.msra.mxu0 0.0
    %5101 = vmatpush.msra.mxu0 0.0
    %5102 = vmatpush.msra.mxu0 0.0
    %5103 = vmatpush.msra.mxu0 0.0
    %5104 = vmatpush.msra.mxu0 0.0
    %5105 = vmatpush.msra.mxu0 0.0
    %5106 = vmatpush.msra.mxu0 0.0
    %5107 = vmatpush.msra.mxu0 0.0
    %5108 = vmatpush.msra.mxu0 0.0
    %5109 = vmatpush.msra.mxu0 0.0
    %5110 = vmatpush.msra.mxu0 0.0
    %5111 = vmatpush.msra.mxu0 %v5094
    %5112 = vmatmul.f32.gmra.mxu0 %v5092
    %v5113 = vpop.f32.mrf.mxu0
    %v5114 = vadd.f32 0.0, %v5113
    %5115 = vdwg.mxu0
    %5116 = vrot.lane.b32.xlu0 %v4089, 68
    %v5117 = vpop.permute.xlu0 %5116
    %v5119 = vsel %vm193, %v5088, 0
    %v5121 = vsel %vm1598, %v5117, 0
    %5123 = vmatpush.msra.mxu0 0.0
    %5124 = vmatpush.msra.mxu0 0.0
    %5125 = vmatpush.msra.mxu0 0.0
    %5126 = vmatpush.msra.mxu0 0.0
    %5127 = vmatpush.msra.mxu0 0.0
    %5128 = vmatpush.msra.mxu0 0.0
    %5129 = vmatpush.msra.mxu0 0.0
    %5130 = vmatpush.msra.mxu0 0.0
    %5131 = vmatpush.msra.mxu0 0.0
    %5132 = vmatpush.msra.mxu0 0.0
    %5133 = vmatpush.msra.mxu0 0.0
    %5134 = vmatpush.msra.mxu0 0.0
    %5135 = vmatpush.msra.mxu0 0.0
    %5136 = vmatpush.msra.mxu0 0.0
    %5137 = vmatpush.msra.mxu0 0.0
    %5138 = vmatpush.msra.mxu0 %v5121
    %5139 = vmatmul.f32.gmra.mxu0 %v5119
    %v5140 = vpop.f32.mrf.mxu0
    %v5141 = vadd.f32 0.0, %v5140
    %5142 = vdwg.mxu0
    %5145 = vrot.lane.b32.xlu0 %v4322, 4
    %v5146 = vpop.permute.xlu0 %5145
    %5147 = vrot.lane.b32.xlu0 %v4349, 4
    %v5148 = vpop.permute.xlu0 %5147
    %5153 = vrot.lane.b32.xlu0 %v4454, 8
    %v5154 = vpop.permute.xlu0 %5153
    %5155 = vrot.lane.b32.xlu0 %v4481, 8
    %v5156 = vpop.permute.xlu0 %5155
    %5161 = vrot.lane.b32.xlu0 %v4586, 12
    %v5162 = vpop.permute.xlu0 %5161
    %5163 = vrot.lane.b32.xlu0 %v4613, 12
    %v5164 = vpop.permute.xlu0 %5163
    %5169 = vrot.lane.b32.xlu0 %v4718, 16
    %v5170 = vpop.permute.xlu0 %5169
    %5171 = vrot.lane.b32.xlu0 %v4745, 16
    %v5172 = vpop.permute.xlu0 %5171
    %5177 = vrot.lane.b32.xlu0 %v4850, 20
    %v5178 = vpop.permute.xlu0 %5177
    %5179 = vrot.lane.b32.xlu0 %v4877, 20
    %v5180 = vpop.permute.xlu0 %5179
    %5185 = vrot.lane.b32.xlu0 %v4982, 24
    %v5186 = vpop.permute.xlu0 %5185
    %5187 = vrot.lane.b32.xlu0 %v5009, 24
    %v5188 = vpop.permute.xlu0 %5187
    %5193 = vrot.lane.b32.xlu0 %v5114, 28
    %v5194 = vpop.permute.xlu0 %5193
    %5195 = vrot.lane.b32.xlu0 %v5141, 28
    %v5196 = vpop.permute.xlu0 %5195
    %v5199 = vsel %vm193, %v4190, %v5146
    %v5200 = vsel %vm193, %v4217, %v5148
    %v5201 = vsel %vm247, %v5199, %v5154
    %v5202 = vsel %vm247, %v5200, %v5156
    %v5203 = vsel %vm1292, %v5201, %v5162
    %v5204 = vsel %vm1292, %v5202, %v5164
    %v5205 = vsel %vm1295, %v5203, %v5170
    %v5206 = vsel %vm1295, %v5204, %v5172
    %v5207 = vsel %vm1298, %v5205, %v5178
    %v5208 = vsel %vm1298, %v5206, %v5180
    %v5209 = vsel %vm1301, %v5207, %v5186
    %v5210 = vsel %vm1301, %v5208, %v5188
    %v5211 = vsel %vm1304, %v5209, %v5194
    %v5212 = vsel %vm1304, %v5210, %v5196
    %v5214 = vperm.slane %v3993, 0
    %v5217 = vsel %vm158, %v5211, 0
    %v5220 = vsel %vm158, %v5212, 0
    %5222 = vmatpush.msra.mxu0 0.0
    %5223 = vmatpush.msra.mxu0 0.0
    %5224 = vmatpush.msra.mxu0 0.0
    %5225 = vmatpush.msra.mxu0 0.0
    %5226 = vmatpush.msra.mxu0 0.0
    %5227 = vmatpush.msra.mxu0 0.0
    %5228 = vmatpush.msra.mxu0 0.0
    %5229 = vmatpush.msra.mxu0 0.0
    %5230 = vmatpush.msra.mxu0 0.0
    %5231 = vmatpush.msra.mxu0 0.0
    %5232 = vmatpush.msra.mxu0 0.0
    %5233 = vmatpush.msra.mxu0 0.0
    %5234 = vmatpush.msra.mxu0 %v3991
    %5235 = vmatpush.msra.mxu0 %v3990
    %5236 = vmatpush.msra.mxu0 %v3989
    %5237 = vmatpush.msra.mxu0 %v3988
    %5238 = vmatmul.f32.gmra.mxu0 %v5217
    %v5239 = vpop.f32.mrf.mxu0
    %v5240 = vadd.f32 %v5214, %v5239
    %5241 = vmatmul.f32.gmra.mxu0 %v5220
    %v5242 = vpop.f32.mrf.mxu0
    %v5243 = vadd.f32 %v5214, %v5242
    %5244 = vdwg.mxu0
    %v5245 = vadd.f32 %v5240, %v3978
    %v5246 = vadd.f32 %v5243, %v3979
    %v5247 = vsel %vm158, %v5245, 0.0
    %5248 = vadd.xlane.f32.xlu0 %v5247
    %v5249 = vpop.xlane.xlu0 %5248
    %v5250 = vsel %vm158, %v5246, 0.0
    %5251 = vadd.xlane.f32.xlu0 %v5250
    %v5252 = vpop.xlane.xlu0 %5251
    %v5253 = vmul.f32 %v5249, %v1353
    %v5254 = vmul.f32 %v5252, %v1353
    %v5255 = vsub.f32 %v5245, %v5253
    %v5256 = vsub.f32 %v5246, %v5254
    %v5257 = vmul.f32 %v5255, %v5255
    %v5258 = vmul.f32 %v5256, %v5256
    %v5259 = vsel %vm158, %v5257, 0.0
    %5260 = vadd.xlane.f32.xlu0 %v5259
    %v5261 = vpop.xlane.xlu0 %5260
    %v5262 = vsel %vm158, %v5258, 0.0
    %5263 = vadd.xlane.f32.xlu0 %v5262
    %v5264 = vpop.xlane.xlu0 %5263
    %v5265 = vmul.f32 %v5261, %v1353
    %v5266 = vmul.f32 %v5264, %v1353
    %v5267 = vadd.f32 %v5265, 1e-05
    %v5268 = vadd.f32 %v5266, 1e-05
    %v5269 = vrsqrt.pop %v5267
    %v5270 = vmul.f32 %v5269, %v5267
    %v5271 = vmul.f32 %v5270, %v5269
    %v5272 = vmul.f32 0.5, %v5271
    %v5273 = vsub.f32 1.5, %v5272
    %v5274 = vmul.f32 %v5269, %v5273
    %vm5275 = vweird.f32 %v5267
    %vm5276 = vweird.f32 %v5269
    %vm5277 = vmor %vm5275, %vm5276
    %v5278 = vsel %vm5277, %v5269, %v5274
    %v5279 = vrsqrt.pop %v5268
    %v5280 = vmul.f32 %v5279, %v5268
    %v5281 = vmul.f32 %v5280, %v5279
    %v5282 = vmul.f32 0.5, %v5281
    %v5283 = vsub.f32 1.5, %v5282
    %v5284 = vmul.f32 %v5279, %v5283
    %vm5285 = vweird.f32 %v5268
    %vm5286 = vweird.f32 %v5279
    %vm5287 = vmor %vm5285, %vm5286
    %v5288 = vsel %vm5287, %v5279, %v5284
    %v5289 = vmul.f32 %v5255, %v5278
    %v5290 = vmul.f32 %v5256, %v5288
    %v5292 = vperm.slane %v3995, 0
    %v5294 = vmul.f32 %v5289, %v5292
    %v5295 = vmul.f32 %v5290, %v5292
    %v5297 = vperm.slane %v3997, 0
    %v5299 = vadd.f32 %v5294, %v5297
    %v5300 = vadd.f32 %v5295, %v5297
    %5301 = vst.msk [vmem:[#allocation14] sm:$0xff] %vm158, %v5299
    %5302 = vst.msk [vmem:[#allocation14 + $0x8] sm:$0xff] %vm158, %v5300
    // Predicated region
    $region62: #{tpu_custom_call.1} parent=1 // pred_check
      _
    $region63: #{tpu_custom_call.1} parent=1 // pred_check_branch
      %5304 = sbr.rel (0) target = $region65
    $region64: #{tpu_custom_call.1} parent=1 // pred_region
      %5306 = vsyncadd [#allocation4], 0
      %s5307 = sshll.u32 [#allocation14], 4
      %s5308 = int_to_ptr.vmem [resolvable:$true] %s5307
      %s5309 = sshll.u32 %s8, 4
      %s5310 = int_to_ptr.hbm [resolvable:$true] %s5309
      %5315 = dma.vmem_to_hbm [thread:$0]  %s5308, 256, %s5310, [#allocation4], 128, 128, 8
    $region65: #{tpu_custom_call.1} parent=1 // pred_fallthru
      _
    // Predicated region
    $region66: #{tpu_custom_call.1} parent=1 // pred_check
      _
    $region67: #{tpu_custom_call.1} parent=1 // pred_check_branch
      %5317 = sbr.rel (0) target = $region69
    $region68: #{tpu_custom_call.1} parent=1 // pred_region
      %5319 = dma.done [#allocation4], 256
    $region69: #{tpu_custom_call.1} parent=1 // pred_fallthru
      _
    %5320 = vsyncpa [#allocation3], 1
    %5321 = vsyncpa [#allocation6], 1
    %5322 = vsyncpa [#allocation9], 1
    %5323 = vsyncpa [#allocation12], 1
    %5324 = vsyncpa [#allocation4], 1

</llo_original>
